<compile_context>
chip_gen: v7x
topology: tpu7x:2x2x1
jax: 0.10.0
libtpu: 0.0.40
codegen_flags: <defaults>
</compile_context>

<pallas_src>
import math

import numpy as np
import jax
import jax.numpy as jnp
from jax.experimental import pallas as pl
from jax.experimental.pallas import tpu as pltpu

EPS = 1e-4
INV_EPS = 1.0 / EPS


def _pow128(x):
    # x ** 128 via repeated squaring (exponent 128 = 2**7), kept in f32.
    for _ in range(7):
        x = x * x
    return x


def _make_kernel(TH, W, N, K, R):
    """Shifted planes: 0:3 color, 3:6 normal, 6 z.  Guides: nrm0-2, z, inv_dz.

    wxy_ref  : (K*K,) f32 SMEM     compile-time spatial gaussian
    invd_ref : (K*K,) f32 SMEM     compile-time 1/dist (0 at the center tap)
    guide_ref: (5, TH, W)          unpadded center guides for this row band
    band_ref : (7, TH+2N, W+2N)    zero-padded shifted planes for this band
    out_ref  : (3, TH, W)          lane-dense planar output
    """

    def kernel(wxy_ref, invd_ref, guide_ref, band_ref, out_ref, acc_col, acc_w):
        ci = pl.program_id(2)            # tap-row chunk index (0 .. K/R - 1)

        @pl.when(ci == 0)
        def _init():
            acc_col[...] = jnp.zeros_like(acc_col)
            acc_w[...] = jnp.zeros_like(acc_w)

        # Loop-invariant center guides (aligned, no per-step relayout).
        nrm0 = guide_ref[0]
        nrm1 = guide_ref[1]
        nrm2 = guide_ref[2]
        z = guide_ref[3]
        inv_dz = guide_ref[4]            # 1/max(dz, 1e-30), precomputed in XLA

        a0 = jnp.zeros((TH, W), jnp.float32)
        a1 = jnp.zeros((TH, W), jnp.float32)
        a2 = jnp.zeros((TH, W), jnp.float32)
        aw = jnp.zeros((TH, W), jnp.float32)

        for r in range(R):               # R tap rows per grid step
            yi = ci * R + r              # tap-row index 0..K-1 (y = yi - N)
            rows = pl.ds(yi, TH)
            c0b = band_ref[0, rows, :]
            c1b = band_ref[1, rows, :]
            c2b = band_ref[2, rows, :]
            n0b = band_ref[3, rows, :]
            n1b = band_ref[4, rows, :]
            n2b = band_ref[5, rows, :]
            zb = band_ref[6, rows, :]

            base = yi * K
            for xi in range(K):          # 2N+1 x-taps, unrolled
                w_xy = wxy_ref[base + xi]
                inv_dist = invd_ref[base + xi]

                # Normal weight: clamp(dot(n_tap, n), eps, 1) ** 128.
                d = (n0b[:, xi:xi + W] * nrm0 +
                     n1b[:, xi:xi + W] * nrm1 +
                     n2b[:, xi:xi + W] * nrm2)
                w_normal = _pow128(jnp.clip(d, EPS, 1.0))

                # Depth weight: exp(-|z_tap - z| / max(dz*dist, eps)), with
                # the divide replaced by a precomputed reciprocal product.
                recip = jnp.minimum(inv_dz * inv_dist, INV_EPS)
                w_depth = jnp.exp(-(jnp.abs(zb[:, xi:xi + W] - z) * recip))

                # Out-of-bounds taps: padded normals give w_normal == 0.0
                # exactly, so no explicit validity mask is needed.
                w = (w_xy * w_normal) * w_depth

                a0 = a0 + c0b[:, xi:xi + W] * w
                a1 = a1 + c1b[:, xi:xi + W] * w
                a2 = a2 + c2b[:, xi:xi + W] * w
                aw = aw + w

        acc_col[0] = acc_col[0] + a0
        acc_col[1] = acc_col[1] + a1
        acc_col[2] = acc_col[2] + a2
        acc_w[...] = acc_w[...] + aw

        @pl.when(ci == pl.num_programs(2) - 1)
        def _finalize():
            # Exact f32 reciprocal once per pixel — keep the 1e-3 tolerance.
            inv = 1.0 / jnp.maximum(acc_w[...], EPS)
            out_ref[0] = acc_col[0] * inv
            out_ref[1] = acc_col[1] * inv
            out_ref[2] = acc_col[2] * inv

    return kernel


def bilateral_denoise(inp, sigma=1.0, tile_h=128):
    """Pallas TPU port of BilateralDenoiser.forward.

    inp: (B, H, W, C) float32, C >= 11
         channels: 0:3 color, 3:6 normal, 6:9 kd (unused), 9:11 (z, dz)
    returns: (B, H, W, 3) float32
    """
    sigma = max(sigma, 1e-4)
    variance = sigma ** 2
    N = 2 * math.ceil(sigma * 2.5) + 1
    K = 2 * N + 1

    inp = inp.astype(jnp.float32)
    B, H, W, C = inp.shape

    # Tap rows per grid step (must divide K = 2N+1, which is odd).
    R = 1
    for cand in (3, 5):
        if K % cand == 0:
            R = cand
            break
    KC = K // R

    # Row-band tile height.  Per-generation knob: 128 fits v7x (64 MiB VMEM)
    # at 1080p; 256-512 amortizes the halo better on v5e/v6e (128 MiB).
    TH = min(tile_h, H)
    nT = -(-H // TH)
    H_pad = nT * TH

    # Planar split (drop unused kd channels 6:9).
    col = jnp.transpose(inp[..., 0:3], (0, 3, 1, 2))          # (B,3,H,W)
    nrm = jnp.transpose(inp[..., 3:6], (0, 3, 1, 2))          # (B,3,H,W)
    z = inp[..., 9]                                            # (B,H,W)
    dz = inp[..., 10]                                          # (B,H,W)
    # Loop-invariant reciprocal factor: 1/max(dz*dist,eps) == min(inv_dz/dist, 1/eps).
    inv_dz = 1.0 / jnp.maximum(dz, 1e-30)                      # finite, <= 1e30

    guides = jnp.concatenate([nrm, z[:, None], inv_dz[:, None]], axis=1)  # (B,5,H,W)
    shift_planes = jnp.concatenate([col, nrm, z[:, None]], axis=1)        # (B,7,H,W)

    # Zero-pad: bottom rows to a multiple of TH; N-wide spatial halo for the
    # shifted planes.  Zero-padded normals make the out-of-bounds tap weight
    # exactly 0, reproducing the torch bounds mask without a validity plane.
    guides = jnp.pad(guides, ((0, 0), (0, 0), (0, H_pad - H), (0, 0)))
    padded = jnp.pad(shift_planes,
                     ((0, 0), (0, 0), (N, N + H_pad - H), (N, N)))
    Wp = W + 2 * N

    # Row-band tiling with a 2N halo, materialized in XLA so the kernel's
    # BlockSpecs stay plain blocks (HBM halo duplication ~ 2N/TH).
    bands = jnp.stack(
        [padded[:, :, t * TH:t * TH + TH + 2 * N, :] for t in range(nT)], axis=1)
    gbands = jnp.stack(
        [guides[:, :, t * TH:t * TH + TH, :] for t in range(nT)], axis=1)

    # Compile-time spatial-gaussian / inverse-distance tables (flat -> SMEM).
    ys, xs = np.meshgrid(np.arange(-N, N + 1, dtype=np.float64),
                         np.arange(-N, N + 1, dtype=np.float64), indexing="ij")
    dist_sqr = xs * xs + ys * ys
    dist = np.sqrt(dist_sqr)
    wxy_tab = jnp.asarray(np.exp(-dist_sqr / (2.0 * variance)).reshape(-1),
                          dtype=jnp.float32)
    # dist==0 entry is irrelevant (|z_tap - z| == 0 at the center tap); store 0
    # so everything stays finite.
    invd_tab = jnp.asarray(
        np.where(dist > 0.0, 1.0 / np.maximum(dist, 1e-30), 0.0).reshape(-1),
        dtype=jnp.float32)

    kernel = _make_kernel(TH, W, N, K, R)

    # Explicit VMEM budget (double-buffered inputs/outputs + accumulators).
    band_bytes = 7 * (TH + 2 * N) * Wp * 4
    guide_bytes = 5 * TH * W * 4
    out_bytes = 3 * TH * W * 4
    scratch_bytes = 4 * TH * W * 4
    need = 2 * (band_bytes + guide_bytes + out_bytes) + scratch_bytes
    vmem_limit = int(min(max(2 * need, 32 * 1024 * 1024), 64 * 1024 * 1024))

    out_bands = pl.pallas_call(
        kernel,
        out_shape=jax.ShapeDtypeStruct((B, nT, 3, TH, W), jnp.float32),
        grid=(B, nT, KC),
        in_specs=[
            pl.BlockSpec(memory_space=pltpu.MemorySpace.SMEM),   # w_xy table
            pl.BlockSpec(memory_space=pltpu.MemorySpace.SMEM),   # 1/dist table
            pl.BlockSpec((None, None, 5, TH, W),
                         lambda b, t, c: (b, t, 0, 0, 0)),
            pl.BlockSpec((None, None, 7, TH + 2 * N, Wp),
                         lambda b, t, c: (b, t, 0, 0, 0)),
        ],
        out_specs=pl.BlockSpec((None, None, 3, TH, W),
                               lambda b, t, c: (b, t, 0, 0, 0)),
        scratch_shapes=[pltpu.VMEM((3, TH, W), jnp.float32),
                        pltpu.VMEM((TH, W), jnp.float32)],
        compiler_params=pltpu.CompilerParams(
            dimension_semantics=("parallel", "parallel", "arbitrary"),
            vmem_limit_bytes=vmem_limit),
    )(wxy_tab, invd_tab, gbands, bands)

    # Reassemble row bands and return the module's NHWC layout.
    out = jnp.transpose(out_bands, (0, 2, 1, 3, 4)).reshape(B, 3, nT * TH, W)
    out = out[:, :, :H, :]
    return jnp.transpose(out, (0, 2, 3, 1))


def ref_denoise(inp, sigma=1.0):
    """Pure numpy reference mirroring the PyTorch forward exactly."""
    eps = 1e-4
    sigma = max(sigma, 1e-4)
    variance = sigma ** 2
    N = 2 * math.ceil(sigma * 2.5) + 1

    inp = np.asarray(inp, dtype=np.float32)
    col = inp[..., 0:3]
    nrm = inp[..., 3:6]
    zdz = inp[..., 9:11]
    B, H, W, _ = inp.shape

    accum_col = np.zeros_like(col)
    accum_w = np.zeros_like(col[..., 0:1])
    ty, tx = np.meshgrid(np.arange(H, dtype=np.float32),
                         np.arange(W, dtype=np.float32), indexing="ij")
    for y in range(-N, N + 1):
        for x in range(-N, N + 1):
            txs = tx[None, ..., None] + x
            tys = ty[None, ..., None] + y
            dist_sqr = x * x + y * y
            dist = math.sqrt(dist_sqr)
            w_xy = math.exp(-dist_sqr / (2.0 * variance))

            nrm_tap = np.roll(nrm, (-y, -x), (1, 2))
            w_normal = np.power(
                np.clip(np.sum(nrm_tap * nrm, -1, keepdims=True), eps, 1.0),
                128.0)

            zdz_tap = np.roll(zdz, (-y, -x), (1, 2))
            w_depth = np.exp(-(np.abs(zdz_tap[..., 0:1] - zdz[..., 0:1]) /
                               np.maximum(zdz[..., 1:2] * dist, eps)))

            w = w_xy * w_normal * w_depth
            w = np.where((txs >= 0) & (txs < W) & (tys >= 0) & (tys < H),
                         w, np.zeros_like(w))

            col_tap = np.roll(col, (-y, -x), (1, 2))
            accum_col += col_tap * w
            accum_w += w
    return accum_col / np.maximum(accum_w, eps)


if __name__ == "__main__":
    key = jax.random.PRNGKey(0)
    B, H, W, C = 2, 16, 16, 11
    inp = jax.random.normal(key, (B, H, W, C), dtype=jnp.float32)

    out = bilateral_denoise(inp, sigma=1.0)
    out = jax.block_until_ready(out)

    ref = ref_denoise(np.asarray(inp), sigma=1.0)
    assert out.shape == (B, H, W, 3)
    err = float(np.max(np.abs(np.asarray(out) - ref)))
    assert np.allclose(np.asarray(out), ref, rtol=1e-3, atol=1e-3), (
        "mismatch: max abs err = %g" % err)

    print("KERNEL_OK")
</pallas_src>

<mosaic_0001>
module attributes {stable_mosaic.version = 11 : i64} {
  func.func @kernel(%arg0: i32, %arg1: i32, %arg2: i32, %arg3: memref<225xf32, #tpu.memory_space<smem>>, %arg4: memref<225xf32, #tpu.memory_space<smem>>, %arg5: memref<1x1x5x16x16xf32, #tpu.memory_space<vmem>>, %arg6: memref<1x1x7x30x30xf32, #tpu.memory_space<vmem>>, %arg7: memref<1x1x3x16x16xf32, #tpu.memory_space<vmem>>, %arg8: memref<3x16x16xf32, #tpu.memory_space<vmem>>, %arg9: memref<16x16xf32, #tpu.memory_space<vmem>>) attributes {dimension_semantics = [#tpu.dimension_semantics<parallel>, #tpu.dimension_semantics<parallel>, #tpu.dimension_semantics<arbitrary>], iteration_bounds = array<i64: 2, 1, 5>, scalar_prefetch = 0 : i64, scratch_operands = 2 : i64, tpu.core_type = #tpu.core_type<tc>, window_params = [{transform_indices = @transform_0, window_bounds = array<i64: 225>}, {transform_indices = @transform_1, window_bounds = array<i64: 225>}, {transform_indices = @transform_2, window_bounds = array<i64: 1, 1, 5, 16, 16>}, {transform_indices = @transform_3, window_bounds = array<i64: 1, 1, 7, 30, 30>}, {transform_indices = @transform_4, window_bounds = array<i64: 1, 1, 3, 16, 16>}]} {
    %c0_i32 = arith.constant 0 : i32
    %0 = arith.cmpi eq, %arg2, %c0_i32 : i32
    %1 = arith.extui %0 : i1 to i32
    %c0_i32_0 = arith.constant 0 : i32
    %2 = arith.cmpi ne, %1, %c0_i32_0 : i32
    scf.if %2 {
      %cst_394 = arith.constant 0.000000e+00 : f32
      %2318 = vector.broadcast %cst_394 : f32 to vector<3x16x16xf32>
      %c0_395 = arith.constant 0 : index
      %c0_396 = arith.constant 0 : index
      %c0_397 = arith.constant 0 : index
      %2319 = vector.load %arg8[%c0_395, %c0_396, %c0_397] : memref<3x16x16xf32, #tpu.memory_space<vmem>>, vector<3x16x16xf32>
      tpu.vector_store %arg8[%c0_395, %c0_396, %c0_397], %2318 {strides = array<i32>} : memref<3x16x16xf32, #tpu.memory_space<vmem>>, vector<3x16x16xf32>,
      %cst_398 = arith.constant 0.000000e+00 : f32
      %2320 = vector.broadcast %cst_398 : f32 to vector<16x16xf32>
      %c0_399 = arith.constant 0 : index
      %c0_400 = arith.constant 0 : index
      %2321 = vector.load %arg9[%c0_399, %c0_400] : memref<16x16xf32, #tpu.memory_space<vmem>>, vector<16x16xf32>
      tpu.vector_store %arg9[%c0_399, %c0_400], %2320 {strides = array<i32>} : memref<16x16xf32, #tpu.memory_space<vmem>>, vector<16x16xf32>,
    } else {
    }
    %c0 = arith.constant 0 : index
    %c0_1 = arith.constant 0 : index
    %c0_2 = arith.constant 0 : index
    %c0_3 = arith.constant 0 : index
    %c0_4 = arith.constant 0 : index
    %3 = vector.load %arg5[%c0, %c0_1, %c0_2, %c0_3, %c0_4] : memref<1x1x5x16x16xf32, #tpu.memory_space<vmem>>, vector<1x1x1x16x16xf32>
    %4 = vector.shape_cast %3 : vector<1x1x1x16x16xf32> to vector<16x16xf32>
    %c0_5 = arith.constant 0 : index
    %c0_6 = arith.constant 0 : index
    %c1 = arith.constant 1 : index
    %c0_7 = arith.constant 0 : index
    %c0_8 = arith.constant 0 : index
    %5 = vector.load %arg5[%c0_5, %c0_6, %c1, %c0_7, %c0_8] : memref<1x1x5x16x16xf32, #tpu.memory_space<vmem>>, vector<1x1x1x16x16xf32>
    %6 = vector.shape_cast %5 : vector<1x1x1x16x16xf32> to vector<16x16xf32>
    %c0_9 = arith.constant 0 : index
    %c0_10 = arith.constant 0 : index
    %c2 = arith.constant 2 : index
    %c0_11 = arith.constant 0 : index
    %c0_12 = arith.constant 0 : index
    %7 = vector.load %arg5[%c0_9, %c0_10, %c2, %c0_11, %c0_12] : memref<1x1x5x16x16xf32, #tpu.memory_space<vmem>>, vector<1x1x1x16x16xf32>
    %8 = vector.shape_cast %7 : vector<1x1x1x16x16xf32> to vector<16x16xf32>
    %c0_13 = arith.constant 0 : index
    %c0_14 = arith.constant 0 : index
    %c3 = arith.constant 3 : index
    %c0_15 = arith.constant 0 : index
    %c0_16 = arith.constant 0 : index
    %9 = vector.load %arg5[%c0_13, %c0_14, %c3, %c0_15, %c0_16] : memref<1x1x5x16x16xf32, #tpu.memory_space<vmem>>, vector<1x1x1x16x16xf32>
    %10 = vector.shape_cast %9 : vector<1x1x1x16x16xf32> to vector<16x16xf32>
    %c0_17 = arith.constant 0 : index
    %c0_18 = arith.constant 0 : index
    %c4 = arith.constant 4 : index
    %c0_19 = arith.constant 0 : index
    %c0_20 = arith.constant 0 : index
    %11 = vector.load %arg5[%c0_17, %c0_18, %c4, %c0_19, %c0_20] : memref<1x1x5x16x16xf32, #tpu.memory_space<vmem>>, vector<1x1x1x16x16xf32>
    %12 = vector.shape_cast %11 : vector<1x1x1x16x16xf32> to vector<16x16xf32>
    %cst = arith.constant 0.000000e+00 : f32
    %13 = vector.broadcast %cst : f32 to vector<16x16xf32>
    %cst_21 = arith.constant 0.000000e+00 : f32
    %14 = vector.broadcast %cst_21 : f32 to vector<16x16xf32>
    %cst_22 = arith.constant 0.000000e+00 : f32
    %15 = vector.broadcast %cst_22 : f32 to vector<16x16xf32>
    %cst_23 = arith.constant 0.000000e+00 : f32
    %16 = vector.broadcast %cst_23 : f32 to vector<16x16xf32>
    %c3_i32 = arith.constant 3 : i32
    %17 = arith.muli %arg2, %c3_i32 : i32
    %c0_i32_24 = arith.constant 0 : i32
    %18 = arith.addi %17, %c0_i32_24 : i32
    %c0_25 = arith.constant 0 : index
    %c0_26 = arith.constant 0 : index
    %c0_27 = arith.constant 0 : index
    %19 = arith.index_cast %18 : i32 to index
    %c0_28 = arith.constant 0 : index
    %20 = vector.load %arg6[%c0_25, %c0_26, %c0_27, %19, %c0_28] : memref<1x1x7x30x30xf32, #tpu.memory_space<vmem>>, vector<1x1x1x16x30xf32>
    %21 = vector.shape_cast %20 : vector<1x1x1x16x30xf32> to vector<16x30xf32>
    %c0_29 = arith.constant 0 : index
    %c0_30 = arith.constant 0 : index
    %c1_31 = arith.constant 1 : index
    %22 = arith.index_cast %18 : i32 to index
    %c0_32 = arith.constant 0 : index
    %23 = vector.load %arg6[%c0_29, %c0_30, %c1_31, %22, %c0_32] : memref<1x1x7x30x30xf32, #tpu.memory_space<vmem>>, vector<1x1x1x16x30xf32>
    %24 = vector.shape_cast %23 : vector<1x1x1x16x30xf32> to vector<16x30xf32>
    %c0_33 = arith.constant 0 : index
    %c0_34 = arith.constant 0 : index
    %c2_35 = arith.constant 2 : index
    %25 = arith.index_cast %18 : i32 to index
    %c0_36 = arith.constant 0 : index
    %26 = vector.load %arg6[%c0_33, %c0_34, %c2_35, %25, %c0_36] : memref<1x1x7x30x30xf32, #tpu.memory_space<vmem>>, vector<1x1x1x16x30xf32>
    %27 = vector.shape_cast %26 : vector<1x1x1x16x30xf32> to vector<16x30xf32>
    %c0_37 = arith.constant 0 : index
    %c0_38 = arith.constant 0 : index
    %c3_39 = arith.constant 3 : index
    %28 = arith.index_cast %18 : i32 to index
    %c0_40 = arith.constant 0 : index
    %29 = vector.load %arg6[%c0_37, %c0_38, %c3_39, %28, %c0_40] : memref<1x1x7x30x30xf32, #tpu.memory_space<vmem>>, vector<1x1x1x16x30xf32>
    %30 = vector.shape_cast %29 : vector<1x1x1x16x30xf32> to vector<16x30xf32>
    %c0_41 = arith.constant 0 : index
    %c0_42 = arith.constant 0 : index
    %c4_43 = arith.constant 4 : index
    %31 = arith.index_cast %18 : i32 to index
    %c0_44 = arith.constant 0 : index
    %32 = vector.load %arg6[%c0_41, %c0_42, %c4_43, %31, %c0_44] : memref<1x1x7x30x30xf32, #tpu.memory_space<vmem>>, vector<1x1x1x16x30xf32>
    %33 = vector.shape_cast %32 : vector<1x1x1x16x30xf32> to vector<16x30xf32>
    %c0_45 = arith.constant 0 : index
    %c0_46 = arith.constant 0 : index
    %c5 = arith.constant 5 : index
    %34 = arith.index_cast %18 : i32 to index
    %c0_47 = arith.constant 0 : index
    %35 = vector.load %arg6[%c0_45, %c0_46, %c5, %34, %c0_47] : memref<1x1x7x30x30xf32, #tpu.memory_space<vmem>>, vector<1x1x1x16x30xf32>
    %36 = vector.shape_cast %35 : vector<1x1x1x16x30xf32> to vector<16x30xf32>
    %c0_48 = arith.constant 0 : index
    %c0_49 = arith.constant 0 : index
    %c6 = arith.constant 6 : index
    %37 = arith.index_cast %18 : i32 to index
    %c0_50 = arith.constant 0 : index
    %38 = vector.load %arg6[%c0_48, %c0_49, %c6, %37, %c0_50] : memref<1x1x7x30x30xf32, #tpu.memory_space<vmem>>, vector<1x1x1x16x30xf32>
    %39 = vector.shape_cast %38 : vector<1x1x1x16x30xf32> to vector<16x30xf32>
    %c15_i32 = arith.constant 15 : i32
    %40 = arith.muli %18, %c15_i32 : i32
    %c0_i32_51 = arith.constant 0 : i32
    %41 = arith.addi %40, %c0_i32_51 : i32
    %42 = arith.index_cast %41 : i32 to index
    %43 = memref.load %arg3[%42] : memref<225xf32, #tpu.memory_space<smem>>
    %c0_i32_52 = arith.constant 0 : i32
    %44 = arith.addi %40, %c0_i32_52 : i32
    %45 = arith.index_cast %44 : i32 to index
    %46 = memref.load %arg4[%45] : memref<225xf32, #tpu.memory_space<smem>>
    %47 = vector.extract_strided_slice %30 {offsets = [0, 0], sizes = [16, 16], strides = [1, 1]} : vector<16x30xf32> to vector<16x16xf32>
    %48 = arith.mulf %47, %4 : vector<16x16xf32>
    %49 = vector.extract_strided_slice %33 {offsets = [0, 0], sizes = [16, 16], strides = [1, 1]} : vector<16x30xf32> to vector<16x16xf32>
    %50 = arith.mulf %49, %6 : vector<16x16xf32>
    %51 = arith.addf %48, %50 : vector<16x16xf32>
    %52 = vector.extract_strided_slice %36 {offsets = [0, 0], sizes = [16, 16], strides = [1, 1]} : vector<16x30xf32> to vector<16x16xf32>
    %53 = arith.mulf %52, %8 : vector<16x16xf32>
    %54 = arith.addf %51, %53 : vector<16x16xf32>
    %cst_53 = arith.constant 9.99999974E-5 : f32
    %cst_54 = arith.constant 1.000000e+00 : f32
    %55 = vector.broadcast %cst_53 : f32 to vector<16x16xf32>
    %56 = arith.maximumf %55, %54 : vector<16x16xf32>
    %57 = vector.broadcast %cst_54 : f32 to vector<16x16xf32>
    %58 = arith.minimumf %57, %56 : vector<16x16xf32>
    %59 = arith.mulf %58, %58 : vector<16x16xf32>
    %60 = arith.mulf %59, %59 : vector<16x16xf32>
    %61 = arith.mulf %60, %60 : vector<16x16xf32>
    %62 = arith.mulf %61, %61 : vector<16x16xf32>
    %63 = arith.mulf %62, %62 : vector<16x16xf32>
    %64 = arith.mulf %63, %63 : vector<16x16xf32>
    %65 = arith.mulf %64, %64 : vector<16x16xf32>
    %66 = vector.broadcast %46 : f32 to vector<16x16xf32>
    %67 = arith.mulf %12, %66 : vector<16x16xf32>
    %cst_55 = arith.constant 1.000000e+04 : f32
    %68 = vector.broadcast %cst_55 : f32 to vector<16x16xf32>
    %69 = arith.minimumf %67, %68 : vector<16x16xf32>
    %70 = vector.extract_strided_slice %39 {offsets = [0, 0], sizes = [16, 16], strides = [1, 1]} : vector<16x30xf32> to vector<16x16xf32>
    %71 = arith.subf %70, %10 : vector<16x16xf32>
    %72 = math.absf %71 : vector<16x16xf32>
    %73 = arith.mulf %72, %69 : vector<16x16xf32>
    %cst_56 = arith.constant 0.000000e+00 : f32
    %74 = vector.broadcast %cst_56 : f32 to vector<16x16xf32>
    %75 = arith.subf %74, %73 : vector<16x16xf32>
    %76 = math.exp %75 : vector<16x16xf32>
    %77 = vector.broadcast %43 : f32 to vector<16x16xf32>
    %78 = arith.mulf %77, %65 : vector<16x16xf32>
    %79 = arith.mulf %78, %76 : vector<16x16xf32>
    %80 = vector.extract_strided_slice %21 {offsets = [0, 0], sizes = [16, 16], strides = [1, 1]} : vector<16x30xf32> to vector<16x16xf32>
    %81 = arith.mulf %80, %79 : vector<16x16xf32>
    %82 = arith.addf %13, %81 : vector<16x16xf32>
    %83 = vector.extract_strided_slice %24 {offsets = [0, 0], sizes = [16, 16], strides = [1, 1]} : vector<16x30xf32> to vector<16x16xf32>
    %84 = arith.mulf %83, %79 : vector<16x16xf32>
    %85 = arith.addf %14, %84 : vector<16x16xf32>
    %86 = vector.extract_strided_slice %27 {offsets = [0, 0], sizes = [16, 16], strides = [1, 1]} : vector<16x30xf32> to vector<16x16xf32>
    %87 = arith.mulf %86, %79 : vector<16x16xf32>
    %88 = arith.addf %15, %87 : vector<16x16xf32>
    %89 = arith.addf %16, %79 : vector<16x16xf32>
    %c1_i32 = arith.constant 1 : i32
    %90 = arith.addi %40, %c1_i32 : i32
    %91 = arith.index_cast %90 : i32 to index
    %92 = memref.load %arg3[%91] : memref<225xf32, #tpu.memory_space<smem>>
    %c1_i32_57 = arith.constant 1 : i32
    %93 = arith.addi %40, %c1_i32_57 : i32
    %94 = arith.index_cast %93 : i32 to index
    %95 = memref.load %arg4[%94] : memref<225xf32, #tpu.memory_space<smem>>
    %96 = vector.extract_strided_slice %30 {offsets = [0, 1], sizes = [16, 16], strides = [1, 1]} : vector<16x30xf32> to vector<16x16xf32>
    %97 = arith.mulf %96, %4 : vector<16x16xf32>
    %98 = vector.extract_strided_slice %33 {offsets = [0, 1], sizes = [16, 16], strides = [1, 1]} : vector<16x30xf32> to vector<16x16xf32>
    %99 = arith.mulf %98, %6 : vector<16x16xf32>
    %100 = arith.addf %97, %99 : vector<16x16xf32>
    %101 = vector.extract_strided_slice %36 {offsets = [0, 1], sizes = [16, 16], strides = [1, 1]} : vector<16x30xf32> to vector<16x16xf32>
    %102 = arith.mulf %101, %8 : vector<16x16xf32>
    %103 = arith.addf %100, %102 : vector<16x16xf32>
    %cst_58 = arith.constant 9.99999974E-5 : f32
    %cst_59 = arith.constant 1.000000e+00 : f32
    %104 = vector.broadcast %cst_58 : f32 to vector<16x16xf32>
    %105 = arith.maximumf %104, %103 : vector<16x16xf32>
    %106 = vector.broadcast %cst_59 : f32 to vector<16x16xf32>
    %107 = arith.minimumf %106, %105 : vector<16x16xf32>
    %108 = arith.mulf %107, %107 : vector<16x16xf32>
    %109 = arith.mulf %108, %108 : vector<16x16xf32>
    %110 = arith.mulf %109, %109 : vector<16x16xf32>
    %111 = arith.mulf %110, %110 : vector<16x16xf32>
    %112 = arith.mulf %111, %111 : vector<16x16xf32>
    %113 = arith.mulf %112, %112 : vector<16x16xf32>
    %114 = arith.mulf %113, %113 : vector<16x16xf32>
    %115 = vector.broadcast %95 : f32 to vector<16x16xf32>
    %116 = arith.mulf %12, %115 : vector<16x16xf32>
    %cst_60 = arith.constant 1.000000e+04 : f32
    %117 = vector.broadcast %cst_60 : f32 to vector<16x16xf32>
    %118 = arith.minimumf %116, %117 : vector<16x16xf32>
    %119 = vector.extract_strided_slice %39 {offsets = [0, 1], sizes = [16, 16], strides = [1, 1]} : vector<16x30xf32> to vector<16x16xf32>
    %120 = arith.subf %119, %10 : vector<16x16xf32>
    %121 = math.absf %120 : vector<16x16xf32>
    %122 = arith.mulf %121, %118 : vector<16x16xf32>
    %cst_61 = arith.constant 0.000000e+00 : f32
    %123 = vector.broadcast %cst_61 : f32 to vector<16x16xf32>
    %124 = arith.subf %123, %122 : vector<16x16xf32>
    %125 = math.exp %124 : vector<16x16xf32>
    %126 = vector.broadcast %92 : f32 to vector<16x16xf32>
    %127 = arith.mulf %126, %114 : vector<16x16xf32>
    %128 = arith.mulf %127, %125 : vector<16x16xf32>
    %129 = vector.extract_strided_slice %21 {offsets = [0, 1], sizes = [16, 16], strides = [1, 1]} : vector<16x30xf32> to vector<16x16xf32>
    %130 = arith.mulf %129, %128 : vector<16x16xf32>
    %131 = arith.addf %82, %130 : vector<16x16xf32>
    %132 = vector.extract_strided_slice %24 {offsets = [0, 1], sizes = [16, 16], strides = [1, 1]} : vector<16x30xf32> to vector<16x16xf32>
    %133 = arith.mulf %132, %128 : vector<16x16xf32>
    %134 = arith.addf %85, %133 : vector<16x16xf32>
    %135 = vector.extract_strided_slice %27 {offsets = [0, 1], sizes = [16, 16], strides = [1, 1]} : vector<16x30xf32> to vector<16x16xf32>
    %136 = arith.mulf %135, %128 : vector<16x16xf32>
    %137 = arith.addf %88, %136 : vector<16x16xf32>
    %138 = arith.addf %89, %128 : vector<16x16xf32>
    %c2_i32 = arith.constant 2 : i32
    %139 = arith.addi %40, %c2_i32 : i32
    %140 = arith.index_cast %139 : i32 to index
    %141 = memref.load %arg3[%140] : memref<225xf32, #tpu.memory_space<smem>>
    %c2_i32_62 = arith.constant 2 : i32
    %142 = arith.addi %40, %c2_i32_62 : i32
    %143 = arith.index_cast %142 : i32 to index
    %144 = memref.load %arg4[%143] : memref<225xf32, #tpu.memory_space<smem>>
    %145 = vector.extract_strided_slice %30 {offsets = [0, 2], sizes = [16, 16], strides = [1, 1]} : vector<16x30xf32> to vector<16x16xf32>
    %146 = arith.mulf %145, %4 : vector<16x16xf32>
    %147 = vector.extract_strided_slice %33 {offsets = [0, 2], sizes = [16, 16], strides = [1, 1]} : vector<16x30xf32> to vector<16x16xf32>
    %148 = arith.mulf %147, %6 : vector<16x16xf32>
    %149 = arith.addf %146, %148 : vector<16x16xf32>
    %150 = vector.extract_strided_slice %36 {offsets = [0, 2], sizes = [16, 16], strides = [1, 1]} : vector<16x30xf32> to vector<16x16xf32>
    %151 = arith.mulf %150, %8 : vector<16x16xf32>
    %152 = arith.addf %149, %151 : vector<16x16xf32>
    %cst_63 = arith.constant 9.99999974E-5 : f32
    %cst_64 = arith.constant 1.000000e+00 : f32
    %153 = vector.broadcast %cst_63 : f32 to vector<16x16xf32>
    %154 = arith.maximumf %153, %152 : vector<16x16xf32>
    %155 = vector.broadcast %cst_64 : f32 to vector<16x16xf32>
    %156 = arith.minimumf %155, %154 : vector<16x16xf32>
    %157 = arith.mulf %156, %156 : vector<16x16xf32>
    %158 = arith.mulf %157, %157 : vector<16x16xf32>
    %159 = arith.mulf %158, %158 : vector<16x16xf32>
    %160 = arith.mulf %159, %159 : vector<16x16xf32>
    %161 = arith.mulf %160, %160 : vector<16x16xf32>
    %162 = arith.mulf %161, %161 : vector<16x16xf32>
    %163 = arith.mulf %162, %162 : vector<16x16xf32>
    %164 = vector.broadcast %144 : f32 to vector<16x16xf32>
    %165 = arith.mulf %12, %164 : vector<16x16xf32>
    %cst_65 = arith.constant 1.000000e+04 : f32
    %166 = vector.broadcast %cst_65 : f32 to vector<16x16xf32>
    %167 = arith.minimumf %165, %166 : vector<16x16xf32>
    %168 = vector.extract_strided_slice %39 {offsets = [0, 2], sizes = [16, 16], strides = [1, 1]} : vector<16x30xf32> to vector<16x16xf32>
    %169 = arith.subf %168, %10 : vector<16x16xf32>
    %170 = math.absf %169 : vector<16x16xf32>
    %171 = arith.mulf %170, %167 : vector<16x16xf32>
    %cst_66 = arith.constant 0.000000e+00 : f32
    %172 = vector.broadcast %cst_66 : f32 to vector<16x16xf32>
    %173 = arith.subf %172, %171 : vector<16x16xf32>
    %174 = math.exp %173 : vector<16x16xf32>
    %175 = vector.broadcast %141 : f32 to vector<16x16xf32>
    %176 = arith.mulf %175, %163 : vector<16x16xf32>
    %177 = arith.mulf %176, %174 : vector<16x16xf32>
    %178 = vector.extract_strided_slice %21 {offsets = [0, 2], sizes = [16, 16], strides = [1, 1]} : vector<16x30xf32> to vector<16x16xf32>
    %179 = arith.mulf %178, %177 : vector<16x16xf32>
    %180 = arith.addf %131, %179 : vector<16x16xf32>
    %181 = vector.extract_strided_slice %24 {offsets = [0, 2], sizes = [16, 16], strides = [1, 1]} : vector<16x30xf32> to vector<16x16xf32>
    %182 = arith.mulf %181, %177 : vector<16x16xf32>
    %183 = arith.addf %134, %182 : vector<16x16xf32>
    %184 = vector.extract_strided_slice %27 {offsets = [0, 2], sizes = [16, 16], strides = [1, 1]} : vector<16x30xf32> to vector<16x16xf32>
    %185 = arith.mulf %184, %177 : vector<16x16xf32>
    %186 = arith.addf %137, %185 : vector<16x16xf32>
    %187 = arith.addf %138, %177 : vector<16x16xf32>
    %c3_i32_67 = arith.constant 3 : i32
    %188 = arith.addi %40, %c3_i32_67 : i32
    %189 = arith.index_cast %188 : i32 to index
    %190 = memref.load %arg3[%189] : memref<225xf32, #tpu.memory_space<smem>>
    %c3_i32_68 = arith.constant 3 : i32
    %191 = arith.addi %40, %c3_i32_68 : i32
    %192 = arith.index_cast %191 : i32 to index
    %193 = memref.load %arg4[%192] : memref<225xf32, #tpu.memory_space<smem>>
    %194 = vector.extract_strided_slice %30 {offsets = [0, 3], sizes = [16, 16], strides = [1, 1]} : vector<16x30xf32> to vector<16x16xf32>
    %195 = arith.mulf %194, %4 : vector<16x16xf32>
    %196 = vector.extract_strided_slice %33 {offsets = [0, 3], sizes = [16, 16], strides = [1, 1]} : vector<16x30xf32> to vector<16x16xf32>
    %197 = arith.mulf %196, %6 : vector<16x16xf32>
    %198 = arith.addf %195, %197 : vector<16x16xf32>
    %199 = vector.extract_strided_slice %36 {offsets = [0, 3], sizes = [16, 16], strides = [1, 1]} : vector<16x30xf32> to vector<16x16xf32>
    %200 = arith.mulf %199, %8 : vector<16x16xf32>
    %201 = arith.addf %198, %200 : vector<16x16xf32>
    %cst_69 = arith.constant 9.99999974E-5 : f32
    %cst_70 = arith.constant 1.000000e+00 : f32
    %202 = vector.broadcast %cst_69 : f32 to vector<16x16xf32>
    %203 = arith.maximumf %202, %201 : vector<16x16xf32>
    %204 = vector.broadcast %cst_70 : f32 to vector<16x16xf32>
    %205 = arith.minimumf %204, %203 : vector<16x16xf32>
    %206 = arith.mulf %205, %205 : vector<16x16xf32>
    %207 = arith.mulf %206, %206 : vector<16x16xf32>
    %208 = arith.mulf %207, %207 : vector<16x16xf32>
    %209 = arith.mulf %208, %208 : vector<16x16xf32>
    %210 = arith.mulf %209, %209 : vector<16x16xf32>
    %211 = arith.mulf %210, %210 : vector<16x16xf32>
    %212 = arith.mulf %211, %211 : vector<16x16xf32>
    %213 = vector.broadcast %193 : f32 to vector<16x16xf32>
    %214 = arith.mulf %12, %213 : vector<16x16xf32>
    %cst_71 = arith.constant 1.000000e+04 : f32
    %215 = vector.broadcast %cst_71 : f32 to vector<16x16xf32>
    %216 = arith.minimumf %214, %215 : vector<16x16xf32>
    %217 = vector.extract_strided_slice %39 {offsets = [0, 3], sizes = [16, 16], strides = [1, 1]} : vector<16x30xf32> to vector<16x16xf32>
    %218 = arith.subf %217, %10 : vector<16x16xf32>
    %219 = math.absf %218 : vector<16x16xf32>
    %220 = arith.mulf %219, %216 : vector<16x16xf32>
    %cst_72 = arith.constant 0.000000e+00 : f32
    %221 = vector.broadcast %cst_72 : f32 to vector<16x16xf32>
    %222 = arith.subf %221, %220 : vector<16x16xf32>
    %223 = math.exp %222 : vector<16x16xf32>
    %224 = vector.broadcast %190 : f32 to vector<16x16xf32>
    %225 = arith.mulf %224, %212 : vector<16x16xf32>
    %226 = arith.mulf %225, %223 : vector<16x16xf32>
    %227 = vector.extract_strided_slice %21 {offsets = [0, 3], sizes = [16, 16], strides = [1, 1]} : vector<16x30xf32> to vector<16x16xf32>
    %228 = arith.mulf %227, %226 : vector<16x16xf32>
    %229 = arith.addf %180, %228 : vector<16x16xf32>
    %230 = vector.extract_strided_slice %24 {offsets = [0, 3], sizes = [16, 16], strides = [1, 1]} : vector<16x30xf32> to vector<16x16xf32>
    %231 = arith.mulf %230, %226 : vector<16x16xf32>
    %232 = arith.addf %183, %231 : vector<16x16xf32>
    %233 = vector.extract_strided_slice %27 {offsets = [0, 3], sizes = [16, 16], strides = [1, 1]} : vector<16x30xf32> to vector<16x16xf32>
    %234 = arith.mulf %233, %226 : vector<16x16xf32>
    %235 = arith.addf %186, %234 : vector<16x16xf32>
    %236 = arith.addf %187, %226 : vector<16x16xf32>
    %c4_i32 = arith.constant 4 : i32
    %237 = arith.addi %40, %c4_i32 : i32
    %238 = arith.index_cast %237 : i32 to index
    %239 = memref.load %arg3[%238] : memref<225xf32, #tpu.memory_space<smem>>
    %c4_i32_73 = arith.constant 4 : i32
    %240 = arith.addi %40, %c4_i32_73 : i32
    %241 = arith.index_cast %240 : i32 to index
    %242 = memref.load %arg4[%241] : memref<225xf32, #tpu.memory_space<smem>>
    %243 = vector.extract_strided_slice %30 {offsets = [0, 4], sizes = [16, 16], strides = [1, 1]} : vector<16x30xf32> to vector<16x16xf32>
    %244 = arith.mulf %243, %4 : vector<16x16xf32>
    %245 = vector.extract_strided_slice %33 {offsets = [0, 4], sizes = [16, 16], strides = [1, 1]} : vector<16x30xf32> to vector<16x16xf32>
    %246 = arith.mulf %245, %6 : vector<16x16xf32>
    %247 = arith.addf %244, %246 : vector<16x16xf32>
    %248 = vector.extract_strided_slice %36 {offsets = [0, 4], sizes = [16, 16], strides = [1, 1]} : vector<16x30xf32> to vector<16x16xf32>
    %249 = arith.mulf %248, %8 : vector<16x16xf32>
    %250 = arith.addf %247, %249 : vector<16x16xf32>
    %cst_74 = arith.constant 9.99999974E-5 : f32
    %cst_75 = arith.constant 1.000000e+00 : f32
    %251 = vector.broadcast %cst_74 : f32 to vector<16x16xf32>
    %252 = arith.maximumf %251, %250 : vector<16x16xf32>
    %253 = vector.broadcast %cst_75 : f32 to vector<16x16xf32>
    %254 = arith.minimumf %253, %252 : vector<16x16xf32>
    %255 = arith.mulf %254, %254 : vector<16x16xf32>
    %256 = arith.mulf %255, %255 : vector<16x16xf32>
    %257 = arith.mulf %256, %256 : vector<16x16xf32>
    %258 = arith.mulf %257, %257 : vector<16x16xf32>
    %259 = arith.mulf %258, %258 : vector<16x16xf32>
    %260 = arith.mulf %259, %259 : vector<16x16xf32>
    %261 = arith.mulf %260, %260 : vector<16x16xf32>
    %262 = vector.broadcast %242 : f32 to vector<16x16xf32>
    %263 = arith.mulf %12, %262 : vector<16x16xf32>
    %cst_76 = arith.constant 1.000000e+04 : f32
    %264 = vector.broadcast %cst_76 : f32 to vector<16x16xf32>
    %265 = arith.minimumf %263, %264 : vector<16x16xf32>
    %266 = vector.extract_strided_slice %39 {offsets = [0, 4], sizes = [16, 16], strides = [1, 1]} : vector<16x30xf32> to vector<16x16xf32>
    %267 = arith.subf %266, %10 : vector<16x16xf32>
    %268 = math.absf %267 : vector<16x16xf32>
    %269 = arith.mulf %268, %265 : vector<16x16xf32>
    %cst_77 = arith.constant 0.000000e+00 : f32
    %270 = vector.broadcast %cst_77 : f32 to vector<16x16xf32>
    %271 = arith.subf %270, %269 : vector<16x16xf32>
    %272 = math.exp %271 : vector<16x16xf32>
    %273 = vector.broadcast %239 : f32 to vector<16x16xf32>
    %274 = arith.mulf %273, %261 : vector<16x16xf32>
    %275 = arith.mulf %274, %272 : vector<16x16xf32>
    %276 = vector.extract_strided_slice %21 {offsets = [0, 4], sizes = [16, 16], strides = [1, 1]} : vector<16x30xf32> to vector<16x16xf32>
    %277 = arith.mulf %276, %275 : vector<16x16xf32>
    %278 = arith.addf %229, %277 : vector<16x16xf32>
    %279 = vector.extract_strided_slice %24 {offsets = [0, 4], sizes = [16, 16], strides = [1, 1]} : vector<16x30xf32> to vector<16x16xf32>
    %280 = arith.mulf %279, %275 : vector<16x16xf32>
    %281 = arith.addf %232, %280 : vector<16x16xf32>
    %282 = vector.extract_strided_slice %27 {offsets = [0, 4], sizes = [16, 16], strides = [1, 1]} : vector<16x30xf32> to vector<16x16xf32>
    %283 = arith.mulf %282, %275 : vector<16x16xf32>
    %284 = arith.addf %235, %283 : vector<16x16xf32>
    %285 = arith.addf %236, %275 : vector<16x16xf32>
    %c5_i32 = arith.constant 5 : i32
    %286 = arith.addi %40, %c5_i32 : i32
    %287 = arith.index_cast %286 : i32 to index
    %288 = memref.load %arg3[%287] : memref<225xf32, #tpu.memory_space<smem>>
    %c5_i32_78 = arith.constant 5 : i32
    %289 = arith.addi %40, %c5_i32_78 : i32
    %290 = arith.index_cast %289 : i32 to index
    %291 = memref.load %arg4[%290] : memref<225xf32, #tpu.memory_space<smem>>
    %292 = vector.extract_strided_slice %30 {offsets = [0, 5], sizes = [16, 16], strides = [1, 1]} : vector<16x30xf32> to vector<16x16xf32>
    %293 = arith.mulf %292, %4 : vector<16x16xf32>
    %294 = vector.extract_strided_slice %33 {offsets = [0, 5], sizes = [16, 16], strides = [1, 1]} : vector<16x30xf32> to vector<16x16xf32>
    %295 = arith.mulf %294, %6 : vector<16x16xf32>
    %296 = arith.addf %293, %295 : vector<16x16xf32>
    %297 = vector.extract_strided_slice %36 {offsets = [0, 5], sizes = [16, 16], strides = [1, 1]} : vector<16x30xf32> to vector<16x16xf32>
    %298 = arith.mulf %297, %8 : vector<16x16xf32>
    %299 = arith.addf %296, %298 : vector<16x16xf32>
    %cst_79 = arith.constant 9.99999974E-5 : f32
    %cst_80 = arith.constant 1.000000e+00 : f32
    %300 = vector.broadcast %cst_79 : f32 to vector<16x16xf32>
    %301 = arith.maximumf %300, %299 : vector<16x16xf32>
    %302 = vector.broadcast %cst_80 : f32 to vector<16x16xf32>
    %303 = arith.minimumf %302, %301 : vector<16x16xf32>
    %304 = arith.mulf %303, %303 : vector<16x16xf32>
    %305 = arith.mulf %304, %304 : vector<16x16xf32>
    %306 = arith.mulf %305, %305 : vector<16x16xf32>
    %307 = arith.mulf %306, %306 : vector<16x16xf32>
    %308 = arith.mulf %307, %307 : vector<16x16xf32>
    %309 = arith.mulf %308, %308 : vector<16x16xf32>
    %310 = arith.mulf %309, %309 : vector<16x16xf32>
    %311 = vector.broadcast %291 : f32 to vector<16x16xf32>
    %312 = arith.mulf %12, %311 : vector<16x16xf32>
    %cst_81 = arith.constant 1.000000e+04 : f32
    %313 = vector.broadcast %cst_81 : f32 to vector<16x16xf32>
    %314 = arith.minimumf %312, %313 : vector<16x16xf32>
    %315 = vector.extract_strided_slice %39 {offsets = [0, 5], sizes = [16, 16], strides = [1, 1]} : vector<16x30xf32> to vector<16x16xf32>
    %316 = arith.subf %315, %10 : vector<16x16xf32>
    %317 = math.absf %316 : vector<16x16xf32>
    %318 = arith.mulf %317, %314 : vector<16x16xf32>
    %cst_82 = arith.constant 0.000000e+00 : f32
    %319 = vector.broadcast %cst_82 : f32 to vector<16x16xf32>
    %320 = arith.subf %319, %318 : vector<16x16xf32>
    %321 = math.exp %320 : vector<16x16xf32>
    %322 = vector.broadcast %288 : f32 to vector<16x16xf32>
    %323 = arith.mulf %322, %310 : vector<16x16xf32>
    %324 = arith.mulf %323, %321 : vector<16x16xf32>
    %325 = vector.extract_strided_slice %21 {offsets = [0, 5], sizes = [16, 16], strides = [1, 1]} : vector<16x30xf32> to vector<16x16xf32>
    %326 = arith.mulf %325, %324 : vector<16x16xf32>
    %327 = arith.addf %278, %326 : vector<16x16xf32>
    %328 = vector.extract_strided_slice %24 {offsets = [0, 5], sizes = [16, 16], strides = [1, 1]} : vector<16x30xf32> to vector<16x16xf32>
    %329 = arith.mulf %328, %324 : vector<16x16xf32>
    %330 = arith.addf %281, %329 : vector<16x16xf32>
    %331 = vector.extract_strided_slice %27 {offsets = [0, 5], sizes = [16, 16], strides = [1, 1]} : vector<16x30xf32> to vector<16x16xf32>
    %332 = arith.mulf %331, %324 : vector<16x16xf32>
    %333 = arith.addf %284, %332 : vector<16x16xf32>
    %334 = arith.addf %285, %324 : vector<16x16xf32>
    %c6_i32 = arith.constant 6 : i32
    %335 = arith.addi %40, %c6_i32 : i32
    %336 = arith.index_cast %335 : i32 to index
    %337 = memref.load %arg3[%336] : memref<225xf32, #tpu.memory_space<smem>>
    %c6_i32_83 = arith.constant 6 : i32
    %338 = arith.addi %40, %c6_i32_83 : i32
    %339 = arith.index_cast %338 : i32 to index
    %340 = memref.load %arg4[%339] : memref<225xf32, #tpu.memory_space<smem>>
    %341 = vector.extract_strided_slice %30 {offsets = [0, 6], sizes = [16, 16], strides = [1, 1]} : vector<16x30xf32> to vector<16x16xf32>
    %342 = arith.mulf %341, %4 : vector<16x16xf32>
    %343 = vector.extract_strided_slice %33 {offsets = [0, 6], sizes = [16, 16], strides = [1, 1]} : vector<16x30xf32> to vector<16x16xf32>
    %344 = arith.mulf %343, %6 : vector<16x16xf32>
    %345 = arith.addf %342, %344 : vector<16x16xf32>
    %346 = vector.extract_strided_slice %36 {offsets = [0, 6], sizes = [16, 16], strides = [1, 1]} : vector<16x30xf32> to vector<16x16xf32>
    %347 = arith.mulf %346, %8 : vector<16x16xf32>
    %348 = arith.addf %345, %347 : vector<16x16xf32>
    %cst_84 = arith.constant 9.99999974E-5 : f32
    %cst_85 = arith.constant 1.000000e+00 : f32
    %349 = vector.broadcast %cst_84 : f32 to vector<16x16xf32>
    %350 = arith.maximumf %349, %348 : vector<16x16xf32>
    %351 = vector.broadcast %cst_85 : f32 to vector<16x16xf32>
    %352 = arith.minimumf %351, %350 : vector<16x16xf32>
    %353 = arith.mulf %352, %352 : vector<16x16xf32>
    %354 = arith.mulf %353, %353 : vector<16x16xf32>
    %355 = arith.mulf %354, %354 : vector<16x16xf32>
    %356 = arith.mulf %355, %355 : vector<16x16xf32>
    %357 = arith.mulf %356, %356 : vector<16x16xf32>
    %358 = arith.mulf %357, %357 : vector<16x16xf32>
    %359 = arith.mulf %358, %358 : vector<16x16xf32>
    %360 = vector.broadcast %340 : f32 to vector<16x16xf32>
    %361 = arith.mulf %12, %360 : vector<16x16xf32>
    %cst_86 = arith.constant 1.000000e+04 : f32
    %362 = vector.broadcast %cst_86 : f32 to vector<16x16xf32>
    %363 = arith.minimumf %361, %362 : vector<16x16xf32>
    %364 = vector.extract_strided_slice %39 {offsets = [0, 6], sizes = [16, 16], strides = [1, 1]} : vector<16x30xf32> to vector<16x16xf32>
    %365 = arith.subf %364, %10 : vector<16x16xf32>
    %366 = math.absf %365 : vector<16x16xf32>
    %367 = arith.mulf %366, %363 : vector<16x16xf32>
    %cst_87 = arith.constant 0.000000e+00 : f32
    %368 = vector.broadcast %cst_87 : f32 to vector<16x16xf32>
    %369 = arith.subf %368, %367 : vector<16x16xf32>
    %370 = math.exp %369 : vector<16x16xf32>
    %371 = vector.broadcast %337 : f32 to vector<16x16xf32>
    %372 = arith.mulf %371, %359 : vector<16x16xf32>
    %373 = arith.mulf %372, %370 : vector<16x16xf32>
    %374 = vector.extract_strided_slice %21 {offsets = [0, 6], sizes = [16, 16], strides = [1, 1]} : vector<16x30xf32> to vector<16x16xf32>
    %375 = arith.mulf %374, %373 : vector<16x16xf32>
    %376 = arith.addf %327, %375 : vector<16x16xf32>
    %377 = vector.extract_strided_slice %24 {offsets = [0, 6], sizes = [16, 16], strides = [1, 1]} : vector<16x30xf32> to vector<16x16xf32>
    %378 = arith.mulf %377, %373 : vector<16x16xf32>
    %379 = arith.addf %330, %378 : vector<16x16xf32>
    %380 = vector.extract_strided_slice %27 {offsets = [0, 6], sizes = [16, 16], strides = [1, 1]} : vector<16x30xf32> to vector<16x16xf32>
    %381 = arith.mulf %380, %373 : vector<16x16xf32>
    %382 = arith.addf %333, %381 : vector<16x16xf32>
    %383 = arith.addf %334, %373 : vector<16x16xf32>
    %c7_i32 = arith.constant 7 : i32
    %384 = arith.addi %40, %c7_i32 : i32
    %385 = arith.index_cast %384 : i32 to index
    %386 = memref.load %arg3[%385] : memref<225xf32, #tpu.memory_space<smem>>
    %c7_i32_88 = arith.constant 7 : i32
    %387 = arith.addi %40, %c7_i32_88 : i32
    %388 = arith.index_cast %387 : i32 to index
    %389 = memref.load %arg4[%388] : memref<225xf32, #tpu.memory_space<smem>>
    %390 = vector.extract_strided_slice %30 {offsets = [0, 7], sizes = [16, 16], strides = [1, 1]} : vector<16x30xf32> to vector<16x16xf32>
    %391 = arith.mulf %390, %4 : vector<16x16xf32>
    %392 = vector.extract_strided_slice %33 {offsets = [0, 7], sizes = [16, 16], strides = [1, 1]} : vector<16x30xf32> to vector<16x16xf32>
    %393 = arith.mulf %392, %6 : vector<16x16xf32>
    %394 = arith.addf %391, %393 : vector<16x16xf32>
    %395 = vector.extract_strided_slice %36 {offsets = [0, 7], sizes = [16, 16], strides = [1, 1]} : vector<16x30xf32> to vector<16x16xf32>
    %396 = arith.mulf %395, %8 : vector<16x16xf32>
    %397 = arith.addf %394, %396 : vector<16x16xf32>
    %cst_89 = arith.constant 9.99999974E-5 : f32
    %cst_90 = arith.constant 1.000000e+00 : f32
    %398 = vector.broadcast %cst_89 : f32 to vector<16x16xf32>
    %399 = arith.maximumf %398, %397 : vector<16x16xf32>
    %400 = vector.broadcast %cst_90 : f32 to vector<16x16xf32>
    %401 = arith.minimumf %400, %399 : vector<16x16xf32>
    %402 = arith.mulf %401, %401 : vector<16x16xf32>
    %403 = arith.mulf %402, %402 : vector<16x16xf32>
    %404 = arith.mulf %403, %403 : vector<16x16xf32>
    %405 = arith.mulf %404, %404 : vector<16x16xf32>
    %406 = arith.mulf %405, %405 : vector<16x16xf32>
    %407 = arith.mulf %406, %406 : vector<16x16xf32>
    %408 = arith.mulf %407, %407 : vector<16x16xf32>
    %409 = vector.broadcast %389 : f32 to vector<16x16xf32>
    %410 = arith.mulf %12, %409 : vector<16x16xf32>
    %cst_91 = arith.constant 1.000000e+04 : f32
    %411 = vector.broadcast %cst_91 : f32 to vector<16x16xf32>
    %412 = arith.minimumf %410, %411 : vector<16x16xf32>
    %413 = vector.extract_strided_slice %39 {offsets = [0, 7], sizes = [16, 16], strides = [1, 1]} : vector<16x30xf32> to vector<16x16xf32>
    %414 = arith.subf %413, %10 : vector<16x16xf32>
    %415 = math.absf %414 : vector<16x16xf32>
    %416 = arith.mulf %415, %412 : vector<16x16xf32>
    %cst_92 = arith.constant 0.000000e+00 : f32
    %417 = vector.broadcast %cst_92 : f32 to vector<16x16xf32>
    %418 = arith.subf %417, %416 : vector<16x16xf32>
    %419 = math.exp %418 : vector<16x16xf32>
    %420 = vector.broadcast %386 : f32 to vector<16x16xf32>
    %421 = arith.mulf %420, %408 : vector<16x16xf32>
    %422 = arith.mulf %421, %419 : vector<16x16xf32>
    %423 = vector.extract_strided_slice %21 {offsets = [0, 7], sizes = [16, 16], strides = [1, 1]} : vector<16x30xf32> to vector<16x16xf32>
    %424 = arith.mulf %423, %422 : vector<16x16xf32>
    %425 = arith.addf %376, %424 : vector<16x16xf32>
    %426 = vector.extract_strided_slice %24 {offsets = [0, 7], sizes = [16, 16], strides = [1, 1]} : vector<16x30xf32> to vector<16x16xf32>
    %427 = arith.mulf %426, %422 : vector<16x16xf32>
    %428 = arith.addf %379, %427 : vector<16x16xf32>
    %429 = vector.extract_strided_slice %27 {offsets = [0, 7], sizes = [16, 16], strides = [1, 1]} : vector<16x30xf32> to vector<16x16xf32>
    %430 = arith.mulf %429, %422 : vector<16x16xf32>
    %431 = arith.addf %382, %430 : vector<16x16xf32>
    %432 = arith.addf %383, %422 : vector<16x16xf32>
    %c8_i32 = arith.constant 8 : i32
    %433 = arith.addi %40, %c8_i32 : i32
    %434 = arith.index_cast %433 : i32 to index
    %435 = memref.load %arg3[%434] : memref<225xf32, #tpu.memory_space<smem>>
    %c8_i32_93 = arith.constant 8 : i32
    %436 = arith.addi %40, %c8_i32_93 : i32
    %437 = arith.index_cast %436 : i32 to index
    %438 = memref.load %arg4[%437] : memref<225xf32, #tpu.memory_space<smem>>
    %439 = vector.extract_strided_slice %30 {offsets = [0, 8], sizes = [16, 16], strides = [1, 1]} : vector<16x30xf32> to vector<16x16xf32>
    %440 = arith.mulf %439, %4 : vector<16x16xf32>
    %441 = vector.extract_strided_slice %33 {offsets = [0, 8], sizes = [16, 16], strides = [1, 1]} : vector<16x30xf32> to vector<16x16xf32>
    %442 = arith.mulf %441, %6 : vector<16x16xf32>
    %443 = arith.addf %440, %442 : vector<16x16xf32>
    %444 = vector.extract_strided_slice %36 {offsets = [0, 8], sizes = [16, 16], strides = [1, 1]} : vector<16x30xf32> to vector<16x16xf32>
    %445 = arith.mulf %444, %8 : vector<16x16xf32>
    %446 = arith.addf %443, %445 : vector<16x16xf32>
    %cst_94 = arith.constant 9.99999974E-5 : f32
    %cst_95 = arith.constant 1.000000e+00 : f32
    %447 = vector.broadcast %cst_94 : f32 to vector<16x16xf32>
    %448 = arith.maximumf %447, %446 : vector<16x16xf32>
    %449 = vector.broadcast %cst_95 : f32 to vector<16x16xf32>
    %450 = arith.minimumf %449, %448 : vector<16x16xf32>
    %451 = arith.mulf %450, %450 : vector<16x16xf32>
    %452 = arith.mulf %451, %451 : vector<16x16xf32>
    %453 = arith.mulf %452, %452 : vector<16x16xf32>
    %454 = arith.mulf %453, %453 : vector<16x16xf32>
    %455 = arith.mulf %454, %454 : vector<16x16xf32>
    %456 = arith.mulf %455, %455 : vector<16x16xf32>
    %457 = arith.mulf %456, %456 : vector<16x16xf32>
    %458 = vector.broadcast %438 : f32 to vector<16x16xf32>
    %459 = arith.mulf %12, %458 : vector<16x16xf32>
    %cst_96 = arith.constant 1.000000e+04 : f32
    %460 = vector.broadcast %cst_96 : f32 to vector<16x16xf32>
    %461 = arith.minimumf %459, %460 : vector<16x16xf32>
    %462 = vector.extract_strided_slice %39 {offsets = [0, 8], sizes = [16, 16], strides = [1, 1]} : vector<16x30xf32> to vector<16x16xf32>
    %463 = arith.subf %462, %10 : vector<16x16xf32>
    %464 = math.absf %463 : vector<16x16xf32>
    %465 = arith.mulf %464, %461 : vector<16x16xf32>
    %cst_97 = arith.constant 0.000000e+00 : f32
    %466 = vector.broadcast %cst_97 : f32 to vector<16x16xf32>
    %467 = arith.subf %466, %465 : vector<16x16xf32>
    %468 = math.exp %467 : vector<16x16xf32>
    %469 = vector.broadcast %435 : f32 to vector<16x16xf32>
    %470 = arith.mulf %469, %457 : vector<16x16xf32>
    %471 = arith.mulf %470, %468 : vector<16x16xf32>
    %472 = vector.extract_strided_slice %21 {offsets = [0, 8], sizes = [16, 16], strides = [1, 1]} : vector<16x30xf32> to vector<16x16xf32>
    %473 = arith.mulf %472, %471 : vector<16x16xf32>
    %474 = arith.addf %425, %473 : vector<16x16xf32>
    %475 = vector.extract_strided_slice %24 {offsets = [0, 8], sizes = [16, 16], strides = [1, 1]} : vector<16x30xf32> to vector<16x16xf32>
    %476 = arith.mulf %475, %471 : vector<16x16xf32>
    %477 = arith.addf %428, %476 : vector<16x16xf32>
    %478 = vector.extract_strided_slice %27 {offsets = [0, 8], sizes = [16, 16], strides = [1, 1]} : vector<16x30xf32> to vector<16x16xf32>
    %479 = arith.mulf %478, %471 : vector<16x16xf32>
    %480 = arith.addf %431, %479 : vector<16x16xf32>
    %481 = arith.addf %432, %471 : vector<16x16xf32>
    %c9_i32 = arith.constant 9 : i32
    %482 = arith.addi %40, %c9_i32 : i32
    %483 = arith.index_cast %482 : i32 to index
    %484 = memref.load %arg3[%483] : memref<225xf32, #tpu.memory_space<smem>>
    %c9_i32_98 = arith.constant 9 : i32
    %485 = arith.addi %40, %c9_i32_98 : i32
    %486 = arith.index_cast %485 : i32 to index
    %487 = memref.load %arg4[%486] : memref<225xf32, #tpu.memory_space<smem>>
    %488 = vector.extract_strided_slice %30 {offsets = [0, 9], sizes = [16, 16], strides = [1, 1]} : vector<16x30xf32> to vector<16x16xf32>
    %489 = arith.mulf %488, %4 : vector<16x16xf32>
    %490 = vector.extract_strided_slice %33 {offsets = [0, 9], sizes = [16, 16], strides = [1, 1]} : vector<16x30xf32> to vector<16x16xf32>
    %491 = arith.mulf %490, %6 : vector<16x16xf32>
    %492 = arith.addf %489, %491 : vector<16x16xf32>
    %493 = vector.extract_strided_slice %36 {offsets = [0, 9], sizes = [16, 16], strides = [1, 1]} : vector<16x30xf32> to vector<16x16xf32>
    %494 = arith.mulf %493, %8 : vector<16x16xf32>
    %495 = arith.addf %492, %494 : vector<16x16xf32>
    %cst_99 = arith.constant 9.99999974E-5 : f32
    %cst_100 = arith.constant 1.000000e+00 : f32
    %496 = vector.broadcast %cst_99 : f32 to vector<16x16xf32>
    %497 = arith.maximumf %496, %495 : vector<16x16xf32>
    %498 = vector.broadcast %cst_100 : f32 to vector<16x16xf32>
    %499 = arith.minimumf %498, %497 : vector<16x16xf32>
    %500 = arith.mulf %499, %499 : vector<16x16xf32>
    %501 = arith.mulf %500, %500 : vector<16x16xf32>
    %502 = arith.mulf %501, %501 : vector<16x16xf32>
    %503 = arith.mulf %502, %502 : vector<16x16xf32>
    %504 = arith.mulf %503, %503 : vector<16x16xf32>
    %505 = arith.mulf %504, %504 : vector<16x16xf32>
    %506 = arith.mulf %505, %505 : vector<16x16xf32>
    %507 = vector.broadcast %487 : f32 to vector<16x16xf32>
    %508 = arith.mulf %12, %507 : vector<16x16xf32>
    %cst_101 = arith.constant 1.000000e+04 : f32
    %509 = vector.broadcast %cst_101 : f32 to vector<16x16xf32>
    %510 = arith.minimumf %508, %509 : vector<16x16xf32>
    %511 = vector.extract_strided_slice %39 {offsets = [0, 9], sizes = [16, 16], strides = [1, 1]} : vector<16x30xf32> to vector<16x16xf32>
    %512 = arith.subf %511, %10 : vector<16x16xf32>
    %513 = math.absf %512 : vector<16x16xf32>
    %514 = arith.mulf %513, %510 : vector<16x16xf32>
    %cst_102 = arith.constant 0.000000e+00 : f32
    %515 = vector.broadcast %cst_102 : f32 to vector<16x16xf32>
    %516 = arith.subf %515, %514 : vector<16x16xf32>
    %517 = math.exp %516 : vector<16x16xf32>
    %518 = vector.broadcast %484 : f32 to vector<16x16xf32>
    %519 = arith.mulf %518, %506 : vector<16x16xf32>
    %520 = arith.mulf %519, %517 : vector<16x16xf32>
    %521 = vector.extract_strided_slice %21 {offsets = [0, 9], sizes = [16, 16], strides = [1, 1]} : vector<16x30xf32> to vector<16x16xf32>
    %522 = arith.mulf %521, %520 : vector<16x16xf32>
    %523 = arith.addf %474, %522 : vector<16x16xf32>
    %524 = vector.extract_strided_slice %24 {offsets = [0, 9], sizes = [16, 16], strides = [1, 1]} : vector<16x30xf32> to vector<16x16xf32>
    %525 = arith.mulf %524, %520 : vector<16x16xf32>
    %526 = arith.addf %477, %525 : vector<16x16xf32>
    %527 = vector.extract_strided_slice %27 {offsets = [0, 9], sizes = [16, 16], strides = [1, 1]} : vector<16x30xf32> to vector<16x16xf32>
    %528 = arith.mulf %527, %520 : vector<16x16xf32>
    %529 = arith.addf %480, %528 : vector<16x16xf32>
    %530 = arith.addf %481, %520 : vector<16x16xf32>
    %c10_i32 = arith.constant 10 : i32
    %531 = arith.addi %40, %c10_i32 : i32
    %532 = arith.index_cast %531 : i32 to index
    %533 = memref.load %arg3[%532] : memref<225xf32, #tpu.memory_space<smem>>
    %c10_i32_103 = arith.constant 10 : i32
    %534 = arith.addi %40, %c10_i32_103 : i32
    %535 = arith.index_cast %534 : i32 to index
    %536 = memref.load %arg4[%535] : memref<225xf32, #tpu.memory_space<smem>>
    %537 = vector.extract_strided_slice %30 {offsets = [0, 10], sizes = [16, 16], strides = [1, 1]} : vector<16x30xf32> to vector<16x16xf32>
    %538 = arith.mulf %537, %4 : vector<16x16xf32>
    %539 = vector.extract_strided_slice %33 {offsets = [0, 10], sizes = [16, 16], strides = [1, 1]} : vector<16x30xf32> to vector<16x16xf32>
    %540 = arith.mulf %539, %6 : vector<16x16xf32>
    %541 = arith.addf %538, %540 : vector<16x16xf32>
    %542 = vector.extract_strided_slice %36 {offsets = [0, 10], sizes = [16, 16], strides = [1, 1]} : vector<16x30xf32> to vector<16x16xf32>
    %543 = arith.mulf %542, %8 : vector<16x16xf32>
    %544 = arith.addf %541, %543 : vector<16x16xf32>
    %cst_104 = arith.constant 9.99999974E-5 : f32
    %cst_105 = arith.constant 1.000000e+00 : f32
    %545 = vector.broadcast %cst_104 : f32 to vector<16x16xf32>
    %546 = arith.maximumf %545, %544 : vector<16x16xf32>
    %547 = vector.broadcast %cst_105 : f32 to vector<16x16xf32>
    %548 = arith.minimumf %547, %546 : vector<16x16xf32>
    %549 = arith.mulf %548, %548 : vector<16x16xf32>
    %550 = arith.mulf %549, %549 : vector<16x16xf32>
    %551 = arith.mulf %550, %550 : vector<16x16xf32>
    %552 = arith.mulf %551, %551 : vector<16x16xf32>
    %553 = arith.mulf %552, %552 : vector<16x16xf32>
    %554 = arith.mulf %553, %553 : vector<16x16xf32>
    %555 = arith.mulf %554, %554 : vector<16x16xf32>
    %556 = vector.broadcast %536 : f32 to vector<16x16xf32>
    %557 = arith.mulf %12, %556 : vector<16x16xf32>
    %cst_106 = arith.constant 1.000000e+04 : f32
    %558 = vector.broadcast %cst_106 : f32 to vector<16x16xf32>
    %559 = arith.minimumf %557, %558 : vector<16x16xf32>
    %560 = vector.extract_strided_slice %39 {offsets = [0, 10], sizes = [16, 16], strides = [1, 1]} : vector<16x30xf32> to vector<16x16xf32>
    %561 = arith.subf %560, %10 : vector<16x16xf32>
    %562 = math.absf %561 : vector<16x16xf32>
    %563 = arith.mulf %562, %559 : vector<16x16xf32>
    %cst_107 = arith.constant 0.000000e+00 : f32
    %564 = vector.broadcast %cst_107 : f32 to vector<16x16xf32>
    %565 = arith.subf %564, %563 : vector<16x16xf32>
    %566 = math.exp %565 : vector<16x16xf32>
    %567 = vector.broadcast %533 : f32 to vector<16x16xf32>
    %568 = arith.mulf %567, %555 : vector<16x16xf32>
    %569 = arith.mulf %568, %566 : vector<16x16xf32>
    %570 = vector.extract_strided_slice %21 {offsets = [0, 10], sizes = [16, 16], strides = [1, 1]} : vector<16x30xf32> to vector<16x16xf32>
    %571 = arith.mulf %570, %569 : vector<16x16xf32>
    %572 = arith.addf %523, %571 : vector<16x16xf32>
    %573 = vector.extract_strided_slice %24 {offsets = [0, 10], sizes = [16, 16], strides = [1, 1]} : vector<16x30xf32> to vector<16x16xf32>
    %574 = arith.mulf %573, %569 : vector<16x16xf32>
    %575 = arith.addf %526, %574 : vector<16x16xf32>
    %576 = vector.extract_strided_slice %27 {offsets = [0, 10], sizes = [16, 16], strides = [1, 1]} : vector<16x30xf32> to vector<16x16xf32>
    %577 = arith.mulf %576, %569 : vector<16x16xf32>
    %578 = arith.addf %529, %577 : vector<16x16xf32>
    %579 = arith.addf %530, %569 : vector<16x16xf32>
    %c11_i32 = arith.constant 11 : i32
    %580 = arith.addi %40, %c11_i32 : i32
    %581 = arith.index_cast %580 : i32 to index
    %582 = memref.load %arg3[%581] : memref<225xf32, #tpu.memory_space<smem>>
    %c11_i32_108 = arith.constant 11 : i32
    %583 = arith.addi %40, %c11_i32_108 : i32
    %584 = arith.index_cast %583 : i32 to index
    %585 = memref.load %arg4[%584] : memref<225xf32, #tpu.memory_space<smem>>
    %586 = vector.extract_strided_slice %30 {offsets = [0, 11], sizes = [16, 16], strides = [1, 1]} : vector<16x30xf32> to vector<16x16xf32>
    %587 = arith.mulf %586, %4 : vector<16x16xf32>
    %588 = vector.extract_strided_slice %33 {offsets = [0, 11], sizes = [16, 16], strides = [1, 1]} : vector<16x30xf32> to vector<16x16xf32>
    %589 = arith.mulf %588, %6 : vector<16x16xf32>
    %590 = arith.addf %587, %589 : vector<16x16xf32>
    %591 = vector.extract_strided_slice %36 {offsets = [0, 11], sizes = [16, 16], strides = [1, 1]} : vector<16x30xf32> to vector<16x16xf32>
    %592 = arith.mulf %591, %8 : vector<16x16xf32>
    %593 = arith.addf %590, %592 : vector<16x16xf32>
    %cst_109 = arith.constant 9.99999974E-5 : f32
    %cst_110 = arith.constant 1.000000e+00 : f32
    %594 = vector.broadcast %cst_109 : f32 to vector<16x16xf32>
    %595 = arith.maximumf %594, %593 : vector<16x16xf32>
    %596 = vector.broadcast %cst_110 : f32 to vector<16x16xf32>
    %597 = arith.minimumf %596, %595 : vector<16x16xf32>
    %598 = arith.mulf %597, %597 : vector<16x16xf32>
    %599 = arith.mulf %598, %598 : vector<16x16xf32>
    %600 = arith.mulf %599, %599 : vector<16x16xf32>
    %601 = arith.mulf %600, %600 : vector<16x16xf32>
    %602 = arith.mulf %601, %601 : vector<16x16xf32>
    %603 = arith.mulf %602, %602 : vector<16x16xf32>
    %604 = arith.mulf %603, %603 : vector<16x16xf32>
    %605 = vector.broadcast %585 : f32 to vector<16x16xf32>
    %606 = arith.mulf %12, %605 : vector<16x16xf32>
    %cst_111 = arith.constant 1.000000e+04 : f32
    %607 = vector.broadcast %cst_111 : f32 to vector<16x16xf32>
    %608 = arith.minimumf %606, %607 : vector<16x16xf32>
    %609 = vector.extract_strided_slice %39 {offsets = [0, 11], sizes = [16, 16], strides = [1, 1]} : vector<16x30xf32> to vector<16x16xf32>
    %610 = arith.subf %609, %10 : vector<16x16xf32>
    %611 = math.absf %610 : vector<16x16xf32>
    %612 = arith.mulf %611, %608 : vector<16x16xf32>
    %cst_112 = arith.constant 0.000000e+00 : f32
    %613 = vector.broadcast %cst_112 : f32 to vector<16x16xf32>
    %614 = arith.subf %613, %612 : vector<16x16xf32>
    %615 = math.exp %614 : vector<16x16xf32>
    %616 = vector.broadcast %582 : f32 to vector<16x16xf32>
    %617 = arith.mulf %616, %604 : vector<16x16xf32>
    %618 = arith.mulf %617, %615 : vector<16x16xf32>
    %619 = vector.extract_strided_slice %21 {offsets = [0, 11], sizes = [16, 16], strides = [1, 1]} : vector<16x30xf32> to vector<16x16xf32>
    %620 = arith.mulf %619, %618 : vector<16x16xf32>
    %621 = arith.addf %572, %620 : vector<16x16xf32>
    %622 = vector.extract_strided_slice %24 {offsets = [0, 11], sizes = [16, 16], strides = [1, 1]} : vector<16x30xf32> to vector<16x16xf32>
    %623 = arith.mulf %622, %618 : vector<16x16xf32>
    %624 = arith.addf %575, %623 : vector<16x16xf32>
    %625 = vector.extract_strided_slice %27 {offsets = [0, 11], sizes = [16, 16], strides = [1, 1]} : vector<16x30xf32> to vector<16x16xf32>
    %626 = arith.mulf %625, %618 : vector<16x16xf32>
    %627 = arith.addf %578, %626 : vector<16x16xf32>
    %628 = arith.addf %579, %618 : vector<16x16xf32>
    %c12_i32 = arith.constant 12 : i32
    %629 = arith.addi %40, %c12_i32 : i32
    %630 = arith.index_cast %629 : i32 to index
    %631 = memref.load %arg3[%630] : memref<225xf32, #tpu.memory_space<smem>>
    %c12_i32_113 = arith.constant 12 : i32
    %632 = arith.addi %40, %c12_i32_113 : i32
    %633 = arith.index_cast %632 : i32 to index
    %634 = memref.load %arg4[%633] : memref<225xf32, #tpu.memory_space<smem>>
    %635 = vector.extract_strided_slice %30 {offsets = [0, 12], sizes = [16, 16], strides = [1, 1]} : vector<16x30xf32> to vector<16x16xf32>
    %636 = arith.mulf %635, %4 : vector<16x16xf32>
    %637 = vector.extract_strided_slice %33 {offsets = [0, 12], sizes = [16, 16], strides = [1, 1]} : vector<16x30xf32> to vector<16x16xf32>
    %638 = arith.mulf %637, %6 : vector<16x16xf32>
    %639 = arith.addf %636, %638 : vector<16x16xf32>
    %640 = vector.extract_strided_slice %36 {offsets = [0, 12], sizes = [16, 16], strides = [1, 1]} : vector<16x30xf32> to vector<16x16xf32>
    %641 = arith.mulf %640, %8 : vector<16x16xf32>
    %642 = arith.addf %639, %641 : vector<16x16xf32>
    %cst_114 = arith.constant 9.99999974E-5 : f32
    %cst_115 = arith.constant 1.000000e+00 : f32
    %643 = vector.broadcast %cst_114 : f32 to vector<16x16xf32>
    %644 = arith.maximumf %643, %642 : vector<16x16xf32>
    %645 = vector.broadcast %cst_115 : f32 to vector<16x16xf32>
    %646 = arith.minimumf %645, %644 : vector<16x16xf32>
    %647 = arith.mulf %646, %646 : vector<16x16xf32>
    %648 = arith.mulf %647, %647 : vector<16x16xf32>
    %649 = arith.mulf %648, %648 : vector<16x16xf32>
    %650 = arith.mulf %649, %649 : vector<16x16xf32>
    %651 = arith.mulf %650, %650 : vector<16x16xf32>
    %652 = arith.mulf %651, %651 : vector<16x16xf32>
    %653 = arith.mulf %652, %652 : vector<16x16xf32>
    %654 = vector.broadcast %634 : f32 to vector<16x16xf32>
    %655 = arith.mulf %12, %654 : vector<16x16xf32>
    %cst_116 = arith.constant 1.000000e+04 : f32
    %656 = vector.broadcast %cst_116 : f32 to vector<16x16xf32>
    %657 = arith.minimumf %655, %656 : vector<16x16xf32>
    %658 = vector.extract_strided_slice %39 {offsets = [0, 12], sizes = [16, 16], strides = [1, 1]} : vector<16x30xf32> to vector<16x16xf32>
    %659 = arith.subf %658, %10 : vector<16x16xf32>
    %660 = math.absf %659 : vector<16x16xf32>
    %661 = arith.mulf %660, %657 : vector<16x16xf32>
    %cst_117 = arith.constant 0.000000e+00 : f32
    %662 = vector.broadcast %cst_117 : f32 to vector<16x16xf32>
    %663 = arith.subf %662, %661 : vector<16x16xf32>
    %664 = math.exp %663 : vector<16x16xf32>
    %665 = vector.broadcast %631 : f32 to vector<16x16xf32>
    %666 = arith.mulf %665, %653 : vector<16x16xf32>
    %667 = arith.mulf %666, %664 : vector<16x16xf32>
    %668 = vector.extract_strided_slice %21 {offsets = [0, 12], sizes = [16, 16], strides = [1, 1]} : vector<16x30xf32> to vector<16x16xf32>
    %669 = arith.mulf %668, %667 : vector<16x16xf32>
    %670 = arith.addf %621, %669 : vector<16x16xf32>
    %671 = vector.extract_strided_slice %24 {offsets = [0, 12], sizes = [16, 16], strides = [1, 1]} : vector<16x30xf32> to vector<16x16xf32>
    %672 = arith.mulf %671, %667 : vector<16x16xf32>
    %673 = arith.addf %624, %672 : vector<16x16xf32>
    %674 = vector.extract_strided_slice %27 {offsets = [0, 12], sizes = [16, 16], strides = [1, 1]} : vector<16x30xf32> to vector<16x16xf32>
    %675 = arith.mulf %674, %667 : vector<16x16xf32>
    %676 = arith.addf %627, %675 : vector<16x16xf32>
    %677 = arith.addf %628, %667 : vector<16x16xf32>
    %c13_i32 = arith.constant 13 : i32
    %678 = arith.addi %40, %c13_i32 : i32
    %679 = arith.index_cast %678 : i32 to index
    %680 = memref.load %arg3[%679] : memref<225xf32, #tpu.memory_space<smem>>
    %c13_i32_118 = arith.constant 13 : i32
    %681 = arith.addi %40, %c13_i32_118 : i32
    %682 = arith.index_cast %681 : i32 to index
    %683 = memref.load %arg4[%682] : memref<225xf32, #tpu.memory_space<smem>>
    %684 = vector.extract_strided_slice %30 {offsets = [0, 13], sizes = [16, 16], strides = [1, 1]} : vector<16x30xf32> to vector<16x16xf32>
    %685 = arith.mulf %684, %4 : vector<16x16xf32>
    %686 = vector.extract_strided_slice %33 {offsets = [0, 13], sizes = [16, 16], strides = [1, 1]} : vector<16x30xf32> to vector<16x16xf32>
    %687 = arith.mulf %686, %6 : vector<16x16xf32>
    %688 = arith.addf %685, %687 : vector<16x16xf32>
    %689 = vector.extract_strided_slice %36 {offsets = [0, 13], sizes = [16, 16], strides = [1, 1]} : vector<16x30xf32> to vector<16x16xf32>
    %690 = arith.mulf %689, %8 : vector<16x16xf32>
    %691 = arith.addf %688, %690 : vector<16x16xf32>
    %cst_119 = arith.constant 9.99999974E-5 : f32
    %cst_120 = arith.constant 1.000000e+00 : f32
    %692 = vector.broadcast %cst_119 : f32 to vector<16x16xf32>
    %693 = arith.maximumf %692, %691 : vector<16x16xf32>
    %694 = vector.broadcast %cst_120 : f32 to vector<16x16xf32>
    %695 = arith.minimumf %694, %693 : vector<16x16xf32>
    %696 = arith.mulf %695, %695 : vector<16x16xf32>
    %697 = arith.mulf %696, %696 : vector<16x16xf32>
    %698 = arith.mulf %697, %697 : vector<16x16xf32>
    %699 = arith.mulf %698, %698 : vector<16x16xf32>
    %700 = arith.mulf %699, %699 : vector<16x16xf32>
    %701 = arith.mulf %700, %700 : vector<16x16xf32>
    %702 = arith.mulf %701, %701 : vector<16x16xf32>
    %703 = vector.broadcast %683 : f32 to vector<16x16xf32>
    %704 = arith.mulf %12, %703 : vector<16x16xf32>
    %cst_121 = arith.constant 1.000000e+04 : f32
    %705 = vector.broadcast %cst_121 : f32 to vector<16x16xf32>
    %706 = arith.minimumf %704, %705 : vector<16x16xf32>
    %707 = vector.extract_strided_slice %39 {offsets = [0, 13], sizes = [16, 16], strides = [1, 1]} : vector<16x30xf32> to vector<16x16xf32>
    %708 = arith.subf %707, %10 : vector<16x16xf32>
    %709 = math.absf %708 : vector<16x16xf32>
    %710 = arith.mulf %709, %706 : vector<16x16xf32>
    %cst_122 = arith.constant 0.000000e+00 : f32
    %711 = vector.broadcast %cst_122 : f32 to vector<16x16xf32>
    %712 = arith.subf %711, %710 : vector<16x16xf32>
    %713 = math.exp %712 : vector<16x16xf32>
    %714 = vector.broadcast %680 : f32 to vector<16x16xf32>
    %715 = arith.mulf %714, %702 : vector<16x16xf32>
    %716 = arith.mulf %715, %713 : vector<16x16xf32>
    %717 = vector.extract_strided_slice %21 {offsets = [0, 13], sizes = [16, 16], strides = [1, 1]} : vector<16x30xf32> to vector<16x16xf32>
    %718 = arith.mulf %717, %716 : vector<16x16xf32>
    %719 = arith.addf %670, %718 : vector<16x16xf32>
    %720 = vector.extract_strided_slice %24 {offsets = [0, 13], sizes = [16, 16], strides = [1, 1]} : vector<16x30xf32> to vector<16x16xf32>
    %721 = arith.mulf %720, %716 : vector<16x16xf32>
    %722 = arith.addf %673, %721 : vector<16x16xf32>
    %723 = vector.extract_strided_slice %27 {offsets = [0, 13], sizes = [16, 16], strides = [1, 1]} : vector<16x30xf32> to vector<16x16xf32>
    %724 = arith.mulf %723, %716 : vector<16x16xf32>
    %725 = arith.addf %676, %724 : vector<16x16xf32>
    %726 = arith.addf %677, %716 : vector<16x16xf32>
    %c14_i32 = arith.constant 14 : i32
    %727 = arith.addi %40, %c14_i32 : i32
    %728 = arith.index_cast %727 : i32 to index
    %729 = memref.load %arg3[%728] : memref<225xf32, #tpu.memory_space<smem>>
    %c14_i32_123 = arith.constant 14 : i32
    %730 = arith.addi %40, %c14_i32_123 : i32
    %731 = arith.index_cast %730 : i32 to index
    %732 = memref.load %arg4[%731] : memref<225xf32, #tpu.memory_space<smem>>
    %733 = vector.extract_strided_slice %30 {offsets = [0, 14], sizes = [16, 16], strides = [1, 1]} : vector<16x30xf32> to vector<16x16xf32>
    %734 = arith.mulf %733, %4 : vector<16x16xf32>
    %735 = vector.extract_strided_slice %33 {offsets = [0, 14], sizes = [16, 16], strides = [1, 1]} : vector<16x30xf32> to vector<16x16xf32>
    %736 = arith.mulf %735, %6 : vector<16x16xf32>
    %737 = arith.addf %734, %736 : vector<16x16xf32>
    %738 = vector.extract_strided_slice %36 {offsets = [0, 14], sizes = [16, 16], strides = [1, 1]} : vector<16x30xf32> to vector<16x16xf32>
    %739 = arith.mulf %738, %8 : vector<16x16xf32>
    %740 = arith.addf %737, %739 : vector<16x16xf32>
    %cst_124 = arith.constant 9.99999974E-5 : f32
    %cst_125 = arith.constant 1.000000e+00 : f32
    %741 = vector.broadcast %cst_124 : f32 to vector<16x16xf32>
    %742 = arith.maximumf %741, %740 : vector<16x16xf32>
    %743 = vector.broadcast %cst_125 : f32 to vector<16x16xf32>
    %744 = arith.minimumf %743, %742 : vector<16x16xf32>
    %745 = arith.mulf %744, %744 : vector<16x16xf32>
    %746 = arith.mulf %745, %745 : vector<16x16xf32>
    %747 = arith.mulf %746, %746 : vector<16x16xf32>
    %748 = arith.mulf %747, %747 : vector<16x16xf32>
    %749 = arith.mulf %748, %748 : vector<16x16xf32>
    %750 = arith.mulf %749, %749 : vector<16x16xf32>
    %751 = arith.mulf %750, %750 : vector<16x16xf32>
    %752 = vector.broadcast %732 : f32 to vector<16x16xf32>
    %753 = arith.mulf %12, %752 : vector<16x16xf32>
    %cst_126 = arith.constant 1.000000e+04 : f32
    %754 = vector.broadcast %cst_126 : f32 to vector<16x16xf32>
    %755 = arith.minimumf %753, %754 : vector<16x16xf32>
    %756 = vector.extract_strided_slice %39 {offsets = [0, 14], sizes = [16, 16], strides = [1, 1]} : vector<16x30xf32> to vector<16x16xf32>
    %757 = arith.subf %756, %10 : vector<16x16xf32>
    %758 = math.absf %757 : vector<16x16xf32>
    %759 = arith.mulf %758, %755 : vector<16x16xf32>
    %cst_127 = arith.constant 0.000000e+00 : f32
    %760 = vector.broadcast %cst_127 : f32 to vector<16x16xf32>
    %761 = arith.subf %760, %759 : vector<16x16xf32>
    %762 = math.exp %761 : vector<16x16xf32>
    %763 = vector.broadcast %729 : f32 to vector<16x16xf32>
    %764 = arith.mulf %763, %751 : vector<16x16xf32>
    %765 = arith.mulf %764, %762 : vector<16x16xf32>
    %766 = vector.extract_strided_slice %21 {offsets = [0, 14], sizes = [16, 16], strides = [1, 1]} : vector<16x30xf32> to vector<16x16xf32>
    %767 = arith.mulf %766, %765 : vector<16x16xf32>
    %768 = arith.addf %719, %767 : vector<16x16xf32>
    %769 = vector.extract_strided_slice %24 {offsets = [0, 14], sizes = [16, 16], strides = [1, 1]} : vector<16x30xf32> to vector<16x16xf32>
    %770 = arith.mulf %769, %765 : vector<16x16xf32>
    %771 = arith.addf %722, %770 : vector<16x16xf32>
    %772 = vector.extract_strided_slice %27 {offsets = [0, 14], sizes = [16, 16], strides = [1, 1]} : vector<16x30xf32> to vector<16x16xf32>
    %773 = arith.mulf %772, %765 : vector<16x16xf32>
    %774 = arith.addf %725, %773 : vector<16x16xf32>
    %775 = arith.addf %726, %765 : vector<16x16xf32>
    %c3_i32_128 = arith.constant 3 : i32
    %776 = arith.muli %arg2, %c3_i32_128 : i32
    %c1_i32_129 = arith.constant 1 : i32
    %777 = arith.addi %776, %c1_i32_129 : i32
    %c0_130 = arith.constant 0 : index
    %c0_131 = arith.constant 0 : index
    %c0_132 = arith.constant 0 : index
    %778 = arith.index_cast %777 : i32 to index
    %c0_133 = arith.constant 0 : index
    %779 = vector.load %arg6[%c0_130, %c0_131, %c0_132, %778, %c0_133] : memref<1x1x7x30x30xf32, #tpu.memory_space<vmem>>, vector<1x1x1x16x30xf32>
    %780 = vector.shape_cast %779 : vector<1x1x1x16x30xf32> to vector<16x30xf32>
    %c0_134 = arith.constant 0 : index
    %c0_135 = arith.constant 0 : index
    %c1_136 = arith.constant 1 : index
    %781 = arith.index_cast %777 : i32 to index
    %c0_137 = arith.constant 0 : index
    %782 = vector.load %arg6[%c0_134, %c0_135, %c1_136, %781, %c0_137] : memref<1x1x7x30x30xf32, #tpu.memory_space<vmem>>, vector<1x1x1x16x30xf32>
    %783 = vector.shape_cast %782 : vector<1x1x1x16x30xf32> to vector<16x30xf32>
    %c0_138 = arith.constant 0 : index
    %c0_139 = arith.constant 0 : index
    %c2_140 = arith.constant 2 : index
    %784 = arith.index_cast %777 : i32 to index
    %c0_141 = arith.constant 0 : index
    %785 = vector.load %arg6[%c0_138, %c0_139, %c2_140, %784, %c0_141] : memref<1x1x7x30x30xf32, #tpu.memory_space<vmem>>, vector<1x1x1x16x30xf32>
    %786 = vector.shape_cast %785 : vector<1x1x1x16x30xf32> to vector<16x30xf32>
    %c0_142 = arith.constant 0 : index
    %c0_143 = arith.constant 0 : index
    %c3_144 = arith.constant 3 : index
    %787 = arith.index_cast %777 : i32 to index
    %c0_145 = arith.constant 0 : index
    %788 = vector.load %arg6[%c0_142, %c0_143, %c3_144, %787, %c0_145] : memref<1x1x7x30x30xf32, #tpu.memory_space<vmem>>, vector<1x1x1x16x30xf32>
    %789 = vector.shape_cast %788 : vector<1x1x1x16x30xf32> to vector<16x30xf32>
    %c0_146 = arith.constant 0 : index
    %c0_147 = arith.constant 0 : index
    %c4_148 = arith.constant 4 : index
    %790 = arith.index_cast %777 : i32 to index
    %c0_149 = arith.constant 0 : index
    %791 = vector.load %arg6[%c0_146, %c0_147, %c4_148, %790, %c0_149] : memref<1x1x7x30x30xf32, #tpu.memory_space<vmem>>, vector<1x1x1x16x30xf32>
    %792 = vector.shape_cast %791 : vector<1x1x1x16x30xf32> to vector<16x30xf32>
    %c0_150 = arith.constant 0 : index
    %c0_151 = arith.constant 0 : index
    %c5_152 = arith.constant 5 : index
    %793 = arith.index_cast %777 : i32 to index
    %c0_153 = arith.constant 0 : index
    %794 = vector.load %arg6[%c0_150, %c0_151, %c5_152, %793, %c0_153] : memref<1x1x7x30x30xf32, #tpu.memory_space<vmem>>, vector<1x1x1x16x30xf32>
    %795 = vector.shape_cast %794 : vector<1x1x1x16x30xf32> to vector<16x30xf32>
    %c0_154 = arith.constant 0 : index
    %c0_155 = arith.constant 0 : index
    %c6_156 = arith.constant 6 : index
    %796 = arith.index_cast %777 : i32 to index
    %c0_157 = arith.constant 0 : index
    %797 = vector.load %arg6[%c0_154, %c0_155, %c6_156, %796, %c0_157] : memref<1x1x7x30x30xf32, #tpu.memory_space<vmem>>, vector<1x1x1x16x30xf32>
    %798 = vector.shape_cast %797 : vector<1x1x1x16x30xf32> to vector<16x30xf32>
    %c15_i32_158 = arith.constant 15 : i32
    %799 = arith.muli %777, %c15_i32_158 : i32
    %c0_i32_159 = arith.constant 0 : i32
    %800 = arith.addi %799, %c0_i32_159 : i32
    %801 = arith.index_cast %800 : i32 to index
    %802 = memref.load %arg3[%801] : memref<225xf32, #tpu.memory_space<smem>>
    %c0_i32_160 = arith.constant 0 : i32
    %803 = arith.addi %799, %c0_i32_160 : i32
    %804 = arith.index_cast %803 : i32 to index
    %805 = memref.load %arg4[%804] : memref<225xf32, #tpu.memory_space<smem>>
    %806 = vector.extract_strided_slice %789 {offsets = [0, 0], sizes = [16, 16], strides = [1, 1]} : vector<16x30xf32> to vector<16x16xf32>
    %807 = arith.mulf %806, %4 : vector<16x16xf32>
    %808 = vector.extract_strided_slice %792 {offsets = [0, 0], sizes = [16, 16], strides = [1, 1]} : vector<16x30xf32> to vector<16x16xf32>
    %809 = arith.mulf %808, %6 : vector<16x16xf32>
    %810 = arith.addf %807, %809 : vector<16x16xf32>
    %811 = vector.extract_strided_slice %795 {offsets = [0, 0], sizes = [16, 16], strides = [1, 1]} : vector<16x30xf32> to vector<16x16xf32>
    %812 = arith.mulf %811, %8 : vector<16x16xf32>
    %813 = arith.addf %810, %812 : vector<16x16xf32>
    %cst_161 = arith.constant 9.99999974E-5 : f32
    %cst_162 = arith.constant 1.000000e+00 : f32
    %814 = vector.broadcast %cst_161 : f32 to vector<16x16xf32>
    %815 = arith.maximumf %814, %813 : vector<16x16xf32>
    %816 = vector.broadcast %cst_162 : f32 to vector<16x16xf32>
    %817 = arith.minimumf %816, %815 : vector<16x16xf32>
    %818 = arith.mulf %817, %817 : vector<16x16xf32>
    %819 = arith.mulf %818, %818 : vector<16x16xf32>
    %820 = arith.mulf %819, %819 : vector<16x16xf32>
    %821 = arith.mulf %820, %820 : vector<16x16xf32>
    %822 = arith.mulf %821, %821 : vector<16x16xf32>
    %823 = arith.mulf %822, %822 : vector<16x16xf32>
    %824 = arith.mulf %823, %823 : vector<16x16xf32>
    %825 = vector.broadcast %805 : f32 to vector<16x16xf32>
    %826 = arith.mulf %12, %825 : vector<16x16xf32>
    %cst_163 = arith.constant 1.000000e+04 : f32
    %827 = vector.broadcast %cst_163 : f32 to vector<16x16xf32>
    %828 = arith.minimumf %826, %827 : vector<16x16xf32>
    %829 = vector.extract_strided_slice %798 {offsets = [0, 0], sizes = [16, 16], strides = [1, 1]} : vector<16x30xf32> to vector<16x16xf32>
    %830 = arith.subf %829, %10 : vector<16x16xf32>
    %831 = math.absf %830 : vector<16x16xf32>
    %832 = arith.mulf %831, %828 : vector<16x16xf32>
    %cst_164 = arith.constant 0.000000e+00 : f32
    %833 = vector.broadcast %cst_164 : f32 to vector<16x16xf32>
    %834 = arith.subf %833, %832 : vector<16x16xf32>
    %835 = math.exp %834 : vector<16x16xf32>
    %836 = vector.broadcast %802 : f32 to vector<16x16xf32>
    %837 = arith.mulf %836, %824 : vector<16x16xf32>
    %838 = arith.mulf %837, %835 : vector<16x16xf32>
    %839 = vector.extract_strided_slice %780 {offsets = [0, 0], sizes = [16, 16], strides = [1, 1]} : vector<16x30xf32> to vector<16x16xf32>
    %840 = arith.mulf %839, %838 : vector<16x16xf32>
    %841 = arith.addf %768, %840 : vector<16x16xf32>
    %842 = vector.extract_strided_slice %783 {offsets = [0, 0], sizes = [16, 16], strides = [1, 1]} : vector<16x30xf32> to vector<16x16xf32>
    %843 = arith.mulf %842, %838 : vector<16x16xf32>
    %844 = arith.addf %771, %843 : vector<16x16xf32>
    %845 = vector.extract_strided_slice %786 {offsets = [0, 0], sizes = [16, 16], strides = [1, 1]} : vector<16x30xf32> to vector<16x16xf32>
    %846 = arith.mulf %845, %838 : vector<16x16xf32>
    %847 = arith.addf %774, %846 : vector<16x16xf32>
    %848 = arith.addf %775, %838 : vector<16x16xf32>
    %c1_i32_165 = arith.constant 1 : i32
    %849 = arith.addi %799, %c1_i32_165 : i32
    %850 = arith.index_cast %849 : i32 to index
    %851 = memref.load %arg3[%850] : memref<225xf32, #tpu.memory_space<smem>>
    %c1_i32_166 = arith.constant 1 : i32
    %852 = arith.addi %799, %c1_i32_166 : i32
    %853 = arith.index_cast %852 : i32 to index
    %854 = memref.load %arg4[%853] : memref<225xf32, #tpu.memory_space<smem>>
    %855 = vector.extract_strided_slice %789 {offsets = [0, 1], sizes = [16, 16], strides = [1, 1]} : vector<16x30xf32> to vector<16x16xf32>
    %856 = arith.mulf %855, %4 : vector<16x16xf32>
    %857 = vector.extract_strided_slice %792 {offsets = [0, 1], sizes = [16, 16], strides = [1, 1]} : vector<16x30xf32> to vector<16x16xf32>
    %858 = arith.mulf %857, %6 : vector<16x16xf32>
    %859 = arith.addf %856, %858 : vector<16x16xf32>
    %860 = vector.extract_strided_slice %795 {offsets = [0, 1], sizes = [16, 16], strides = [1, 1]} : vector<16x30xf32> to vector<16x16xf32>
    %861 = arith.mulf %860, %8 : vector<16x16xf32>
    %862 = arith.addf %859, %861 : vector<16x16xf32>
    %cst_167 = arith.constant 9.99999974E-5 : f32
    %cst_168 = arith.constant 1.000000e+00 : f32
    %863 = vector.broadcast %cst_167 : f32 to vector<16x16xf32>
    %864 = arith.maximumf %863, %862 : vector<16x16xf32>
    %865 = vector.broadcast %cst_168 : f32 to vector<16x16xf32>
    %866 = arith.minimumf %865, %864 : vector<16x16xf32>
    %867 = arith.mulf %866, %866 : vector<16x16xf32>
    %868 = arith.mulf %867, %867 : vector<16x16xf32>
    %869 = arith.mulf %868, %868 : vector<16x16xf32>
    %870 = arith.mulf %869, %869 : vector<16x16xf32>
    %871 = arith.mulf %870, %870 : vector<16x16xf32>
    %872 = arith.mulf %871, %871 : vector<16x16xf32>
    %873 = arith.mulf %872, %872 : vector<16x16xf32>
    %874 = vector.broadcast %854 : f32 to vector<16x16xf32>
    %875 = arith.mulf %12, %874 : vector<16x16xf32>
    %cst_169 = arith.constant 1.000000e+04 : f32
    %876 = vector.broadcast %cst_169 : f32 to vector<16x16xf32>
    %877 = arith.minimumf %875, %876 : vector<16x16xf32>
    %878 = vector.extract_strided_slice %798 {offsets = [0, 1], sizes = [16, 16], strides = [1, 1]} : vector<16x30xf32> to vector<16x16xf32>
    %879 = arith.subf %878, %10 : vector<16x16xf32>
    %880 = math.absf %879 : vector<16x16xf32>
    %881 = arith.mulf %880, %877 : vector<16x16xf32>
    %cst_170 = arith.constant 0.000000e+00 : f32
    %882 = vector.broadcast %cst_170 : f32 to vector<16x16xf32>
    %883 = arith.subf %882, %881 : vector<16x16xf32>
    %884 = math.exp %883 : vector<16x16xf32>
    %885 = vector.broadcast %851 : f32 to vector<16x16xf32>
    %886 = arith.mulf %885, %873 : vector<16x16xf32>
    %887 = arith.mulf %886, %884 : vector<16x16xf32>
    %888 = vector.extract_strided_slice %780 {offsets = [0, 1], sizes = [16, 16], strides = [1, 1]} : vector<16x30xf32> to vector<16x16xf32>
    %889 = arith.mulf %888, %887 : vector<16x16xf32>
    %890 = arith.addf %841, %889 : vector<16x16xf32>
    %891 = vector.extract_strided_slice %783 {offsets = [0, 1], sizes = [16, 16], strides = [1, 1]} : vector<16x30xf32> to vector<16x16xf32>
    %892 = arith.mulf %891, %887 : vector<16x16xf32>
    %893 = arith.addf %844, %892 : vector<16x16xf32>
    %894 = vector.extract_strided_slice %786 {offsets = [0, 1], sizes = [16, 16], strides = [1, 1]} : vector<16x30xf32> to vector<16x16xf32>
    %895 = arith.mulf %894, %887 : vector<16x16xf32>
    %896 = arith.addf %847, %895 : vector<16x16xf32>
    %897 = arith.addf %848, %887 : vector<16x16xf32>
    %c2_i32_171 = arith.constant 2 : i32
    %898 = arith.addi %799, %c2_i32_171 : i32
    %899 = arith.index_cast %898 : i32 to index
    %900 = memref.load %arg3[%899] : memref<225xf32, #tpu.memory_space<smem>>
    %c2_i32_172 = arith.constant 2 : i32
    %901 = arith.addi %799, %c2_i32_172 : i32
    %902 = arith.index_cast %901 : i32 to index
    %903 = memref.load %arg4[%902] : memref<225xf32, #tpu.memory_space<smem>>
    %904 = vector.extract_strided_slice %789 {offsets = [0, 2], sizes = [16, 16], strides = [1, 1]} : vector<16x30xf32> to vector<16x16xf32>
    %905 = arith.mulf %904, %4 : vector<16x16xf32>
    %906 = vector.extract_strided_slice %792 {offsets = [0, 2], sizes = [16, 16], strides = [1, 1]} : vector<16x30xf32> to vector<16x16xf32>
    %907 = arith.mulf %906, %6 : vector<16x16xf32>
    %908 = arith.addf %905, %907 : vector<16x16xf32>
    %909 = vector.extract_strided_slice %795 {offsets = [0, 2], sizes = [16, 16], strides = [1, 1]} : vector<16x30xf32> to vector<16x16xf32>
    %910 = arith.mulf %909, %8 : vector<16x16xf32>
    %911 = arith.addf %908, %910 : vector<16x16xf32>
    %cst_173 = arith.constant 9.99999974E-5 : f32
    %cst_174 = arith.constant 1.000000e+00 : f32
    %912 = vector.broadcast %cst_173 : f32 to vector<16x16xf32>
    %913 = arith.maximumf %912, %911 : vector<16x16xf32>
    %914 = vector.broadcast %cst_174 : f32 to vector<16x16xf32>
    %915 = arith.minimumf %914, %913 : vector<16x16xf32>
    %916 = arith.mulf %915, %915 : vector<16x16xf32>
    %917 = arith.mulf %916, %916 : vector<16x16xf32>
    %918 = arith.mulf %917, %917 : vector<16x16xf32>
    %919 = arith.mulf %918, %918 : vector<16x16xf32>
    %920 = arith.mulf %919, %919 : vector<16x16xf32>
    %921 = arith.mulf %920, %920 : vector<16x16xf32>
    %922 = arith.mulf %921, %921 : vector<16x16xf32>
    %923 = vector.broadcast %903 : f32 to vector<16x16xf32>
    %924 = arith.mulf %12, %923 : vector<16x16xf32>
    %cst_175 = arith.constant 1.000000e+04 : f32
    %925 = vector.broadcast %cst_175 : f32 to vector<16x16xf32>
    %926 = arith.minimumf %924, %925 : vector<16x16xf32>
    %927 = vector.extract_strided_slice %798 {offsets = [0, 2], sizes = [16, 16], strides = [1, 1]} : vector<16x30xf32> to vector<16x16xf32>
    %928 = arith.subf %927, %10 : vector<16x16xf32>
    %929 = math.absf %928 : vector<16x16xf32>
    %930 = arith.mulf %929, %926 : vector<16x16xf32>
    %cst_176 = arith.constant 0.000000e+00 : f32
    %931 = vector.broadcast %cst_176 : f32 to vector<16x16xf32>
    %932 = arith.subf %931, %930 : vector<16x16xf32>
    %933 = math.exp %932 : vector<16x16xf32>
    %934 = vector.broadcast %900 : f32 to vector<16x16xf32>
    %935 = arith.mulf %934, %922 : vector<16x16xf32>
    %936 = arith.mulf %935, %933 : vector<16x16xf32>
    %937 = vector.extract_strided_slice %780 {offsets = [0, 2], sizes = [16, 16], strides = [1, 1]} : vector<16x30xf32> to vector<16x16xf32>
    %938 = arith.mulf %937, %936 : vector<16x16xf32>
    %939 = arith.addf %890, %938 : vector<16x16xf32>
    %940 = vector.extract_strided_slice %783 {offsets = [0, 2], sizes = [16, 16], strides = [1, 1]} : vector<16x30xf32> to vector<16x16xf32>
    %941 = arith.mulf %940, %936 : vector<16x16xf32>
    %942 = arith.addf %893, %941 : vector<16x16xf32>
    %943 = vector.extract_strided_slice %786 {offsets = [0, 2], sizes = [16, 16], strides = [1, 1]} : vector<16x30xf32> to vector<16x16xf32>
    %944 = arith.mulf %943, %936 : vector<16x16xf32>
    %945 = arith.addf %896, %944 : vector<16x16xf32>
    %946 = arith.addf %897, %936 : vector<16x16xf32>
    %c3_i32_177 = arith.constant 3 : i32
    %947 = arith.addi %799, %c3_i32_177 : i32
    %948 = arith.index_cast %947 : i32 to index
    %949 = memref.load %arg3[%948] : memref<225xf32, #tpu.memory_space<smem>>
    %c3_i32_178 = arith.constant 3 : i32
    %950 = arith.addi %799, %c3_i32_178 : i32
    %951 = arith.index_cast %950 : i32 to index
    %952 = memref.load %arg4[%951] : memref<225xf32, #tpu.memory_space<smem>>
    %953 = vector.extract_strided_slice %789 {offsets = [0, 3], sizes = [16, 16], strides = [1, 1]} : vector<16x30xf32> to vector<16x16xf32>
    %954 = arith.mulf %953, %4 : vector<16x16xf32>
    %955 = vector.extract_strided_slice %792 {offsets = [0, 3], sizes = [16, 16], strides = [1, 1]} : vector<16x30xf32> to vector<16x16xf32>
    %956 = arith.mulf %955, %6 : vector<16x16xf32>
    %957 = arith.addf %954, %956 : vector<16x16xf32>
    %958 = vector.extract_strided_slice %795 {offsets = [0, 3], sizes = [16, 16], strides = [1, 1]} : vector<16x30xf32> to vector<16x16xf32>
    %959 = arith.mulf %958, %8 : vector<16x16xf32>
    %960 = arith.addf %957, %959 : vector<16x16xf32>
    %cst_179 = arith.constant 9.99999974E-5 : f32
    %cst_180 = arith.constant 1.000000e+00 : f32
    %961 = vector.broadcast %cst_179 : f32 to vector<16x16xf32>
    %962 = arith.maximumf %961, %960 : vector<16x16xf32>
    %963 = vector.broadcast %cst_180 : f32 to vector<16x16xf32>
    %964 = arith.minimumf %963, %962 : vector<16x16xf32>
    %965 = arith.mulf %964, %964 : vector<16x16xf32>
    %966 = arith.mulf %965, %965 : vector<16x16xf32>
    %967 = arith.mulf %966, %966 : vector<16x16xf32>
    %968 = arith.mulf %967, %967 : vector<16x16xf32>
    %969 = arith.mulf %968, %968 : vector<16x16xf32>
    %970 = arith.mulf %969, %969 : vector<16x16xf32>
    %971 = arith.mulf %970, %970 : vector<16x16xf32>
    %972 = vector.broadcast %952 : f32 to vector<16x16xf32>
    %973 = arith.mulf %12, %972 : vector<16x16xf32>
    %cst_181 = arith.constant 1.000000e+04 : f32
    %974 = vector.broadcast %cst_181 : f32 to vector<16x16xf32>
    %975 = arith.minimumf %973, %974 : vector<16x16xf32>
    %976 = vector.extract_strided_slice %798 {offsets = [0, 3], sizes = [16, 16], strides = [1, 1]} : vector<16x30xf32> to vector<16x16xf32>
    %977 = arith.subf %976, %10 : vector<16x16xf32>
    %978 = math.absf %977 : vector<16x16xf32>
    %979 = arith.mulf %978, %975 : vector<16x16xf32>
    %cst_182 = arith.constant 0.000000e+00 : f32
    %980 = vector.broadcast %cst_182 : f32 to vector<16x16xf32>
    %981 = arith.subf %980, %979 : vector<16x16xf32>
    %982 = math.exp %981 : vector<16x16xf32>
    %983 = vector.broadcast %949 : f32 to vector<16x16xf32>
    %984 = arith.mulf %983, %971 : vector<16x16xf32>
    %985 = arith.mulf %984, %982 : vector<16x16xf32>
    %986 = vector.extract_strided_slice %780 {offsets = [0, 3], sizes = [16, 16], strides = [1, 1]} : vector<16x30xf32> to vector<16x16xf32>
    %987 = arith.mulf %986, %985 : vector<16x16xf32>
    %988 = arith.addf %939, %987 : vector<16x16xf32>
    %989 = vector.extract_strided_slice %783 {offsets = [0, 3], sizes = [16, 16], strides = [1, 1]} : vector<16x30xf32> to vector<16x16xf32>
    %990 = arith.mulf %989, %985 : vector<16x16xf32>
    %991 = arith.addf %942, %990 : vector<16x16xf32>
    %992 = vector.extract_strided_slice %786 {offsets = [0, 3], sizes = [16, 16], strides = [1, 1]} : vector<16x30xf32> to vector<16x16xf32>
    %993 = arith.mulf %992, %985 : vector<16x16xf32>
    %994 = arith.addf %945, %993 : vector<16x16xf32>
    %995 = arith.addf %946, %985 : vector<16x16xf32>
    %c4_i32_183 = arith.constant 4 : i32
    %996 = arith.addi %799, %c4_i32_183 : i32
    %997 = arith.index_cast %996 : i32 to index
    %998 = memref.load %arg3[%997] : memref<225xf32, #tpu.memory_space<smem>>
    %c4_i32_184 = arith.constant 4 : i32
    %999 = arith.addi %799, %c4_i32_184 : i32
    %1000 = arith.index_cast %999 : i32 to index
    %1001 = memref.load %arg4[%1000] : memref<225xf32, #tpu.memory_space<smem>>
    %1002 = vector.extract_strided_slice %789 {offsets = [0, 4], sizes = [16, 16], strides = [1, 1]} : vector<16x30xf32> to vector<16x16xf32>
    %1003 = arith.mulf %1002, %4 : vector<16x16xf32>
    %1004 = vector.extract_strided_slice %792 {offsets = [0, 4], sizes = [16, 16], strides = [1, 1]} : vector<16x30xf32> to vector<16x16xf32>
    %1005 = arith.mulf %1004, %6 : vector<16x16xf32>
    %1006 = arith.addf %1003, %1005 : vector<16x16xf32>
    %1007 = vector.extract_strided_slice %795 {offsets = [0, 4], sizes = [16, 16], strides = [1, 1]} : vector<16x30xf32> to vector<16x16xf32>
    %1008 = arith.mulf %1007, %8 : vector<16x16xf32>
    %1009 = arith.addf %1006, %1008 : vector<16x16xf32>
    %cst_185 = arith.constant 9.99999974E-5 : f32
    %cst_186 = arith.constant 1.000000e+00 : f32
    %1010 = vector.broadcast %cst_185 : f32 to vector<16x16xf32>
    %1011 = arith.maximumf %1010, %1009 : vector<16x16xf32>
    %1012 = vector.broadcast %cst_186 : f32 to vector<16x16xf32>
    %1013 = arith.minimumf %1012, %1011 : vector<16x16xf32>
    %1014 = arith.mulf %1013, %1013 : vector<16x16xf32>
    %1015 = arith.mulf %1014, %1014 : vector<16x16xf32>
    %1016 = arith.mulf %1015, %1015 : vector<16x16xf32>
    %1017 = arith.mulf %1016, %1016 : vector<16x16xf32>
    %1018 = arith.mulf %1017, %1017 : vector<16x16xf32>
    %1019 = arith.mulf %1018, %1018 : vector<16x16xf32>
    %1020 = arith.mulf %1019, %1019 : vector<16x16xf32>
    %1021 = vector.broadcast %1001 : f32 to vector<16x16xf32>
    %1022 = arith.mulf %12, %1021 : vector<16x16xf32>
    %cst_187 = arith.constant 1.000000e+04 : f32
    %1023 = vector.broadcast %cst_187 : f32 to vector<16x16xf32>
    %1024 = arith.minimumf %1022, %1023 : vector<16x16xf32>
    %1025 = vector.extract_strided_slice %798 {offsets = [0, 4], sizes = [16, 16], strides = [1, 1]} : vector<16x30xf32> to vector<16x16xf32>
    %1026 = arith.subf %1025, %10 : vector<16x16xf32>
    %1027 = math.absf %1026 : vector<16x16xf32>
    %1028 = arith.mulf %1027, %1024 : vector<16x16xf32>
    %cst_188 = arith.constant 0.000000e+00 : f32
    %1029 = vector.broadcast %cst_188 : f32 to vector<16x16xf32>
    %1030 = arith.subf %1029, %1028 : vector<16x16xf32>
    %1031 = math.exp %1030 : vector<16x16xf32>
    %1032 = vector.broadcast %998 : f32 to vector<16x16xf32>
    %1033 = arith.mulf %1032, %1020 : vector<16x16xf32>
    %1034 = arith.mulf %1033, %1031 : vector<16x16xf32>
    %1035 = vector.extract_strided_slice %780 {offsets = [0, 4], sizes = [16, 16], strides = [1, 1]} : vector<16x30xf32> to vector<16x16xf32>
    %1036 = arith.mulf %1035, %1034 : vector<16x16xf32>
    %1037 = arith.addf %988, %1036 : vector<16x16xf32>
    %1038 = vector.extract_strided_slice %783 {offsets = [0, 4], sizes = [16, 16], strides = [1, 1]} : vector<16x30xf32> to vector<16x16xf32>
    %1039 = arith.mulf %1038, %1034 : vector<16x16xf32>
    %1040 = arith.addf %991, %1039 : vector<16x16xf32>
    %1041 = vector.extract_strided_slice %786 {offsets = [0, 4], sizes = [16, 16], strides = [1, 1]} : vector<16x30xf32> to vector<16x16xf32>
    %1042 = arith.mulf %1041, %1034 : vector<16x16xf32>
    %1043 = arith.addf %994, %1042 : vector<16x16xf32>
    %1044 = arith.addf %995, %1034 : vector<16x16xf32>
    %c5_i32_189 = arith.constant 5 : i32
    %1045 = arith.addi %799, %c5_i32_189 : i32
    %1046 = arith.index_cast %1045 : i32 to index
    %1047 = memref.load %arg3[%1046] : memref<225xf32, #tpu.memory_space<smem>>
    %c5_i32_190 = arith.constant 5 : i32
    %1048 = arith.addi %799, %c5_i32_190 : i32
    %1049 = arith.index_cast %1048 : i32 to index
    %1050 = memref.load %arg4[%1049] : memref<225xf32, #tpu.memory_space<smem>>
    %1051 = vector.extract_strided_slice %789 {offsets = [0, 5], sizes = [16, 16], strides = [1, 1]} : vector<16x30xf32> to vector<16x16xf32>
    %1052 = arith.mulf %1051, %4 : vector<16x16xf32>
    %1053 = vector.extract_strided_slice %792 {offsets = [0, 5], sizes = [16, 16], strides = [1, 1]} : vector<16x30xf32> to vector<16x16xf32>
    %1054 = arith.mulf %1053, %6 : vector<16x16xf32>
    %1055 = arith.addf %1052, %1054 : vector<16x16xf32>
    %1056 = vector.extract_strided_slice %795 {offsets = [0, 5], sizes = [16, 16], strides = [1, 1]} : vector<16x30xf32> to vector<16x16xf32>
    %1057 = arith.mulf %1056, %8 : vector<16x16xf32>
    %1058 = arith.addf %1055, %1057 : vector<16x16xf32>
    %cst_191 = arith.constant 9.99999974E-5 : f32
    %cst_192 = arith.constant 1.000000e+00 : f32
    %1059 = vector.broadcast %cst_191 : f32 to vector<16x16xf32>
    %1060 = arith.maximumf %1059, %1058 : vector<16x16xf32>
    %1061 = vector.broadcast %cst_192 : f32 to vector<16x16xf32>
    %1062 = arith.minimumf %1061, %1060 : vector<16x16xf32>
    %1063 = arith.mulf %1062, %1062 : vector<16x16xf32>
    %1064 = arith.mulf %1063, %1063 : vector<16x16xf32>
    %1065 = arith.mulf %1064, %1064 : vector<16x16xf32>
    %1066 = arith.mulf %1065, %1065 : vector<16x16xf32>
    %1067 = arith.mulf %1066, %1066 : vector<16x16xf32>
    %1068 = arith.mulf %1067, %1067 : vector<16x16xf32>
    %1069 = arith.mulf %1068, %1068 : vector<16x16xf32>
    %1070 = vector.broadcast %1050 : f32 to vector<16x16xf32>
    %1071 = arith.mulf %12, %1070 : vector<16x16xf32>
    %cst_193 = arith.constant 1.000000e+04 : f32
    %1072 = vector.broadcast %cst_193 : f32 to vector<16x16xf32>
    %1073 = arith.minimumf %1071, %1072 : vector<16x16xf32>
    %1074 = vector.extract_strided_slice %798 {offsets = [0, 5], sizes = [16, 16], strides = [1, 1]} : vector<16x30xf32> to vector<16x16xf32>
    %1075 = arith.subf %1074, %10 : vector<16x16xf32>
    %1076 = math.absf %1075 : vector<16x16xf32>
    %1077 = arith.mulf %1076, %1073 : vector<16x16xf32>
    %cst_194 = arith.constant 0.000000e+00 : f32
    %1078 = vector.broadcast %cst_194 : f32 to vector<16x16xf32>
    %1079 = arith.subf %1078, %1077 : vector<16x16xf32>
    %1080 = math.exp %1079 : vector<16x16xf32>
    %1081 = vector.broadcast %1047 : f32 to vector<16x16xf32>
    %1082 = arith.mulf %1081, %1069 : vector<16x16xf32>
    %1083 = arith.mulf %1082, %1080 : vector<16x16xf32>
    %1084 = vector.extract_strided_slice %780 {offsets = [0, 5], sizes = [16, 16], strides = [1, 1]} : vector<16x30xf32> to vector<16x16xf32>
    %1085 = arith.mulf %1084, %1083 : vector<16x16xf32>
    %1086 = arith.addf %1037, %1085 : vector<16x16xf32>
    %1087 = vector.extract_strided_slice %783 {offsets = [0, 5], sizes = [16, 16], strides = [1, 1]} : vector<16x30xf32> to vector<16x16xf32>
    %1088 = arith.mulf %1087, %1083 : vector<16x16xf32>
    %1089 = arith.addf %1040, %1088 : vector<16x16xf32>
    %1090 = vector.extract_strided_slice %786 {offsets = [0, 5], sizes = [16, 16], strides = [1, 1]} : vector<16x30xf32> to vector<16x16xf32>
    %1091 = arith.mulf %1090, %1083 : vector<16x16xf32>
    %1092 = arith.addf %1043, %1091 : vector<16x16xf32>
    %1093 = arith.addf %1044, %1083 : vector<16x16xf32>
    %c6_i32_195 = arith.constant 6 : i32
    %1094 = arith.addi %799, %c6_i32_195 : i32
    %1095 = arith.index_cast %1094 : i32 to index
    %1096 = memref.load %arg3[%1095] : memref<225xf32, #tpu.memory_space<smem>>
    %c6_i32_196 = arith.constant 6 : i32
    %1097 = arith.addi %799, %c6_i32_196 : i32
    %1098 = arith.index_cast %1097 : i32 to index
    %1099 = memref.load %arg4[%1098] : memref<225xf32, #tpu.memory_space<smem>>
    %1100 = vector.extract_strided_slice %789 {offsets = [0, 6], sizes = [16, 16], strides = [1, 1]} : vector<16x30xf32> to vector<16x16xf32>
    %1101 = arith.mulf %1100, %4 : vector<16x16xf32>
    %1102 = vector.extract_strided_slice %792 {offsets = [0, 6], sizes = [16, 16], strides = [1, 1]} : vector<16x30xf32> to vector<16x16xf32>
    %1103 = arith.mulf %1102, %6 : vector<16x16xf32>
    %1104 = arith.addf %1101, %1103 : vector<16x16xf32>
    %1105 = vector.extract_strided_slice %795 {offsets = [0, 6], sizes = [16, 16], strides = [1, 1]} : vector<16x30xf32> to vector<16x16xf32>
    %1106 = arith.mulf %1105, %8 : vector<16x16xf32>
    %1107 = arith.addf %1104, %1106 : vector<16x16xf32>
    %cst_197 = arith.constant 9.99999974E-5 : f32
    %cst_198 = arith.constant 1.000000e+00 : f32
    %1108 = vector.broadcast %cst_197 : f32 to vector<16x16xf32>
    %1109 = arith.maximumf %1108, %1107 : vector<16x16xf32>
    %1110 = vector.broadcast %cst_198 : f32 to vector<16x16xf32>
    %1111 = arith.minimumf %1110, %1109 : vector<16x16xf32>
    %1112 = arith.mulf %1111, %1111 : vector<16x16xf32>
    %1113 = arith.mulf %1112, %1112 : vector<16x16xf32>
    %1114 = arith.mulf %1113, %1113 : vector<16x16xf32>
    %1115 = arith.mulf %1114, %1114 : vector<16x16xf32>
    %1116 = arith.mulf %1115, %1115 : vector<16x16xf32>
    %1117 = arith.mulf %1116, %1116 : vector<16x16xf32>
    %1118 = arith.mulf %1117, %1117 : vector<16x16xf32>
    %1119 = vector.broadcast %1099 : f32 to vector<16x16xf32>
    %1120 = arith.mulf %12, %1119 : vector<16x16xf32>
    %cst_199 = arith.constant 1.000000e+04 : f32
    %1121 = vector.broadcast %cst_199 : f32 to vector<16x16xf32>
    %1122 = arith.minimumf %1120, %1121 : vector<16x16xf32>
    %1123 = vector.extract_strided_slice %798 {offsets = [0, 6], sizes = [16, 16], strides = [1, 1]} : vector<16x30xf32> to vector<16x16xf32>
    %1124 = arith.subf %1123, %10 : vector<16x16xf32>
    %1125 = math.absf %1124 : vector<16x16xf32>
    %1126 = arith.mulf %1125, %1122 : vector<16x16xf32>
    %cst_200 = arith.constant 0.000000e+00 : f32
    %1127 = vector.broadcast %cst_200 : f32 to vector<16x16xf32>
    %1128 = arith.subf %1127, %1126 : vector<16x16xf32>
    %1129 = math.exp %1128 : vector<16x16xf32>
    %1130 = vector.broadcast %1096 : f32 to vector<16x16xf32>
    %1131 = arith.mulf %1130, %1118 : vector<16x16xf32>
    %1132 = arith.mulf %1131, %1129 : vector<16x16xf32>
    %1133 = vector.extract_strided_slice %780 {offsets = [0, 6], sizes = [16, 16], strides = [1, 1]} : vector<16x30xf32> to vector<16x16xf32>
    %1134 = arith.mulf %1133, %1132 : vector<16x16xf32>
    %1135 = arith.addf %1086, %1134 : vector<16x16xf32>
    %1136 = vector.extract_strided_slice %783 {offsets = [0, 6], sizes = [16, 16], strides = [1, 1]} : vector<16x30xf32> to vector<16x16xf32>
    %1137 = arith.mulf %1136, %1132 : vector<16x16xf32>
    %1138 = arith.addf %1089, %1137 : vector<16x16xf32>
    %1139 = vector.extract_strided_slice %786 {offsets = [0, 6], sizes = [16, 16], strides = [1, 1]} : vector<16x30xf32> to vector<16x16xf32>
    %1140 = arith.mulf %1139, %1132 : vector<16x16xf32>
    %1141 = arith.addf %1092, %1140 : vector<16x16xf32>
    %1142 = arith.addf %1093, %1132 : vector<16x16xf32>
    %c7_i32_201 = arith.constant 7 : i32
    %1143 = arith.addi %799, %c7_i32_201 : i32
    %1144 = arith.index_cast %1143 : i32 to index
    %1145 = memref.load %arg3[%1144] : memref<225xf32, #tpu.memory_space<smem>>
    %c7_i32_202 = arith.constant 7 : i32
    %1146 = arith.addi %799, %c7_i32_202 : i32
    %1147 = arith.index_cast %1146 : i32 to index
    %1148 = memref.load %arg4[%1147] : memref<225xf32, #tpu.memory_space<smem>>
    %1149 = vector.extract_strided_slice %789 {offsets = [0, 7], sizes = [16, 16], strides = [1, 1]} : vector<16x30xf32> to vector<16x16xf32>
    %1150 = arith.mulf %1149, %4 : vector<16x16xf32>
    %1151 = vector.extract_strided_slice %792 {offsets = [0, 7], sizes = [16, 16], strides = [1, 1]} : vector<16x30xf32> to vector<16x16xf32>
    %1152 = arith.mulf %1151, %6 : vector<16x16xf32>
    %1153 = arith.addf %1150, %1152 : vector<16x16xf32>
    %1154 = vector.extract_strided_slice %795 {offsets = [0, 7], sizes = [16, 16], strides = [1, 1]} : vector<16x30xf32> to vector<16x16xf32>
    %1155 = arith.mulf %1154, %8 : vector<16x16xf32>
    %1156 = arith.addf %1153, %1155 : vector<16x16xf32>
    %cst_203 = arith.constant 9.99999974E-5 : f32
    %cst_204 = arith.constant 1.000000e+00 : f32
    %1157 = vector.broadcast %cst_203 : f32 to vector<16x16xf32>
    %1158 = arith.maximumf %1157, %1156 : vector<16x16xf32>
    %1159 = vector.broadcast %cst_204 : f32 to vector<16x16xf32>
    %1160 = arith.minimumf %1159, %1158 : vector<16x16xf32>
    %1161 = arith.mulf %1160, %1160 : vector<16x16xf32>
    %1162 = arith.mulf %1161, %1161 : vector<16x16xf32>
    %1163 = arith.mulf %1162, %1162 : vector<16x16xf32>
    %1164 = arith.mulf %1163, %1163 : vector<16x16xf32>
    %1165 = arith.mulf %1164, %1164 : vector<16x16xf32>
    %1166 = arith.mulf %1165, %1165 : vector<16x16xf32>
    %1167 = arith.mulf %1166, %1166 : vector<16x16xf32>
    %1168 = vector.broadcast %1148 : f32 to vector<16x16xf32>
    %1169 = arith.mulf %12, %1168 : vector<16x16xf32>
    %cst_205 = arith.constant 1.000000e+04 : f32
    %1170 = vector.broadcast %cst_205 : f32 to vector<16x16xf32>
    %1171 = arith.minimumf %1169, %1170 : vector<16x16xf32>
    %1172 = vector.extract_strided_slice %798 {offsets = [0, 7], sizes = [16, 16], strides = [1, 1]} : vector<16x30xf32> to vector<16x16xf32>
    %1173 = arith.subf %1172, %10 : vector<16x16xf32>
    %1174 = math.absf %1173 : vector<16x16xf32>
    %1175 = arith.mulf %1174, %1171 : vector<16x16xf32>
    %cst_206 = arith.constant 0.000000e+00 : f32
    %1176 = vector.broadcast %cst_206 : f32 to vector<16x16xf32>
    %1177 = arith.subf %1176, %1175 : vector<16x16xf32>
    %1178 = math.exp %1177 : vector<16x16xf32>
    %1179 = vector.broadcast %1145 : f32 to vector<16x16xf32>
    %1180 = arith.mulf %1179, %1167 : vector<16x16xf32>
    %1181 = arith.mulf %1180, %1178 : vector<16x16xf32>
    %1182 = vector.extract_strided_slice %780 {offsets = [0, 7], sizes = [16, 16], strides = [1, 1]} : vector<16x30xf32> to vector<16x16xf32>
    %1183 = arith.mulf %1182, %1181 : vector<16x16xf32>
    %1184 = arith.addf %1135, %1183 : vector<16x16xf32>
    %1185 = vector.extract_strided_slice %783 {offsets = [0, 7], sizes = [16, 16], strides = [1, 1]} : vector<16x30xf32> to vector<16x16xf32>
    %1186 = arith.mulf %1185, %1181 : vector<16x16xf32>
    %1187 = arith.addf %1138, %1186 : vector<16x16xf32>
    %1188 = vector.extract_strided_slice %786 {offsets = [0, 7], sizes = [16, 16], strides = [1, 1]} : vector<16x30xf32> to vector<16x16xf32>
    %1189 = arith.mulf %1188, %1181 : vector<16x16xf32>
    %1190 = arith.addf %1141, %1189 : vector<16x16xf32>
    %1191 = arith.addf %1142, %1181 : vector<16x16xf32>
    %c8_i32_207 = arith.constant 8 : i32
    %1192 = arith.addi %799, %c8_i32_207 : i32
    %1193 = arith.index_cast %1192 : i32 to index
    %1194 = memref.load %arg3[%1193] : memref<225xf32, #tpu.memory_space<smem>>
    %c8_i32_208 = arith.constant 8 : i32
    %1195 = arith.addi %799, %c8_i32_208 : i32
    %1196 = arith.index_cast %1195 : i32 to index
    %1197 = memref.load %arg4[%1196] : memref<225xf32, #tpu.memory_space<smem>>
    %1198 = vector.extract_strided_slice %789 {offsets = [0, 8], sizes = [16, 16], strides = [1, 1]} : vector<16x30xf32> to vector<16x16xf32>
    %1199 = arith.mulf %1198, %4 : vector<16x16xf32>
    %1200 = vector.extract_strided_slice %792 {offsets = [0, 8], sizes = [16, 16], strides = [1, 1]} : vector<16x30xf32> to vector<16x16xf32>
    %1201 = arith.mulf %1200, %6 : vector<16x16xf32>
    %1202 = arith.addf %1199, %1201 : vector<16x16xf32>
    %1203 = vector.extract_strided_slice %795 {offsets = [0, 8], sizes = [16, 16], strides = [1, 1]} : vector<16x30xf32> to vector<16x16xf32>
    %1204 = arith.mulf %1203, %8 : vector<16x16xf32>
    %1205 = arith.addf %1202, %1204 : vector<16x16xf32>
    %cst_209 = arith.constant 9.99999974E-5 : f32
    %cst_210 = arith.constant 1.000000e+00 : f32
    %1206 = vector.broadcast %cst_209 : f32 to vector<16x16xf32>
    %1207 = arith.maximumf %1206, %1205 : vector<16x16xf32>
    %1208 = vector.broadcast %cst_210 : f32 to vector<16x16xf32>
    %1209 = arith.minimumf %1208, %1207 : vector<16x16xf32>
    %1210 = arith.mulf %1209, %1209 : vector<16x16xf32>
    %1211 = arith.mulf %1210, %1210 : vector<16x16xf32>
    %1212 = arith.mulf %1211, %1211 : vector<16x16xf32>
    %1213 = arith.mulf %1212, %1212 : vector<16x16xf32>
    %1214 = arith.mulf %1213, %1213 : vector<16x16xf32>
    %1215 = arith.mulf %1214, %1214 : vector<16x16xf32>
    %1216 = arith.mulf %1215, %1215 : vector<16x16xf32>
    %1217 = vector.broadcast %1197 : f32 to vector<16x16xf32>
    %1218 = arith.mulf %12, %1217 : vector<16x16xf32>
    %cst_211 = arith.constant 1.000000e+04 : f32
    %1219 = vector.broadcast %cst_211 : f32 to vector<16x16xf32>
    %1220 = arith.minimumf %1218, %1219 : vector<16x16xf32>
    %1221 = vector.extract_strided_slice %798 {offsets = [0, 8], sizes = [16, 16], strides = [1, 1]} : vector<16x30xf32> to vector<16x16xf32>
    %1222 = arith.subf %1221, %10 : vector<16x16xf32>
    %1223 = math.absf %1222 : vector<16x16xf32>
    %1224 = arith.mulf %1223, %1220 : vector<16x16xf32>
    %cst_212 = arith.constant 0.000000e+00 : f32
    %1225 = vector.broadcast %cst_212 : f32 to vector<16x16xf32>
    %1226 = arith.subf %1225, %1224 : vector<16x16xf32>
    %1227 = math.exp %1226 : vector<16x16xf32>
    %1228 = vector.broadcast %1194 : f32 to vector<16x16xf32>
    %1229 = arith.mulf %1228, %1216 : vector<16x16xf32>
    %1230 = arith.mulf %1229, %1227 : vector<16x16xf32>
    %1231 = vector.extract_strided_slice %780 {offsets = [0, 8], sizes = [16, 16], strides = [1, 1]} : vector<16x30xf32> to vector<16x16xf32>
    %1232 = arith.mulf %1231, %1230 : vector<16x16xf32>
    %1233 = arith.addf %1184, %1232 : vector<16x16xf32>
    %1234 = vector.extract_strided_slice %783 {offsets = [0, 8], sizes = [16, 16], strides = [1, 1]} : vector<16x30xf32> to vector<16x16xf32>
    %1235 = arith.mulf %1234, %1230 : vector<16x16xf32>
    %1236 = arith.addf %1187, %1235 : vector<16x16xf32>
    %1237 = vector.extract_strided_slice %786 {offsets = [0, 8], sizes = [16, 16], strides = [1, 1]} : vector<16x30xf32> to vector<16x16xf32>
    %1238 = arith.mulf %1237, %1230 : vector<16x16xf32>
    %1239 = arith.addf %1190, %1238 : vector<16x16xf32>
    %1240 = arith.addf %1191, %1230 : vector<16x16xf32>
    %c9_i32_213 = arith.constant 9 : i32
    %1241 = arith.addi %799, %c9_i32_213 : i32
    %1242 = arith.index_cast %1241 : i32 to index
    %1243 = memref.load %arg3[%1242] : memref<225xf32, #tpu.memory_space<smem>>
    %c9_i32_214 = arith.constant 9 : i32
    %1244 = arith.addi %799, %c9_i32_214 : i32
    %1245 = arith.index_cast %1244 : i32 to index
    %1246 = memref.load %arg4[%1245] : memref<225xf32, #tpu.memory_space<smem>>
    %1247 = vector.extract_strided_slice %789 {offsets = [0, 9], sizes = [16, 16], strides = [1, 1]} : vector<16x30xf32> to vector<16x16xf32>
    %1248 = arith.mulf %1247, %4 : vector<16x16xf32>
    %1249 = vector.extract_strided_slice %792 {offsets = [0, 9], sizes = [16, 16], strides = [1, 1]} : vector<16x30xf32> to vector<16x16xf32>
    %1250 = arith.mulf %1249, %6 : vector<16x16xf32>
    %1251 = arith.addf %1248, %1250 : vector<16x16xf32>
    %1252 = vector.extract_strided_slice %795 {offsets = [0, 9], sizes = [16, 16], strides = [1, 1]} : vector<16x30xf32> to vector<16x16xf32>
    %1253 = arith.mulf %1252, %8 : vector<16x16xf32>
    %1254 = arith.addf %1251, %1253 : vector<16x16xf32>
    %cst_215 = arith.constant 9.99999974E-5 : f32
    %cst_216 = arith.constant 1.000000e+00 : f32
    %1255 = vector.broadcast %cst_215 : f32 to vector<16x16xf32>
    %1256 = arith.maximumf %1255, %1254 : vector<16x16xf32>
    %1257 = vector.broadcast %cst_216 : f32 to vector<16x16xf32>
    %1258 = arith.minimumf %1257, %1256 : vector<16x16xf32>
    %1259 = arith.mulf %1258, %1258 : vector<16x16xf32>
    %1260 = arith.mulf %1259, %1259 : vector<16x16xf32>
    %1261 = arith.mulf %1260, %1260 : vector<16x16xf32>
    %1262 = arith.mulf %1261, %1261 : vector<16x16xf32>
    %1263 = arith.mulf %1262, %1262 : vector<16x16xf32>
    %1264 = arith.mulf %1263, %1263 : vector<16x16xf32>
    %1265 = arith.mulf %1264, %1264 : vector<16x16xf32>
    %1266 = vector.broadcast %1246 : f32 to vector<16x16xf32>
    %1267 = arith.mulf %12, %1266 : vector<16x16xf32>
    %cst_217 = arith.constant 1.000000e+04 : f32
    %1268 = vector.broadcast %cst_217 : f32 to vector<16x16xf32>
    %1269 = arith.minimumf %1267, %1268 : vector<16x16xf32>
    %1270 = vector.extract_strided_slice %798 {offsets = [0, 9], sizes = [16, 16], strides = [1, 1]} : vector<16x30xf32> to vector<16x16xf32>
    %1271 = arith.subf %1270, %10 : vector<16x16xf32>
    %1272 = math.absf %1271 : vector<16x16xf32>
    %1273 = arith.mulf %1272, %1269 : vector<16x16xf32>
    %cst_218 = arith.constant 0.000000e+00 : f32
    %1274 = vector.broadcast %cst_218 : f32 to vector<16x16xf32>
    %1275 = arith.subf %1274, %1273 : vector<16x16xf32>
    %1276 = math.exp %1275 : vector<16x16xf32>
    %1277 = vector.broadcast %1243 : f32 to vector<16x16xf32>
    %1278 = arith.mulf %1277, %1265 : vector<16x16xf32>
    %1279 = arith.mulf %1278, %1276 : vector<16x16xf32>
    %1280 = vector.extract_strided_slice %780 {offsets = [0, 9], sizes = [16, 16], strides = [1, 1]} : vector<16x30xf32> to vector<16x16xf32>
    %1281 = arith.mulf %1280, %1279 : vector<16x16xf32>
    %1282 = arith.addf %1233, %1281 : vector<16x16xf32>
    %1283 = vector.extract_strided_slice %783 {offsets = [0, 9], sizes = [16, 16], strides = [1, 1]} : vector<16x30xf32> to vector<16x16xf32>
    %1284 = arith.mulf %1283, %1279 : vector<16x16xf32>
    %1285 = arith.addf %1236, %1284 : vector<16x16xf32>
    %1286 = vector.extract_strided_slice %786 {offsets = [0, 9], sizes = [16, 16], strides = [1, 1]} : vector<16x30xf32> to vector<16x16xf32>
    %1287 = arith.mulf %1286, %1279 : vector<16x16xf32>
    %1288 = arith.addf %1239, %1287 : vector<16x16xf32>
    %1289 = arith.addf %1240, %1279 : vector<16x16xf32>
    %c10_i32_219 = arith.constant 10 : i32
    %1290 = arith.addi %799, %c10_i32_219 : i32
    %1291 = arith.index_cast %1290 : i32 to index
    %1292 = memref.load %arg3[%1291] : memref<225xf32, #tpu.memory_space<smem>>
    %c10_i32_220 = arith.constant 10 : i32
    %1293 = arith.addi %799, %c10_i32_220 : i32
    %1294 = arith.index_cast %1293 : i32 to index
    %1295 = memref.load %arg4[%1294] : memref<225xf32, #tpu.memory_space<smem>>
    %1296 = vector.extract_strided_slice %789 {offsets = [0, 10], sizes = [16, 16], strides = [1, 1]} : vector<16x30xf32> to vector<16x16xf32>
    %1297 = arith.mulf %1296, %4 : vector<16x16xf32>
    %1298 = vector.extract_strided_slice %792 {offsets = [0, 10], sizes = [16, 16], strides = [1, 1]} : vector<16x30xf32> to vector<16x16xf32>
    %1299 = arith.mulf %1298, %6 : vector<16x16xf32>
    %1300 = arith.addf %1297, %1299 : vector<16x16xf32>
    %1301 = vector.extract_strided_slice %795 {offsets = [0, 10], sizes = [16, 16], strides = [1, 1]} : vector<16x30xf32> to vector<16x16xf32>
    %1302 = arith.mulf %1301, %8 : vector<16x16xf32>
    %1303 = arith.addf %1300, %1302 : vector<16x16xf32>
    %cst_221 = arith.constant 9.99999974E-5 : f32
    %cst_222 = arith.constant 1.000000e+00 : f32
    %1304 = vector.broadcast %cst_221 : f32 to vector<16x16xf32>
    %1305 = arith.maximumf %1304, %1303 : vector<16x16xf32>
    %1306 = vector.broadcast %cst_222 : f32 to vector<16x16xf32>
    %1307 = arith.minimumf %1306, %1305 : vector<16x16xf32>
    %1308 = arith.mulf %1307, %1307 : vector<16x16xf32>
    %1309 = arith.mulf %1308, %1308 : vector<16x16xf32>
    %1310 = arith.mulf %1309, %1309 : vector<16x16xf32>
    %1311 = arith.mulf %1310, %1310 : vector<16x16xf32>
    %1312 = arith.mulf %1311, %1311 : vector<16x16xf32>
    %1313 = arith.mulf %1312, %1312 : vector<16x16xf32>
    %1314 = arith.mulf %1313, %1313 : vector<16x16xf32>
    %1315 = vector.broadcast %1295 : f32 to vector<16x16xf32>
    %1316 = arith.mulf %12, %1315 : vector<16x16xf32>
    %cst_223 = arith.constant 1.000000e+04 : f32
    %1317 = vector.broadcast %cst_223 : f32 to vector<16x16xf32>
    %1318 = arith.minimumf %1316, %1317 : vector<16x16xf32>
    %1319 = vector.extract_strided_slice %798 {offsets = [0, 10], sizes = [16, 16], strides = [1, 1]} : vector<16x30xf32> to vector<16x16xf32>
    %1320 = arith.subf %1319, %10 : vector<16x16xf32>
    %1321 = math.absf %1320 : vector<16x16xf32>
    %1322 = arith.mulf %1321, %1318 : vector<16x16xf32>
    %cst_224 = arith.constant 0.000000e+00 : f32
    %1323 = vector.broadcast %cst_224 : f32 to vector<16x16xf32>
    %1324 = arith.subf %1323, %1322 : vector<16x16xf32>
    %1325 = math.exp %1324 : vector<16x16xf32>
    %1326 = vector.broadcast %1292 : f32 to vector<16x16xf32>
    %1327 = arith.mulf %1326, %1314 : vector<16x16xf32>
    %1328 = arith.mulf %1327, %1325 : vector<16x16xf32>
    %1329 = vector.extract_strided_slice %780 {offsets = [0, 10], sizes = [16, 16], strides = [1, 1]} : vector<16x30xf32> to vector<16x16xf32>
    %1330 = arith.mulf %1329, %1328 : vector<16x16xf32>
    %1331 = arith.addf %1282, %1330 : vector<16x16xf32>
    %1332 = vector.extract_strided_slice %783 {offsets = [0, 10], sizes = [16, 16], strides = [1, 1]} : vector<16x30xf32> to vector<16x16xf32>
    %1333 = arith.mulf %1332, %1328 : vector<16x16xf32>
    %1334 = arith.addf %1285, %1333 : vector<16x16xf32>
    %1335 = vector.extract_strided_slice %786 {offsets = [0, 10], sizes = [16, 16], strides = [1, 1]} : vector<16x30xf32> to vector<16x16xf32>
    %1336 = arith.mulf %1335, %1328 : vector<16x16xf32>
    %1337 = arith.addf %1288, %1336 : vector<16x16xf32>
    %1338 = arith.addf %1289, %1328 : vector<16x16xf32>
    %c11_i32_225 = arith.constant 11 : i32
    %1339 = arith.addi %799, %c11_i32_225 : i32
    %1340 = arith.index_cast %1339 : i32 to index
    %1341 = memref.load %arg3[%1340] : memref<225xf32, #tpu.memory_space<smem>>
    %c11_i32_226 = arith.constant 11 : i32
    %1342 = arith.addi %799, %c11_i32_226 : i32
    %1343 = arith.index_cast %1342 : i32 to index
    %1344 = memref.load %arg4[%1343] : memref<225xf32, #tpu.memory_space<smem>>
    %1345 = vector.extract_strided_slice %789 {offsets = [0, 11], sizes = [16, 16], strides = [1, 1]} : vector<16x30xf32> to vector<16x16xf32>
    %1346 = arith.mulf %1345, %4 : vector<16x16xf32>
    %1347 = vector.extract_strided_slice %792 {offsets = [0, 11], sizes = [16, 16], strides = [1, 1]} : vector<16x30xf32> to vector<16x16xf32>
    %1348 = arith.mulf %1347, %6 : vector<16x16xf32>
    %1349 = arith.addf %1346, %1348 : vector<16x16xf32>
    %1350 = vector.extract_strided_slice %795 {offsets = [0, 11], sizes = [16, 16], strides = [1, 1]} : vector<16x30xf32> to vector<16x16xf32>
    %1351 = arith.mulf %1350, %8 : vector<16x16xf32>
    %1352 = arith.addf %1349, %1351 : vector<16x16xf32>
    %cst_227 = arith.constant 9.99999974E-5 : f32
    %cst_228 = arith.constant 1.000000e+00 : f32
    %1353 = vector.broadcast %cst_227 : f32 to vector<16x16xf32>
    %1354 = arith.maximumf %1353, %1352 : vector<16x16xf32>
    %1355 = vector.broadcast %cst_228 : f32 to vector<16x16xf32>
    %1356 = arith.minimumf %1355, %1354 : vector<16x16xf32>
    %1357 = arith.mulf %1356, %1356 : vector<16x16xf32>
    %1358 = arith.mulf %1357, %1357 : vector<16x16xf32>
    %1359 = arith.mulf %1358, %1358 : vector<16x16xf32>
    %1360 = arith.mulf %1359, %1359 : vector<16x16xf32>
    %1361 = arith.mulf %1360, %1360 : vector<16x16xf32>
    %1362 = arith.mulf %1361, %1361 : vector<16x16xf32>
    %1363 = arith.mulf %1362, %1362 : vector<16x16xf32>
    %1364 = vector.broadcast %1344 : f32 to vector<16x16xf32>
    %1365 = arith.mulf %12, %1364 : vector<16x16xf32>
    %cst_229 = arith.constant 1.000000e+04 : f32
    %1366 = vector.broadcast %cst_229 : f32 to vector<16x16xf32>
    %1367 = arith.minimumf %1365, %1366 : vector<16x16xf32>
    %1368 = vector.extract_strided_slice %798 {offsets = [0, 11], sizes = [16, 16], strides = [1, 1]} : vector<16x30xf32> to vector<16x16xf32>
    %1369 = arith.subf %1368, %10 : vector<16x16xf32>
    %1370 = math.absf %1369 : vector<16x16xf32>
    %1371 = arith.mulf %1370, %1367 : vector<16x16xf32>
    %cst_230 = arith.constant 0.000000e+00 : f32
    %1372 = vector.broadcast %cst_230 : f32 to vector<16x16xf32>
    %1373 = arith.subf %1372, %1371 : vector<16x16xf32>
    %1374 = math.exp %1373 : vector<16x16xf32>
    %1375 = vector.broadcast %1341 : f32 to vector<16x16xf32>
    %1376 = arith.mulf %1375, %1363 : vector<16x16xf32>
    %1377 = arith.mulf %1376, %1374 : vector<16x16xf32>
    %1378 = vector.extract_strided_slice %780 {offsets = [0, 11], sizes = [16, 16], strides = [1, 1]} : vector<16x30xf32> to vector<16x16xf32>
    %1379 = arith.mulf %1378, %1377 : vector<16x16xf32>
    %1380 = arith.addf %1331, %1379 : vector<16x16xf32>
    %1381 = vector.extract_strided_slice %783 {offsets = [0, 11], sizes = [16, 16], strides = [1, 1]} : vector<16x30xf32> to vector<16x16xf32>
    %1382 = arith.mulf %1381, %1377 : vector<16x16xf32>
    %1383 = arith.addf %1334, %1382 : vector<16x16xf32>
    %1384 = vector.extract_strided_slice %786 {offsets = [0, 11], sizes = [16, 16], strides = [1, 1]} : vector<16x30xf32> to vector<16x16xf32>
    %1385 = arith.mulf %1384, %1377 : vector<16x16xf32>
    %1386 = arith.addf %1337, %1385 : vector<16x16xf32>
    %1387 = arith.addf %1338, %1377 : vector<16x16xf32>
    %c12_i32_231 = arith.constant 12 : i32
    %1388 = arith.addi %799, %c12_i32_231 : i32
    %1389 = arith.index_cast %1388 : i32 to index
    %1390 = memref.load %arg3[%1389] : memref<225xf32, #tpu.memory_space<smem>>
    %c12_i32_232 = arith.constant 12 : i32
    %1391 = arith.addi %799, %c12_i32_232 : i32
    %1392 = arith.index_cast %1391 : i32 to index
    %1393 = memref.load %arg4[%1392] : memref<225xf32, #tpu.memory_space<smem>>
    %1394 = vector.extract_strided_slice %789 {offsets = [0, 12], sizes = [16, 16], strides = [1, 1]} : vector<16x30xf32> to vector<16x16xf32>
    %1395 = arith.mulf %1394, %4 : vector<16x16xf32>
    %1396 = vector.extract_strided_slice %792 {offsets = [0, 12], sizes = [16, 16], strides = [1, 1]} : vector<16x30xf32> to vector<16x16xf32>
    %1397 = arith.mulf %1396, %6 : vector<16x16xf32>
    %1398 = arith.addf %1395, %1397 : vector<16x16xf32>
    %1399 = vector.extract_strided_slice %795 {offsets = [0, 12], sizes = [16, 16], strides = [1, 1]} : vector<16x30xf32> to vector<16x16xf32>
    %1400 = arith.mulf %1399, %8 : vector<16x16xf32>
    %1401 = arith.addf %1398, %1400 : vector<16x16xf32>
    %cst_233 = arith.constant 9.99999974E-5 : f32
    %cst_234 = arith.constant 1.000000e+00 : f32
    %1402 = vector.broadcast %cst_233 : f32 to vector<16x16xf32>
    %1403 = arith.maximumf %1402, %1401 : vector<16x16xf32>
    %1404 = vector.broadcast %cst_234 : f32 to vector<16x16xf32>
    %1405 = arith.minimumf %1404, %1403 : vector<16x16xf32>
    %1406 = arith.mulf %1405, %1405 : vector<16x16xf32>
    %1407 = arith.mulf %1406, %1406 : vector<16x16xf32>
    %1408 = arith.mulf %1407, %1407 : vector<16x16xf32>
    %1409 = arith.mulf %1408, %1408 : vector<16x16xf32>
    %1410 = arith.mulf %1409, %1409 : vector<16x16xf32>
    %1411 = arith.mulf %1410, %1410 : vector<16x16xf32>
    %1412 = arith.mulf %1411, %1411 : vector<16x16xf32>
    %1413 = vector.broadcast %1393 : f32 to vector<16x16xf32>
    %1414 = arith.mulf %12, %1413 : vector<16x16xf32>
    %cst_235 = arith.constant 1.000000e+04 : f32
    %1415 = vector.broadcast %cst_235 : f32 to vector<16x16xf32>
    %1416 = arith.minimumf %1414, %1415 : vector<16x16xf32>
    %1417 = vector.extract_strided_slice %798 {offsets = [0, 12], sizes = [16, 16], strides = [1, 1]} : vector<16x30xf32> to vector<16x16xf32>
    %1418 = arith.subf %1417, %10 : vector<16x16xf32>
    %1419 = math.absf %1418 : vector<16x16xf32>
    %1420 = arith.mulf %1419, %1416 : vector<16x16xf32>
    %cst_236 = arith.constant 0.000000e+00 : f32
    %1421 = vector.broadcast %cst_236 : f32 to vector<16x16xf32>
    %1422 = arith.subf %1421, %1420 : vector<16x16xf32>
    %1423 = math.exp %1422 : vector<16x16xf32>
    %1424 = vector.broadcast %1390 : f32 to vector<16x16xf32>
    %1425 = arith.mulf %1424, %1412 : vector<16x16xf32>
    %1426 = arith.mulf %1425, %1423 : vector<16x16xf32>
    %1427 = vector.extract_strided_slice %780 {offsets = [0, 12], sizes = [16, 16], strides = [1, 1]} : vector<16x30xf32> to vector<16x16xf32>
    %1428 = arith.mulf %1427, %1426 : vector<16x16xf32>
    %1429 = arith.addf %1380, %1428 : vector<16x16xf32>
    %1430 = vector.extract_strided_slice %783 {offsets = [0, 12], sizes = [16, 16], strides = [1, 1]} : vector<16x30xf32> to vector<16x16xf32>
    %1431 = arith.mulf %1430, %1426 : vector<16x16xf32>
    %1432 = arith.addf %1383, %1431 : vector<16x16xf32>
    %1433 = vector.extract_strided_slice %786 {offsets = [0, 12], sizes = [16, 16], strides = [1, 1]} : vector<16x30xf32> to vector<16x16xf32>
    %1434 = arith.mulf %1433, %1426 : vector<16x16xf32>
    %1435 = arith.addf %1386, %1434 : vector<16x16xf32>
    %1436 = arith.addf %1387, %1426 : vector<16x16xf32>
    %c13_i32_237 = arith.constant 13 : i32
    %1437 = arith.addi %799, %c13_i32_237 : i32
    %1438 = arith.index_cast %1437 : i32 to index
    %1439 = memref.load %arg3[%1438] : memref<225xf32, #tpu.memory_space<smem>>
    %c13_i32_238 = arith.constant 13 : i32
    %1440 = arith.addi %799, %c13_i32_238 : i32
    %1441 = arith.index_cast %1440 : i32 to index
    %1442 = memref.load %arg4[%1441] : memref<225xf32, #tpu.memory_space<smem>>
    %1443 = vector.extract_strided_slice %789 {offsets = [0, 13], sizes = [16, 16], strides = [1, 1]} : vector<16x30xf32> to vector<16x16xf32>
    %1444 = arith.mulf %1443, %4 : vector<16x16xf32>
    %1445 = vector.extract_strided_slice %792 {offsets = [0, 13], sizes = [16, 16], strides = [1, 1]} : vector<16x30xf32> to vector<16x16xf32>
    %1446 = arith.mulf %1445, %6 : vector<16x16xf32>
    %1447 = arith.addf %1444, %1446 : vector<16x16xf32>
    %1448 = vector.extract_strided_slice %795 {offsets = [0, 13], sizes = [16, 16], strides = [1, 1]} : vector<16x30xf32> to vector<16x16xf32>
    %1449 = arith.mulf %1448, %8 : vector<16x16xf32>
    %1450 = arith.addf %1447, %1449 : vector<16x16xf32>
    %cst_239 = arith.constant 9.99999974E-5 : f32
    %cst_240 = arith.constant 1.000000e+00 : f32
    %1451 = vector.broadcast %cst_239 : f32 to vector<16x16xf32>
    %1452 = arith.maximumf %1451, %1450 : vector<16x16xf32>
    %1453 = vector.broadcast %cst_240 : f32 to vector<16x16xf32>
    %1454 = arith.minimumf %1453, %1452 : vector<16x16xf32>
    %1455 = arith.mulf %1454, %1454 : vector<16x16xf32>
    %1456 = arith.mulf %1455, %1455 : vector<16x16xf32>
    %1457 = arith.mulf %1456, %1456 : vector<16x16xf32>
    %1458 = arith.mulf %1457, %1457 : vector<16x16xf32>
    %1459 = arith.mulf %1458, %1458 : vector<16x16xf32>
    %1460 = arith.mulf %1459, %1459 : vector<16x16xf32>
    %1461 = arith.mulf %1460, %1460 : vector<16x16xf32>
    %1462 = vector.broadcast %1442 : f32 to vector<16x16xf32>
    %1463 = arith.mulf %12, %1462 : vector<16x16xf32>
    %cst_241 = arith.constant 1.000000e+04 : f32
    %1464 = vector.broadcast %cst_241 : f32 to vector<16x16xf32>
    %1465 = arith.minimumf %1463, %1464 : vector<16x16xf32>
    %1466 = vector.extract_strided_slice %798 {offsets = [0, 13], sizes = [16, 16], strides = [1, 1]} : vector<16x30xf32> to vector<16x16xf32>
    %1467 = arith.subf %1466, %10 : vector<16x16xf32>
    %1468 = math.absf %1467 : vector<16x16xf32>
    %1469 = arith.mulf %1468, %1465 : vector<16x16xf32>
    %cst_242 = arith.constant 0.000000e+00 : f32
    %1470 = vector.broadcast %cst_242 : f32 to vector<16x16xf32>
    %1471 = arith.subf %1470, %1469 : vector<16x16xf32>
    %1472 = math.exp %1471 : vector<16x16xf32>
    %1473 = vector.broadcast %1439 : f32 to vector<16x16xf32>
    %1474 = arith.mulf %1473, %1461 : vector<16x16xf32>
    %1475 = arith.mulf %1474, %1472 : vector<16x16xf32>
    %1476 = vector.extract_strided_slice %780 {offsets = [0, 13], sizes = [16, 16], strides = [1, 1]} : vector<16x30xf32> to vector<16x16xf32>
    %1477 = arith.mulf %1476, %1475 : vector<16x16xf32>
    %1478 = arith.addf %1429, %1477 : vector<16x16xf32>
    %1479 = vector.extract_strided_slice %783 {offsets = [0, 13], sizes = [16, 16], strides = [1, 1]} : vector<16x30xf32> to vector<16x16xf32>
    %1480 = arith.mulf %1479, %1475 : vector<16x16xf32>
    %1481 = arith.addf %1432, %1480 : vector<16x16xf32>
    %1482 = vector.extract_strided_slice %786 {offsets = [0, 13], sizes = [16, 16], strides = [1, 1]} : vector<16x30xf32> to vector<16x16xf32>
    %1483 = arith.mulf %1482, %1475 : vector<16x16xf32>
    %1484 = arith.addf %1435, %1483 : vector<16x16xf32>
    %1485 = arith.addf %1436, %1475 : vector<16x16xf32>
    %c14_i32_243 = arith.constant 14 : i32
    %1486 = arith.addi %799, %c14_i32_243 : i32
    %1487 = arith.index_cast %1486 : i32 to index
    %1488 = memref.load %arg3[%1487] : memref<225xf32, #tpu.memory_space<smem>>
    %c14_i32_244 = arith.constant 14 : i32
    %1489 = arith.addi %799, %c14_i32_244 : i32
    %1490 = arith.index_cast %1489 : i32 to index
    %1491 = memref.load %arg4[%1490] : memref<225xf32, #tpu.memory_space<smem>>
    %1492 = vector.extract_strided_slice %789 {offsets = [0, 14], sizes = [16, 16], strides = [1, 1]} : vector<16x30xf32> to vector<16x16xf32>
    %1493 = arith.mulf %1492, %4 : vector<16x16xf32>
    %1494 = vector.extract_strided_slice %792 {offsets = [0, 14], sizes = [16, 16], strides = [1, 1]} : vector<16x30xf32> to vector<16x16xf32>
    %1495 = arith.mulf %1494, %6 : vector<16x16xf32>
    %1496 = arith.addf %1493, %1495 : vector<16x16xf32>
    %1497 = vector.extract_strided_slice %795 {offsets = [0, 14], sizes = [16, 16], strides = [1, 1]} : vector<16x30xf32> to vector<16x16xf32>
    %1498 = arith.mulf %1497, %8 : vector<16x16xf32>
    %1499 = arith.addf %1496, %1498 : vector<16x16xf32>
    %cst_245 = arith.constant 9.99999974E-5 : f32
    %cst_246 = arith.constant 1.000000e+00 : f32
    %1500 = vector.broadcast %cst_245 : f32 to vector<16x16xf32>
    %1501 = arith.maximumf %1500, %1499 : vector<16x16xf32>
    %1502 = vector.broadcast %cst_246 : f32 to vector<16x16xf32>
    %1503 = arith.minimumf %1502, %1501 : vector<16x16xf32>
    %1504 = arith.mulf %1503, %1503 : vector<16x16xf32>
    %1505 = arith.mulf %1504, %1504 : vector<16x16xf32>
    %1506 = arith.mulf %1505, %1505 : vector<16x16xf32>
    %1507 = arith.mulf %1506, %1506 : vector<16x16xf32>
    %1508 = arith.mulf %1507, %1507 : vector<16x16xf32>
    %1509 = arith.mulf %1508, %1508 : vector<16x16xf32>
    %1510 = arith.mulf %1509, %1509 : vector<16x16xf32>
    %1511 = vector.broadcast %1491 : f32 to vector<16x16xf32>
    %1512 = arith.mulf %12, %1511 : vector<16x16xf32>
    %cst_247 = arith.constant 1.000000e+04 : f32
    %1513 = vector.broadcast %cst_247 : f32 to vector<16x16xf32>
    %1514 = arith.minimumf %1512, %1513 : vector<16x16xf32>
    %1515 = vector.extract_strided_slice %798 {offsets = [0, 14], sizes = [16, 16], strides = [1, 1]} : vector<16x30xf32> to vector<16x16xf32>
    %1516 = arith.subf %1515, %10 : vector<16x16xf32>
    %1517 = math.absf %1516 : vector<16x16xf32>
    %1518 = arith.mulf %1517, %1514 : vector<16x16xf32>
    %cst_248 = arith.constant 0.000000e+00 : f32
    %1519 = vector.broadcast %cst_248 : f32 to vector<16x16xf32>
    %1520 = arith.subf %1519, %1518 : vector<16x16xf32>
    %1521 = math.exp %1520 : vector<16x16xf32>
    %1522 = vector.broadcast %1488 : f32 to vector<16x16xf32>
    %1523 = arith.mulf %1522, %1510 : vector<16x16xf32>
    %1524 = arith.mulf %1523, %1521 : vector<16x16xf32>
    %1525 = vector.extract_strided_slice %780 {offsets = [0, 14], sizes = [16, 16], strides = [1, 1]} : vector<16x30xf32> to vector<16x16xf32>
    %1526 = arith.mulf %1525, %1524 : vector<16x16xf32>
    %1527 = arith.addf %1478, %1526 : vector<16x16xf32>
    %1528 = vector.extract_strided_slice %783 {offsets = [0, 14], sizes = [16, 16], strides = [1, 1]} : vector<16x30xf32> to vector<16x16xf32>
    %1529 = arith.mulf %1528, %1524 : vector<16x16xf32>
    %1530 = arith.addf %1481, %1529 : vector<16x16xf32>
    %1531 = vector.extract_strided_slice %786 {offsets = [0, 14], sizes = [16, 16], strides = [1, 1]} : vector<16x30xf32> to vector<16x16xf32>
    %1532 = arith.mulf %1531, %1524 : vector<16x16xf32>
    %1533 = arith.addf %1484, %1532 : vector<16x16xf32>
    %1534 = arith.addf %1485, %1524 : vector<16x16xf32>
    %c3_i32_249 = arith.constant 3 : i32
    %1535 = arith.muli %arg2, %c3_i32_249 : i32
    %c2_i32_250 = arith.constant 2 : i32
    %1536 = arith.addi %1535, %c2_i32_250 : i32
    %c0_251 = arith.constant 0 : index
    %c0_252 = arith.constant 0 : index
    %c0_253 = arith.constant 0 : index
    %1537 = arith.index_cast %1536 : i32 to index
    %c0_254 = arith.constant 0 : index
    %1538 = vector.load %arg6[%c0_251, %c0_252, %c0_253, %1537, %c0_254] : memref<1x1x7x30x30xf32, #tpu.memory_space<vmem>>, vector<1x1x1x16x30xf32>
    %1539 = vector.shape_cast %1538 : vector<1x1x1x16x30xf32> to vector<16x30xf32>
    %c0_255 = arith.constant 0 : index
    %c0_256 = arith.constant 0 : index
    %c1_257 = arith.constant 1 : index
    %1540 = arith.index_cast %1536 : i32 to index
    %c0_258 = arith.constant 0 : index
    %1541 = vector.load %arg6[%c0_255, %c0_256, %c1_257, %1540, %c0_258] : memref<1x1x7x30x30xf32, #tpu.memory_space<vmem>>, vector<1x1x1x16x30xf32>
    %1542 = vector.shape_cast %1541 : vector<1x1x1x16x30xf32> to vector<16x30xf32>
    %c0_259 = arith.constant 0 : index
    %c0_260 = arith.constant 0 : index
    %c2_261 = arith.constant 2 : index
    %1543 = arith.index_cast %1536 : i32 to index
    %c0_262 = arith.constant 0 : index
    %1544 = vector.load %arg6[%c0_259, %c0_260, %c2_261, %1543, %c0_262] : memref<1x1x7x30x30xf32, #tpu.memory_space<vmem>>, vector<1x1x1x16x30xf32>
    %1545 = vector.shape_cast %1544 : vector<1x1x1x16x30xf32> to vector<16x30xf32>
    %c0_263 = arith.constant 0 : index
    %c0_264 = arith.constant 0 : index
    %c3_265 = arith.constant 3 : index
    %1546 = arith.index_cast %1536 : i32 to index
    %c0_266 = arith.constant 0 : index
    %1547 = vector.load %arg6[%c0_263, %c0_264, %c3_265, %1546, %c0_266] : memref<1x1x7x30x30xf32, #tpu.memory_space<vmem>>, vector<1x1x1x16x30xf32>
    %1548 = vector.shape_cast %1547 : vector<1x1x1x16x30xf32> to vector<16x30xf32>
    %c0_267 = arith.constant 0 : index
    %c0_268 = arith.constant 0 : index
    %c4_269 = arith.constant 4 : index
    %1549 = arith.index_cast %1536 : i32 to index
    %c0_270 = arith.constant 0 : index
    %1550 = vector.load %arg6[%c0_267, %c0_268, %c4_269, %1549, %c0_270] : memref<1x1x7x30x30xf32, #tpu.memory_space<vmem>>, vector<1x1x1x16x30xf32>
    %1551 = vector.shape_cast %1550 : vector<1x1x1x16x30xf32> to vector<16x30xf32>
    %c0_271 = arith.constant 0 : index
    %c0_272 = arith.constant 0 : index
    %c5_273 = arith.constant 5 : index
    %1552 = arith.index_cast %1536 : i32 to index
    %c0_274 = arith.constant 0 : index
    %1553 = vector.load %arg6[%c0_271, %c0_272, %c5_273, %1552, %c0_274] : memref<1x1x7x30x30xf32, #tpu.memory_space<vmem>>, vector<1x1x1x16x30xf32>
    %1554 = vector.shape_cast %1553 : vector<1x1x1x16x30xf32> to vector<16x30xf32>
    %c0_275 = arith.constant 0 : index
    %c0_276 = arith.constant 0 : index
    %c6_277 = arith.constant 6 : index
    %1555 = arith.index_cast %1536 : i32 to index
    %c0_278 = arith.constant 0 : index
    %1556 = vector.load %arg6[%c0_275, %c0_276, %c6_277, %1555, %c0_278] : memref<1x1x7x30x30xf32, #tpu.memory_space<vmem>>, vector<1x1x1x16x30xf32>
    %1557 = vector.shape_cast %1556 : vector<1x1x1x16x30xf32> to vector<16x30xf32>
    %c15_i32_279 = arith.constant 15 : i32
    %1558 = arith.muli %1536, %c15_i32_279 : i32
    %c0_i32_280 = arith.constant 0 : i32
    %1559 = arith.addi %1558, %c0_i32_280 : i32
    %1560 = arith.index_cast %1559 : i32 to index
    %1561 = memref.load %arg3[%1560] : memref<225xf32, #tpu.memory_space<smem>>
    %c0_i32_281 = arith.constant 0 : i32
    %1562 = arith.addi %1558, %c0_i32_281 : i32
    %1563 = arith.index_cast %1562 : i32 to index
    %1564 = memref.load %arg4[%1563] : memref<225xf32, #tpu.memory_space<smem>>
    %1565 = vector.extract_strided_slice %1548 {offsets = [0, 0], sizes = [16, 16], strides = [1, 1]} : vector<16x30xf32> to vector<16x16xf32>
    %1566 = arith.mulf %1565, %4 : vector<16x16xf32>
    %1567 = vector.extract_strided_slice %1551 {offsets = [0, 0], sizes = [16, 16], strides = [1, 1]} : vector<16x30xf32> to vector<16x16xf32>
    %1568 = arith.mulf %1567, %6 : vector<16x16xf32>
    %1569 = arith.addf %1566, %1568 : vector<16x16xf32>
    %1570 = vector.extract_strided_slice %1554 {offsets = [0, 0], sizes = [16, 16], strides = [1, 1]} : vector<16x30xf32> to vector<16x16xf32>
    %1571 = arith.mulf %1570, %8 : vector<16x16xf32>
    %1572 = arith.addf %1569, %1571 : vector<16x16xf32>
    %cst_282 = arith.constant 9.99999974E-5 : f32
    %cst_283 = arith.constant 1.000000e+00 : f32
    %1573 = vector.broadcast %cst_282 : f32 to vector<16x16xf32>
    %1574 = arith.maximumf %1573, %1572 : vector<16x16xf32>
    %1575 = vector.broadcast %cst_283 : f32 to vector<16x16xf32>
    %1576 = arith.minimumf %1575, %1574 : vector<16x16xf32>
    %1577 = arith.mulf %1576, %1576 : vector<16x16xf32>
    %1578 = arith.mulf %1577, %1577 : vector<16x16xf32>
    %1579 = arith.mulf %1578, %1578 : vector<16x16xf32>
    %1580 = arith.mulf %1579, %1579 : vector<16x16xf32>
    %1581 = arith.mulf %1580, %1580 : vector<16x16xf32>
    %1582 = arith.mulf %1581, %1581 : vector<16x16xf32>
    %1583 = arith.mulf %1582, %1582 : vector<16x16xf32>
    %1584 = vector.broadcast %1564 : f32 to vector<16x16xf32>
    %1585 = arith.mulf %12, %1584 : vector<16x16xf32>
    %cst_284 = arith.constant 1.000000e+04 : f32
    %1586 = vector.broadcast %cst_284 : f32 to vector<16x16xf32>
    %1587 = arith.minimumf %1585, %1586 : vector<16x16xf32>
    %1588 = vector.extract_strided_slice %1557 {offsets = [0, 0], sizes = [16, 16], strides = [1, 1]} : vector<16x30xf32> to vector<16x16xf32>
    %1589 = arith.subf %1588, %10 : vector<16x16xf32>
    %1590 = math.absf %1589 : vector<16x16xf32>
    %1591 = arith.mulf %1590, %1587 : vector<16x16xf32>
    %cst_285 = arith.constant 0.000000e+00 : f32
    %1592 = vector.broadcast %cst_285 : f32 to vector<16x16xf32>
    %1593 = arith.subf %1592, %1591 : vector<16x16xf32>
    %1594 = math.exp %1593 : vector<16x16xf32>
    %1595 = vector.broadcast %1561 : f32 to vector<16x16xf32>
    %1596 = arith.mulf %1595, %1583 : vector<16x16xf32>
    %1597 = arith.mulf %1596, %1594 : vector<16x16xf32>
    %1598 = vector.extract_strided_slice %1539 {offsets = [0, 0], sizes = [16, 16], strides = [1, 1]} : vector<16x30xf32> to vector<16x16xf32>
    %1599 = arith.mulf %1598, %1597 : vector<16x16xf32>
    %1600 = arith.addf %1527, %1599 : vector<16x16xf32>
    %1601 = vector.extract_strided_slice %1542 {offsets = [0, 0], sizes = [16, 16], strides = [1, 1]} : vector<16x30xf32> to vector<16x16xf32>
    %1602 = arith.mulf %1601, %1597 : vector<16x16xf32>
    %1603 = arith.addf %1530, %1602 : vector<16x16xf32>
    %1604 = vector.extract_strided_slice %1545 {offsets = [0, 0], sizes = [16, 16], strides = [1, 1]} : vector<16x30xf32> to vector<16x16xf32>
    %1605 = arith.mulf %1604, %1597 : vector<16x16xf32>
    %1606 = arith.addf %1533, %1605 : vector<16x16xf32>
    %1607 = arith.addf %1534, %1597 : vector<16x16xf32>
    %c1_i32_286 = arith.constant 1 : i32
    %1608 = arith.addi %1558, %c1_i32_286 : i32
    %1609 = arith.index_cast %1608 : i32 to index
    %1610 = memref.load %arg3[%1609] : memref<225xf32, #tpu.memory_space<smem>>
    %c1_i32_287 = arith.constant 1 : i32
    %1611 = arith.addi %1558, %c1_i32_287 : i32
    %1612 = arith.index_cast %1611 : i32 to index
    %1613 = memref.load %arg4[%1612] : memref<225xf32, #tpu.memory_space<smem>>
    %1614 = vector.extract_strided_slice %1548 {offsets = [0, 1], sizes = [16, 16], strides = [1, 1]} : vector<16x30xf32> to vector<16x16xf32>
    %1615 = arith.mulf %1614, %4 : vector<16x16xf32>
    %1616 = vector.extract_strided_slice %1551 {offsets = [0, 1], sizes = [16, 16], strides = [1, 1]} : vector<16x30xf32> to vector<16x16xf32>
    %1617 = arith.mulf %1616, %6 : vector<16x16xf32>
    %1618 = arith.addf %1615, %1617 : vector<16x16xf32>
    %1619 = vector.extract_strided_slice %1554 {offsets = [0, 1], sizes = [16, 16], strides = [1, 1]} : vector<16x30xf32> to vector<16x16xf32>
    %1620 = arith.mulf %1619, %8 : vector<16x16xf32>
    %1621 = arith.addf %1618, %1620 : vector<16x16xf32>
    %cst_288 = arith.constant 9.99999974E-5 : f32
    %cst_289 = arith.constant 1.000000e+00 : f32
    %1622 = vector.broadcast %cst_288 : f32 to vector<16x16xf32>
    %1623 = arith.maximumf %1622, %1621 : vector<16x16xf32>
    %1624 = vector.broadcast %cst_289 : f32 to vector<16x16xf32>
    %1625 = arith.minimumf %1624, %1623 : vector<16x16xf32>
    %1626 = arith.mulf %1625, %1625 : vector<16x16xf32>
    %1627 = arith.mulf %1626, %1626 : vector<16x16xf32>
    %1628 = arith.mulf %1627, %1627 : vector<16x16xf32>
    %1629 = arith.mulf %1628, %1628 : vector<16x16xf32>
    %1630 = arith.mulf %1629, %1629 : vector<16x16xf32>
    %1631 = arith.mulf %1630, %1630 : vector<16x16xf32>
    %1632 = arith.mulf %1631, %1631 : vector<16x16xf32>
    %1633 = vector.broadcast %1613 : f32 to vector<16x16xf32>
    %1634 = arith.mulf %12, %1633 : vector<16x16xf32>
    %cst_290 = arith.constant 1.000000e+04 : f32
    %1635 = vector.broadcast %cst_290 : f32 to vector<16x16xf32>
    %1636 = arith.minimumf %1634, %1635 : vector<16x16xf32>
    %1637 = vector.extract_strided_slice %1557 {offsets = [0, 1], sizes = [16, 16], strides = [1, 1]} : vector<16x30xf32> to vector<16x16xf32>
    %1638 = arith.subf %1637, %10 : vector<16x16xf32>
    %1639 = math.absf %1638 : vector<16x16xf32>
    %1640 = arith.mulf %1639, %1636 : vector<16x16xf32>
    %cst_291 = arith.constant 0.000000e+00 : f32
    %1641 = vector.broadcast %cst_291 : f32 to vector<16x16xf32>
    %1642 = arith.subf %1641, %1640 : vector<16x16xf32>
    %1643 = math.exp %1642 : vector<16x16xf32>
    %1644 = vector.broadcast %1610 : f32 to vector<16x16xf32>
    %1645 = arith.mulf %1644, %1632 : vector<16x16xf32>
    %1646 = arith.mulf %1645, %1643 : vector<16x16xf32>
    %1647 = vector.extract_strided_slice %1539 {offsets = [0, 1], sizes = [16, 16], strides = [1, 1]} : vector<16x30xf32> to vector<16x16xf32>
    %1648 = arith.mulf %1647, %1646 : vector<16x16xf32>
    %1649 = arith.addf %1600, %1648 : vector<16x16xf32>
    %1650 = vector.extract_strided_slice %1542 {offsets = [0, 1], sizes = [16, 16], strides = [1, 1]} : vector<16x30xf32> to vector<16x16xf32>
    %1651 = arith.mulf %1650, %1646 : vector<16x16xf32>
    %1652 = arith.addf %1603, %1651 : vector<16x16xf32>
    %1653 = vector.extract_strided_slice %1545 {offsets = [0, 1], sizes = [16, 16], strides = [1, 1]} : vector<16x30xf32> to vector<16x16xf32>
    %1654 = arith.mulf %1653, %1646 : vector<16x16xf32>
    %1655 = arith.addf %1606, %1654 : vector<16x16xf32>
    %1656 = arith.addf %1607, %1646 : vector<16x16xf32>
    %c2_i32_292 = arith.constant 2 : i32
    %1657 = arith.addi %1558, %c2_i32_292 : i32
    %1658 = arith.index_cast %1657 : i32 to index
    %1659 = memref.load %arg3[%1658] : memref<225xf32, #tpu.memory_space<smem>>
    %c2_i32_293 = arith.constant 2 : i32
    %1660 = arith.addi %1558, %c2_i32_293 : i32
    %1661 = arith.index_cast %1660 : i32 to index
    %1662 = memref.load %arg4[%1661] : memref<225xf32, #tpu.memory_space<smem>>
    %1663 = vector.extract_strided_slice %1548 {offsets = [0, 2], sizes = [16, 16], strides = [1, 1]} : vector<16x30xf32> to vector<16x16xf32>
    %1664 = arith.mulf %1663, %4 : vector<16x16xf32>
    %1665 = vector.extract_strided_slice %1551 {offsets = [0, 2], sizes = [16, 16], strides = [1, 1]} : vector<16x30xf32> to vector<16x16xf32>
    %1666 = arith.mulf %1665, %6 : vector<16x16xf32>
    %1667 = arith.addf %1664, %1666 : vector<16x16xf32>
    %1668 = vector.extract_strided_slice %1554 {offsets = [0, 2], sizes = [16, 16], strides = [1, 1]} : vector<16x30xf32> to vector<16x16xf32>
    %1669 = arith.mulf %1668, %8 : vector<16x16xf32>
    %1670 = arith.addf %1667, %1669 : vector<16x16xf32>
    %cst_294 = arith.constant 9.99999974E-5 : f32
    %cst_295 = arith.constant 1.000000e+00 : f32
    %1671 = vector.broadcast %cst_294 : f32 to vector<16x16xf32>
    %1672 = arith.maximumf %1671, %1670 : vector<16x16xf32>
    %1673 = vector.broadcast %cst_295 : f32 to vector<16x16xf32>
    %1674 = arith.minimumf %1673, %1672 : vector<16x16xf32>
    %1675 = arith.mulf %1674, %1674 : vector<16x16xf32>
    %1676 = arith.mulf %1675, %1675 : vector<16x16xf32>
    %1677 = arith.mulf %1676, %1676 : vector<16x16xf32>
    %1678 = arith.mulf %1677, %1677 : vector<16x16xf32>
    %1679 = arith.mulf %1678, %1678 : vector<16x16xf32>
    %1680 = arith.mulf %1679, %1679 : vector<16x16xf32>
    %1681 = arith.mulf %1680, %1680 : vector<16x16xf32>
    %1682 = vector.broadcast %1662 : f32 to vector<16x16xf32>
    %1683 = arith.mulf %12, %1682 : vector<16x16xf32>
    %cst_296 = arith.constant 1.000000e+04 : f32
    %1684 = vector.broadcast %cst_296 : f32 to vector<16x16xf32>
    %1685 = arith.minimumf %1683, %1684 : vector<16x16xf32>
    %1686 = vector.extract_strided_slice %1557 {offsets = [0, 2], sizes = [16, 16], strides = [1, 1]} : vector<16x30xf32> to vector<16x16xf32>
    %1687 = arith.subf %1686, %10 : vector<16x16xf32>
    %1688 = math.absf %1687 : vector<16x16xf32>
    %1689 = arith.mulf %1688, %1685 : vector<16x16xf32>
    %cst_297 = arith.constant 0.000000e+00 : f32
    %1690 = vector.broadcast %cst_297 : f32 to vector<16x16xf32>
    %1691 = arith.subf %1690, %1689 : vector<16x16xf32>
    %1692 = math.exp %1691 : vector<16x16xf32>
    %1693 = vector.broadcast %1659 : f32 to vector<16x16xf32>
    %1694 = arith.mulf %1693, %1681 : vector<16x16xf32>
    %1695 = arith.mulf %1694, %1692 : vector<16x16xf32>
    %1696 = vector.extract_strided_slice %1539 {offsets = [0, 2], sizes = [16, 16], strides = [1, 1]} : vector<16x30xf32> to vector<16x16xf32>
    %1697 = arith.mulf %1696, %1695 : vector<16x16xf32>
    %1698 = arith.addf %1649, %1697 : vector<16x16xf32>
    %1699 = vector.extract_strided_slice %1542 {offsets = [0, 2], sizes = [16, 16], strides = [1, 1]} : vector<16x30xf32> to vector<16x16xf32>
    %1700 = arith.mulf %1699, %1695 : vector<16x16xf32>
    %1701 = arith.addf %1652, %1700 : vector<16x16xf32>
    %1702 = vector.extract_strided_slice %1545 {offsets = [0, 2], sizes = [16, 16], strides = [1, 1]} : vector<16x30xf32> to vector<16x16xf32>
    %1703 = arith.mulf %1702, %1695 : vector<16x16xf32>
    %1704 = arith.addf %1655, %1703 : vector<16x16xf32>
    %1705 = arith.addf %1656, %1695 : vector<16x16xf32>
    %c3_i32_298 = arith.constant 3 : i32
    %1706 = arith.addi %1558, %c3_i32_298 : i32
    %1707 = arith.index_cast %1706 : i32 to index
    %1708 = memref.load %arg3[%1707] : memref<225xf32, #tpu.memory_space<smem>>
    %c3_i32_299 = arith.constant 3 : i32
    %1709 = arith.addi %1558, %c3_i32_299 : i32
    %1710 = arith.index_cast %1709 : i32 to index
    %1711 = memref.load %arg4[%1710] : memref<225xf32, #tpu.memory_space<smem>>
    %1712 = vector.extract_strided_slice %1548 {offsets = [0, 3], sizes = [16, 16], strides = [1, 1]} : vector<16x30xf32> to vector<16x16xf32>
    %1713 = arith.mulf %1712, %4 : vector<16x16xf32>
    %1714 = vector.extract_strided_slice %1551 {offsets = [0, 3], sizes = [16, 16], strides = [1, 1]} : vector<16x30xf32> to vector<16x16xf32>
    %1715 = arith.mulf %1714, %6 : vector<16x16xf32>
    %1716 = arith.addf %1713, %1715 : vector<16x16xf32>
    %1717 = vector.extract_strided_slice %1554 {offsets = [0, 3], sizes = [16, 16], strides = [1, 1]} : vector<16x30xf32> to vector<16x16xf32>
    %1718 = arith.mulf %1717, %8 : vector<16x16xf32>
    %1719 = arith.addf %1716, %1718 : vector<16x16xf32>
    %cst_300 = arith.constant 9.99999974E-5 : f32
    %cst_301 = arith.constant 1.000000e+00 : f32
    %1720 = vector.broadcast %cst_300 : f32 to vector<16x16xf32>
    %1721 = arith.maximumf %1720, %1719 : vector<16x16xf32>
    %1722 = vector.broadcast %cst_301 : f32 to vector<16x16xf32>
    %1723 = arith.minimumf %1722, %1721 : vector<16x16xf32>
    %1724 = arith.mulf %1723, %1723 : vector<16x16xf32>
    %1725 = arith.mulf %1724, %1724 : vector<16x16xf32>
    %1726 = arith.mulf %1725, %1725 : vector<16x16xf32>
    %1727 = arith.mulf %1726, %1726 : vector<16x16xf32>
    %1728 = arith.mulf %1727, %1727 : vector<16x16xf32>
    %1729 = arith.mulf %1728, %1728 : vector<16x16xf32>
    %1730 = arith.mulf %1729, %1729 : vector<16x16xf32>
    %1731 = vector.broadcast %1711 : f32 to vector<16x16xf32>
    %1732 = arith.mulf %12, %1731 : vector<16x16xf32>
    %cst_302 = arith.constant 1.000000e+04 : f32
    %1733 = vector.broadcast %cst_302 : f32 to vector<16x16xf32>
    %1734 = arith.minimumf %1732, %1733 : vector<16x16xf32>
    %1735 = vector.extract_strided_slice %1557 {offsets = [0, 3], sizes = [16, 16], strides = [1, 1]} : vector<16x30xf32> to vector<16x16xf32>
    %1736 = arith.subf %1735, %10 : vector<16x16xf32>
    %1737 = math.absf %1736 : vector<16x16xf32>
    %1738 = arith.mulf %1737, %1734 : vector<16x16xf32>
    %cst_303 = arith.constant 0.000000e+00 : f32
    %1739 = vector.broadcast %cst_303 : f32 to vector<16x16xf32>
    %1740 = arith.subf %1739, %1738 : vector<16x16xf32>
    %1741 = math.exp %1740 : vector<16x16xf32>
    %1742 = vector.broadcast %1708 : f32 to vector<16x16xf32>
    %1743 = arith.mulf %1742, %1730 : vector<16x16xf32>
    %1744 = arith.mulf %1743, %1741 : vector<16x16xf32>
    %1745 = vector.extract_strided_slice %1539 {offsets = [0, 3], sizes = [16, 16], strides = [1, 1]} : vector<16x30xf32> to vector<16x16xf32>
    %1746 = arith.mulf %1745, %1744 : vector<16x16xf32>
    %1747 = arith.addf %1698, %1746 : vector<16x16xf32>
    %1748 = vector.extract_strided_slice %1542 {offsets = [0, 3], sizes = [16, 16], strides = [1, 1]} : vector<16x30xf32> to vector<16x16xf32>
    %1749 = arith.mulf %1748, %1744 : vector<16x16xf32>
    %1750 = arith.addf %1701, %1749 : vector<16x16xf32>
    %1751 = vector.extract_strided_slice %1545 {offsets = [0, 3], sizes = [16, 16], strides = [1, 1]} : vector<16x30xf32> to vector<16x16xf32>
    %1752 = arith.mulf %1751, %1744 : vector<16x16xf32>
    %1753 = arith.addf %1704, %1752 : vector<16x16xf32>
    %1754 = arith.addf %1705, %1744 : vector<16x16xf32>
    %c4_i32_304 = arith.constant 4 : i32
    %1755 = arith.addi %1558, %c4_i32_304 : i32
    %1756 = arith.index_cast %1755 : i32 to index
    %1757 = memref.load %arg3[%1756] : memref<225xf32, #tpu.memory_space<smem>>
    %c4_i32_305 = arith.constant 4 : i32
    %1758 = arith.addi %1558, %c4_i32_305 : i32
    %1759 = arith.index_cast %1758 : i32 to index
    %1760 = memref.load %arg4[%1759] : memref<225xf32, #tpu.memory_space<smem>>
    %1761 = vector.extract_strided_slice %1548 {offsets = [0, 4], sizes = [16, 16], strides = [1, 1]} : vector<16x30xf32> to vector<16x16xf32>
    %1762 = arith.mulf %1761, %4 : vector<16x16xf32>
    %1763 = vector.extract_strided_slice %1551 {offsets = [0, 4], sizes = [16, 16], strides = [1, 1]} : vector<16x30xf32> to vector<16x16xf32>
    %1764 = arith.mulf %1763, %6 : vector<16x16xf32>
    %1765 = arith.addf %1762, %1764 : vector<16x16xf32>
    %1766 = vector.extract_strided_slice %1554 {offsets = [0, 4], sizes = [16, 16], strides = [1, 1]} : vector<16x30xf32> to vector<16x16xf32>
    %1767 = arith.mulf %1766, %8 : vector<16x16xf32>
    %1768 = arith.addf %1765, %1767 : vector<16x16xf32>
    %cst_306 = arith.constant 9.99999974E-5 : f32
    %cst_307 = arith.constant 1.000000e+00 : f32
    %1769 = vector.broadcast %cst_306 : f32 to vector<16x16xf32>
    %1770 = arith.maximumf %1769, %1768 : vector<16x16xf32>
    %1771 = vector.broadcast %cst_307 : f32 to vector<16x16xf32>
    %1772 = arith.minimumf %1771, %1770 : vector<16x16xf32>
    %1773 = arith.mulf %1772, %1772 : vector<16x16xf32>
    %1774 = arith.mulf %1773, %1773 : vector<16x16xf32>
    %1775 = arith.mulf %1774, %1774 : vector<16x16xf32>
    %1776 = arith.mulf %1775, %1775 : vector<16x16xf32>
    %1777 = arith.mulf %1776, %1776 : vector<16x16xf32>
    %1778 = arith.mulf %1777, %1777 : vector<16x16xf32>
    %1779 = arith.mulf %1778, %1778 : vector<16x16xf32>
    %1780 = vector.broadcast %1760 : f32 to vector<16x16xf32>
    %1781 = arith.mulf %12, %1780 : vector<16x16xf32>
    %cst_308 = arith.constant 1.000000e+04 : f32
    %1782 = vector.broadcast %cst_308 : f32 to vector<16x16xf32>
    %1783 = arith.minimumf %1781, %1782 : vector<16x16xf32>
    %1784 = vector.extract_strided_slice %1557 {offsets = [0, 4], sizes = [16, 16], strides = [1, 1]} : vector<16x30xf32> to vector<16x16xf32>
    %1785 = arith.subf %1784, %10 : vector<16x16xf32>
    %1786 = math.absf %1785 : vector<16x16xf32>
    %1787 = arith.mulf %1786, %1783 : vector<16x16xf32>
    %cst_309 = arith.constant 0.000000e+00 : f32
    %1788 = vector.broadcast %cst_309 : f32 to vector<16x16xf32>
    %1789 = arith.subf %1788, %1787 : vector<16x16xf32>
    %1790 = math.exp %1789 : vector<16x16xf32>
    %1791 = vector.broadcast %1757 : f32 to vector<16x16xf32>
    %1792 = arith.mulf %1791, %1779 : vector<16x16xf32>
    %1793 = arith.mulf %1792, %1790 : vector<16x16xf32>
    %1794 = vector.extract_strided_slice %1539 {offsets = [0, 4], sizes = [16, 16], strides = [1, 1]} : vector<16x30xf32> to vector<16x16xf32>
    %1795 = arith.mulf %1794, %1793 : vector<16x16xf32>
    %1796 = arith.addf %1747, %1795 : vector<16x16xf32>
    %1797 = vector.extract_strided_slice %1542 {offsets = [0, 4], sizes = [16, 16], strides = [1, 1]} : vector<16x30xf32> to vector<16x16xf32>
    %1798 = arith.mulf %1797, %1793 : vector<16x16xf32>
    %1799 = arith.addf %1750, %1798 : vector<16x16xf32>
    %1800 = vector.extract_strided_slice %1545 {offsets = [0, 4], sizes = [16, 16], strides = [1, 1]} : vector<16x30xf32> to vector<16x16xf32>
    %1801 = arith.mulf %1800, %1793 : vector<16x16xf32>
    %1802 = arith.addf %1753, %1801 : vector<16x16xf32>
    %1803 = arith.addf %1754, %1793 : vector<16x16xf32>
    %c5_i32_310 = arith.constant 5 : i32
    %1804 = arith.addi %1558, %c5_i32_310 : i32
    %1805 = arith.index_cast %1804 : i32 to index
    %1806 = memref.load %arg3[%1805] : memref<225xf32, #tpu.memory_space<smem>>
    %c5_i32_311 = arith.constant 5 : i32
    %1807 = arith.addi %1558, %c5_i32_311 : i32
    %1808 = arith.index_cast %1807 : i32 to index
    %1809 = memref.load %arg4[%1808] : memref<225xf32, #tpu.memory_space<smem>>
    %1810 = vector.extract_strided_slice %1548 {offsets = [0, 5], sizes = [16, 16], strides = [1, 1]} : vector<16x30xf32> to vector<16x16xf32>
    %1811 = arith.mulf %1810, %4 : vector<16x16xf32>
    %1812 = vector.extract_strided_slice %1551 {offsets = [0, 5], sizes = [16, 16], strides = [1, 1]} : vector<16x30xf32> to vector<16x16xf32>
    %1813 = arith.mulf %1812, %6 : vector<16x16xf32>
    %1814 = arith.addf %1811, %1813 : vector<16x16xf32>
    %1815 = vector.extract_strided_slice %1554 {offsets = [0, 5], sizes = [16, 16], strides = [1, 1]} : vector<16x30xf32> to vector<16x16xf32>
    %1816 = arith.mulf %1815, %8 : vector<16x16xf32>
    %1817 = arith.addf %1814, %1816 : vector<16x16xf32>
    %cst_312 = arith.constant 9.99999974E-5 : f32
    %cst_313 = arith.constant 1.000000e+00 : f32
    %1818 = vector.broadcast %cst_312 : f32 to vector<16x16xf32>
    %1819 = arith.maximumf %1818, %1817 : vector<16x16xf32>
    %1820 = vector.broadcast %cst_313 : f32 to vector<16x16xf32>
    %1821 = arith.minimumf %1820, %1819 : vector<16x16xf32>
    %1822 = arith.mulf %1821, %1821 : vector<16x16xf32>
    %1823 = arith.mulf %1822, %1822 : vector<16x16xf32>
    %1824 = arith.mulf %1823, %1823 : vector<16x16xf32>
    %1825 = arith.mulf %1824, %1824 : vector<16x16xf32>
    %1826 = arith.mulf %1825, %1825 : vector<16x16xf32>
    %1827 = arith.mulf %1826, %1826 : vector<16x16xf32>
    %1828 = arith.mulf %1827, %1827 : vector<16x16xf32>
    %1829 = vector.broadcast %1809 : f32 to vector<16x16xf32>
    %1830 = arith.mulf %12, %1829 : vector<16x16xf32>
    %cst_314 = arith.constant 1.000000e+04 : f32
    %1831 = vector.broadcast %cst_314 : f32 to vector<16x16xf32>
    %1832 = arith.minimumf %1830, %1831 : vector<16x16xf32>
    %1833 = vector.extract_strided_slice %1557 {offsets = [0, 5], sizes = [16, 16], strides = [1, 1]} : vector<16x30xf32> to vector<16x16xf32>
    %1834 = arith.subf %1833, %10 : vector<16x16xf32>
    %1835 = math.absf %1834 : vector<16x16xf32>
    %1836 = arith.mulf %1835, %1832 : vector<16x16xf32>
    %cst_315 = arith.constant 0.000000e+00 : f32
    %1837 = vector.broadcast %cst_315 : f32 to vector<16x16xf32>
    %1838 = arith.subf %1837, %1836 : vector<16x16xf32>
    %1839 = math.exp %1838 : vector<16x16xf32>
    %1840 = vector.broadcast %1806 : f32 to vector<16x16xf32>
    %1841 = arith.mulf %1840, %1828 : vector<16x16xf32>
    %1842 = arith.mulf %1841, %1839 : vector<16x16xf32>
    %1843 = vector.extract_strided_slice %1539 {offsets = [0, 5], sizes = [16, 16], strides = [1, 1]} : vector<16x30xf32> to vector<16x16xf32>
    %1844 = arith.mulf %1843, %1842 : vector<16x16xf32>
    %1845 = arith.addf %1796, %1844 : vector<16x16xf32>
    %1846 = vector.extract_strided_slice %1542 {offsets = [0, 5], sizes = [16, 16], strides = [1, 1]} : vector<16x30xf32> to vector<16x16xf32>
    %1847 = arith.mulf %1846, %1842 : vector<16x16xf32>
    %1848 = arith.addf %1799, %1847 : vector<16x16xf32>
    %1849 = vector.extract_strided_slice %1545 {offsets = [0, 5], sizes = [16, 16], strides = [1, 1]} : vector<16x30xf32> to vector<16x16xf32>
    %1850 = arith.mulf %1849, %1842 : vector<16x16xf32>
    %1851 = arith.addf %1802, %1850 : vector<16x16xf32>
    %1852 = arith.addf %1803, %1842 : vector<16x16xf32>
    %c6_i32_316 = arith.constant 6 : i32
    %1853 = arith.addi %1558, %c6_i32_316 : i32
    %1854 = arith.index_cast %1853 : i32 to index
    %1855 = memref.load %arg3[%1854] : memref<225xf32, #tpu.memory_space<smem>>
    %c6_i32_317 = arith.constant 6 : i32
    %1856 = arith.addi %1558, %c6_i32_317 : i32
    %1857 = arith.index_cast %1856 : i32 to index
    %1858 = memref.load %arg4[%1857] : memref<225xf32, #tpu.memory_space<smem>>
    %1859 = vector.extract_strided_slice %1548 {offsets = [0, 6], sizes = [16, 16], strides = [1, 1]} : vector<16x30xf32> to vector<16x16xf32>
    %1860 = arith.mulf %1859, %4 : vector<16x16xf32>
    %1861 = vector.extract_strided_slice %1551 {offsets = [0, 6], sizes = [16, 16], strides = [1, 1]} : vector<16x30xf32> to vector<16x16xf32>
    %1862 = arith.mulf %1861, %6 : vector<16x16xf32>
    %1863 = arith.addf %1860, %1862 : vector<16x16xf32>
    %1864 = vector.extract_strided_slice %1554 {offsets = [0, 6], sizes = [16, 16], strides = [1, 1]} : vector<16x30xf32> to vector<16x16xf32>
    %1865 = arith.mulf %1864, %8 : vector<16x16xf32>
    %1866 = arith.addf %1863, %1865 : vector<16x16xf32>
    %cst_318 = arith.constant 9.99999974E-5 : f32
    %cst_319 = arith.constant 1.000000e+00 : f32
    %1867 = vector.broadcast %cst_318 : f32 to vector<16x16xf32>
    %1868 = arith.maximumf %1867, %1866 : vector<16x16xf32>
    %1869 = vector.broadcast %cst_319 : f32 to vector<16x16xf32>
    %1870 = arith.minimumf %1869, %1868 : vector<16x16xf32>
    %1871 = arith.mulf %1870, %1870 : vector<16x16xf32>
    %1872 = arith.mulf %1871, %1871 : vector<16x16xf32>
    %1873 = arith.mulf %1872, %1872 : vector<16x16xf32>
    %1874 = arith.mulf %1873, %1873 : vector<16x16xf32>
    %1875 = arith.mulf %1874, %1874 : vector<16x16xf32>
    %1876 = arith.mulf %1875, %1875 : vector<16x16xf32>
    %1877 = arith.mulf %1876, %1876 : vector<16x16xf32>
    %1878 = vector.broadcast %1858 : f32 to vector<16x16xf32>
    %1879 = arith.mulf %12, %1878 : vector<16x16xf32>
    %cst_320 = arith.constant 1.000000e+04 : f32
    %1880 = vector.broadcast %cst_320 : f32 to vector<16x16xf32>
    %1881 = arith.minimumf %1879, %1880 : vector<16x16xf32>
    %1882 = vector.extract_strided_slice %1557 {offsets = [0, 6], sizes = [16, 16], strides = [1, 1]} : vector<16x30xf32> to vector<16x16xf32>
    %1883 = arith.subf %1882, %10 : vector<16x16xf32>
    %1884 = math.absf %1883 : vector<16x16xf32>
    %1885 = arith.mulf %1884, %1881 : vector<16x16xf32>
    %cst_321 = arith.constant 0.000000e+00 : f32
    %1886 = vector.broadcast %cst_321 : f32 to vector<16x16xf32>
    %1887 = arith.subf %1886, %1885 : vector<16x16xf32>
    %1888 = math.exp %1887 : vector<16x16xf32>
    %1889 = vector.broadcast %1855 : f32 to vector<16x16xf32>
    %1890 = arith.mulf %1889, %1877 : vector<16x16xf32>
    %1891 = arith.mulf %1890, %1888 : vector<16x16xf32>
    %1892 = vector.extract_strided_slice %1539 {offsets = [0, 6], sizes = [16, 16], strides = [1, 1]} : vector<16x30xf32> to vector<16x16xf32>
    %1893 = arith.mulf %1892, %1891 : vector<16x16xf32>
    %1894 = arith.addf %1845, %1893 : vector<16x16xf32>
    %1895 = vector.extract_strided_slice %1542 {offsets = [0, 6], sizes = [16, 16], strides = [1, 1]} : vector<16x30xf32> to vector<16x16xf32>
    %1896 = arith.mulf %1895, %1891 : vector<16x16xf32>
    %1897 = arith.addf %1848, %1896 : vector<16x16xf32>
    %1898 = vector.extract_strided_slice %1545 {offsets = [0, 6], sizes = [16, 16], strides = [1, 1]} : vector<16x30xf32> to vector<16x16xf32>
    %1899 = arith.mulf %1898, %1891 : vector<16x16xf32>
    %1900 = arith.addf %1851, %1899 : vector<16x16xf32>
    %1901 = arith.addf %1852, %1891 : vector<16x16xf32>
    %c7_i32_322 = arith.constant 7 : i32
    %1902 = arith.addi %1558, %c7_i32_322 : i32
    %1903 = arith.index_cast %1902 : i32 to index
    %1904 = memref.load %arg3[%1903] : memref<225xf32, #tpu.memory_space<smem>>
    %c7_i32_323 = arith.constant 7 : i32
    %1905 = arith.addi %1558, %c7_i32_323 : i32
    %1906 = arith.index_cast %1905 : i32 to index
    %1907 = memref.load %arg4[%1906] : memref<225xf32, #tpu.memory_space<smem>>
    %1908 = vector.extract_strided_slice %1548 {offsets = [0, 7], sizes = [16, 16], strides = [1, 1]} : vector<16x30xf32> to vector<16x16xf32>
    %1909 = arith.mulf %1908, %4 : vector<16x16xf32>
    %1910 = vector.extract_strided_slice %1551 {offsets = [0, 7], sizes = [16, 16], strides = [1, 1]} : vector<16x30xf32> to vector<16x16xf32>
    %1911 = arith.mulf %1910, %6 : vector<16x16xf32>
    %1912 = arith.addf %1909, %1911 : vector<16x16xf32>
    %1913 = vector.extract_strided_slice %1554 {offsets = [0, 7], sizes = [16, 16], strides = [1, 1]} : vector<16x30xf32> to vector<16x16xf32>
    %1914 = arith.mulf %1913, %8 : vector<16x16xf32>
    %1915 = arith.addf %1912, %1914 : vector<16x16xf32>
    %cst_324 = arith.constant 9.99999974E-5 : f32
    %cst_325 = arith.constant 1.000000e+00 : f32
    %1916 = vector.broadcast %cst_324 : f32 to vector<16x16xf32>
    %1917 = arith.maximumf %1916, %1915 : vector<16x16xf32>
    %1918 = vector.broadcast %cst_325 : f32 to vector<16x16xf32>
    %1919 = arith.minimumf %1918, %1917 : vector<16x16xf32>
    %1920 = arith.mulf %1919, %1919 : vector<16x16xf32>
    %1921 = arith.mulf %1920, %1920 : vector<16x16xf32>
    %1922 = arith.mulf %1921, %1921 : vector<16x16xf32>
    %1923 = arith.mulf %1922, %1922 : vector<16x16xf32>
    %1924 = arith.mulf %1923, %1923 : vector<16x16xf32>
    %1925 = arith.mulf %1924, %1924 : vector<16x16xf32>
    %1926 = arith.mulf %1925, %1925 : vector<16x16xf32>
    %1927 = vector.broadcast %1907 : f32 to vector<16x16xf32>
    %1928 = arith.mulf %12, %1927 : vector<16x16xf32>
    %cst_326 = arith.constant 1.000000e+04 : f32
    %1929 = vector.broadcast %cst_326 : f32 to vector<16x16xf32>
    %1930 = arith.minimumf %1928, %1929 : vector<16x16xf32>
    %1931 = vector.extract_strided_slice %1557 {offsets = [0, 7], sizes = [16, 16], strides = [1, 1]} : vector<16x30xf32> to vector<16x16xf32>
    %1932 = arith.subf %1931, %10 : vector<16x16xf32>
    %1933 = math.absf %1932 : vector<16x16xf32>
    %1934 = arith.mulf %1933, %1930 : vector<16x16xf32>
    %cst_327 = arith.constant 0.000000e+00 : f32
    %1935 = vector.broadcast %cst_327 : f32 to vector<16x16xf32>
    %1936 = arith.subf %1935, %1934 : vector<16x16xf32>
    %1937 = math.exp %1936 : vector<16x16xf32>
    %1938 = vector.broadcast %1904 : f32 to vector<16x16xf32>
    %1939 = arith.mulf %1938, %1926 : vector<16x16xf32>
    %1940 = arith.mulf %1939, %1937 : vector<16x16xf32>
    %1941 = vector.extract_strided_slice %1539 {offsets = [0, 7], sizes = [16, 16], strides = [1, 1]} : vector<16x30xf32> to vector<16x16xf32>
    %1942 = arith.mulf %1941, %1940 : vector<16x16xf32>
    %1943 = arith.addf %1894, %1942 : vector<16x16xf32>
    %1944 = vector.extract_strided_slice %1542 {offsets = [0, 7], sizes = [16, 16], strides = [1, 1]} : vector<16x30xf32> to vector<16x16xf32>
    %1945 = arith.mulf %1944, %1940 : vector<16x16xf32>
    %1946 = arith.addf %1897, %1945 : vector<16x16xf32>
    %1947 = vector.extract_strided_slice %1545 {offsets = [0, 7], sizes = [16, 16], strides = [1, 1]} : vector<16x30xf32> to vector<16x16xf32>
    %1948 = arith.mulf %1947, %1940 : vector<16x16xf32>
    %1949 = arith.addf %1900, %1948 : vector<16x16xf32>
    %1950 = arith.addf %1901, %1940 : vector<16x16xf32>
    %c8_i32_328 = arith.constant 8 : i32
    %1951 = arith.addi %1558, %c8_i32_328 : i32
    %1952 = arith.index_cast %1951 : i32 to index
    %1953 = memref.load %arg3[%1952] : memref<225xf32, #tpu.memory_space<smem>>
    %c8_i32_329 = arith.constant 8 : i32
    %1954 = arith.addi %1558, %c8_i32_329 : i32
    %1955 = arith.index_cast %1954 : i32 to index
    %1956 = memref.load %arg4[%1955] : memref<225xf32, #tpu.memory_space<smem>>
    %1957 = vector.extract_strided_slice %1548 {offsets = [0, 8], sizes = [16, 16], strides = [1, 1]} : vector<16x30xf32> to vector<16x16xf32>
    %1958 = arith.mulf %1957, %4 : vector<16x16xf32>
    %1959 = vector.extract_strided_slice %1551 {offsets = [0, 8], sizes = [16, 16], strides = [1, 1]} : vector<16x30xf32> to vector<16x16xf32>
    %1960 = arith.mulf %1959, %6 : vector<16x16xf32>
    %1961 = arith.addf %1958, %1960 : vector<16x16xf32>
    %1962 = vector.extract_strided_slice %1554 {offsets = [0, 8], sizes = [16, 16], strides = [1, 1]} : vector<16x30xf32> to vector<16x16xf32>
    %1963 = arith.mulf %1962, %8 : vector<16x16xf32>
    %1964 = arith.addf %1961, %1963 : vector<16x16xf32>
    %cst_330 = arith.constant 9.99999974E-5 : f32
    %cst_331 = arith.constant 1.000000e+00 : f32
    %1965 = vector.broadcast %cst_330 : f32 to vector<16x16xf32>
    %1966 = arith.maximumf %1965, %1964 : vector<16x16xf32>
    %1967 = vector.broadcast %cst_331 : f32 to vector<16x16xf32>
    %1968 = arith.minimumf %1967, %1966 : vector<16x16xf32>
    %1969 = arith.mulf %1968, %1968 : vector<16x16xf32>
    %1970 = arith.mulf %1969, %1969 : vector<16x16xf32>
    %1971 = arith.mulf %1970, %1970 : vector<16x16xf32>
    %1972 = arith.mulf %1971, %1971 : vector<16x16xf32>
    %1973 = arith.mulf %1972, %1972 : vector<16x16xf32>
    %1974 = arith.mulf %1973, %1973 : vector<16x16xf32>
    %1975 = arith.mulf %1974, %1974 : vector<16x16xf32>
    %1976 = vector.broadcast %1956 : f32 to vector<16x16xf32>
    %1977 = arith.mulf %12, %1976 : vector<16x16xf32>
    %cst_332 = arith.constant 1.000000e+04 : f32
    %1978 = vector.broadcast %cst_332 : f32 to vector<16x16xf32>
    %1979 = arith.minimumf %1977, %1978 : vector<16x16xf32>
    %1980 = vector.extract_strided_slice %1557 {offsets = [0, 8], sizes = [16, 16], strides = [1, 1]} : vector<16x30xf32> to vector<16x16xf32>
    %1981 = arith.subf %1980, %10 : vector<16x16xf32>
    %1982 = math.absf %1981 : vector<16x16xf32>
    %1983 = arith.mulf %1982, %1979 : vector<16x16xf32>
    %cst_333 = arith.constant 0.000000e+00 : f32
    %1984 = vector.broadcast %cst_333 : f32 to vector<16x16xf32>
    %1985 = arith.subf %1984, %1983 : vector<16x16xf32>
    %1986 = math.exp %1985 : vector<16x16xf32>
    %1987 = vector.broadcast %1953 : f32 to vector<16x16xf32>
    %1988 = arith.mulf %1987, %1975 : vector<16x16xf32>
    %1989 = arith.mulf %1988, %1986 : vector<16x16xf32>
    %1990 = vector.extract_strided_slice %1539 {offsets = [0, 8], sizes = [16, 16], strides = [1, 1]} : vector<16x30xf32> to vector<16x16xf32>
    %1991 = arith.mulf %1990, %1989 : vector<16x16xf32>
    %1992 = arith.addf %1943, %1991 : vector<16x16xf32>
    %1993 = vector.extract_strided_slice %1542 {offsets = [0, 8], sizes = [16, 16], strides = [1, 1]} : vector<16x30xf32> to vector<16x16xf32>
    %1994 = arith.mulf %1993, %1989 : vector<16x16xf32>
    %1995 = arith.addf %1946, %1994 : vector<16x16xf32>
    %1996 = vector.extract_strided_slice %1545 {offsets = [0, 8], sizes = [16, 16], strides = [1, 1]} : vector<16x30xf32> to vector<16x16xf32>
    %1997 = arith.mulf %1996, %1989 : vector<16x16xf32>
    %1998 = arith.addf %1949, %1997 : vector<16x16xf32>
    %1999 = arith.addf %1950, %1989 : vector<16x16xf32>
    %c9_i32_334 = arith.constant 9 : i32
    %2000 = arith.addi %1558, %c9_i32_334 : i32
    %2001 = arith.index_cast %2000 : i32 to index
    %2002 = memref.load %arg3[%2001] : memref<225xf32, #tpu.memory_space<smem>>
    %c9_i32_335 = arith.constant 9 : i32
    %2003 = arith.addi %1558, %c9_i32_335 : i32
    %2004 = arith.index_cast %2003 : i32 to index
    %2005 = memref.load %arg4[%2004] : memref<225xf32, #tpu.memory_space<smem>>
    %2006 = vector.extract_strided_slice %1548 {offsets = [0, 9], sizes = [16, 16], strides = [1, 1]} : vector<16x30xf32> to vector<16x16xf32>
    %2007 = arith.mulf %2006, %4 : vector<16x16xf32>
    %2008 = vector.extract_strided_slice %1551 {offsets = [0, 9], sizes = [16, 16], strides = [1, 1]} : vector<16x30xf32> to vector<16x16xf32>
    %2009 = arith.mulf %2008, %6 : vector<16x16xf32>
    %2010 = arith.addf %2007, %2009 : vector<16x16xf32>
    %2011 = vector.extract_strided_slice %1554 {offsets = [0, 9], sizes = [16, 16], strides = [1, 1]} : vector<16x30xf32> to vector<16x16xf32>
    %2012 = arith.mulf %2011, %8 : vector<16x16xf32>
    %2013 = arith.addf %2010, %2012 : vector<16x16xf32>
    %cst_336 = arith.constant 9.99999974E-5 : f32
    %cst_337 = arith.constant 1.000000e+00 : f32
    %2014 = vector.broadcast %cst_336 : f32 to vector<16x16xf32>
    %2015 = arith.maximumf %2014, %2013 : vector<16x16xf32>
    %2016 = vector.broadcast %cst_337 : f32 to vector<16x16xf32>
    %2017 = arith.minimumf %2016, %2015 : vector<16x16xf32>
    %2018 = arith.mulf %2017, %2017 : vector<16x16xf32>
    %2019 = arith.mulf %2018, %2018 : vector<16x16xf32>
    %2020 = arith.mulf %2019, %2019 : vector<16x16xf32>
    %2021 = arith.mulf %2020, %2020 : vector<16x16xf32>
    %2022 = arith.mulf %2021, %2021 : vector<16x16xf32>
    %2023 = arith.mulf %2022, %2022 : vector<16x16xf32>
    %2024 = arith.mulf %2023, %2023 : vector<16x16xf32>
    %2025 = vector.broadcast %2005 : f32 to vector<16x16xf32>
    %2026 = arith.mulf %12, %2025 : vector<16x16xf32>
    %cst_338 = arith.constant 1.000000e+04 : f32
    %2027 = vector.broadcast %cst_338 : f32 to vector<16x16xf32>
    %2028 = arith.minimumf %2026, %2027 : vector<16x16xf32>
    %2029 = vector.extract_strided_slice %1557 {offsets = [0, 9], sizes = [16, 16], strides = [1, 1]} : vector<16x30xf32> to vector<16x16xf32>
    %2030 = arith.subf %2029, %10 : vector<16x16xf32>
    %2031 = math.absf %2030 : vector<16x16xf32>
    %2032 = arith.mulf %2031, %2028 : vector<16x16xf32>
    %cst_339 = arith.constant 0.000000e+00 : f32
    %2033 = vector.broadcast %cst_339 : f32 to vector<16x16xf32>
    %2034 = arith.subf %2033, %2032 : vector<16x16xf32>
    %2035 = math.exp %2034 : vector<16x16xf32>
    %2036 = vector.broadcast %2002 : f32 to vector<16x16xf32>
    %2037 = arith.mulf %2036, %2024 : vector<16x16xf32>
    %2038 = arith.mulf %2037, %2035 : vector<16x16xf32>
    %2039 = vector.extract_strided_slice %1539 {offsets = [0, 9], sizes = [16, 16], strides = [1, 1]} : vector<16x30xf32> to vector<16x16xf32>
    %2040 = arith.mulf %2039, %2038 : vector<16x16xf32>
    %2041 = arith.addf %1992, %2040 : vector<16x16xf32>
    %2042 = vector.extract_strided_slice %1542 {offsets = [0, 9], sizes = [16, 16], strides = [1, 1]} : vector<16x30xf32> to vector<16x16xf32>
    %2043 = arith.mulf %2042, %2038 : vector<16x16xf32>
    %2044 = arith.addf %1995, %2043 : vector<16x16xf32>
    %2045 = vector.extract_strided_slice %1545 {offsets = [0, 9], sizes = [16, 16], strides = [1, 1]} : vector<16x30xf32> to vector<16x16xf32>
    %2046 = arith.mulf %2045, %2038 : vector<16x16xf32>
    %2047 = arith.addf %1998, %2046 : vector<16x16xf32>
    %2048 = arith.addf %1999, %2038 : vector<16x16xf32>
    %c10_i32_340 = arith.constant 10 : i32
    %2049 = arith.addi %1558, %c10_i32_340 : i32
    %2050 = arith.index_cast %2049 : i32 to index
    %2051 = memref.load %arg3[%2050] : memref<225xf32, #tpu.memory_space<smem>>
    %c10_i32_341 = arith.constant 10 : i32
    %2052 = arith.addi %1558, %c10_i32_341 : i32
    %2053 = arith.index_cast %2052 : i32 to index
    %2054 = memref.load %arg4[%2053] : memref<225xf32, #tpu.memory_space<smem>>
    %2055 = vector.extract_strided_slice %1548 {offsets = [0, 10], sizes = [16, 16], strides = [1, 1]} : vector<16x30xf32> to vector<16x16xf32>
    %2056 = arith.mulf %2055, %4 : vector<16x16xf32>
    %2057 = vector.extract_strided_slice %1551 {offsets = [0, 10], sizes = [16, 16], strides = [1, 1]} : vector<16x30xf32> to vector<16x16xf32>
    %2058 = arith.mulf %2057, %6 : vector<16x16xf32>
    %2059 = arith.addf %2056, %2058 : vector<16x16xf32>
    %2060 = vector.extract_strided_slice %1554 {offsets = [0, 10], sizes = [16, 16], strides = [1, 1]} : vector<16x30xf32> to vector<16x16xf32>
    %2061 = arith.mulf %2060, %8 : vector<16x16xf32>
    %2062 = arith.addf %2059, %2061 : vector<16x16xf32>
    %cst_342 = arith.constant 9.99999974E-5 : f32
    %cst_343 = arith.constant 1.000000e+00 : f32
    %2063 = vector.broadcast %cst_342 : f32 to vector<16x16xf32>
    %2064 = arith.maximumf %2063, %2062 : vector<16x16xf32>
    %2065 = vector.broadcast %cst_343 : f32 to vector<16x16xf32>
    %2066 = arith.minimumf %2065, %2064 : vector<16x16xf32>
    %2067 = arith.mulf %2066, %2066 : vector<16x16xf32>
    %2068 = arith.mulf %2067, %2067 : vector<16x16xf32>
    %2069 = arith.mulf %2068, %2068 : vector<16x16xf32>
    %2070 = arith.mulf %2069, %2069 : vector<16x16xf32>
    %2071 = arith.mulf %2070, %2070 : vector<16x16xf32>
    %2072 = arith.mulf %2071, %2071 : vector<16x16xf32>
    %2073 = arith.mulf %2072, %2072 : vector<16x16xf32>
    %2074 = vector.broadcast %2054 : f32 to vector<16x16xf32>
    %2075 = arith.mulf %12, %2074 : vector<16x16xf32>
    %cst_344 = arith.constant 1.000000e+04 : f32
    %2076 = vector.broadcast %cst_344 : f32 to vector<16x16xf32>
    %2077 = arith.minimumf %2075, %2076 : vector<16x16xf32>
    %2078 = vector.extract_strided_slice %1557 {offsets = [0, 10], sizes = [16, 16], strides = [1, 1]} : vector<16x30xf32> to vector<16x16xf32>
    %2079 = arith.subf %2078, %10 : vector<16x16xf32>
    %2080 = math.absf %2079 : vector<16x16xf32>
    %2081 = arith.mulf %2080, %2077 : vector<16x16xf32>
    %cst_345 = arith.constant 0.000000e+00 : f32
    %2082 = vector.broadcast %cst_345 : f32 to vector<16x16xf32>
    %2083 = arith.subf %2082, %2081 : vector<16x16xf32>
    %2084 = math.exp %2083 : vector<16x16xf32>
    %2085 = vector.broadcast %2051 : f32 to vector<16x16xf32>
    %2086 = arith.mulf %2085, %2073 : vector<16x16xf32>
    %2087 = arith.mulf %2086, %2084 : vector<16x16xf32>
    %2088 = vector.extract_strided_slice %1539 {offsets = [0, 10], sizes = [16, 16], strides = [1, 1]} : vector<16x30xf32> to vector<16x16xf32>
    %2089 = arith.mulf %2088, %2087 : vector<16x16xf32>
    %2090 = arith.addf %2041, %2089 : vector<16x16xf32>
    %2091 = vector.extract_strided_slice %1542 {offsets = [0, 10], sizes = [16, 16], strides = [1, 1]} : vector<16x30xf32> to vector<16x16xf32>
    %2092 = arith.mulf %2091, %2087 : vector<16x16xf32>
    %2093 = arith.addf %2044, %2092 : vector<16x16xf32>
    %2094 = vector.extract_strided_slice %1545 {offsets = [0, 10], sizes = [16, 16], strides = [1, 1]} : vector<16x30xf32> to vector<16x16xf32>
    %2095 = arith.mulf %2094, %2087 : vector<16x16xf32>
    %2096 = arith.addf %2047, %2095 : vector<16x16xf32>
    %2097 = arith.addf %2048, %2087 : vector<16x16xf32>
    %c11_i32_346 = arith.constant 11 : i32
    %2098 = arith.addi %1558, %c11_i32_346 : i32
    %2099 = arith.index_cast %2098 : i32 to index
    %2100 = memref.load %arg3[%2099] : memref<225xf32, #tpu.memory_space<smem>>
    %c11_i32_347 = arith.constant 11 : i32
    %2101 = arith.addi %1558, %c11_i32_347 : i32
    %2102 = arith.index_cast %2101 : i32 to index
    %2103 = memref.load %arg4[%2102] : memref<225xf32, #tpu.memory_space<smem>>
    %2104 = vector.extract_strided_slice %1548 {offsets = [0, 11], sizes = [16, 16], strides = [1, 1]} : vector<16x30xf32> to vector<16x16xf32>
    %2105 = arith.mulf %2104, %4 : vector<16x16xf32>
    %2106 = vector.extract_strided_slice %1551 {offsets = [0, 11], sizes = [16, 16], strides = [1, 1]} : vector<16x30xf32> to vector<16x16xf32>
    %2107 = arith.mulf %2106, %6 : vector<16x16xf32>
    %2108 = arith.addf %2105, %2107 : vector<16x16xf32>
    %2109 = vector.extract_strided_slice %1554 {offsets = [0, 11], sizes = [16, 16], strides = [1, 1]} : vector<16x30xf32> to vector<16x16xf32>
    %2110 = arith.mulf %2109, %8 : vector<16x16xf32>
    %2111 = arith.addf %2108, %2110 : vector<16x16xf32>
    %cst_348 = arith.constant 9.99999974E-5 : f32
    %cst_349 = arith.constant 1.000000e+00 : f32
    %2112 = vector.broadcast %cst_348 : f32 to vector<16x16xf32>
    %2113 = arith.maximumf %2112, %2111 : vector<16x16xf32>
    %2114 = vector.broadcast %cst_349 : f32 to vector<16x16xf32>
    %2115 = arith.minimumf %2114, %2113 : vector<16x16xf32>
    %2116 = arith.mulf %2115, %2115 : vector<16x16xf32>
    %2117 = arith.mulf %2116, %2116 : vector<16x16xf32>
    %2118 = arith.mulf %2117, %2117 : vector<16x16xf32>
    %2119 = arith.mulf %2118, %2118 : vector<16x16xf32>
    %2120 = arith.mulf %2119, %2119 : vector<16x16xf32>
    %2121 = arith.mulf %2120, %2120 : vector<16x16xf32>
    %2122 = arith.mulf %2121, %2121 : vector<16x16xf32>
    %2123 = vector.broadcast %2103 : f32 to vector<16x16xf32>
    %2124 = arith.mulf %12, %2123 : vector<16x16xf32>
    %cst_350 = arith.constant 1.000000e+04 : f32
    %2125 = vector.broadcast %cst_350 : f32 to vector<16x16xf32>
    %2126 = arith.minimumf %2124, %2125 : vector<16x16xf32>
    %2127 = vector.extract_strided_slice %1557 {offsets = [0, 11], sizes = [16, 16], strides = [1, 1]} : vector<16x30xf32> to vector<16x16xf32>
    %2128 = arith.subf %2127, %10 : vector<16x16xf32>
    %2129 = math.absf %2128 : vector<16x16xf32>
    %2130 = arith.mulf %2129, %2126 : vector<16x16xf32>
    %cst_351 = arith.constant 0.000000e+00 : f32
    %2131 = vector.broadcast %cst_351 : f32 to vector<16x16xf32>
    %2132 = arith.subf %2131, %2130 : vector<16x16xf32>
    %2133 = math.exp %2132 : vector<16x16xf32>
    %2134 = vector.broadcast %2100 : f32 to vector<16x16xf32>
    %2135 = arith.mulf %2134, %2122 : vector<16x16xf32>
    %2136 = arith.mulf %2135, %2133 : vector<16x16xf32>
    %2137 = vector.extract_strided_slice %1539 {offsets = [0, 11], sizes = [16, 16], strides = [1, 1]} : vector<16x30xf32> to vector<16x16xf32>
    %2138 = arith.mulf %2137, %2136 : vector<16x16xf32>
    %2139 = arith.addf %2090, %2138 : vector<16x16xf32>
    %2140 = vector.extract_strided_slice %1542 {offsets = [0, 11], sizes = [16, 16], strides = [1, 1]} : vector<16x30xf32> to vector<16x16xf32>
    %2141 = arith.mulf %2140, %2136 : vector<16x16xf32>
    %2142 = arith.addf %2093, %2141 : vector<16x16xf32>
    %2143 = vector.extract_strided_slice %1545 {offsets = [0, 11], sizes = [16, 16], strides = [1, 1]} : vector<16x30xf32> to vector<16x16xf32>
    %2144 = arith.mulf %2143, %2136 : vector<16x16xf32>
    %2145 = arith.addf %2096, %2144 : vector<16x16xf32>
    %2146 = arith.addf %2097, %2136 : vector<16x16xf32>
    %c12_i32_352 = arith.constant 12 : i32
    %2147 = arith.addi %1558, %c12_i32_352 : i32
    %2148 = arith.index_cast %2147 : i32 to index
    %2149 = memref.load %arg3[%2148] : memref<225xf32, #tpu.memory_space<smem>>
    %c12_i32_353 = arith.constant 12 : i32
    %2150 = arith.addi %1558, %c12_i32_353 : i32
    %2151 = arith.index_cast %2150 : i32 to index
    %2152 = memref.load %arg4[%2151] : memref<225xf32, #tpu.memory_space<smem>>
    %2153 = vector.extract_strided_slice %1548 {offsets = [0, 12], sizes = [16, 16], strides = [1, 1]} : vector<16x30xf32> to vector<16x16xf32>
    %2154 = arith.mulf %2153, %4 : vector<16x16xf32>
    %2155 = vector.extract_strided_slice %1551 {offsets = [0, 12], sizes = [16, 16], strides = [1, 1]} : vector<16x30xf32> to vector<16x16xf32>
    %2156 = arith.mulf %2155, %6 : vector<16x16xf32>
    %2157 = arith.addf %2154, %2156 : vector<16x16xf32>
    %2158 = vector.extract_strided_slice %1554 {offsets = [0, 12], sizes = [16, 16], strides = [1, 1]} : vector<16x30xf32> to vector<16x16xf32>
    %2159 = arith.mulf %2158, %8 : vector<16x16xf32>
    %2160 = arith.addf %2157, %2159 : vector<16x16xf32>
    %cst_354 = arith.constant 9.99999974E-5 : f32
    %cst_355 = arith.constant 1.000000e+00 : f32
    %2161 = vector.broadcast %cst_354 : f32 to vector<16x16xf32>
    %2162 = arith.maximumf %2161, %2160 : vector<16x16xf32>
    %2163 = vector.broadcast %cst_355 : f32 to vector<16x16xf32>
    %2164 = arith.minimumf %2163, %2162 : vector<16x16xf32>
    %2165 = arith.mulf %2164, %2164 : vector<16x16xf32>
    %2166 = arith.mulf %2165, %2165 : vector<16x16xf32>
    %2167 = arith.mulf %2166, %2166 : vector<16x16xf32>
    %2168 = arith.mulf %2167, %2167 : vector<16x16xf32>
    %2169 = arith.mulf %2168, %2168 : vector<16x16xf32>
    %2170 = arith.mulf %2169, %2169 : vector<16x16xf32>
    %2171 = arith.mulf %2170, %2170 : vector<16x16xf32>
    %2172 = vector.broadcast %2152 : f32 to vector<16x16xf32>
    %2173 = arith.mulf %12, %2172 : vector<16x16xf32>
    %cst_356 = arith.constant 1.000000e+04 : f32
    %2174 = vector.broadcast %cst_356 : f32 to vector<16x16xf32>
    %2175 = arith.minimumf %2173, %2174 : vector<16x16xf32>
    %2176 = vector.extract_strided_slice %1557 {offsets = [0, 12], sizes = [16, 16], strides = [1, 1]} : vector<16x30xf32> to vector<16x16xf32>
    %2177 = arith.subf %2176, %10 : vector<16x16xf32>
    %2178 = math.absf %2177 : vector<16x16xf32>
    %2179 = arith.mulf %2178, %2175 : vector<16x16xf32>
    %cst_357 = arith.constant 0.000000e+00 : f32
    %2180 = vector.broadcast %cst_357 : f32 to vector<16x16xf32>
    %2181 = arith.subf %2180, %2179 : vector<16x16xf32>
    %2182 = math.exp %2181 : vector<16x16xf32>
    %2183 = vector.broadcast %2149 : f32 to vector<16x16xf32>
    %2184 = arith.mulf %2183, %2171 : vector<16x16xf32>
    %2185 = arith.mulf %2184, %2182 : vector<16x16xf32>
    %2186 = vector.extract_strided_slice %1539 {offsets = [0, 12], sizes = [16, 16], strides = [1, 1]} : vector<16x30xf32> to vector<16x16xf32>
    %2187 = arith.mulf %2186, %2185 : vector<16x16xf32>
    %2188 = arith.addf %2139, %2187 : vector<16x16xf32>
    %2189 = vector.extract_strided_slice %1542 {offsets = [0, 12], sizes = [16, 16], strides = [1, 1]} : vector<16x30xf32> to vector<16x16xf32>
    %2190 = arith.mulf %2189, %2185 : vector<16x16xf32>
    %2191 = arith.addf %2142, %2190 : vector<16x16xf32>
    %2192 = vector.extract_strided_slice %1545 {offsets = [0, 12], sizes = [16, 16], strides = [1, 1]} : vector<16x30xf32> to vector<16x16xf32>
    %2193 = arith.mulf %2192, %2185 : vector<16x16xf32>
    %2194 = arith.addf %2145, %2193 : vector<16x16xf32>
    %2195 = arith.addf %2146, %2185 : vector<16x16xf32>
    %c13_i32_358 = arith.constant 13 : i32
    %2196 = arith.addi %1558, %c13_i32_358 : i32
    %2197 = arith.index_cast %2196 : i32 to index
    %2198 = memref.load %arg3[%2197] : memref<225xf32, #tpu.memory_space<smem>>
    %c13_i32_359 = arith.constant 13 : i32
    %2199 = arith.addi %1558, %c13_i32_359 : i32
    %2200 = arith.index_cast %2199 : i32 to index
    %2201 = memref.load %arg4[%2200] : memref<225xf32, #tpu.memory_space<smem>>
    %2202 = vector.extract_strided_slice %1548 {offsets = [0, 13], sizes = [16, 16], strides = [1, 1]} : vector<16x30xf32> to vector<16x16xf32>
    %2203 = arith.mulf %2202, %4 : vector<16x16xf32>
    %2204 = vector.extract_strided_slice %1551 {offsets = [0, 13], sizes = [16, 16], strides = [1, 1]} : vector<16x30xf32> to vector<16x16xf32>
    %2205 = arith.mulf %2204, %6 : vector<16x16xf32>
    %2206 = arith.addf %2203, %2205 : vector<16x16xf32>
    %2207 = vector.extract_strided_slice %1554 {offsets = [0, 13], sizes = [16, 16], strides = [1, 1]} : vector<16x30xf32> to vector<16x16xf32>
    %2208 = arith.mulf %2207, %8 : vector<16x16xf32>
    %2209 = arith.addf %2206, %2208 : vector<16x16xf32>
    %cst_360 = arith.constant 9.99999974E-5 : f32
    %cst_361 = arith.constant 1.000000e+00 : f32
    %2210 = vector.broadcast %cst_360 : f32 to vector<16x16xf32>
    %2211 = arith.maximumf %2210, %2209 : vector<16x16xf32>
    %2212 = vector.broadcast %cst_361 : f32 to vector<16x16xf32>
    %2213 = arith.minimumf %2212, %2211 : vector<16x16xf32>
    %2214 = arith.mulf %2213, %2213 : vector<16x16xf32>
    %2215 = arith.mulf %2214, %2214 : vector<16x16xf32>
    %2216 = arith.mulf %2215, %2215 : vector<16x16xf32>
    %2217 = arith.mulf %2216, %2216 : vector<16x16xf32>
    %2218 = arith.mulf %2217, %2217 : vector<16x16xf32>
    %2219 = arith.mulf %2218, %2218 : vector<16x16xf32>
    %2220 = arith.mulf %2219, %2219 : vector<16x16xf32>
    %2221 = vector.broadcast %2201 : f32 to vector<16x16xf32>
    %2222 = arith.mulf %12, %2221 : vector<16x16xf32>
    %cst_362 = arith.constant 1.000000e+04 : f32
    %2223 = vector.broadcast %cst_362 : f32 to vector<16x16xf32>
    %2224 = arith.minimumf %2222, %2223 : vector<16x16xf32>
    %2225 = vector.extract_strided_slice %1557 {offsets = [0, 13], sizes = [16, 16], strides = [1, 1]} : vector<16x30xf32> to vector<16x16xf32>
    %2226 = arith.subf %2225, %10 : vector<16x16xf32>
    %2227 = math.absf %2226 : vector<16x16xf32>
    %2228 = arith.mulf %2227, %2224 : vector<16x16xf32>
    %cst_363 = arith.constant 0.000000e+00 : f32
    %2229 = vector.broadcast %cst_363 : f32 to vector<16x16xf32>
    %2230 = arith.subf %2229, %2228 : vector<16x16xf32>
    %2231 = math.exp %2230 : vector<16x16xf32>
    %2232 = vector.broadcast %2198 : f32 to vector<16x16xf32>
    %2233 = arith.mulf %2232, %2220 : vector<16x16xf32>
    %2234 = arith.mulf %2233, %2231 : vector<16x16xf32>
    %2235 = vector.extract_strided_slice %1539 {offsets = [0, 13], sizes = [16, 16], strides = [1, 1]} : vector<16x30xf32> to vector<16x16xf32>
    %2236 = arith.mulf %2235, %2234 : vector<16x16xf32>
    %2237 = arith.addf %2188, %2236 : vector<16x16xf32>
    %2238 = vector.extract_strided_slice %1542 {offsets = [0, 13], sizes = [16, 16], strides = [1, 1]} : vector<16x30xf32> to vector<16x16xf32>
    %2239 = arith.mulf %2238, %2234 : vector<16x16xf32>
    %2240 = arith.addf %2191, %2239 : vector<16x16xf32>
    %2241 = vector.extract_strided_slice %1545 {offsets = [0, 13], sizes = [16, 16], strides = [1, 1]} : vector<16x30xf32> to vector<16x16xf32>
    %2242 = arith.mulf %2241, %2234 : vector<16x16xf32>
    %2243 = arith.addf %2194, %2242 : vector<16x16xf32>
    %2244 = arith.addf %2195, %2234 : vector<16x16xf32>
    %c14_i32_364 = arith.constant 14 : i32
    %2245 = arith.addi %1558, %c14_i32_364 : i32
    %2246 = arith.index_cast %2245 : i32 to index
    %2247 = memref.load %arg3[%2246] : memref<225xf32, #tpu.memory_space<smem>>
    %c14_i32_365 = arith.constant 14 : i32
    %2248 = arith.addi %1558, %c14_i32_365 : i32
    %2249 = arith.index_cast %2248 : i32 to index
    %2250 = memref.load %arg4[%2249] : memref<225xf32, #tpu.memory_space<smem>>
    %2251 = vector.extract_strided_slice %1548 {offsets = [0, 14], sizes = [16, 16], strides = [1, 1]} : vector<16x30xf32> to vector<16x16xf32>
    %2252 = arith.mulf %2251, %4 : vector<16x16xf32>
    %2253 = vector.extract_strided_slice %1551 {offsets = [0, 14], sizes = [16, 16], strides = [1, 1]} : vector<16x30xf32> to vector<16x16xf32>
    %2254 = arith.mulf %2253, %6 : vector<16x16xf32>
    %2255 = arith.addf %2252, %2254 : vector<16x16xf32>
    %2256 = vector.extract_strided_slice %1554 {offsets = [0, 14], sizes = [16, 16], strides = [1, 1]} : vector<16x30xf32> to vector<16x16xf32>
    %2257 = arith.mulf %2256, %8 : vector<16x16xf32>
    %2258 = arith.addf %2255, %2257 : vector<16x16xf32>
    %cst_366 = arith.constant 9.99999974E-5 : f32
    %cst_367 = arith.constant 1.000000e+00 : f32
    %2259 = vector.broadcast %cst_366 : f32 to vector<16x16xf32>
    %2260 = arith.maximumf %2259, %2258 : vector<16x16xf32>
    %2261 = vector.broadcast %cst_367 : f32 to vector<16x16xf32>
    %2262 = arith.minimumf %2261, %2260 : vector<16x16xf32>
    %2263 = arith.mulf %2262, %2262 : vector<16x16xf32>
    %2264 = arith.mulf %2263, %2263 : vector<16x16xf32>
    %2265 = arith.mulf %2264, %2264 : vector<16x16xf32>
    %2266 = arith.mulf %2265, %2265 : vector<16x16xf32>
    %2267 = arith.mulf %2266, %2266 : vector<16x16xf32>
    %2268 = arith.mulf %2267, %2267 : vector<16x16xf32>
    %2269 = arith.mulf %2268, %2268 : vector<16x16xf32>
    %2270 = vector.broadcast %2250 : f32 to vector<16x16xf32>
    %2271 = arith.mulf %12, %2270 : vector<16x16xf32>
    %cst_368 = arith.constant 1.000000e+04 : f32
    %2272 = vector.broadcast %cst_368 : f32 to vector<16x16xf32>
    %2273 = arith.minimumf %2271, %2272 : vector<16x16xf32>
    %2274 = vector.extract_strided_slice %1557 {offsets = [0, 14], sizes = [16, 16], strides = [1, 1]} : vector<16x30xf32> to vector<16x16xf32>
    %2275 = arith.subf %2274, %10 : vector<16x16xf32>
    %2276 = math.absf %2275 : vector<16x16xf32>
    %2277 = arith.mulf %2276, %2273 : vector<16x16xf32>
    %cst_369 = arith.constant 0.000000e+00 : f32
    %2278 = vector.broadcast %cst_369 : f32 to vector<16x16xf32>
    %2279 = arith.subf %2278, %2277 : vector<16x16xf32>
    %2280 = math.exp %2279 : vector<16x16xf32>
    %2281 = vector.broadcast %2247 : f32 to vector<16x16xf32>
    %2282 = arith.mulf %2281, %2269 : vector<16x16xf32>
    %2283 = arith.mulf %2282, %2280 : vector<16x16xf32>
    %2284 = vector.extract_strided_slice %1539 {offsets = [0, 14], sizes = [16, 16], strides = [1, 1]} : vector<16x30xf32> to vector<16x16xf32>
    %2285 = arith.mulf %2284, %2283 : vector<16x16xf32>
    %2286 = arith.addf %2237, %2285 : vector<16x16xf32>
    %2287 = vector.extract_strided_slice %1542 {offsets = [0, 14], sizes = [16, 16], strides = [1, 1]} : vector<16x30xf32> to vector<16x16xf32>
    %2288 = arith.mulf %2287, %2283 : vector<16x16xf32>
    %2289 = arith.addf %2240, %2288 : vector<16x16xf32>
    %2290 = vector.extract_strided_slice %1545 {offsets = [0, 14], sizes = [16, 16], strides = [1, 1]} : vector<16x30xf32> to vector<16x16xf32>
    %2291 = arith.mulf %2290, %2283 : vector<16x16xf32>
    %2292 = arith.addf %2243, %2291 : vector<16x16xf32>
    %2293 = arith.addf %2244, %2283 : vector<16x16xf32>
    %c0_370 = arith.constant 0 : index
    %c0_371 = arith.constant 0 : index
    %c0_372 = arith.constant 0 : index
    %2294 = vector.load %arg8[%c0_370, %c0_371, %c0_372] : memref<3x16x16xf32, #tpu.memory_space<vmem>>, vector<1x16x16xf32>
    %2295 = vector.shape_cast %2294 : vector<1x16x16xf32> to vector<16x16xf32>
    %2296 = arith.addf %2295, %2286 : vector<16x16xf32>
    %c0_373 = arith.constant 0 : index
    %c0_374 = arith.constant 0 : index
    %c0_375 = arith.constant 0 : index
    %2297 = vector.load %arg8[%c0_373, %c0_374, %c0_375] : memref<3x16x16xf32, #tpu.memory_space<vmem>>, vector<1x16x16xf32>
    %2298 = vector.shape_cast %2297 : vector<1x16x16xf32> to vector<16x16xf32>
    %2299 = vector.shape_cast %2296 : vector<16x16xf32> to vector<1x16x16xf32>
    tpu.vector_store %arg8[%c0_373, %c0_374, %c0_375], %2299 {strides = array<i32>} : memref<3x16x16xf32, #tpu.memory_space<vmem>>, vector<1x16x16xf32>,
    %c1_376 = arith.constant 1 : index
    %c0_377 = arith.constant 0 : index
    %c0_378 = arith.constant 0 : index
    %2300 = vector.load %arg8[%c1_376, %c0_377, %c0_378] : memref<3x16x16xf32, #tpu.memory_space<vmem>>, vector<1x16x16xf32>
    %2301 = vector.shape_cast %2300 : vector<1x16x16xf32> to vector<16x16xf32>
    %2302 = arith.addf %2301, %2289 : vector<16x16xf32>
    %c1_379 = arith.constant 1 : index
    %c0_380 = arith.constant 0 : index
    %c0_381 = arith.constant 0 : index
    %2303 = vector.load %arg8[%c1_379, %c0_380, %c0_381] : memref<3x16x16xf32, #tpu.memory_space<vmem>>, vector<1x16x16xf32>
    %2304 = vector.shape_cast %2303 : vector<1x16x16xf32> to vector<16x16xf32>
    %2305 = vector.shape_cast %2302 : vector<16x16xf32> to vector<1x16x16xf32>
    tpu.vector_store %arg8[%c1_379, %c0_380, %c0_381], %2305 {strides = array<i32>} : memref<3x16x16xf32, #tpu.memory_space<vmem>>, vector<1x16x16xf32>,
    %c2_382 = arith.constant 2 : index
    %c0_383 = arith.constant 0 : index
    %c0_384 = arith.constant 0 : index
    %2306 = vector.load %arg8[%c2_382, %c0_383, %c0_384] : memref<3x16x16xf32, #tpu.memory_space<vmem>>, vector<1x16x16xf32>
    %2307 = vector.shape_cast %2306 : vector<1x16x16xf32> to vector<16x16xf32>
    %2308 = arith.addf %2307, %2292 : vector<16x16xf32>
    %c2_385 = arith.constant 2 : index
    %c0_386 = arith.constant 0 : index
    %c0_387 = arith.constant 0 : index
    %2309 = vector.load %arg8[%c2_385, %c0_386, %c0_387] : memref<3x16x16xf32, #tpu.memory_space<vmem>>, vector<1x16x16xf32>
    %2310 = vector.shape_cast %2309 : vector<1x16x16xf32> to vector<16x16xf32>
    %2311 = vector.shape_cast %2308 : vector<16x16xf32> to vector<1x16x16xf32>
    tpu.vector_store %arg8[%c2_385, %c0_386, %c0_387], %2311 {strides = array<i32>} : memref<3x16x16xf32, #tpu.memory_space<vmem>>, vector<1x16x16xf32>,
    %c0_388 = arith.constant 0 : index
    %c0_389 = arith.constant 0 : index
    %2312 = vector.load %arg9[%c0_388, %c0_389] : memref<16x16xf32, #tpu.memory_space<vmem>>, vector<16x16xf32>
    %2313 = arith.addf %2312, %2293 : vector<16x16xf32>
    %c0_390 = arith.constant 0 : index
    %c0_391 = arith.constant 0 : index
    %2314 = vector.load %arg9[%c0_390, %c0_391] : memref<16x16xf32, #tpu.memory_space<vmem>>, vector<16x16xf32>
    tpu.vector_store %arg9[%c0_390, %c0_391], %2313 {strides = array<i32>} : memref<16x16xf32, #tpu.memory_space<vmem>>, vector<16x16xf32>,
    %c4_i32_392 = arith.constant 4 : i32
    %2315 = arith.cmpi eq, %arg2, %c4_i32_392 : i32
    %2316 = arith.extui %2315 : i1 to i32
    %c0_i32_393 = arith.constant 0 : i32
    %2317 = arith.cmpi ne, %2316, %c0_i32_393 : i32
    scf.if %2317 {
      %c0_394 = arith.constant 0 : index
      %c0_395 = arith.constant 0 : index
      %2318 = vector.load %arg9[%c0_394, %c0_395] : memref<16x16xf32, #tpu.memory_space<vmem>>, vector<16x16xf32>
      %cst_396 = arith.constant 9.99999974E-5 : f32
      %2319 = vector.broadcast %cst_396 : f32 to vector<16x16xf32>
      %2320 = arith.maximumf %2318, %2319 : vector<16x16xf32>
      %cst_397 = arith.constant 1.000000e+00 : f32
      %2321 = vector.broadcast %cst_397 : f32 to vector<16x16xf32>
      %2322 = arith.divf %2321, %2320 : vector<16x16xf32>
      %c0_398 = arith.constant 0 : index
      %c0_399 = arith.constant 0 : index
      %c0_400 = arith.constant 0 : index
      %2323 = vector.load %arg8[%c0_398, %c0_399, %c0_400] : memref<3x16x16xf32, #tpu.memory_space<vmem>>, vector<1x16x16xf32>
      %2324 = vector.shape_cast %2323 : vector<1x16x16xf32> to vector<16x16xf32>
      %2325 = arith.mulf %2324, %2322 : vector<16x16xf32>
      %c0_401 = arith.constant 0 : index
      %c0_402 = arith.constant 0 : index
      %c0_403 = arith.constant 0 : index
      %c0_404 = arith.constant 0 : index
      %c0_405 = arith.constant 0 : index
      %2326 = vector.load %arg7[%c0_401, %c0_402, %c0_403, %c0_404, %c0_405] : memref<1x1x3x16x16xf32, #tpu.memory_space<vmem>>, vector<1x1x1x16x16xf32>
      %2327 = vector.shape_cast %2326 : vector<1x1x1x16x16xf32> to vector<16x16xf32>
      %2328 = vector.shape_cast %2325 : vector<16x16xf32> to vector<1x1x1x16x16xf32>
      tpu.vector_store %arg7[%c0_401, %c0_402, %c0_403, %c0_404, %c0_405], %2328 {strides = array<i32>} : memref<1x1x3x16x16xf32, #tpu.memory_space<vmem>>, vector<1x1x1x16x16xf32>,
      %c1_406 = arith.constant 1 : index
      %c0_407 = arith.constant 0 : index
      %c0_408 = arith.constant 0 : index
      %2329 = vector.load %arg8[%c1_406, %c0_407, %c0_408] : memref<3x16x16xf32, #tpu.memory_space<vmem>>, vector<1x16x16xf32>
      %2330 = vector.shape_cast %2329 : vector<1x16x16xf32> to vector<16x16xf32>
      %2331 = arith.mulf %2330, %2322 : vector<16x16xf32>
      %c0_409 = arith.constant 0 : index
      %c0_410 = arith.constant 0 : index
      %c1_411 = arith.constant 1 : index
      %c0_412 = arith.constant 0 : index
      %c0_413 = arith.constant 0 : index
      %2332 = vector.load %arg7[%c0_409, %c0_410, %c1_411, %c0_412, %c0_413] : memref<1x1x3x16x16xf32, #tpu.memory_space<vmem>>, vector<1x1x1x16x16xf32>
      %2333 = vector.shape_cast %2332 : vector<1x1x1x16x16xf32> to vector<16x16xf32>
      %2334 = vector.shape_cast %2331 : vector<16x16xf32> to vector<1x1x1x16x16xf32>
      tpu.vector_store %arg7[%c0_409, %c0_410, %c1_411, %c0_412, %c0_413], %2334 {strides = array<i32>} : memref<1x1x3x16x16xf32, #tpu.memory_space<vmem>>, vector<1x1x1x16x16xf32>,
      %c2_414 = arith.constant 2 : index
      %c0_415 = arith.constant 0 : index
      %c0_416 = arith.constant 0 : index
      %2335 = vector.load %arg8[%c2_414, %c0_415, %c0_416] : memref<3x16x16xf32, #tpu.memory_space<vmem>>, vector<1x16x16xf32>
      %2336 = vector.shape_cast %2335 : vector<1x16x16xf32> to vector<16x16xf32>
      %2337 = arith.mulf %2336, %2322 : vector<16x16xf32>
      %c0_417 = arith.constant 0 : index
      %c0_418 = arith.constant 0 : index
      %c2_419 = arith.constant 2 : index
      %c0_420 = arith.constant 0 : index
      %c0_421 = arith.constant 0 : index
      %2338 = vector.load %arg7[%c0_417, %c0_418, %c2_419, %c0_420, %c0_421] : memref<1x1x3x16x16xf32, #tpu.memory_space<vmem>>, vector<1x1x1x16x16xf32>
      %2339 = vector.shape_cast %2338 : vector<1x1x1x16x16xf32> to vector<16x16xf32>
      %2340 = vector.shape_cast %2337 : vector<16x16xf32> to vector<1x1x1x16x16xf32>
      tpu.vector_store %arg7[%c0_417, %c0_418, %c2_419, %c0_420, %c0_421], %2340 {strides = array<i32>} : memref<1x1x3x16x16xf32, #tpu.memory_space<vmem>>, vector<1x1x1x16x16xf32>,
    } else {
    }
    return
  }
  func.func @transform_0(%arg0: i32, %arg1: i32, %arg2: i32) -> i32 {
    %c0_i32 = arith.constant 0 : i32
    %c0_i32_0 = arith.constant 0 : i32
    return %c0_i32 : i32
  }
  func.func @transform_1(%arg0: i32, %arg1: i32, %arg2: i32) -> i32 {
    %c0_i32 = arith.constant 0 : i32
    %c0_i32_0 = arith.constant 0 : i32
    return %c0_i32 : i32
  }
  func.func @transform_2(%arg0: i32, %arg1: i32, %arg2: i32) -> (i32, i32, i32, i32, i32) {
    %c0_i32 = arith.constant 0 : i32
    %c0_i32_0 = arith.constant 0 : i32
    %c0_i32_1 = arith.constant 0 : i32
    %c0_i32_2 = arith.constant 0 : i32
    return %arg0, %arg1, %c0_i32, %c0_i32_0, %c0_i32_1 : i32, i32, i32, i32, i32
  }
  func.func @transform_3(%arg0: i32, %arg1: i32, %arg2: i32) -> (i32, i32, i32, i32, i32) {
    %c0_i32 = arith.constant 0 : i32
    %c0_i32_0 = arith.constant 0 : i32
    %c0_i32_1 = arith.constant 0 : i32
    %c0_i32_2 = arith.constant 0 : i32
    return %arg0, %arg1, %c0_i32, %c0_i32_0, %c0_i32_1 : i32, i32, i32, i32, i32
  }
  func.func @transform_4(%arg0: i32, %arg1: i32, %arg2: i32) -> (i32, i32, i32, i32, i32) {
    %c0_i32 = arith.constant 0 : i32
    %c0_i32_0 = arith.constant 0 : i32
    %c0_i32_1 = arith.constant 0 : i32
    %c0_i32_2 = arith.constant 0 : i32
    return %arg0, %arg1, %c0_i32, %c0_i32_0, %c0_i32_1 : i32, i32, i32, i32, i32
  }
}

</mosaic_0001>

<llo_original>
// kernel: tpu_custom_call.1
$region0: #{tpu_custom_call.1}
  #allocation0 [shape = 'u32[]', space=smem, size = 0x4, offset = 0x4, fixed_abs, tag = 'smem constant byte address 0x4 - core index']
  #allocation1 [shape = 'u32[144,128]{1,0:T(1,128)}', space=vmem, size = 0x12000, scoped, tag = 'internal scratch']
  #allocation2 [shape = 'f32[3,16,16]{2,1,0:T(8,128)}', space=vmem, size = 0x6000, scoped, tag = 'scratch operand']
  #allocation3 [shape = 'f32[16,16]{1,0:T(8,128)}', space=vmem, size = 0x2000, scoped, tag = 'scratch operand']
  %s0 = inlined_call_operand.vmem [shape: f32[225], index: 0, kind: input, shape index: {}]
  %s1 = inlined_call_operand.vmem [shape: f32[225], index: 1, kind: input, shape index: {}]
  %s2 = inlined_call_operand.vmem [shape: f32[2,1,5,16,16], index: 2, kind: input, shape index: {}]
  %s3 = inlined_call_operand.vmem [shape: f32[2,1,7,30,30], index: 3, kind: input, shape index: {}]
  %s4 = inlined_call_operand.hbm [shape: f32[2,1,3,16,16], index: 4, kind: output, shape index: {}]
  %s5 = sld [smem:[#allocation0]]
  $region65: #{tpu_custom_call.1} parent=0
    _
  %s7 = ssub.s32 1, %s5
  %s8 = scalar_select 0, %s7, %s5
  $region1: #{tpu_custom_call.1} parent=0
    #allocation4 [shape = 'u8[1024]{0}', space=smem, size = 0x400, scoped, tag = 'input window, operand 0, single buffered']
    #allocation5 [shape = 's32[2]{0}', space=sflag, size = 0x8, scoped, tag = 'scoped memory for tpu_custom_call.1']
    #allocation6 [shape = 's32[2]{0}', space=sflag, size = 0x8, scoped, tag = 'scoped memory for tpu_custom_call.1']
    #allocation7 [shape = 'u8[1024]{0}', space=smem, size = 0x400, scoped, tag = 'input window, operand 1, single buffered']
    #allocation8 [shape = 's32[1]{0}', space=sflag, size = 0x4, scoped, tag = 'scoped memory for tpu_custom_call.1']
    #allocation9 [shape = 'u8[49152]{0}', space=vmem, size = 0xc000, scoped, tag = 'output window, operand 0']
    %9 = vsyncpa [#allocation6], 0
    %10 = vsyncpa [#allocation8], 0
    %11 = vsyncpa [#allocation5], 0
    %s12 = scalar_lea.sflag [#allocation5], 1
    %13 = vsyncpa %s12, 0
    loop: start=0, step=1, limit=12
    $region2: #{tpu_custom_call.1} parent=1 // loop_pre_header
      _
    $region3: #{tpu_custom_call.1} parent=1 // loop_header
      %s15 = sphi 0, %s19
      %p16 = scmp.ge.s32.totalorder %s15, 12
      %s22 = sphi 0, %s41
      %s23 = sphi 0, %s37
      %s24 = sphi 0, %s33
      %s25 = sphi 0, %s22
      %s26 = sphi 0, %s23
      %s27 = sphi 0, %s24
      %s28 = sphi 0, %s25
      %s29 = sphi 0, %s26
      %s30 = sphi 0, %s27
      %s42 = sphi 0, %s42
      %s44 = sphi 0, %s42
      %s45 = sphi 0, %s44
      %s59 = sphi 0, %s45
      %s63 = sphi 0, %s63
      %s65 = sphi 0, %s63
      %s66 = sphi 0, %s65
      %s80 = sphi 0, %s66
      %s88 = sphi 0, %s90
      %s91 = sphi 0, %s88
      %s92 = sphi 0, %s91
      %s108 = sphi 0, %s92
      %s116 = sphi 0, %s118
      %s119 = sphi 0, %s116
      %s120 = sphi 0, %s119
      %s136 = sphi 0, %s120
      %s144 = sphi 0, %s146
      %s147 = sphi 0, %s144
      %s148 = sphi 0, %s147
      %s164 = sphi 0, %s148
    $region4: #{tpu_custom_call.1} parent=1 // loop_header_branch
      %18 = sbr.rel (%p16) target = $region8
    $region5: #{tpu_custom_call.1} parent=1 // loop_body
      %s20 = ssub.s32 %s15, 1
      %s21 = ssub.s32 %s15, 2
      %s31 = sadd.s32 1, %s24
      %p32 = scmp.ge.s32.totalorder %s31, 5
      %s33 = scalar_select %p32, 0, %s31
      %s34 = sadd.s32 1, %s23
      %s35 = scalar_select %p32, %s34, %s23
      %p36 = scmp.ge.s32.totalorder %s35, 1
      %s37 = scalar_select %p36, 0, %s35
      %s38 = sadd.s32 1, %s22
      %s39 = scalar_select %p36, %s38, %s22
      %p40 = scmp.ge.s32.totalorder %s39, 2
      %s41 = scalar_select %p40, 0, %s39
      %s43 = sadd.s32 %s42, 1
      %p46 = scmp.eq.s32.totalorder %s15, 9
      %p47 = scmp.ne.s32.totalorder %s42, %s44
      %p48 = scmp.eq.s32.totalorder %s15, 0
      %p49 = por %p47, %p48
      %p50 = scmp.ne.s32.totalorder %s42, %s44
      %p51 = scmp.eq.s32.totalorder %s20, 9
      %p52 = por %p50, %p51
      %p53 = scmp.ne.s32.totalorder %s44, %s45
      %p54 = scmp.eq.s32.totalorder %s20, 0
      %p55 = por %p53, %p54
      %p56 = scmp.ne.s32.totalorder %s44, %s45
      %p57 = scmp.eq.s32.totalorder %s21, 9
      %p58 = por %p56, %p57
      %p60 = scmp.ne.s32.totalorder %s45, %s59
      %p61 = scmp.eq.s32.totalorder %s21, 0
      %p62 = por %p60, %p61
      %s64 = sadd.s32 %s63, 1
      %p67 = scmp.eq.s32.totalorder %s15, 9
      %p68 = scmp.ne.s32.totalorder %s63, %s65
      %p69 = scmp.eq.s32.totalorder %s15, 0
      %p70 = por %p68, %p69
      %p71 = scmp.ne.s32.totalorder %s63, %s65
      %p72 = scmp.eq.s32.totalorder %s20, 9
      %p73 = por %p71, %p72
      %p74 = scmp.ne.s32.totalorder %s65, %s66
      %p75 = scmp.eq.s32.totalorder %s20, 0
      %p76 = por %p74, %p75
      %p77 = scmp.ne.s32.totalorder %s65, %s66
      %p78 = scmp.eq.s32.totalorder %s21, 9
      %p79 = por %p77, %p78
      %p81 = scmp.ne.s32.totalorder %s66, %s80
      %p82 = scmp.eq.s32.totalorder %s21, 0
      %p83 = por %p81, %p82
      %s84 = ssub.s32 %s22, %s41
      %s85 = ssub.s32 %s23, %s37
      %s86 = sor.u32 %s84, %s85
      %p87 = scmp.eq.s32.totalorder %s86, 0
      %s89 = sadd.s32 %s88, 1
      %s90 = scalar_select %p87, %s88, %s89
      %p93 = pneg %p87
      %p94 = scmp.eq.s32.totalorder %s15, 9
      %p95 = por %p93, %p94
      %p96 = scmp.ne.s32.totalorder %s88, %s91
      %p97 = scmp.eq.s32.totalorder %s15, 0
      %p98 = por %p96, %p97
      %p99 = scmp.ne.s32.totalorder %s88, %s91
      %p100 = scmp.eq.s32.totalorder %s20, 9
      %p101 = por %p99, %p100
      %p102 = scmp.ne.s32.totalorder %s91, %s92
      %p103 = scmp.eq.s32.totalorder %s20, 0
      %p104 = por %p102, %p103
      %p105 = scmp.ne.s32.totalorder %s91, %s92
      %p106 = scmp.eq.s32.totalorder %s21, 9
      %p107 = por %p105, %p106
      %p109 = scmp.ne.s32.totalorder %s92, %s108
      %p110 = scmp.eq.s32.totalorder %s21, 0
      %p111 = por %p109, %p110
      %s112 = ssub.s32 %s22, %s41
      %s113 = ssub.s32 %s23, %s37
      %s114 = sor.u32 %s112, %s113
      %p115 = scmp.eq.s32.totalorder %s114, 0
      %s117 = sadd.s32 %s116, 1
      %s118 = scalar_select %p115, %s116, %s117
      %p121 = pneg %p115
      %p122 = scmp.eq.s32.totalorder %s15, 9
      %p123 = por %p121, %p122
      %p124 = scmp.ne.s32.totalorder %s116, %s119
      %p125 = scmp.eq.s32.totalorder %s15, 0
      %p126 = por %p124, %p125
      %p127 = scmp.ne.s32.totalorder %s116, %s119
      %p128 = scmp.eq.s32.totalorder %s20, 9
      %p129 = por %p127, %p128
      %p130 = scmp.ne.s32.totalorder %s119, %s120
      %p131 = scmp.eq.s32.totalorder %s20, 0
      %p132 = por %p130, %p131
      %p133 = scmp.ne.s32.totalorder %s119, %s120
      %p134 = scmp.eq.s32.totalorder %s21, 9
      %p135 = por %p133, %p134
      %p137 = scmp.ne.s32.totalorder %s120, %s136
      %p138 = scmp.eq.s32.totalorder %s21, 0
      %p139 = por %p137, %p138
      %s140 = ssub.s32 %s22, %s41
      %s141 = ssub.s32 %s23, %s37
      %s142 = sor.u32 %s140, %s141
      %p143 = scmp.eq.s32.totalorder %s142, 0
      %s145 = sadd.s32 %s144, 1
      %s146 = scalar_select %p143, %s144, %s145
      %p149 = pneg %p143
      %p150 = scmp.eq.s32.totalorder %s15, 9
      %p151 = por %p149, %p150
      %p152 = scmp.ne.s32.totalorder %s144, %s147
      %p153 = scmp.eq.s32.totalorder %s15, 0
      %p154 = por %p152, %p153
      %p155 = scmp.ne.s32.totalorder %s144, %s147
      %p156 = scmp.eq.s32.totalorder %s20, 9
      %p157 = por %p155, %p156
      %p158 = scmp.ne.s32.totalorder %s147, %s148
      %p159 = scmp.eq.s32.totalorder %s20, 0
      %p160 = por %p158, %p159
      %p161 = scmp.ne.s32.totalorder %s147, %s148
      %p162 = scmp.eq.s32.totalorder %s21, 9
      %p163 = por %p161, %p162
      %p165 = scmp.ne.s32.totalorder %s148, %s164
      %p166 = scmp.eq.s32.totalorder %s21, 0
      %p167 = por %p165, %p166
      %p168 = scmp.le.s32.totalorder 1, %s15
      %p169 = scmp.lt.s32.totalorder %s15, 11
      %p170 = pnand %p168, %p169
      %p171 = pneg %p170
      // Predicated region
      $region9: #{tpu_custom_call.1} parent=5 // pred_check
        _
      $region10: #{tpu_custom_call.1} parent=5 // pred_check_branch
        %173 = sbr.rel (%p170) target = $region12
      $region11: #{tpu_custom_call.1} parent=5 // pred_region
        %s174 = ssub.s32 %s15, 1
        // Predicated region
        $region13: #{tpu_custom_call.1} parent=11 // pred_check
          %p175 = pneg %p55
        $region14: #{tpu_custom_call.1} parent=11 // pred_check_branch
          %177 = sbr.rel (%p175) target = $region16
        $region15: #{tpu_custom_call.1} parent=11 // pred_region
          %s179 = ssub.s32 32, 32
          %180 = vsyncadd [#allocation6], %s179
          %s182 = sshll.u32 %s0, 4
          %s183 = int_to_ptr.vmem [resolvable:$true] %s182
          %185 = dma.vmem_to_smem %s183, 32, [#allocation4], [#allocation6]
        $region16: #{tpu_custom_call.1} parent=11 // pred_fallthru
          _
        // Predicated region
        $region17: #{tpu_custom_call.1} parent=11 // pred_check
          %p186 = pneg %p76
        $region18: #{tpu_custom_call.1} parent=11 // pred_check_branch
          %188 = sbr.rel (%p186) target = $region20
        $region19: #{tpu_custom_call.1} parent=11 // pred_region
          %s190 = ssub.s32 32, 32
          %191 = vsyncadd [#allocation8], %s190
          %s193 = sshll.u32 %s1, 4
          %s194 = int_to_ptr.vmem [resolvable:$true] %s193
          %196 = dma.vmem_to_smem %s194, 32, [#allocation7], [#allocation8]
        $region20: #{tpu_custom_call.1} parent=11 // pred_fallthru
          _
      $region12: #{tpu_custom_call.1} parent=5 // pred_fallthru
        _
      %p197 = scmp.lt.s32.totalorder %s15, 10
      // Predicated region
      $region21: #{tpu_custom_call.1} parent=5 // pred_check
        %p198 = pneg %p197
      $region22: #{tpu_custom_call.1} parent=5 // pred_check_branch
        %200 = sbr.rel (%p198) target = $region24
      $region23: #{tpu_custom_call.1} parent=5 // pred_region
        // Predicated region
        $region25: #{tpu_custom_call.1} parent=23 // pred_check
          %p201 = pneg %p98
        $region26: #{tpu_custom_call.1} parent=23 // pred_check_branch
          %203 = sbr.rel (%p201) target = $region28
        $region27: #{tpu_custom_call.1} parent=23 // pred_region
          %p204 = scmp.lt.s32.totalorder %s22, 1
          %s205 = scalar_select %p204, %s22, 1
          %p206 = scmp.lt.s32.totalorder %s23, 0
          %s207 = scalar_select %p206, %s23, 0
          %s208 = smul.addr %s207, 10
          %s209 = smul.addr %s205, 10
          %s210 = sadd.s32 %s208, %s209
          %s211 = smul.addr %s210, 8
          %s212 = scalar_lea.vmem %s2, %s211
        $region28: #{tpu_custom_call.1} parent=23 // pred_fallthru
          _
        // Predicated region
        $region29: #{tpu_custom_call.1} parent=23 // pred_check
          %p213 = pneg %p126
        $region30: #{tpu_custom_call.1} parent=23 // pred_check_branch
          %215 = sbr.rel (%p213) target = $region32
        $region31: #{tpu_custom_call.1} parent=23 // pred_region
          %p216 = scmp.lt.s32.totalorder %s22, 1
          %s217 = scalar_select %p216, %s22, 1
          %p218 = scmp.lt.s32.totalorder %s23, 0
          %s219 = scalar_select %p218, %s23, 0
          %s220 = smul.addr %s219, 28
          %s221 = smul.addr %s217, 28
          %s222 = sadd.s32 %s220, %s221
          %s223 = smul.addr %s222, 8
          %s224 = scalar_lea.vmem %s3, %s223
        $region32: #{tpu_custom_call.1} parent=23 // pred_fallthru
          _
      $region24: #{tpu_custom_call.1} parent=5 // pred_fallthru
        _
      %p225 = scmp.le.s32.totalorder 1, %s15
      %p226 = scmp.lt.s32.totalorder %s15, 11
      %p227 = pnand %p225, %p226
      %p228 = pneg %p227
      // Predicated region
      $region33: #{tpu_custom_call.1} parent=5 // pred_check
        _
      $region34: #{tpu_custom_call.1} parent=5 // pred_check_branch
        %230 = sbr.rel (%p227) target = $region36
      $region35: #{tpu_custom_call.1} parent=5 // pred_region
        %s231 = ssub.s32 %s15, 1
        // Predicated region
        $region37: #{tpu_custom_call.1} parent=35 // pred_check
          %p232 = pneg %p55
        $region38: #{tpu_custom_call.1} parent=35 // pred_check_branch
          %234 = sbr.rel (%p232) target = $region40
        $region39: #{tpu_custom_call.1} parent=35 // pred_region
          %235 = dma.done [#allocation6], 32
        $region40: #{tpu_custom_call.1} parent=35 // pred_fallthru
          _
        // Predicated region
        $region41: #{tpu_custom_call.1} parent=35 // pred_check
          %p236 = pneg %p76
        $region42: #{tpu_custom_call.1} parent=35 // pred_check_branch
          %238 = sbr.rel (%p236) target = $region44
        $region43: #{tpu_custom_call.1} parent=35 // pred_region
          %239 = dma.done [#allocation8], 32
        $region44: #{tpu_custom_call.1} parent=35 // pred_fallthru
          _
        %240 = sfence
        %p241 = pneg %p55
        %p242 = pneg %p52
        %p243 = pneg %p76
        %p244 = pneg %p73
        %p245 = scmp.lt.s32.totalorder %s25, 1
        %s246 = scalar_select %p245, %s25, 1
        %p247 = scmp.lt.s32.totalorder %s26, 0
        %s248 = scalar_select %p247, %s26, 0
        %s249 = smul.addr %s248, 10
        %s250 = smul.addr %s246, 10
        %s251 = sadd.s32 %s249, %s250
        %s252 = smul.addr %s251, 8
        %s253 = scalar_lea.vmem %s2, %s252
        %p254 = pneg %p104
        %p255 = pneg %p101
        %p256 = scmp.lt.s32.totalorder %s25, 1
        %s257 = scalar_select %p256, %s25, 1
        %p258 = scmp.lt.s32.totalorder %s26, 0
        %s259 = scalar_select %p258, %s26, 0
        %s260 = smul.addr %s259, 28
        %s261 = smul.addr %s257, 28
        %s262 = sadd.s32 %s260, %s261
        %s263 = smul.addr %s262, 8
        %s264 = scalar_lea.vmem %s3, %s263
        %p265 = pneg %p132
        %p266 = pneg %p129
        %p267 = pneg %p160
        %p268 = pneg %p157
        %s269 = sand.u32 %s147, 1
        %s270 = scalar_lea.sflag [#allocation5], %s269
        %s271 = sand.u32 %s147, 1
        %s272 = smul.addr %s271, 48
        %s273 = scalar_lea.vmem [#allocation9], %s272
        %p274 = scmp.lt.s32.totalorder %s25, 1
        %s275 = scalar_select %p274, %s25, 1
        %p276 = scmp.lt.s32.totalorder %s26, 0
        %s277 = scalar_select %p276, %s26, 0
        %s278 = smul.addr %s277, 10
        %s279 = smul.addr %s275, 10
        %s280 = sadd.s32 %s278, %s279
        %s281 = smul.addr %s280, 8
        %s282 = scalar_lea.vmem %s2, %s281
        %p283 = scmp.lt.s32.totalorder %s25, 1
        %s284 = scalar_select %p283, %s25, 1
        %p285 = scmp.lt.s32.totalorder %s26, 0
        %s286 = scalar_select %p285, %s26, 0
        %s287 = smul.addr %s286, 28
        %s288 = smul.addr %s284, 28
        %s289 = sadd.s32 %s287, %s288
        %s290 = smul.addr %s289, 8
        %s291 = scalar_lea.vmem %s3, %s290
        %p292 = scmp.eq.s32.totalorder %s27, 0
        // Predicated region
        $region45: #{tpu_custom_call.1} parent=35 // pred_check
          %p293 = pneg %p292
        $region46: #{tpu_custom_call.1} parent=35 // pred_check_branch
          %295 = sbr.rel (%p293) target = $region48
        $region47: #{tpu_custom_call.1} parent=35 // pred_region
          %vm296 = vcmask 130048
          %297 = vst.msk [vmem:[#allocation2] sm:$0xff] %vm296, 0.0
          %298 = vst.msk [vmem:[#allocation2 + $0x8] sm:$0xff] %vm296, 0.0
          %299 = vst.msk [vmem:[#allocation2 + $0x10] sm:$0xff] %vm296, 0.0
          %300 = vst.msk [vmem:[#allocation2 + $0x18] sm:$0xff] %vm296, 0.0
          %301 = vst.msk [vmem:[#allocation2 + $0x20] sm:$0xff] %vm296, 0.0
          %302 = vst.msk [vmem:[#allocation2 + $0x28] sm:$0xff] %vm296, 0.0
          %303 = vst.msk [vmem:[#allocation3] sm:$0xff] %vm296, 0.0
          %304 = vst.msk [vmem:[#allocation3 + $0x8] sm:$0xff] %vm296, 0.0
        $region48: #{tpu_custom_call.1} parent=35 // pred_fallthru
          _
        %v305 = vld [vmem:[%s282] sm:$0xff]
        %v306 = vld [vmem:[%s282 + $0x8] sm:$0xff]
        %s307 = scalar_lea.vmem %s282, 16
        %v308 = vld [vmem:[%s307] sm:$0xff]
        %v309 = vld [vmem:[%s307 + $0x8] sm:$0xff]
        %s310 = scalar_lea.vmem %s282, 32
        %v311 = vld [vmem:[%s310] sm:$0xff]
        %v312 = vld [vmem:[%s310 + $0x8] sm:$0xff]
        %s313 = scalar_lea.vmem %s282, 48
        %v314 = vld [vmem:[%s313] sm:$0xff]
        %v315 = vld [vmem:[%s313 + $0x8] sm:$0xff]
        %s316 = scalar_lea.vmem %s282, 64
        %v317 = vld [vmem:[%s316] sm:$0xff]
        %v318 = vld [vmem:[%s316 + $0x8] sm:$0xff]
        %s319 = smul.u32 %s27, 3
        %s320 = scalar_lea.vmem %s291, %s319
        %v321 = vld [vmem:[%s320] sm:$0xff]
        %v322 = vld [vmem:[%s320 + $0x8] sm:$0xff]
        %s323 = sadd.s32 %s319, 32
        %s324 = scalar_lea.vmem %s291, %s323
        %v325 = vld [vmem:[%s324] sm:$0xff]
        %v326 = vld [vmem:[%s324 + $0x8] sm:$0xff]
        %s327 = sadd.s32 %s319, 64
        %s328 = scalar_lea.vmem %s291, %s327
        %v329 = vld [vmem:[%s328] sm:$0xff]
        %v330 = vld [vmem:[%s328 + $0x8] sm:$0xff]
        %s331 = sadd.s32 %s319, 96
        %s332 = scalar_lea.vmem %s291, %s331
        %v333 = vld [vmem:[%s332] sm:$0xff]
        %v334 = vld [vmem:[%s332 + $0x8] sm:$0xff]
        %s335 = sadd.s32 %s319, 128
        %s336 = scalar_lea.vmem %s291, %s335
        %v337 = vld [vmem:[%s336] sm:$0xff]
        %v338 = vld [vmem:[%s336 + $0x8] sm:$0xff]
        %s339 = sadd.s32 %s319, 160
        %s340 = scalar_lea.vmem %s291, %s339
        %v341 = vld [vmem:[%s340] sm:$0xff]
        %v342 = vld [vmem:[%s340 + $0x8] sm:$0xff]
        %s343 = sadd.s32 %s319, 192
        %s344 = scalar_lea.vmem %s291, %s343
        %v345 = vld [vmem:[%s344] sm:$0xff]
        %v346 = vld [vmem:[%s344 + $0x8] sm:$0xff]
        %s347 = smul.u32 %s27, 45
        %s348 = sld [smem:[#allocation4 + %s347]]
        %s349 = sld [smem:[#allocation7 + %s347]]
        %v350 = vmul.f32 %v333, %v305
        %v351 = vmul.f32 %v334, %v306
        %v352 = vmul.f32 %v337, %v308
        %v353 = vmul.f32 %v338, %v309
        %v354 = vadd.f32 %v350, %v352
        %v355 = vadd.f32 %v351, %v353
        %v356 = vmul.f32 %v341, %v311
        %v357 = vmul.f32 %v342, %v312
        %v358 = vadd.f32 %v354, %v356
        %v359 = vadd.f32 %v355, %v357
        %v360 = vmax.f32 %v358, 0.0001
        %v361 = vmax.f32 %v359, 0.0001
        %v362 = vmin.f32 %v360, 1.0
        %v363 = vmin.f32 %v361, 1.0
        %v364 = vmul.f32 %v362, %v362
        %v365 = vmul.f32 %v363, %v363
        %v366 = vmul.f32 %v364, %v364
        %v367 = vmul.f32 %v365, %v365
        %v368 = vmul.f32 %v366, %v366
        %v369 = vmul.f32 %v367, %v367
        %v370 = vmul.f32 %v368, %v368
        %v371 = vmul.f32 %v369, %v369
        %v372 = vmul.f32 %v370, %v370
        %v373 = vmul.f32 %v371, %v371
        %v374 = vmul.f32 %v372, %v372
        %v375 = vmul.f32 %v373, %v373
        %v376 = vmul.f32 %v374, %v374
        %v377 = vmul.f32 %v375, %v375
        %v378 = vstv %s349
        %v379 = vmul.f32 %v317, %v378
        %v380 = vmul.f32 %v318, %v378
        %v381 = vmin.f32 %v379, 10000.0
        %v382 = vmin.f32 %v380, 10000.0
        %v383 = vsub.f32 %v345, %v314
        %v384 = vsub.f32 %v346, %v315
        %v385 = vand.u32 2147483647, %v383
        %v386 = vand.u32 2147483647, %v384
        %v387 = vmul.f32 %v385, %v381
        %v388 = vmul.f32 %v386, %v382
        %v389 = vsub.f32 0.0, %v387
        %v390 = vsub.f32 0.0, %v388
        %v391 = vmul.f32 %v389, 1.442695
        %v392 = vpow.pop %v391
        %v393 = vmul.f32 %v390, 1.442695
        %v394 = vpow.pop %v393
        %v395 = vstv %s348
        %v396 = vmul.f32 %v395, %v376
        %v397 = vmul.f32 %v395, %v377
        %v398 = vmul.f32 %v396, %v392
        %v399 = vmul.f32 %v397, %v394
        %v400 = vmul.f32 %v321, %v398
        %v401 = vmul.f32 %v322, %v399
        %v402 = vadd.f32 %v400, 0.0
        %v403 = vadd.f32 %v401, 0.0
        %v404 = vmul.f32 %v325, %v398
        %v405 = vmul.f32 %v326, %v399
        %v406 = vadd.f32 %v404, 0.0
        %v407 = vadd.f32 %v405, 0.0
        %v408 = vmul.f32 %v329, %v398
        %v409 = vmul.f32 %v330, %v399
        %v410 = vadd.f32 %v408, 0.0
        %v411 = vadd.f32 %v409, 0.0
        %v412 = vadd.f32 %v398, 0.0
        %v413 = vadd.f32 %v399, 0.0
        %s414 = sadd.s32 %s347, 1
        %s415 = sld [smem:[#allocation4 + %s414]]
        %s416 = sld [smem:[#allocation7 + %s414]]
        %419 = vrot.lane.b32.xlu0 %v305, 1
        %v420 = vpop.permute.xlu0 %419
        %421 = vrot.lane.b32.xlu0 %v306, 1
        %v422 = vpop.permute.xlu0 %421
        %v425 = vmul.f32 %v333, %v420
        %v426 = vmul.f32 %v334, %v422
        %429 = vrot.lane.b32.xlu0 %v308, 1
        %v430 = vpop.permute.xlu0 %429
        %431 = vrot.lane.b32.xlu0 %v309, 1
        %v432 = vpop.permute.xlu0 %431
        %v435 = vmul.f32 %v337, %v430
        %v436 = vmul.f32 %v338, %v432
        %v437 = vadd.f32 %v425, %v435
        %v438 = vadd.f32 %v426, %v436
        %441 = vrot.lane.b32.xlu0 %v311, 1
        %v442 = vpop.permute.xlu0 %441
        %443 = vrot.lane.b32.xlu0 %v312, 1
        %v444 = vpop.permute.xlu0 %443
        %v447 = vmul.f32 %v341, %v442
        %v448 = vmul.f32 %v342, %v444
        %v449 = vadd.f32 %v437, %v447
        %v450 = vadd.f32 %v438, %v448
        %v451 = vmax.f32 %v449, 0.0001
        %v452 = vmax.f32 %v450, 0.0001
        %v453 = vmin.f32 %v451, 1.0
        %v454 = vmin.f32 %v452, 1.0
        %v455 = vmul.f32 %v453, %v453
        %v456 = vmul.f32 %v454, %v454
        %v457 = vmul.f32 %v455, %v455
        %v458 = vmul.f32 %v456, %v456
        %v459 = vmul.f32 %v457, %v457
        %v460 = vmul.f32 %v458, %v458
        %v461 = vmul.f32 %v459, %v459
        %v462 = vmul.f32 %v460, %v460
        %v463 = vmul.f32 %v461, %v461
        %v464 = vmul.f32 %v462, %v462
        %v465 = vmul.f32 %v463, %v463
        %v466 = vmul.f32 %v464, %v464
        %v467 = vmul.f32 %v465, %v465
        %v468 = vmul.f32 %v466, %v466
        %v469 = vstv %s416
        %v470 = vmul.f32 %v317, %v469
        %v471 = vmul.f32 %v318, %v469
        %v472 = vmin.f32 %v470, 10000.0
        %v473 = vmin.f32 %v471, 10000.0
        %476 = vrot.lane.b32.xlu0 %v314, 1
        %v477 = vpop.permute.xlu0 %476
        %478 = vrot.lane.b32.xlu0 %v315, 1
        %v479 = vpop.permute.xlu0 %478
        %v482 = vsub.f32 %v345, %v477
        %v483 = vsub.f32 %v346, %v479
        %v484 = vand.u32 2147483647, %v482
        %v485 = vand.u32 2147483647, %v483
        %488 = vrot.lane.b32.xlu0 %v472, 1
        %v489 = vpop.permute.xlu0 %488
        %490 = vrot.lane.b32.xlu0 %v473, 1
        %v491 = vpop.permute.xlu0 %490
        %v494 = vmul.f32 %v484, %v489
        %v495 = vmul.f32 %v485, %v491
        %v496 = vsub.f32 0.0, %v494
        %v497 = vsub.f32 0.0, %v495
        %v498 = vmul.f32 %v496, 1.442695
        %v499 = vpow.pop %v498
        %v500 = vmul.f32 %v497, 1.442695
        %v501 = vpow.pop %v500
        %v502 = vstv %s415
        %v503 = vmul.f32 %v502, %v467
        %v504 = vmul.f32 %v502, %v468
        %v505 = vmul.f32 %v503, %v499
        %v506 = vmul.f32 %v504, %v501
        %v507 = vmul.f32 %v321, %v505
        %v508 = vmul.f32 %v322, %v506
        %511 = vrot.lane.b32.xlu0 %v507, 127
        %v512 = vpop.permute.xlu0 %511
        %513 = vrot.lane.b32.xlu0 %v508, 127
        %v514 = vpop.permute.xlu0 %513
        %v517 = vadd.f32 %v402, %v512
        %v518 = vadd.f32 %v403, %v514
        %v519 = vmul.f32 %v325, %v505
        %v520 = vmul.f32 %v326, %v506
        %523 = vrot.lane.b32.xlu0 %v519, 127
        %v524 = vpop.permute.xlu0 %523
        %525 = vrot.lane.b32.xlu0 %v520, 127
        %v526 = vpop.permute.xlu0 %525
        %v529 = vadd.f32 %v406, %v524
        %v530 = vadd.f32 %v407, %v526
        %v531 = vmul.f32 %v329, %v505
        %v532 = vmul.f32 %v330, %v506
        %535 = vrot.lane.b32.xlu0 %v531, 127
        %v536 = vpop.permute.xlu0 %535
        %537 = vrot.lane.b32.xlu0 %v532, 127
        %v538 = vpop.permute.xlu0 %537
        %v541 = vadd.f32 %v410, %v536
        %v542 = vadd.f32 %v411, %v538
        %545 = vrot.lane.b32.xlu0 %v505, 127
        %v546 = vpop.permute.xlu0 %545
        %547 = vrot.lane.b32.xlu0 %v506, 127
        %v548 = vpop.permute.xlu0 %547
        %v551 = vadd.f32 %v412, %v546
        %v552 = vadd.f32 %v413, %v548
        %s553 = sadd.s32 %s347, 2
        %s554 = sld [smem:[#allocation4 + %s553]]
        %s555 = sld [smem:[#allocation7 + %s553]]
        %556 = vrot.lane.b32.xlu0 %v305, 2
        %v557 = vpop.permute.xlu0 %556
        %558 = vrot.lane.b32.xlu0 %v306, 2
        %v559 = vpop.permute.xlu0 %558
        %v562 = vmul.f32 %v333, %v557
        %v563 = vmul.f32 %v334, %v559
        %564 = vrot.lane.b32.xlu0 %v308, 2
        %v565 = vpop.permute.xlu0 %564
        %566 = vrot.lane.b32.xlu0 %v309, 2
        %v567 = vpop.permute.xlu0 %566
        %v570 = vmul.f32 %v337, %v565
        %v571 = vmul.f32 %v338, %v567
        %v572 = vadd.f32 %v562, %v570
        %v573 = vadd.f32 %v563, %v571
        %574 = vrot.lane.b32.xlu0 %v311, 2
        %v575 = vpop.permute.xlu0 %574
        %576 = vrot.lane.b32.xlu0 %v312, 2
        %v577 = vpop.permute.xlu0 %576
        %v580 = vmul.f32 %v341, %v575
        %v581 = vmul.f32 %v342, %v577
        %v582 = vadd.f32 %v572, %v580
        %v583 = vadd.f32 %v573, %v581
        %v584 = vmax.f32 %v582, 0.0001
        %v585 = vmax.f32 %v583, 0.0001
        %v586 = vmin.f32 %v584, 1.0
        %v587 = vmin.f32 %v585, 1.0
        %v588 = vmul.f32 %v586, %v586
        %v589 = vmul.f32 %v587, %v587
        %v590 = vmul.f32 %v588, %v588
        %v591 = vmul.f32 %v589, %v589
        %v592 = vmul.f32 %v590, %v590
        %v593 = vmul.f32 %v591, %v591
        %v594 = vmul.f32 %v592, %v592
        %v595 = vmul.f32 %v593, %v593
        %v596 = vmul.f32 %v594, %v594
        %v597 = vmul.f32 %v595, %v595
        %v598 = vmul.f32 %v596, %v596
        %v599 = vmul.f32 %v597, %v597
        %v600 = vmul.f32 %v598, %v598
        %v601 = vmul.f32 %v599, %v599
        %v602 = vstv %s555
        %v603 = vmul.f32 %v317, %v602
        %v604 = vmul.f32 %v318, %v602
        %v605 = vmin.f32 %v603, 10000.0
        %v606 = vmin.f32 %v604, 10000.0
        %607 = vrot.lane.b32.xlu0 %v314, 2
        %v608 = vpop.permute.xlu0 %607
        %609 = vrot.lane.b32.xlu0 %v315, 2
        %v610 = vpop.permute.xlu0 %609
        %v613 = vsub.f32 %v345, %v608
        %v614 = vsub.f32 %v346, %v610
        %v615 = vand.u32 2147483647, %v613
        %v616 = vand.u32 2147483647, %v614
        %619 = vrot.lane.b32.xlu0 %v605, 2
        %v620 = vpop.permute.xlu0 %619
        %621 = vrot.lane.b32.xlu0 %v606, 2
        %v622 = vpop.permute.xlu0 %621
        %v625 = vmul.f32 %v615, %v620
        %v626 = vmul.f32 %v616, %v622
        %v627 = vsub.f32 0.0, %v625
        %v628 = vsub.f32 0.0, %v626
        %v629 = vmul.f32 %v627, 1.442695
        %v630 = vpow.pop %v629
        %v631 = vmul.f32 %v628, 1.442695
        %v632 = vpow.pop %v631
        %v633 = vstv %s554
        %v634 = vmul.f32 %v633, %v600
        %v635 = vmul.f32 %v633, %v601
        %v636 = vmul.f32 %v634, %v630
        %v637 = vmul.f32 %v635, %v632
        %v638 = vmul.f32 %v321, %v636
        %v639 = vmul.f32 %v322, %v637
        %642 = vrot.lane.b32.xlu0 %v638, 126
        %v643 = vpop.permute.xlu0 %642
        %644 = vrot.lane.b32.xlu0 %v639, 126
        %v645 = vpop.permute.xlu0 %644
        %v648 = vadd.f32 %v517, %v643
        %v649 = vadd.f32 %v518, %v645
        %v650 = vmul.f32 %v325, %v636
        %v651 = vmul.f32 %v326, %v637
        %654 = vrot.lane.b32.xlu0 %v650, 126
        %v655 = vpop.permute.xlu0 %654
        %656 = vrot.lane.b32.xlu0 %v651, 126
        %v657 = vpop.permute.xlu0 %656
        %v660 = vadd.f32 %v529, %v655
        %v661 = vadd.f32 %v530, %v657
        %v662 = vmul.f32 %v329, %v636
        %v663 = vmul.f32 %v330, %v637
        %666 = vrot.lane.b32.xlu0 %v662, 126
        %v667 = vpop.permute.xlu0 %666
        %668 = vrot.lane.b32.xlu0 %v663, 126
        %v669 = vpop.permute.xlu0 %668
        %v672 = vadd.f32 %v541, %v667
        %v673 = vadd.f32 %v542, %v669
        %676 = vrot.lane.b32.xlu0 %v636, 126
        %v677 = vpop.permute.xlu0 %676
        %678 = vrot.lane.b32.xlu0 %v637, 126
        %v679 = vpop.permute.xlu0 %678
        %v682 = vadd.f32 %v551, %v677
        %v683 = vadd.f32 %v552, %v679
        %s684 = sadd.s32 %s347, 3
        %s685 = sld [smem:[#allocation4 + %s684]]
        %s686 = sld [smem:[#allocation7 + %s684]]
        %687 = vrot.lane.b32.xlu0 %v305, 3
        %v688 = vpop.permute.xlu0 %687
        %689 = vrot.lane.b32.xlu0 %v306, 3
        %v690 = vpop.permute.xlu0 %689
        %v693 = vmul.f32 %v333, %v688
        %v694 = vmul.f32 %v334, %v690
        %695 = vrot.lane.b32.xlu0 %v308, 3
        %v696 = vpop.permute.xlu0 %695
        %697 = vrot.lane.b32.xlu0 %v309, 3
        %v698 = vpop.permute.xlu0 %697
        %v701 = vmul.f32 %v337, %v696
        %v702 = vmul.f32 %v338, %v698
        %v703 = vadd.f32 %v693, %v701
        %v704 = vadd.f32 %v694, %v702
        %705 = vrot.lane.b32.xlu0 %v311, 3
        %v706 = vpop.permute.xlu0 %705
        %707 = vrot.lane.b32.xlu0 %v312, 3
        %v708 = vpop.permute.xlu0 %707
        %v711 = vmul.f32 %v341, %v706
        %v712 = vmul.f32 %v342, %v708
        %v713 = vadd.f32 %v703, %v711
        %v714 = vadd.f32 %v704, %v712
        %v715 = vmax.f32 %v713, 0.0001
        %v716 = vmax.f32 %v714, 0.0001
        %v717 = vmin.f32 %v715, 1.0
        %v718 = vmin.f32 %v716, 1.0
        %v719 = vmul.f32 %v717, %v717
        %v720 = vmul.f32 %v718, %v718
        %v721 = vmul.f32 %v719, %v719
        %v722 = vmul.f32 %v720, %v720
        %v723 = vmul.f32 %v721, %v721
        %v724 = vmul.f32 %v722, %v722
        %v725 = vmul.f32 %v723, %v723
        %v726 = vmul.f32 %v724, %v724
        %v727 = vmul.f32 %v725, %v725
        %v728 = vmul.f32 %v726, %v726
        %v729 = vmul.f32 %v727, %v727
        %v730 = vmul.f32 %v728, %v728
        %v731 = vmul.f32 %v729, %v729
        %v732 = vmul.f32 %v730, %v730
        %v733 = vstv %s686
        %v734 = vmul.f32 %v317, %v733
        %v735 = vmul.f32 %v318, %v733
        %v736 = vmin.f32 %v734, 10000.0
        %v737 = vmin.f32 %v735, 10000.0
        %738 = vrot.lane.b32.xlu0 %v314, 3
        %v739 = vpop.permute.xlu0 %738
        %740 = vrot.lane.b32.xlu0 %v315, 3
        %v741 = vpop.permute.xlu0 %740
        %v744 = vsub.f32 %v345, %v739
        %v745 = vsub.f32 %v346, %v741
        %v746 = vand.u32 2147483647, %v744
        %v747 = vand.u32 2147483647, %v745
        %750 = vrot.lane.b32.xlu0 %v736, 3
        %v751 = vpop.permute.xlu0 %750
        %752 = vrot.lane.b32.xlu0 %v737, 3
        %v753 = vpop.permute.xlu0 %752
        %v756 = vmul.f32 %v746, %v751
        %v757 = vmul.f32 %v747, %v753
        %v758 = vsub.f32 0.0, %v756
        %v759 = vsub.f32 0.0, %v757
        %v760 = vmul.f32 %v758, 1.442695
        %v761 = vpow.pop %v760
        %v762 = vmul.f32 %v759, 1.442695
        %v763 = vpow.pop %v762
        %v764 = vstv %s685
        %v765 = vmul.f32 %v764, %v731
        %v766 = vmul.f32 %v764, %v732
        %v767 = vmul.f32 %v765, %v761
        %v768 = vmul.f32 %v766, %v763
        %v769 = vmul.f32 %v321, %v767
        %v770 = vmul.f32 %v322, %v768
        %773 = vrot.lane.b32.xlu0 %v769, 125
        %v774 = vpop.permute.xlu0 %773
        %775 = vrot.lane.b32.xlu0 %v770, 125
        %v776 = vpop.permute.xlu0 %775
        %v779 = vadd.f32 %v648, %v774
        %v780 = vadd.f32 %v649, %v776
        %v781 = vmul.f32 %v325, %v767
        %v782 = vmul.f32 %v326, %v768
        %785 = vrot.lane.b32.xlu0 %v781, 125
        %v786 = vpop.permute.xlu0 %785
        %787 = vrot.lane.b32.xlu0 %v782, 125
        %v788 = vpop.permute.xlu0 %787
        %v791 = vadd.f32 %v660, %v786
        %v792 = vadd.f32 %v661, %v788
        %v793 = vmul.f32 %v329, %v767
        %v794 = vmul.f32 %v330, %v768
        %797 = vrot.lane.b32.xlu0 %v793, 125
        %v798 = vpop.permute.xlu0 %797
        %799 = vrot.lane.b32.xlu0 %v794, 125
        %v800 = vpop.permute.xlu0 %799
        %v803 = vadd.f32 %v672, %v798
        %v804 = vadd.f32 %v673, %v800
        %807 = vrot.lane.b32.xlu0 %v767, 125
        %v808 = vpop.permute.xlu0 %807
        %809 = vrot.lane.b32.xlu0 %v768, 125
        %v810 = vpop.permute.xlu0 %809
        %v813 = vadd.f32 %v682, %v808
        %v814 = vadd.f32 %v683, %v810
        %s815 = sadd.s32 %s347, 4
        %s816 = sld [smem:[#allocation4 + %s815]]
        %s817 = sld [smem:[#allocation7 + %s815]]
        %818 = vrot.lane.b32.xlu0 %v305, 4
        %v819 = vpop.permute.xlu0 %818
        %820 = vrot.lane.b32.xlu0 %v306, 4
        %v821 = vpop.permute.xlu0 %820
        %v824 = vmul.f32 %v333, %v819
        %v825 = vmul.f32 %v334, %v821
        %826 = vrot.lane.b32.xlu0 %v308, 4
        %v827 = vpop.permute.xlu0 %826
        %828 = vrot.lane.b32.xlu0 %v309, 4
        %v829 = vpop.permute.xlu0 %828
        %v832 = vmul.f32 %v337, %v827
        %v833 = vmul.f32 %v338, %v829
        %v834 = vadd.f32 %v824, %v832
        %v835 = vadd.f32 %v825, %v833
        %836 = vrot.lane.b32.xlu0 %v311, 4
        %v837 = vpop.permute.xlu0 %836
        %838 = vrot.lane.b32.xlu0 %v312, 4
        %v839 = vpop.permute.xlu0 %838
        %v842 = vmul.f32 %v341, %v837
        %v843 = vmul.f32 %v342, %v839
        %v844 = vadd.f32 %v834, %v842
        %v845 = vadd.f32 %v835, %v843
        %v846 = vmax.f32 %v844, 0.0001
        %v847 = vmax.f32 %v845, 0.0001
        %v848 = vmin.f32 %v846, 1.0
        %v849 = vmin.f32 %v847, 1.0
        %v850 = vmul.f32 %v848, %v848
        %v851 = vmul.f32 %v849, %v849
        %v852 = vmul.f32 %v850, %v850
        %v853 = vmul.f32 %v851, %v851
        %v854 = vmul.f32 %v852, %v852
        %v855 = vmul.f32 %v853, %v853
        %v856 = vmul.f32 %v854, %v854
        %v857 = vmul.f32 %v855, %v855
        %v858 = vmul.f32 %v856, %v856
        %v859 = vmul.f32 %v857, %v857
        %v860 = vmul.f32 %v858, %v858
        %v861 = vmul.f32 %v859, %v859
        %v862 = vmul.f32 %v860, %v860
        %v863 = vmul.f32 %v861, %v861
        %v864 = vstv %s817
        %v865 = vmul.f32 %v317, %v864
        %v866 = vmul.f32 %v318, %v864
        %v867 = vmin.f32 %v865, 10000.0
        %v868 = vmin.f32 %v866, 10000.0
        %869 = vrot.lane.b32.xlu0 %v314, 4
        %v870 = vpop.permute.xlu0 %869
        %871 = vrot.lane.b32.xlu0 %v315, 4
        %v872 = vpop.permute.xlu0 %871
        %v875 = vsub.f32 %v345, %v870
        %v876 = vsub.f32 %v346, %v872
        %v877 = vand.u32 2147483647, %v875
        %v878 = vand.u32 2147483647, %v876
        %881 = vrot.lane.b32.xlu0 %v867, 4
        %v882 = vpop.permute.xlu0 %881
        %883 = vrot.lane.b32.xlu0 %v868, 4
        %v884 = vpop.permute.xlu0 %883
        %v887 = vmul.f32 %v877, %v882
        %v888 = vmul.f32 %v878, %v884
        %v889 = vsub.f32 0.0, %v887
        %v890 = vsub.f32 0.0, %v888
        %v891 = vmul.f32 %v889, 1.442695
        %v892 = vpow.pop %v891
        %v893 = vmul.f32 %v890, 1.442695
        %v894 = vpow.pop %v893
        %v895 = vstv %s816
        %v896 = vmul.f32 %v895, %v862
        %v897 = vmul.f32 %v895, %v863
        %v898 = vmul.f32 %v896, %v892
        %v899 = vmul.f32 %v897, %v894
        %v900 = vmul.f32 %v321, %v898
        %v901 = vmul.f32 %v322, %v899
        %904 = vrot.lane.b32.xlu0 %v900, 124
        %v905 = vpop.permute.xlu0 %904
        %906 = vrot.lane.b32.xlu0 %v901, 124
        %v907 = vpop.permute.xlu0 %906
        %v910 = vadd.f32 %v779, %v905
        %v911 = vadd.f32 %v780, %v907
        %v912 = vmul.f32 %v325, %v898
        %v913 = vmul.f32 %v326, %v899
        %916 = vrot.lane.b32.xlu0 %v912, 124
        %v917 = vpop.permute.xlu0 %916
        %918 = vrot.lane.b32.xlu0 %v913, 124
        %v919 = vpop.permute.xlu0 %918
        %v922 = vadd.f32 %v791, %v917
        %v923 = vadd.f32 %v792, %v919
        %v924 = vmul.f32 %v329, %v898
        %v925 = vmul.f32 %v330, %v899
        %928 = vrot.lane.b32.xlu0 %v924, 124
        %v929 = vpop.permute.xlu0 %928
        %930 = vrot.lane.b32.xlu0 %v925, 124
        %v931 = vpop.permute.xlu0 %930
        %v934 = vadd.f32 %v803, %v929
        %v935 = vadd.f32 %v804, %v931
        %938 = vrot.lane.b32.xlu0 %v898, 124
        %v939 = vpop.permute.xlu0 %938
        %940 = vrot.lane.b32.xlu0 %v899, 124
        %v941 = vpop.permute.xlu0 %940
        %v944 = vadd.f32 %v813, %v939
        %v945 = vadd.f32 %v814, %v941
        %s946 = sadd.s32 %s347, 5
        %s947 = sld [smem:[#allocation4 + %s946]]
        %s948 = sld [smem:[#allocation7 + %s946]]
        %949 = vrot.lane.b32.xlu0 %v305, 5
        %v950 = vpop.permute.xlu0 %949
        %951 = vrot.lane.b32.xlu0 %v306, 5
        %v952 = vpop.permute.xlu0 %951
        %v955 = vmul.f32 %v333, %v950
        %v956 = vmul.f32 %v334, %v952
        %957 = vrot.lane.b32.xlu0 %v308, 5
        %v958 = vpop.permute.xlu0 %957
        %959 = vrot.lane.b32.xlu0 %v309, 5
        %v960 = vpop.permute.xlu0 %959
        %v963 = vmul.f32 %v337, %v958
        %v964 = vmul.f32 %v338, %v960
        %v965 = vadd.f32 %v955, %v963
        %v966 = vadd.f32 %v956, %v964
        %967 = vrot.lane.b32.xlu0 %v311, 5
        %v968 = vpop.permute.xlu0 %967
        %969 = vrot.lane.b32.xlu0 %v312, 5
        %v970 = vpop.permute.xlu0 %969
        %v973 = vmul.f32 %v341, %v968
        %v974 = vmul.f32 %v342, %v970
        %v975 = vadd.f32 %v965, %v973
        %v976 = vadd.f32 %v966, %v974
        %v977 = vmax.f32 %v975, 0.0001
        %v978 = vmax.f32 %v976, 0.0001
        %v979 = vmin.f32 %v977, 1.0
        %v980 = vmin.f32 %v978, 1.0
        %v981 = vmul.f32 %v979, %v979
        %v982 = vmul.f32 %v980, %v980
        %v983 = vmul.f32 %v981, %v981
        %v984 = vmul.f32 %v982, %v982
        %v985 = vmul.f32 %v983, %v983
        %v986 = vmul.f32 %v984, %v984
        %v987 = vmul.f32 %v985, %v985
        %v988 = vmul.f32 %v986, %v986
        %v989 = vmul.f32 %v987, %v987
        %v990 = vmul.f32 %v988, %v988
        %v991 = vmul.f32 %v989, %v989
        %v992 = vmul.f32 %v990, %v990
        %v993 = vmul.f32 %v991, %v991
        %v994 = vmul.f32 %v992, %v992
        %v995 = vstv %s948
        %v996 = vmul.f32 %v317, %v995
        %v997 = vmul.f32 %v318, %v995
        %v998 = vmin.f32 %v996, 10000.0
        %v999 = vmin.f32 %v997, 10000.0
        %1000 = vrot.lane.b32.xlu0 %v314, 5
        %v1001 = vpop.permute.xlu0 %1000
        %1002 = vrot.lane.b32.xlu0 %v315, 5
        %v1003 = vpop.permute.xlu0 %1002
        %v1006 = vsub.f32 %v345, %v1001
        %v1007 = vsub.f32 %v346, %v1003
        %v1008 = vand.u32 2147483647, %v1006
        %v1009 = vand.u32 2147483647, %v1007
        %1012 = vrot.lane.b32.xlu0 %v998, 5
        %v1013 = vpop.permute.xlu0 %1012
        %1014 = vrot.lane.b32.xlu0 %v999, 5
        %v1015 = vpop.permute.xlu0 %1014
        %v1018 = vmul.f32 %v1008, %v1013
        %v1019 = vmul.f32 %v1009, %v1015
        %v1020 = vsub.f32 0.0, %v1018
        %v1021 = vsub.f32 0.0, %v1019
        %v1022 = vmul.f32 %v1020, 1.442695
        %v1023 = vpow.pop %v1022
        %v1024 = vmul.f32 %v1021, 1.442695
        %v1025 = vpow.pop %v1024
        %v1026 = vstv %s947
        %v1027 = vmul.f32 %v1026, %v993
        %v1028 = vmul.f32 %v1026, %v994
        %v1029 = vmul.f32 %v1027, %v1023
        %v1030 = vmul.f32 %v1028, %v1025
        %v1031 = vmul.f32 %v321, %v1029
        %v1032 = vmul.f32 %v322, %v1030
        %1035 = vrot.lane.b32.xlu0 %v1031, 123
        %v1036 = vpop.permute.xlu0 %1035
        %1037 = vrot.lane.b32.xlu0 %v1032, 123
        %v1038 = vpop.permute.xlu0 %1037
        %v1041 = vadd.f32 %v910, %v1036
        %v1042 = vadd.f32 %v911, %v1038
        %v1043 = vmul.f32 %v325, %v1029
        %v1044 = vmul.f32 %v326, %v1030
        %1047 = vrot.lane.b32.xlu0 %v1043, 123
        %v1048 = vpop.permute.xlu0 %1047
        %1049 = vrot.lane.b32.xlu0 %v1044, 123
        %v1050 = vpop.permute.xlu0 %1049
        %v1053 = vadd.f32 %v922, %v1048
        %v1054 = vadd.f32 %v923, %v1050
        %v1055 = vmul.f32 %v329, %v1029
        %v1056 = vmul.f32 %v330, %v1030
        %1059 = vrot.lane.b32.xlu0 %v1055, 123
        %v1060 = vpop.permute.xlu0 %1059
        %1061 = vrot.lane.b32.xlu0 %v1056, 123
        %v1062 = vpop.permute.xlu0 %1061
        %v1065 = vadd.f32 %v934, %v1060
        %v1066 = vadd.f32 %v935, %v1062
        %1069 = vrot.lane.b32.xlu0 %v1029, 123
        %v1070 = vpop.permute.xlu0 %1069
        %1071 = vrot.lane.b32.xlu0 %v1030, 123
        %v1072 = vpop.permute.xlu0 %1071
        %v1075 = vadd.f32 %v944, %v1070
        %v1076 = vadd.f32 %v945, %v1072
        %s1077 = sadd.s32 %s347, 6
        %s1078 = sld [smem:[#allocation4 + %s1077]]
        %s1079 = sld [smem:[#allocation7 + %s1077]]
        %1080 = vrot.lane.b32.xlu0 %v305, 6
        %v1081 = vpop.permute.xlu0 %1080
        %1082 = vrot.lane.b32.xlu0 %v306, 6
        %v1083 = vpop.permute.xlu0 %1082
        %v1086 = vmul.f32 %v333, %v1081
        %v1087 = vmul.f32 %v334, %v1083
        %1088 = vrot.lane.b32.xlu0 %v308, 6
        %v1089 = vpop.permute.xlu0 %1088
        %1090 = vrot.lane.b32.xlu0 %v309, 6
        %v1091 = vpop.permute.xlu0 %1090
        %v1094 = vmul.f32 %v337, %v1089
        %v1095 = vmul.f32 %v338, %v1091
        %v1096 = vadd.f32 %v1086, %v1094
        %v1097 = vadd.f32 %v1087, %v1095
        %1098 = vrot.lane.b32.xlu0 %v311, 6
        %v1099 = vpop.permute.xlu0 %1098
        %1100 = vrot.lane.b32.xlu0 %v312, 6
        %v1101 = vpop.permute.xlu0 %1100
        %v1104 = vmul.f32 %v341, %v1099
        %v1105 = vmul.f32 %v342, %v1101
        %v1106 = vadd.f32 %v1096, %v1104
        %v1107 = vadd.f32 %v1097, %v1105
        %v1108 = vmax.f32 %v1106, 0.0001
        %v1109 = vmax.f32 %v1107, 0.0001
        %v1110 = vmin.f32 %v1108, 1.0
        %v1111 = vmin.f32 %v1109, 1.0
        %v1112 = vmul.f32 %v1110, %v1110
        %v1113 = vmul.f32 %v1111, %v1111
        %v1114 = vmul.f32 %v1112, %v1112
        %v1115 = vmul.f32 %v1113, %v1113
        %v1116 = vmul.f32 %v1114, %v1114
        %v1117 = vmul.f32 %v1115, %v1115
        %v1118 = vmul.f32 %v1116, %v1116
        %v1119 = vmul.f32 %v1117, %v1117
        %v1120 = vmul.f32 %v1118, %v1118
        %v1121 = vmul.f32 %v1119, %v1119
        %v1122 = vmul.f32 %v1120, %v1120
        %v1123 = vmul.f32 %v1121, %v1121
        %v1124 = vmul.f32 %v1122, %v1122
        %v1125 = vmul.f32 %v1123, %v1123
        %v1126 = vstv %s1079
        %v1127 = vmul.f32 %v317, %v1126
        %v1128 = vmul.f32 %v318, %v1126
        %v1129 = vmin.f32 %v1127, 10000.0
        %v1130 = vmin.f32 %v1128, 10000.0
        %1131 = vrot.lane.b32.xlu0 %v314, 6
        %v1132 = vpop.permute.xlu0 %1131
        %1133 = vrot.lane.b32.xlu0 %v315, 6
        %v1134 = vpop.permute.xlu0 %1133
        %v1137 = vsub.f32 %v345, %v1132
        %v1138 = vsub.f32 %v346, %v1134
        %v1139 = vand.u32 2147483647, %v1137
        %v1140 = vand.u32 2147483647, %v1138
        %1143 = vrot.lane.b32.xlu0 %v1129, 6
        %v1144 = vpop.permute.xlu0 %1143
        %1145 = vrot.lane.b32.xlu0 %v1130, 6
        %v1146 = vpop.permute.xlu0 %1145
        %v1149 = vmul.f32 %v1139, %v1144
        %v1150 = vmul.f32 %v1140, %v1146
        %v1151 = vsub.f32 0.0, %v1149
        %v1152 = vsub.f32 0.0, %v1150
        %v1153 = vmul.f32 %v1151, 1.442695
        %v1154 = vpow.pop %v1153
        %v1155 = vmul.f32 %v1152, 1.442695
        %v1156 = vpow.pop %v1155
        %v1157 = vstv %s1078
        %v1158 = vmul.f32 %v1157, %v1124
        %v1159 = vmul.f32 %v1157, %v1125
        %v1160 = vmul.f32 %v1158, %v1154
        %v1161 = vmul.f32 %v1159, %v1156
        %v1162 = vmul.f32 %v321, %v1160
        %v1163 = vmul.f32 %v322, %v1161
        %1166 = vrot.lane.b32.xlu0 %v1162, 122
        %v1167 = vpop.permute.xlu0 %1166
        %1168 = vrot.lane.b32.xlu0 %v1163, 122
        %v1169 = vpop.permute.xlu0 %1168
        %v1172 = vadd.f32 %v1041, %v1167
        %v1173 = vadd.f32 %v1042, %v1169
        %v1174 = vmul.f32 %v325, %v1160
        %v1175 = vmul.f32 %v326, %v1161
        %1178 = vrot.lane.b32.xlu0 %v1174, 122
        %v1179 = vpop.permute.xlu0 %1178
        %1180 = vrot.lane.b32.xlu0 %v1175, 122
        %v1181 = vpop.permute.xlu0 %1180
        %v1184 = vadd.f32 %v1053, %v1179
        %v1185 = vadd.f32 %v1054, %v1181
        %v1186 = vmul.f32 %v329, %v1160
        %v1187 = vmul.f32 %v330, %v1161
        %1190 = vrot.lane.b32.xlu0 %v1186, 122
        %v1191 = vpop.permute.xlu0 %1190
        %1192 = vrot.lane.b32.xlu0 %v1187, 122
        %v1193 = vpop.permute.xlu0 %1192
        %v1196 = vadd.f32 %v1065, %v1191
        %v1197 = vadd.f32 %v1066, %v1193
        %1200 = vrot.lane.b32.xlu0 %v1160, 122
        %v1201 = vpop.permute.xlu0 %1200
        %1202 = vrot.lane.b32.xlu0 %v1161, 122
        %v1203 = vpop.permute.xlu0 %1202
        %v1206 = vadd.f32 %v1075, %v1201
        %v1207 = vadd.f32 %v1076, %v1203
        %s1208 = sadd.s32 %s347, 7
        %s1209 = sld [smem:[#allocation4 + %s1208]]
        %s1210 = sld [smem:[#allocation7 + %s1208]]
        %1211 = vrot.lane.b32.xlu0 %v305, 7
        %v1212 = vpop.permute.xlu0 %1211
        %1213 = vrot.lane.b32.xlu0 %v306, 7
        %v1214 = vpop.permute.xlu0 %1213
        %v1217 = vmul.f32 %v333, %v1212
        %v1218 = vmul.f32 %v334, %v1214
        %1219 = vrot.lane.b32.xlu0 %v308, 7
        %v1220 = vpop.permute.xlu0 %1219
        %1221 = vrot.lane.b32.xlu0 %v309, 7
        %v1222 = vpop.permute.xlu0 %1221
        %v1225 = vmul.f32 %v337, %v1220
        %v1226 = vmul.f32 %v338, %v1222
        %v1227 = vadd.f32 %v1217, %v1225
        %v1228 = vadd.f32 %v1218, %v1226
        %1229 = vrot.lane.b32.xlu0 %v311, 7
        %v1230 = vpop.permute.xlu0 %1229
        %1231 = vrot.lane.b32.xlu0 %v312, 7
        %v1232 = vpop.permute.xlu0 %1231
        %v1235 = vmul.f32 %v341, %v1230
        %v1236 = vmul.f32 %v342, %v1232
        %v1237 = vadd.f32 %v1227, %v1235
        %v1238 = vadd.f32 %v1228, %v1236
        %v1239 = vmax.f32 %v1237, 0.0001
        %v1240 = vmax.f32 %v1238, 0.0001
        %v1241 = vmin.f32 %v1239, 1.0
        %v1242 = vmin.f32 %v1240, 1.0
        %v1243 = vmul.f32 %v1241, %v1241
        %v1244 = vmul.f32 %v1242, %v1242
        %v1245 = vmul.f32 %v1243, %v1243
        %v1246 = vmul.f32 %v1244, %v1244
        %v1247 = vmul.f32 %v1245, %v1245
        %v1248 = vmul.f32 %v1246, %v1246
        %v1249 = vmul.f32 %v1247, %v1247
        %v1250 = vmul.f32 %v1248, %v1248
        %v1251 = vmul.f32 %v1249, %v1249
        %v1252 = vmul.f32 %v1250, %v1250
        %v1253 = vmul.f32 %v1251, %v1251
        %v1254 = vmul.f32 %v1252, %v1252
        %v1255 = vmul.f32 %v1253, %v1253
        %v1256 = vmul.f32 %v1254, %v1254
        %v1257 = vstv %s1210
        %v1258 = vmul.f32 %v317, %v1257
        %v1259 = vmul.f32 %v318, %v1257
        %v1260 = vmin.f32 %v1258, 10000.0
        %v1261 = vmin.f32 %v1259, 10000.0
        %1262 = vrot.lane.b32.xlu0 %v314, 7
        %v1263 = vpop.permute.xlu0 %1262
        %1264 = vrot.lane.b32.xlu0 %v315, 7
        %v1265 = vpop.permute.xlu0 %1264
        %v1268 = vsub.f32 %v345, %v1263
        %v1269 = vsub.f32 %v346, %v1265
        %v1270 = vand.u32 2147483647, %v1268
        %v1271 = vand.u32 2147483647, %v1269
        %1274 = vrot.lane.b32.xlu0 %v1260, 7
        %v1275 = vpop.permute.xlu0 %1274
        %1276 = vrot.lane.b32.xlu0 %v1261, 7
        %v1277 = vpop.permute.xlu0 %1276
        %v1280 = vmul.f32 %v1270, %v1275
        %v1281 = vmul.f32 %v1271, %v1277
        %v1282 = vsub.f32 0.0, %v1280
        %v1283 = vsub.f32 0.0, %v1281
        %v1284 = vmul.f32 %v1282, 1.442695
        %v1285 = vpow.pop %v1284
        %v1286 = vmul.f32 %v1283, 1.442695
        %v1287 = vpow.pop %v1286
        %v1288 = vstv %s1209
        %v1289 = vmul.f32 %v1288, %v1255
        %v1290 = vmul.f32 %v1288, %v1256
        %v1291 = vmul.f32 %v1289, %v1285
        %v1292 = vmul.f32 %v1290, %v1287
        %v1293 = vmul.f32 %v321, %v1291
        %v1294 = vmul.f32 %v322, %v1292
        %1297 = vrot.lane.b32.xlu0 %v1293, 121
        %v1298 = vpop.permute.xlu0 %1297
        %1299 = vrot.lane.b32.xlu0 %v1294, 121
        %v1300 = vpop.permute.xlu0 %1299
        %v1303 = vadd.f32 %v1172, %v1298
        %v1304 = vadd.f32 %v1173, %v1300
        %v1305 = vmul.f32 %v325, %v1291
        %v1306 = vmul.f32 %v326, %v1292
        %1309 = vrot.lane.b32.xlu0 %v1305, 121
        %v1310 = vpop.permute.xlu0 %1309
        %1311 = vrot.lane.b32.xlu0 %v1306, 121
        %v1312 = vpop.permute.xlu0 %1311
        %v1315 = vadd.f32 %v1184, %v1310
        %v1316 = vadd.f32 %v1185, %v1312
        %v1317 = vmul.f32 %v329, %v1291
        %v1318 = vmul.f32 %v330, %v1292
        %1321 = vrot.lane.b32.xlu0 %v1317, 121
        %v1322 = vpop.permute.xlu0 %1321
        %1323 = vrot.lane.b32.xlu0 %v1318, 121
        %v1324 = vpop.permute.xlu0 %1323
        %v1327 = vadd.f32 %v1196, %v1322
        %v1328 = vadd.f32 %v1197, %v1324
        %1331 = vrot.lane.b32.xlu0 %v1291, 121
        %v1332 = vpop.permute.xlu0 %1331
        %1333 = vrot.lane.b32.xlu0 %v1292, 121
        %v1334 = vpop.permute.xlu0 %1333
        %v1337 = vadd.f32 %v1206, %v1332
        %v1338 = vadd.f32 %v1207, %v1334
        %s1339 = sadd.s32 %s347, 8
        %s1340 = sld [smem:[#allocation4 + %s1339]]
        %s1341 = sld [smem:[#allocation7 + %s1339]]
        %1342 = vrot.lane.b32.xlu0 %v305, 8
        %v1343 = vpop.permute.xlu0 %1342
        %1344 = vrot.lane.b32.xlu0 %v306, 8
        %v1345 = vpop.permute.xlu0 %1344
        %v1348 = vmul.f32 %v333, %v1343
        %v1349 = vmul.f32 %v334, %v1345
        %1350 = vrot.lane.b32.xlu0 %v308, 8
        %v1351 = vpop.permute.xlu0 %1350
        %1352 = vrot.lane.b32.xlu0 %v309, 8
        %v1353 = vpop.permute.xlu0 %1352
        %v1356 = vmul.f32 %v337, %v1351
        %v1357 = vmul.f32 %v338, %v1353
        %v1358 = vadd.f32 %v1348, %v1356
        %v1359 = vadd.f32 %v1349, %v1357
        %1360 = vrot.lane.b32.xlu0 %v311, 8
        %v1361 = vpop.permute.xlu0 %1360
        %1362 = vrot.lane.b32.xlu0 %v312, 8
        %v1363 = vpop.permute.xlu0 %1362
        %v1366 = vmul.f32 %v341, %v1361
        %v1367 = vmul.f32 %v342, %v1363
        %v1368 = vadd.f32 %v1358, %v1366
        %v1369 = vadd.f32 %v1359, %v1367
        %v1370 = vmax.f32 %v1368, 0.0001
        %v1371 = vmax.f32 %v1369, 0.0001
        %v1372 = vmin.f32 %v1370, 1.0
        %v1373 = vmin.f32 %v1371, 1.0
        %v1374 = vmul.f32 %v1372, %v1372
        %v1375 = vmul.f32 %v1373, %v1373
        %v1376 = vmul.f32 %v1374, %v1374
        %v1377 = vmul.f32 %v1375, %v1375
        %v1378 = vmul.f32 %v1376, %v1376
        %v1379 = vmul.f32 %v1377, %v1377
        %v1380 = vmul.f32 %v1378, %v1378
        %v1381 = vmul.f32 %v1379, %v1379
        %v1382 = vmul.f32 %v1380, %v1380
        %v1383 = vmul.f32 %v1381, %v1381
        %v1384 = vmul.f32 %v1382, %v1382
        %v1385 = vmul.f32 %v1383, %v1383
        %v1386 = vmul.f32 %v1384, %v1384
        %v1387 = vmul.f32 %v1385, %v1385
        %v1388 = vstv %s1341
        %v1389 = vmul.f32 %v317, %v1388
        %v1390 = vmul.f32 %v318, %v1388
        %v1391 = vmin.f32 %v1389, 10000.0
        %v1392 = vmin.f32 %v1390, 10000.0
        %1393 = vrot.lane.b32.xlu0 %v314, 8
        %v1394 = vpop.permute.xlu0 %1393
        %1395 = vrot.lane.b32.xlu0 %v315, 8
        %v1396 = vpop.permute.xlu0 %1395
        %v1399 = vsub.f32 %v345, %v1394
        %v1400 = vsub.f32 %v346, %v1396
        %v1401 = vand.u32 2147483647, %v1399
        %v1402 = vand.u32 2147483647, %v1400
        %1405 = vrot.lane.b32.xlu0 %v1391, 8
        %v1406 = vpop.permute.xlu0 %1405
        %1407 = vrot.lane.b32.xlu0 %v1392, 8
        %v1408 = vpop.permute.xlu0 %1407
        %v1411 = vmul.f32 %v1401, %v1406
        %v1412 = vmul.f32 %v1402, %v1408
        %v1413 = vsub.f32 0.0, %v1411
        %v1414 = vsub.f32 0.0, %v1412
        %v1415 = vmul.f32 %v1413, 1.442695
        %v1416 = vpow.pop %v1415
        %v1417 = vmul.f32 %v1414, 1.442695
        %v1418 = vpow.pop %v1417
        %v1419 = vstv %s1340
        %v1420 = vmul.f32 %v1419, %v1386
        %v1421 = vmul.f32 %v1419, %v1387
        %v1422 = vmul.f32 %v1420, %v1416
        %v1423 = vmul.f32 %v1421, %v1418
        %v1424 = vmul.f32 %v321, %v1422
        %v1425 = vmul.f32 %v322, %v1423
        %1428 = vrot.lane.b32.xlu0 %v1424, 120
        %v1429 = vpop.permute.xlu0 %1428
        %1430 = vrot.lane.b32.xlu0 %v1425, 120
        %v1431 = vpop.permute.xlu0 %1430
        %v1434 = vadd.f32 %v1303, %v1429
        %v1435 = vadd.f32 %v1304, %v1431
        %v1436 = vmul.f32 %v325, %v1422
        %v1437 = vmul.f32 %v326, %v1423
        %1440 = vrot.lane.b32.xlu0 %v1436, 120
        %v1441 = vpop.permute.xlu0 %1440
        %1442 = vrot.lane.b32.xlu0 %v1437, 120
        %v1443 = vpop.permute.xlu0 %1442
        %v1446 = vadd.f32 %v1315, %v1441
        %v1447 = vadd.f32 %v1316, %v1443
        %v1448 = vmul.f32 %v329, %v1422
        %v1449 = vmul.f32 %v330, %v1423
        %1452 = vrot.lane.b32.xlu0 %v1448, 120
        %v1453 = vpop.permute.xlu0 %1452
        %1454 = vrot.lane.b32.xlu0 %v1449, 120
        %v1455 = vpop.permute.xlu0 %1454
        %v1458 = vadd.f32 %v1327, %v1453
        %v1459 = vadd.f32 %v1328, %v1455
        %1462 = vrot.lane.b32.xlu0 %v1422, 120
        %v1463 = vpop.permute.xlu0 %1462
        %1464 = vrot.lane.b32.xlu0 %v1423, 120
        %v1465 = vpop.permute.xlu0 %1464
        %v1468 = vadd.f32 %v1337, %v1463
        %v1469 = vadd.f32 %v1338, %v1465
        %s1470 = sadd.s32 %s347, 9
        %s1471 = sld [smem:[#allocation4 + %s1470]]
        %s1472 = sld [smem:[#allocation7 + %s1470]]
        %1473 = vrot.lane.b32.xlu0 %v305, 9
        %v1474 = vpop.permute.xlu0 %1473
        %1475 = vrot.lane.b32.xlu0 %v306, 9
        %v1476 = vpop.permute.xlu0 %1475
        %v1479 = vmul.f32 %v333, %v1474
        %v1480 = vmul.f32 %v334, %v1476
        %1481 = vrot.lane.b32.xlu0 %v308, 9
        %v1482 = vpop.permute.xlu0 %1481
        %1483 = vrot.lane.b32.xlu0 %v309, 9
        %v1484 = vpop.permute.xlu0 %1483
        %v1487 = vmul.f32 %v337, %v1482
        %v1488 = vmul.f32 %v338, %v1484
        %v1489 = vadd.f32 %v1479, %v1487
        %v1490 = vadd.f32 %v1480, %v1488
        %1491 = vrot.lane.b32.xlu0 %v311, 9
        %v1492 = vpop.permute.xlu0 %1491
        %1493 = vrot.lane.b32.xlu0 %v312, 9
        %v1494 = vpop.permute.xlu0 %1493
        %v1497 = vmul.f32 %v341, %v1492
        %v1498 = vmul.f32 %v342, %v1494
        %v1499 = vadd.f32 %v1489, %v1497
        %v1500 = vadd.f32 %v1490, %v1498
        %v1501 = vmax.f32 %v1499, 0.0001
        %v1502 = vmax.f32 %v1500, 0.0001
        %v1503 = vmin.f32 %v1501, 1.0
        %v1504 = vmin.f32 %v1502, 1.0
        %v1505 = vmul.f32 %v1503, %v1503
        %v1506 = vmul.f32 %v1504, %v1504
        %v1507 = vmul.f32 %v1505, %v1505
        %v1508 = vmul.f32 %v1506, %v1506
        %v1509 = vmul.f32 %v1507, %v1507
        %v1510 = vmul.f32 %v1508, %v1508
        %v1511 = vmul.f32 %v1509, %v1509
        %v1512 = vmul.f32 %v1510, %v1510
        %v1513 = vmul.f32 %v1511, %v1511
        %v1514 = vmul.f32 %v1512, %v1512
        %v1515 = vmul.f32 %v1513, %v1513
        %v1516 = vmul.f32 %v1514, %v1514
        %v1517 = vmul.f32 %v1515, %v1515
        %v1518 = vmul.f32 %v1516, %v1516
        %v1519 = vstv %s1472
        %v1520 = vmul.f32 %v317, %v1519
        %v1521 = vmul.f32 %v318, %v1519
        %v1522 = vmin.f32 %v1520, 10000.0
        %v1523 = vmin.f32 %v1521, 10000.0
        %1524 = vrot.lane.b32.xlu0 %v314, 9
        %v1525 = vpop.permute.xlu0 %1524
        %1526 = vrot.lane.b32.xlu0 %v315, 9
        %v1527 = vpop.permute.xlu0 %1526
        %v1530 = vsub.f32 %v345, %v1525
        %v1531 = vsub.f32 %v346, %v1527
        %v1532 = vand.u32 2147483647, %v1530
        %v1533 = vand.u32 2147483647, %v1531
        %1536 = vrot.lane.b32.xlu0 %v1522, 9
        %v1537 = vpop.permute.xlu0 %1536
        %1538 = vrot.lane.b32.xlu0 %v1523, 9
        %v1539 = vpop.permute.xlu0 %1538
        %v1542 = vmul.f32 %v1532, %v1537
        %v1543 = vmul.f32 %v1533, %v1539
        %v1544 = vsub.f32 0.0, %v1542
        %v1545 = vsub.f32 0.0, %v1543
        %v1546 = vmul.f32 %v1544, 1.442695
        %v1547 = vpow.pop %v1546
        %v1548 = vmul.f32 %v1545, 1.442695
        %v1549 = vpow.pop %v1548
        %v1550 = vstv %s1471
        %v1551 = vmul.f32 %v1550, %v1517
        %v1552 = vmul.f32 %v1550, %v1518
        %v1553 = vmul.f32 %v1551, %v1547
        %v1554 = vmul.f32 %v1552, %v1549
        %v1555 = vmul.f32 %v321, %v1553
        %v1556 = vmul.f32 %v322, %v1554
        %1559 = vrot.lane.b32.xlu0 %v1555, 119
        %v1560 = vpop.permute.xlu0 %1559
        %1561 = vrot.lane.b32.xlu0 %v1556, 119
        %v1562 = vpop.permute.xlu0 %1561
        %v1565 = vadd.f32 %v1434, %v1560
        %v1566 = vadd.f32 %v1435, %v1562
        %v1567 = vmul.f32 %v325, %v1553
        %v1568 = vmul.f32 %v326, %v1554
        %1571 = vrot.lane.b32.xlu0 %v1567, 119
        %v1572 = vpop.permute.xlu0 %1571
        %1573 = vrot.lane.b32.xlu0 %v1568, 119
        %v1574 = vpop.permute.xlu0 %1573
        %v1577 = vadd.f32 %v1446, %v1572
        %v1578 = vadd.f32 %v1447, %v1574
        %v1579 = vmul.f32 %v329, %v1553
        %v1580 = vmul.f32 %v330, %v1554
        %1583 = vrot.lane.b32.xlu0 %v1579, 119
        %v1584 = vpop.permute.xlu0 %1583
        %1585 = vrot.lane.b32.xlu0 %v1580, 119
        %v1586 = vpop.permute.xlu0 %1585
        %v1589 = vadd.f32 %v1458, %v1584
        %v1590 = vadd.f32 %v1459, %v1586
        %1593 = vrot.lane.b32.xlu0 %v1553, 119
        %v1594 = vpop.permute.xlu0 %1593
        %1595 = vrot.lane.b32.xlu0 %v1554, 119
        %v1596 = vpop.permute.xlu0 %1595
        %v1599 = vadd.f32 %v1468, %v1594
        %v1600 = vadd.f32 %v1469, %v1596
        %s1601 = sadd.s32 %s347, 10
        %s1602 = sld [smem:[#allocation4 + %s1601]]
        %s1603 = sld [smem:[#allocation7 + %s1601]]
        %1604 = vrot.lane.b32.xlu0 %v305, 10
        %v1605 = vpop.permute.xlu0 %1604
        %1606 = vrot.lane.b32.xlu0 %v306, 10
        %v1607 = vpop.permute.xlu0 %1606
        %v1610 = vmul.f32 %v333, %v1605
        %v1611 = vmul.f32 %v334, %v1607
        %1612 = vrot.lane.b32.xlu0 %v308, 10
        %v1613 = vpop.permute.xlu0 %1612
        %1614 = vrot.lane.b32.xlu0 %v309, 10
        %v1615 = vpop.permute.xlu0 %1614
        %v1618 = vmul.f32 %v337, %v1613
        %v1619 = vmul.f32 %v338, %v1615
        %v1620 = vadd.f32 %v1610, %v1618
        %v1621 = vadd.f32 %v1611, %v1619
        %1622 = vrot.lane.b32.xlu0 %v311, 10
        %v1623 = vpop.permute.xlu0 %1622
        %1624 = vrot.lane.b32.xlu0 %v312, 10
        %v1625 = vpop.permute.xlu0 %1624
        %v1628 = vmul.f32 %v341, %v1623
        %v1629 = vmul.f32 %v342, %v1625
        %v1630 = vadd.f32 %v1620, %v1628
        %v1631 = vadd.f32 %v1621, %v1629
        %v1632 = vmax.f32 %v1630, 0.0001
        %v1633 = vmax.f32 %v1631, 0.0001
        %v1634 = vmin.f32 %v1632, 1.0
        %v1635 = vmin.f32 %v1633, 1.0
        %v1636 = vmul.f32 %v1634, %v1634
        %v1637 = vmul.f32 %v1635, %v1635
        %v1638 = vmul.f32 %v1636, %v1636
        %v1639 = vmul.f32 %v1637, %v1637
        %v1640 = vmul.f32 %v1638, %v1638
        %v1641 = vmul.f32 %v1639, %v1639
        %v1642 = vmul.f32 %v1640, %v1640
        %v1643 = vmul.f32 %v1641, %v1641
        %v1644 = vmul.f32 %v1642, %v1642
        %v1645 = vmul.f32 %v1643, %v1643
        %v1646 = vmul.f32 %v1644, %v1644
        %v1647 = vmul.f32 %v1645, %v1645
        %v1648 = vmul.f32 %v1646, %v1646
        %v1649 = vmul.f32 %v1647, %v1647
        %v1650 = vstv %s1603
        %v1651 = vmul.f32 %v317, %v1650
        %v1652 = vmul.f32 %v318, %v1650
        %v1653 = vmin.f32 %v1651, 10000.0
        %v1654 = vmin.f32 %v1652, 10000.0
        %1655 = vrot.lane.b32.xlu0 %v314, 10
        %v1656 = vpop.permute.xlu0 %1655
        %1657 = vrot.lane.b32.xlu0 %v315, 10
        %v1658 = vpop.permute.xlu0 %1657
        %v1661 = vsub.f32 %v345, %v1656
        %v1662 = vsub.f32 %v346, %v1658
        %v1663 = vand.u32 2147483647, %v1661
        %v1664 = vand.u32 2147483647, %v1662
        %1667 = vrot.lane.b32.xlu0 %v1653, 10
        %v1668 = vpop.permute.xlu0 %1667
        %1669 = vrot.lane.b32.xlu0 %v1654, 10
        %v1670 = vpop.permute.xlu0 %1669
        %v1673 = vmul.f32 %v1663, %v1668
        %v1674 = vmul.f32 %v1664, %v1670
        %v1675 = vsub.f32 0.0, %v1673
        %v1676 = vsub.f32 0.0, %v1674
        %v1677 = vmul.f32 %v1675, 1.442695
        %v1678 = vpow.pop %v1677
        %v1679 = vmul.f32 %v1676, 1.442695
        %v1680 = vpow.pop %v1679
        %v1681 = vstv %s1602
        %v1682 = vmul.f32 %v1681, %v1648
        %v1683 = vmul.f32 %v1681, %v1649
        %v1684 = vmul.f32 %v1682, %v1678
        %v1685 = vmul.f32 %v1683, %v1680
        %v1686 = vmul.f32 %v321, %v1684
        %v1687 = vmul.f32 %v322, %v1685
        %1690 = vrot.lane.b32.xlu0 %v1686, 118
        %v1691 = vpop.permute.xlu0 %1690
        %1692 = vrot.lane.b32.xlu0 %v1687, 118
        %v1693 = vpop.permute.xlu0 %1692
        %v1696 = vadd.f32 %v1565, %v1691
        %v1697 = vadd.f32 %v1566, %v1693
        %v1698 = vmul.f32 %v325, %v1684
        %v1699 = vmul.f32 %v326, %v1685
        %1702 = vrot.lane.b32.xlu0 %v1698, 118
        %v1703 = vpop.permute.xlu0 %1702
        %1704 = vrot.lane.b32.xlu0 %v1699, 118
        %v1705 = vpop.permute.xlu0 %1704
        %v1708 = vadd.f32 %v1577, %v1703
        %v1709 = vadd.f32 %v1578, %v1705
        %v1710 = vmul.f32 %v329, %v1684
        %v1711 = vmul.f32 %v330, %v1685
        %1714 = vrot.lane.b32.xlu0 %v1710, 118
        %v1715 = vpop.permute.xlu0 %1714
        %1716 = vrot.lane.b32.xlu0 %v1711, 118
        %v1717 = vpop.permute.xlu0 %1716
        %v1720 = vadd.f32 %v1589, %v1715
        %v1721 = vadd.f32 %v1590, %v1717
        %1724 = vrot.lane.b32.xlu0 %v1684, 118
        %v1725 = vpop.permute.xlu0 %1724
        %1726 = vrot.lane.b32.xlu0 %v1685, 118
        %v1727 = vpop.permute.xlu0 %1726
        %v1730 = vadd.f32 %v1599, %v1725
        %v1731 = vadd.f32 %v1600, %v1727
        %s1732 = sadd.s32 %s347, 11
        %s1733 = sld [smem:[#allocation4 + %s1732]]
        %s1734 = sld [smem:[#allocation7 + %s1732]]
        %1735 = vrot.lane.b32.xlu0 %v305, 11
        %v1736 = vpop.permute.xlu0 %1735
        %1737 = vrot.lane.b32.xlu0 %v306, 11
        %v1738 = vpop.permute.xlu0 %1737
        %v1741 = vmul.f32 %v333, %v1736
        %v1742 = vmul.f32 %v334, %v1738
        %1743 = vrot.lane.b32.xlu0 %v308, 11
        %v1744 = vpop.permute.xlu0 %1743
        %1745 = vrot.lane.b32.xlu0 %v309, 11
        %v1746 = vpop.permute.xlu0 %1745
        %v1749 = vmul.f32 %v337, %v1744
        %v1750 = vmul.f32 %v338, %v1746
        %v1751 = vadd.f32 %v1741, %v1749
        %v1752 = vadd.f32 %v1742, %v1750
        %1753 = vrot.lane.b32.xlu0 %v311, 11
        %v1754 = vpop.permute.xlu0 %1753
        %1755 = vrot.lane.b32.xlu0 %v312, 11
        %v1756 = vpop.permute.xlu0 %1755
        %v1759 = vmul.f32 %v341, %v1754
        %v1760 = vmul.f32 %v342, %v1756
        %v1761 = vadd.f32 %v1751, %v1759
        %v1762 = vadd.f32 %v1752, %v1760
        %v1763 = vmax.f32 %v1761, 0.0001
        %v1764 = vmax.f32 %v1762, 0.0001
        %v1765 = vmin.f32 %v1763, 1.0
        %v1766 = vmin.f32 %v1764, 1.0
        %v1767 = vmul.f32 %v1765, %v1765
        %v1768 = vmul.f32 %v1766, %v1766
        %v1769 = vmul.f32 %v1767, %v1767
        %v1770 = vmul.f32 %v1768, %v1768
        %v1771 = vmul.f32 %v1769, %v1769
        %v1772 = vmul.f32 %v1770, %v1770
        %v1773 = vmul.f32 %v1771, %v1771
        %v1774 = vmul.f32 %v1772, %v1772
        %v1775 = vmul.f32 %v1773, %v1773
        %v1776 = vmul.f32 %v1774, %v1774
        %v1777 = vmul.f32 %v1775, %v1775
        %v1778 = vmul.f32 %v1776, %v1776
        %v1779 = vmul.f32 %v1777, %v1777
        %v1780 = vmul.f32 %v1778, %v1778
        %v1781 = vstv %s1734
        %v1782 = vmul.f32 %v317, %v1781
        %v1783 = vmul.f32 %v318, %v1781
        %v1784 = vmin.f32 %v1782, 10000.0
        %v1785 = vmin.f32 %v1783, 10000.0
        %1786 = vrot.lane.b32.xlu0 %v314, 11
        %v1787 = vpop.permute.xlu0 %1786
        %1788 = vrot.lane.b32.xlu0 %v315, 11
        %v1789 = vpop.permute.xlu0 %1788
        %v1792 = vsub.f32 %v345, %v1787
        %v1793 = vsub.f32 %v346, %v1789
        %v1794 = vand.u32 2147483647, %v1792
        %v1795 = vand.u32 2147483647, %v1793
        %1798 = vrot.lane.b32.xlu0 %v1784, 11
        %v1799 = vpop.permute.xlu0 %1798
        %1800 = vrot.lane.b32.xlu0 %v1785, 11
        %v1801 = vpop.permute.xlu0 %1800
        %v1804 = vmul.f32 %v1794, %v1799
        %v1805 = vmul.f32 %v1795, %v1801
        %v1806 = vsub.f32 0.0, %v1804
        %v1807 = vsub.f32 0.0, %v1805
        %v1808 = vmul.f32 %v1806, 1.442695
        %v1809 = vpow.pop %v1808
        %v1810 = vmul.f32 %v1807, 1.442695
        %v1811 = vpow.pop %v1810
        %v1812 = vstv %s1733
        %v1813 = vmul.f32 %v1812, %v1779
        %v1814 = vmul.f32 %v1812, %v1780
        %v1815 = vmul.f32 %v1813, %v1809
        %v1816 = vmul.f32 %v1814, %v1811
        %v1817 = vmul.f32 %v321, %v1815
        %v1818 = vmul.f32 %v322, %v1816
        %1821 = vrot.lane.b32.xlu0 %v1817, 117
        %v1822 = vpop.permute.xlu0 %1821
        %1823 = vrot.lane.b32.xlu0 %v1818, 117
        %v1824 = vpop.permute.xlu0 %1823
        %v1827 = vadd.f32 %v1696, %v1822
        %v1828 = vadd.f32 %v1697, %v1824
        %v1829 = vmul.f32 %v325, %v1815
        %v1830 = vmul.f32 %v326, %v1816
        %1833 = vrot.lane.b32.xlu0 %v1829, 117
        %v1834 = vpop.permute.xlu0 %1833
        %1835 = vrot.lane.b32.xlu0 %v1830, 117
        %v1836 = vpop.permute.xlu0 %1835
        %v1839 = vadd.f32 %v1708, %v1834
        %v1840 = vadd.f32 %v1709, %v1836
        %v1841 = vmul.f32 %v329, %v1815
        %v1842 = vmul.f32 %v330, %v1816
        %1845 = vrot.lane.b32.xlu0 %v1841, 117
        %v1846 = vpop.permute.xlu0 %1845
        %1847 = vrot.lane.b32.xlu0 %v1842, 117
        %v1848 = vpop.permute.xlu0 %1847
        %v1851 = vadd.f32 %v1720, %v1846
        %v1852 = vadd.f32 %v1721, %v1848
        %1855 = vrot.lane.b32.xlu0 %v1815, 117
        %v1856 = vpop.permute.xlu0 %1855
        %1857 = vrot.lane.b32.xlu0 %v1816, 117
        %v1858 = vpop.permute.xlu0 %1857
        %v1861 = vadd.f32 %v1730, %v1856
        %v1862 = vadd.f32 %v1731, %v1858
        %s1863 = sadd.s32 %s347, 12
        %s1864 = sld [smem:[#allocation4 + %s1863]]
        %s1865 = sld [smem:[#allocation7 + %s1863]]
        %1866 = vrot.lane.b32.xlu0 %v305, 12
        %v1867 = vpop.permute.xlu0 %1866
        %1868 = vrot.lane.b32.xlu0 %v306, 12
        %v1869 = vpop.permute.xlu0 %1868
        %v1872 = vmul.f32 %v333, %v1867
        %v1873 = vmul.f32 %v334, %v1869
        %1874 = vrot.lane.b32.xlu0 %v308, 12
        %v1875 = vpop.permute.xlu0 %1874
        %1876 = vrot.lane.b32.xlu0 %v309, 12
        %v1877 = vpop.permute.xlu0 %1876
        %v1880 = vmul.f32 %v337, %v1875
        %v1881 = vmul.f32 %v338, %v1877
        %v1882 = vadd.f32 %v1872, %v1880
        %v1883 = vadd.f32 %v1873, %v1881
        %1884 = vrot.lane.b32.xlu0 %v311, 12
        %v1885 = vpop.permute.xlu0 %1884
        %1886 = vrot.lane.b32.xlu0 %v312, 12
        %v1887 = vpop.permute.xlu0 %1886
        %v1890 = vmul.f32 %v341, %v1885
        %v1891 = vmul.f32 %v342, %v1887
        %v1892 = vadd.f32 %v1882, %v1890
        %v1893 = vadd.f32 %v1883, %v1891
        %v1894 = vmax.f32 %v1892, 0.0001
        %v1895 = vmax.f32 %v1893, 0.0001
        %v1896 = vmin.f32 %v1894, 1.0
        %v1897 = vmin.f32 %v1895, 1.0
        %v1898 = vmul.f32 %v1896, %v1896
        %v1899 = vmul.f32 %v1897, %v1897
        %v1900 = vmul.f32 %v1898, %v1898
        %v1901 = vmul.f32 %v1899, %v1899
        %v1902 = vmul.f32 %v1900, %v1900
        %v1903 = vmul.f32 %v1901, %v1901
        %v1904 = vmul.f32 %v1902, %v1902
        %v1905 = vmul.f32 %v1903, %v1903
        %v1906 = vmul.f32 %v1904, %v1904
        %v1907 = vmul.f32 %v1905, %v1905
        %v1908 = vmul.f32 %v1906, %v1906
        %v1909 = vmul.f32 %v1907, %v1907
        %v1910 = vmul.f32 %v1908, %v1908
        %v1911 = vmul.f32 %v1909, %v1909
        %v1912 = vstv %s1865
        %v1913 = vmul.f32 %v317, %v1912
        %v1914 = vmul.f32 %v318, %v1912
        %v1915 = vmin.f32 %v1913, 10000.0
        %v1916 = vmin.f32 %v1914, 10000.0
        %1917 = vrot.lane.b32.xlu0 %v314, 12
        %v1918 = vpop.permute.xlu0 %1917
        %1919 = vrot.lane.b32.xlu0 %v315, 12
        %v1920 = vpop.permute.xlu0 %1919
        %v1923 = vsub.f32 %v345, %v1918
        %v1924 = vsub.f32 %v346, %v1920
        %v1925 = vand.u32 2147483647, %v1923
        %v1926 = vand.u32 2147483647, %v1924
        %1929 = vrot.lane.b32.xlu0 %v1915, 12
        %v1930 = vpop.permute.xlu0 %1929
        %1931 = vrot.lane.b32.xlu0 %v1916, 12
        %v1932 = vpop.permute.xlu0 %1931
        %v1935 = vmul.f32 %v1925, %v1930
        %v1936 = vmul.f32 %v1926, %v1932
        %v1937 = vsub.f32 0.0, %v1935
        %v1938 = vsub.f32 0.0, %v1936
        %v1939 = vmul.f32 %v1937, 1.442695
        %v1940 = vpow.pop %v1939
        %v1941 = vmul.f32 %v1938, 1.442695
        %v1942 = vpow.pop %v1941
        %v1943 = vstv %s1864
        %v1944 = vmul.f32 %v1943, %v1910
        %v1945 = vmul.f32 %v1943, %v1911
        %v1946 = vmul.f32 %v1944, %v1940
        %v1947 = vmul.f32 %v1945, %v1942
        %v1948 = vmul.f32 %v321, %v1946
        %v1949 = vmul.f32 %v322, %v1947
        %1952 = vrot.lane.b32.xlu0 %v1948, 116
        %v1953 = vpop.permute.xlu0 %1952
        %1954 = vrot.lane.b32.xlu0 %v1949, 116
        %v1955 = vpop.permute.xlu0 %1954
        %v1958 = vadd.f32 %v1827, %v1953
        %v1959 = vadd.f32 %v1828, %v1955
        %v1960 = vmul.f32 %v325, %v1946
        %v1961 = vmul.f32 %v326, %v1947
        %1964 = vrot.lane.b32.xlu0 %v1960, 116
        %v1965 = vpop.permute.xlu0 %1964
        %1966 = vrot.lane.b32.xlu0 %v1961, 116
        %v1967 = vpop.permute.xlu0 %1966
        %v1970 = vadd.f32 %v1839, %v1965
        %v1971 = vadd.f32 %v1840, %v1967
        %v1972 = vmul.f32 %v329, %v1946
        %v1973 = vmul.f32 %v330, %v1947
        %1976 = vrot.lane.b32.xlu0 %v1972, 116
        %v1977 = vpop.permute.xlu0 %1976
        %1978 = vrot.lane.b32.xlu0 %v1973, 116
        %v1979 = vpop.permute.xlu0 %1978
        %v1982 = vadd.f32 %v1851, %v1977
        %v1983 = vadd.f32 %v1852, %v1979
        %1986 = vrot.lane.b32.xlu0 %v1946, 116
        %v1987 = vpop.permute.xlu0 %1986
        %1988 = vrot.lane.b32.xlu0 %v1947, 116
        %v1989 = vpop.permute.xlu0 %1988
        %v1992 = vadd.f32 %v1861, %v1987
        %v1993 = vadd.f32 %v1862, %v1989
        %s1994 = sadd.s32 %s347, 13
        %s1995 = sld [smem:[#allocation4 + %s1994]]
        %s1996 = sld [smem:[#allocation7 + %s1994]]
        %1997 = vrot.lane.b32.xlu0 %v305, 13
        %v1998 = vpop.permute.xlu0 %1997
        %1999 = vrot.lane.b32.xlu0 %v306, 13
        %v2000 = vpop.permute.xlu0 %1999
        %v2003 = vmul.f32 %v333, %v1998
        %v2004 = vmul.f32 %v334, %v2000
        %2005 = vrot.lane.b32.xlu0 %v308, 13
        %v2006 = vpop.permute.xlu0 %2005
        %2007 = vrot.lane.b32.xlu0 %v309, 13
        %v2008 = vpop.permute.xlu0 %2007
        %v2011 = vmul.f32 %v337, %v2006
        %v2012 = vmul.f32 %v338, %v2008
        %v2013 = vadd.f32 %v2003, %v2011
        %v2014 = vadd.f32 %v2004, %v2012
        %2015 = vrot.lane.b32.xlu0 %v311, 13
        %v2016 = vpop.permute.xlu0 %2015
        %2017 = vrot.lane.b32.xlu0 %v312, 13
        %v2018 = vpop.permute.xlu0 %2017
        %v2021 = vmul.f32 %v341, %v2016
        %v2022 = vmul.f32 %v342, %v2018
        %v2023 = vadd.f32 %v2013, %v2021
        %v2024 = vadd.f32 %v2014, %v2022
        %v2025 = vmax.f32 %v2023, 0.0001
        %v2026 = vmax.f32 %v2024, 0.0001
        %v2027 = vmin.f32 %v2025, 1.0
        %v2028 = vmin.f32 %v2026, 1.0
        %v2029 = vmul.f32 %v2027, %v2027
        %v2030 = vmul.f32 %v2028, %v2028
        %v2031 = vmul.f32 %v2029, %v2029
        %v2032 = vmul.f32 %v2030, %v2030
        %v2033 = vmul.f32 %v2031, %v2031
        %v2034 = vmul.f32 %v2032, %v2032
        %v2035 = vmul.f32 %v2033, %v2033
        %v2036 = vmul.f32 %v2034, %v2034
        %v2037 = vmul.f32 %v2035, %v2035
        %v2038 = vmul.f32 %v2036, %v2036
        %v2039 = vmul.f32 %v2037, %v2037
        %v2040 = vmul.f32 %v2038, %v2038
        %v2041 = vmul.f32 %v2039, %v2039
        %v2042 = vmul.f32 %v2040, %v2040
        %v2043 = vstv %s1996
        %v2044 = vmul.f32 %v317, %v2043
        %v2045 = vmul.f32 %v318, %v2043
        %v2046 = vmin.f32 %v2044, 10000.0
        %v2047 = vmin.f32 %v2045, 10000.0
        %2048 = vrot.lane.b32.xlu0 %v314, 13
        %v2049 = vpop.permute.xlu0 %2048
        %2050 = vrot.lane.b32.xlu0 %v315, 13
        %v2051 = vpop.permute.xlu0 %2050
        %v2054 = vsub.f32 %v345, %v2049
        %v2055 = vsub.f32 %v346, %v2051
        %v2056 = vand.u32 2147483647, %v2054
        %v2057 = vand.u32 2147483647, %v2055
        %2060 = vrot.lane.b32.xlu0 %v2046, 13
        %v2061 = vpop.permute.xlu0 %2060
        %2062 = vrot.lane.b32.xlu0 %v2047, 13
        %v2063 = vpop.permute.xlu0 %2062
        %v2066 = vmul.f32 %v2056, %v2061
        %v2067 = vmul.f32 %v2057, %v2063
        %v2068 = vsub.f32 0.0, %v2066
        %v2069 = vsub.f32 0.0, %v2067
        %v2070 = vmul.f32 %v2068, 1.442695
        %v2071 = vpow.pop %v2070
        %v2072 = vmul.f32 %v2069, 1.442695
        %v2073 = vpow.pop %v2072
        %v2074 = vstv %s1995
        %v2075 = vmul.f32 %v2074, %v2041
        %v2076 = vmul.f32 %v2074, %v2042
        %v2077 = vmul.f32 %v2075, %v2071
        %v2078 = vmul.f32 %v2076, %v2073
        %v2079 = vmul.f32 %v321, %v2077
        %v2080 = vmul.f32 %v322, %v2078
        %2083 = vrot.lane.b32.xlu0 %v2079, 115
        %v2084 = vpop.permute.xlu0 %2083
        %2085 = vrot.lane.b32.xlu0 %v2080, 115
        %v2086 = vpop.permute.xlu0 %2085
        %v2089 = vadd.f32 %v1958, %v2084
        %v2090 = vadd.f32 %v1959, %v2086
        %v2091 = vmul.f32 %v325, %v2077
        %v2092 = vmul.f32 %v326, %v2078
        %2095 = vrot.lane.b32.xlu0 %v2091, 115
        %v2096 = vpop.permute.xlu0 %2095
        %2097 = vrot.lane.b32.xlu0 %v2092, 115
        %v2098 = vpop.permute.xlu0 %2097
        %v2101 = vadd.f32 %v1970, %v2096
        %v2102 = vadd.f32 %v1971, %v2098
        %v2103 = vmul.f32 %v329, %v2077
        %v2104 = vmul.f32 %v330, %v2078
        %2107 = vrot.lane.b32.xlu0 %v2103, 115
        %v2108 = vpop.permute.xlu0 %2107
        %2109 = vrot.lane.b32.xlu0 %v2104, 115
        %v2110 = vpop.permute.xlu0 %2109
        %v2113 = vadd.f32 %v1982, %v2108
        %v2114 = vadd.f32 %v1983, %v2110
        %2117 = vrot.lane.b32.xlu0 %v2077, 115
        %v2118 = vpop.permute.xlu0 %2117
        %2119 = vrot.lane.b32.xlu0 %v2078, 115
        %v2120 = vpop.permute.xlu0 %2119
        %v2123 = vadd.f32 %v1992, %v2118
        %v2124 = vadd.f32 %v1993, %v2120
        %s2125 = sadd.s32 %s347, 14
        %s2126 = sld [smem:[#allocation4 + %s2125]]
        %s2127 = sld [smem:[#allocation7 + %s2125]]
        %2128 = vrot.lane.b32.xlu0 %v305, 14
        %v2129 = vpop.permute.xlu0 %2128
        %2130 = vrot.lane.b32.xlu0 %v306, 14
        %v2131 = vpop.permute.xlu0 %2130
        %v2134 = vmul.f32 %v333, %v2129
        %v2135 = vmul.f32 %v334, %v2131
        %2136 = vrot.lane.b32.xlu0 %v308, 14
        %v2137 = vpop.permute.xlu0 %2136
        %2138 = vrot.lane.b32.xlu0 %v309, 14
        %v2139 = vpop.permute.xlu0 %2138
        %v2142 = vmul.f32 %v337, %v2137
        %v2143 = vmul.f32 %v338, %v2139
        %v2144 = vadd.f32 %v2134, %v2142
        %v2145 = vadd.f32 %v2135, %v2143
        %2146 = vrot.lane.b32.xlu0 %v311, 14
        %v2147 = vpop.permute.xlu0 %2146
        %2148 = vrot.lane.b32.xlu0 %v312, 14
        %v2149 = vpop.permute.xlu0 %2148
        %v2152 = vmul.f32 %v341, %v2147
        %v2153 = vmul.f32 %v342, %v2149
        %v2154 = vadd.f32 %v2144, %v2152
        %v2155 = vadd.f32 %v2145, %v2153
        %v2156 = vmax.f32 %v2154, 0.0001
        %v2157 = vmax.f32 %v2155, 0.0001
        %v2158 = vmin.f32 %v2156, 1.0
        %v2159 = vmin.f32 %v2157, 1.0
        %v2160 = vmul.f32 %v2158, %v2158
        %v2161 = vmul.f32 %v2159, %v2159
        %v2162 = vmul.f32 %v2160, %v2160
        %v2163 = vmul.f32 %v2161, %v2161
        %v2164 = vmul.f32 %v2162, %v2162
        %v2165 = vmul.f32 %v2163, %v2163
        %v2166 = vmul.f32 %v2164, %v2164
        %v2167 = vmul.f32 %v2165, %v2165
        %v2168 = vmul.f32 %v2166, %v2166
        %v2169 = vmul.f32 %v2167, %v2167
        %v2170 = vmul.f32 %v2168, %v2168
        %v2171 = vmul.f32 %v2169, %v2169
        %v2172 = vmul.f32 %v2170, %v2170
        %v2173 = vmul.f32 %v2171, %v2171
        %v2174 = vstv %s2127
        %v2175 = vmul.f32 %v317, %v2174
        %v2176 = vmul.f32 %v318, %v2174
        %v2177 = vmin.f32 %v2175, 10000.0
        %v2178 = vmin.f32 %v2176, 10000.0
        %2179 = vrot.lane.b32.xlu0 %v314, 14
        %v2180 = vpop.permute.xlu0 %2179
        %2181 = vrot.lane.b32.xlu0 %v315, 14
        %v2182 = vpop.permute.xlu0 %2181
        %v2185 = vsub.f32 %v345, %v2180
        %v2186 = vsub.f32 %v346, %v2182
        %v2187 = vand.u32 2147483647, %v2185
        %v2188 = vand.u32 2147483647, %v2186
        %2191 = vrot.lane.b32.xlu0 %v2177, 14
        %v2192 = vpop.permute.xlu0 %2191
        %2193 = vrot.lane.b32.xlu0 %v2178, 14
        %v2194 = vpop.permute.xlu0 %2193
        %v2197 = vmul.f32 %v2187, %v2192
        %v2198 = vmul.f32 %v2188, %v2194
        %v2199 = vsub.f32 0.0, %v2197
        %v2200 = vsub.f32 0.0, %v2198
        %v2201 = vmul.f32 %v2199, 1.442695
        %v2202 = vpow.pop %v2201
        %v2203 = vmul.f32 %v2200, 1.442695
        %v2204 = vpow.pop %v2203
        %v2205 = vstv %s2126
        %v2206 = vmul.f32 %v2205, %v2172
        %v2207 = vmul.f32 %v2205, %v2173
        %v2208 = vmul.f32 %v2206, %v2202
        %v2209 = vmul.f32 %v2207, %v2204
        %v2210 = vmul.f32 %v321, %v2208
        %v2211 = vmul.f32 %v322, %v2209
        %2214 = vrot.lane.b32.xlu0 %v2210, 114
        %v2215 = vpop.permute.xlu0 %2214
        %2216 = vrot.lane.b32.xlu0 %v2211, 114
        %v2217 = vpop.permute.xlu0 %2216
        %v2220 = vadd.f32 %v2089, %v2215
        %v2221 = vadd.f32 %v2090, %v2217
        %v2222 = vmul.f32 %v325, %v2208
        %v2223 = vmul.f32 %v326, %v2209
        %2226 = vrot.lane.b32.xlu0 %v2222, 114
        %v2227 = vpop.permute.xlu0 %2226
        %2228 = vrot.lane.b32.xlu0 %v2223, 114
        %v2229 = vpop.permute.xlu0 %2228
        %v2232 = vadd.f32 %v2101, %v2227
        %v2233 = vadd.f32 %v2102, %v2229
        %v2234 = vmul.f32 %v329, %v2208
        %v2235 = vmul.f32 %v330, %v2209
        %2238 = vrot.lane.b32.xlu0 %v2234, 114
        %v2239 = vpop.permute.xlu0 %2238
        %2240 = vrot.lane.b32.xlu0 %v2235, 114
        %v2241 = vpop.permute.xlu0 %2240
        %v2244 = vadd.f32 %v2113, %v2239
        %v2245 = vadd.f32 %v2114, %v2241
        %2248 = vrot.lane.b32.xlu0 %v2208, 114
        %v2249 = vpop.permute.xlu0 %2248
        %2250 = vrot.lane.b32.xlu0 %v2209, 114
        %v2251 = vpop.permute.xlu0 %2250
        %v2254 = vadd.f32 %v2123, %v2249
        %v2255 = vadd.f32 %v2124, %v2251
        %s2256 = sadd.s32 %s319, 1
        %s2257 = scalar_lea.vmem %s291, %s2256
        %v2258 = vld [vmem:[%s2257] sm:$0xff]
        %v2259 = vld [vmem:[%s2257 + $0x8] sm:$0xff]
        %s2260 = sadd.s32 %s2256, 32
        %s2261 = scalar_lea.vmem %s291, %s2260
        %v2262 = vld [vmem:[%s2261] sm:$0xff]
        %v2263 = vld [vmem:[%s2261 + $0x8] sm:$0xff]
        %s2264 = sadd.s32 %s2256, 64
        %s2265 = scalar_lea.vmem %s291, %s2264
        %v2266 = vld [vmem:[%s2265] sm:$0xff]
        %v2267 = vld [vmem:[%s2265 + $0x8] sm:$0xff]
        %s2268 = sadd.s32 %s2256, 96
        %s2269 = scalar_lea.vmem %s291, %s2268
        %v2270 = vld [vmem:[%s2269] sm:$0xff]
        %v2271 = vld [vmem:[%s2269 + $0x8] sm:$0xff]
        %s2272 = sadd.s32 %s2256, 128
        %s2273 = scalar_lea.vmem %s291, %s2272
        %v2274 = vld [vmem:[%s2273] sm:$0xff]
        %v2275 = vld [vmem:[%s2273 + $0x8] sm:$0xff]
        %s2276 = sadd.s32 %s2256, 160
        %s2277 = scalar_lea.vmem %s291, %s2276
        %v2278 = vld [vmem:[%s2277] sm:$0xff]
        %v2279 = vld [vmem:[%s2277 + $0x8] sm:$0xff]
        %s2280 = sadd.s32 %s2256, 192
        %s2281 = scalar_lea.vmem %s291, %s2280
        %v2282 = vld [vmem:[%s2281] sm:$0xff]
        %v2283 = vld [vmem:[%s2281 + $0x8] sm:$0xff]
        %s2284 = smul.u32 %s2256, 15
        %s2285 = sld [smem:[#allocation4 + %s2284]]
        %s2286 = sld [smem:[#allocation7 + %s2284]]
        %v2287 = vmul.f32 %v2270, %v305
        %v2288 = vmul.f32 %v2271, %v306
        %v2289 = vmul.f32 %v2274, %v308
        %v2290 = vmul.f32 %v2275, %v309
        %v2291 = vadd.f32 %v2287, %v2289
        %v2292 = vadd.f32 %v2288, %v2290
        %v2293 = vmul.f32 %v2278, %v311
        %v2294 = vmul.f32 %v2279, %v312
        %v2295 = vadd.f32 %v2291, %v2293
        %v2296 = vadd.f32 %v2292, %v2294
        %v2297 = vmax.f32 %v2295, 0.0001
        %v2298 = vmax.f32 %v2296, 0.0001
        %v2299 = vmin.f32 %v2297, 1.0
        %v2300 = vmin.f32 %v2298, 1.0
        %v2301 = vmul.f32 %v2299, %v2299
        %v2302 = vmul.f32 %v2300, %v2300
        %v2303 = vmul.f32 %v2301, %v2301
        %v2304 = vmul.f32 %v2302, %v2302
        %v2305 = vmul.f32 %v2303, %v2303
        %v2306 = vmul.f32 %v2304, %v2304
        %v2307 = vmul.f32 %v2305, %v2305
        %v2308 = vmul.f32 %v2306, %v2306
        %v2309 = vmul.f32 %v2307, %v2307
        %v2310 = vmul.f32 %v2308, %v2308
        %v2311 = vmul.f32 %v2309, %v2309
        %v2312 = vmul.f32 %v2310, %v2310
        %v2313 = vmul.f32 %v2311, %v2311
        %v2314 = vmul.f32 %v2312, %v2312
        %v2315 = vstv %s2286
        %v2316 = vmul.f32 %v317, %v2315
        %v2317 = vmul.f32 %v318, %v2315
        %v2318 = vmin.f32 %v2316, 10000.0
        %v2319 = vmin.f32 %v2317, 10000.0
        %v2320 = vsub.f32 %v2282, %v314
        %v2321 = vsub.f32 %v2283, %v315
        %v2322 = vand.u32 2147483647, %v2320
        %v2323 = vand.u32 2147483647, %v2321
        %v2324 = vmul.f32 %v2322, %v2318
        %v2325 = vmul.f32 %v2323, %v2319
        %v2326 = vsub.f32 0.0, %v2324
        %v2327 = vsub.f32 0.0, %v2325
        %v2328 = vmul.f32 %v2326, 1.442695
        %v2329 = vpow.pop %v2328
        %v2330 = vmul.f32 %v2327, 1.442695
        %v2331 = vpow.pop %v2330
        %v2332 = vstv %s2285
        %v2333 = vmul.f32 %v2332, %v2313
        %v2334 = vmul.f32 %v2332, %v2314
        %v2335 = vmul.f32 %v2333, %v2329
        %v2336 = vmul.f32 %v2334, %v2331
        %v2337 = vmul.f32 %v2258, %v2335
        %v2338 = vmul.f32 %v2259, %v2336
        %v2339 = vadd.f32 %v2220, %v2337
        %v2340 = vadd.f32 %v2221, %v2338
        %v2341 = vmul.f32 %v2262, %v2335
        %v2342 = vmul.f32 %v2263, %v2336
        %v2343 = vadd.f32 %v2232, %v2341
        %v2344 = vadd.f32 %v2233, %v2342
        %v2345 = vmul.f32 %v2266, %v2335
        %v2346 = vmul.f32 %v2267, %v2336
        %v2347 = vadd.f32 %v2244, %v2345
        %v2348 = vadd.f32 %v2245, %v2346
        %v2349 = vadd.f32 %v2254, %v2335
        %v2350 = vadd.f32 %v2255, %v2336
        %s2351 = sadd.s32 %s2284, 1
        %s2352 = sld [smem:[#allocation4 + %s2351]]
        %s2353 = sld [smem:[#allocation7 + %s2351]]
        %v2354 = vmul.f32 %v2270, %v420
        %v2355 = vmul.f32 %v2271, %v422
        %v2356 = vmul.f32 %v2274, %v430
        %v2357 = vmul.f32 %v2275, %v432
        %v2358 = vadd.f32 %v2354, %v2356
        %v2359 = vadd.f32 %v2355, %v2357
        %v2360 = vmul.f32 %v2278, %v442
        %v2361 = vmul.f32 %v2279, %v444
        %v2362 = vadd.f32 %v2358, %v2360
        %v2363 = vadd.f32 %v2359, %v2361
        %v2364 = vmax.f32 %v2362, 0.0001
        %v2365 = vmax.f32 %v2363, 0.0001
        %v2366 = vmin.f32 %v2364, 1.0
        %v2367 = vmin.f32 %v2365, 1.0
        %v2368 = vmul.f32 %v2366, %v2366
        %v2369 = vmul.f32 %v2367, %v2367
        %v2370 = vmul.f32 %v2368, %v2368
        %v2371 = vmul.f32 %v2369, %v2369
        %v2372 = vmul.f32 %v2370, %v2370
        %v2373 = vmul.f32 %v2371, %v2371
        %v2374 = vmul.f32 %v2372, %v2372
        %v2375 = vmul.f32 %v2373, %v2373
        %v2376 = vmul.f32 %v2374, %v2374
        %v2377 = vmul.f32 %v2375, %v2375
        %v2378 = vmul.f32 %v2376, %v2376
        %v2379 = vmul.f32 %v2377, %v2377
        %v2380 = vmul.f32 %v2378, %v2378
        %v2381 = vmul.f32 %v2379, %v2379
        %v2382 = vstv %s2353
        %v2383 = vmul.f32 %v317, %v2382
        %v2384 = vmul.f32 %v318, %v2382
        %v2385 = vmin.f32 %v2383, 10000.0
        %v2386 = vmin.f32 %v2384, 10000.0
        %v2387 = vsub.f32 %v2282, %v477
        %v2388 = vsub.f32 %v2283, %v479
        %v2389 = vand.u32 2147483647, %v2387
        %v2390 = vand.u32 2147483647, %v2388
        %2393 = vrot.lane.b32.xlu0 %v2385, 1
        %v2394 = vpop.permute.xlu0 %2393
        %2395 = vrot.lane.b32.xlu0 %v2386, 1
        %v2396 = vpop.permute.xlu0 %2395
        %v2399 = vmul.f32 %v2389, %v2394
        %v2400 = vmul.f32 %v2390, %v2396
        %v2401 = vsub.f32 0.0, %v2399
        %v2402 = vsub.f32 0.0, %v2400
        %v2403 = vmul.f32 %v2401, 1.442695
        %v2404 = vpow.pop %v2403
        %v2405 = vmul.f32 %v2402, 1.442695
        %v2406 = vpow.pop %v2405
        %v2407 = vstv %s2352
        %v2408 = vmul.f32 %v2407, %v2380
        %v2409 = vmul.f32 %v2407, %v2381
        %v2410 = vmul.f32 %v2408, %v2404
        %v2411 = vmul.f32 %v2409, %v2406
        %v2412 = vmul.f32 %v2258, %v2410
        %v2413 = vmul.f32 %v2259, %v2411
        %2416 = vrot.lane.b32.xlu0 %v2412, 127
        %v2417 = vpop.permute.xlu0 %2416
        %2418 = vrot.lane.b32.xlu0 %v2413, 127
        %v2419 = vpop.permute.xlu0 %2418
        %v2422 = vadd.f32 %v2339, %v2417
        %v2423 = vadd.f32 %v2340, %v2419
        %v2424 = vmul.f32 %v2262, %v2410
        %v2425 = vmul.f32 %v2263, %v2411
        %2428 = vrot.lane.b32.xlu0 %v2424, 127
        %v2429 = vpop.permute.xlu0 %2428
        %2430 = vrot.lane.b32.xlu0 %v2425, 127
        %v2431 = vpop.permute.xlu0 %2430
        %v2434 = vadd.f32 %v2343, %v2429
        %v2435 = vadd.f32 %v2344, %v2431
        %v2436 = vmul.f32 %v2266, %v2410
        %v2437 = vmul.f32 %v2267, %v2411
        %2440 = vrot.lane.b32.xlu0 %v2436, 127
        %v2441 = vpop.permute.xlu0 %2440
        %2442 = vrot.lane.b32.xlu0 %v2437, 127
        %v2443 = vpop.permute.xlu0 %2442
        %v2446 = vadd.f32 %v2347, %v2441
        %v2447 = vadd.f32 %v2348, %v2443
        %2450 = vrot.lane.b32.xlu0 %v2410, 127
        %v2451 = vpop.permute.xlu0 %2450
        %2452 = vrot.lane.b32.xlu0 %v2411, 127
        %v2453 = vpop.permute.xlu0 %2452
        %v2456 = vadd.f32 %v2349, %v2451
        %v2457 = vadd.f32 %v2350, %v2453
        %s2458 = sadd.s32 %s2284, 2
        %s2459 = sld [smem:[#allocation4 + %s2458]]
        %s2460 = sld [smem:[#allocation7 + %s2458]]
        %v2461 = vmul.f32 %v2270, %v557
        %v2462 = vmul.f32 %v2271, %v559
        %v2463 = vmul.f32 %v2274, %v565
        %v2464 = vmul.f32 %v2275, %v567
        %v2465 = vadd.f32 %v2461, %v2463
        %v2466 = vadd.f32 %v2462, %v2464
        %v2467 = vmul.f32 %v2278, %v575
        %v2468 = vmul.f32 %v2279, %v577
        %v2469 = vadd.f32 %v2465, %v2467
        %v2470 = vadd.f32 %v2466, %v2468
        %v2471 = vmax.f32 %v2469, 0.0001
        %v2472 = vmax.f32 %v2470, 0.0001
        %v2473 = vmin.f32 %v2471, 1.0
        %v2474 = vmin.f32 %v2472, 1.0
        %v2475 = vmul.f32 %v2473, %v2473
        %v2476 = vmul.f32 %v2474, %v2474
        %v2477 = vmul.f32 %v2475, %v2475
        %v2478 = vmul.f32 %v2476, %v2476
        %v2479 = vmul.f32 %v2477, %v2477
        %v2480 = vmul.f32 %v2478, %v2478
        %v2481 = vmul.f32 %v2479, %v2479
        %v2482 = vmul.f32 %v2480, %v2480
        %v2483 = vmul.f32 %v2481, %v2481
        %v2484 = vmul.f32 %v2482, %v2482
        %v2485 = vmul.f32 %v2483, %v2483
        %v2486 = vmul.f32 %v2484, %v2484
        %v2487 = vmul.f32 %v2485, %v2485
        %v2488 = vmul.f32 %v2486, %v2486
        %v2489 = vstv %s2460
        %v2490 = vmul.f32 %v317, %v2489
        %v2491 = vmul.f32 %v318, %v2489
        %v2492 = vmin.f32 %v2490, 10000.0
        %v2493 = vmin.f32 %v2491, 10000.0
        %v2494 = vsub.f32 %v2282, %v608
        %v2495 = vsub.f32 %v2283, %v610
        %v2496 = vand.u32 2147483647, %v2494
        %v2497 = vand.u32 2147483647, %v2495
        %2500 = vrot.lane.b32.xlu0 %v2492, 2
        %v2501 = vpop.permute.xlu0 %2500
        %2502 = vrot.lane.b32.xlu0 %v2493, 2
        %v2503 = vpop.permute.xlu0 %2502
        %v2506 = vmul.f32 %v2496, %v2501
        %v2507 = vmul.f32 %v2497, %v2503
        %v2508 = vsub.f32 0.0, %v2506
        %v2509 = vsub.f32 0.0, %v2507
        %v2510 = vmul.f32 %v2508, 1.442695
        %v2511 = vpow.pop %v2510
        %v2512 = vmul.f32 %v2509, 1.442695
        %v2513 = vpow.pop %v2512
        %v2514 = vstv %s2459
        %v2515 = vmul.f32 %v2514, %v2487
        %v2516 = vmul.f32 %v2514, %v2488
        %v2517 = vmul.f32 %v2515, %v2511
        %v2518 = vmul.f32 %v2516, %v2513
        %v2519 = vmul.f32 %v2258, %v2517
        %v2520 = vmul.f32 %v2259, %v2518
        %2523 = vrot.lane.b32.xlu0 %v2519, 126
        %v2524 = vpop.permute.xlu0 %2523
        %2525 = vrot.lane.b32.xlu0 %v2520, 126
        %v2526 = vpop.permute.xlu0 %2525
        %v2529 = vadd.f32 %v2422, %v2524
        %v2530 = vadd.f32 %v2423, %v2526
        %v2531 = vmul.f32 %v2262, %v2517
        %v2532 = vmul.f32 %v2263, %v2518
        %2535 = vrot.lane.b32.xlu0 %v2531, 126
        %v2536 = vpop.permute.xlu0 %2535
        %2537 = vrot.lane.b32.xlu0 %v2532, 126
        %v2538 = vpop.permute.xlu0 %2537
        %v2541 = vadd.f32 %v2434, %v2536
        %v2542 = vadd.f32 %v2435, %v2538
        %v2543 = vmul.f32 %v2266, %v2517
        %v2544 = vmul.f32 %v2267, %v2518
        %2547 = vrot.lane.b32.xlu0 %v2543, 126
        %v2548 = vpop.permute.xlu0 %2547
        %2549 = vrot.lane.b32.xlu0 %v2544, 126
        %v2550 = vpop.permute.xlu0 %2549
        %v2553 = vadd.f32 %v2446, %v2548
        %v2554 = vadd.f32 %v2447, %v2550
        %2557 = vrot.lane.b32.xlu0 %v2517, 126
        %v2558 = vpop.permute.xlu0 %2557
        %2559 = vrot.lane.b32.xlu0 %v2518, 126
        %v2560 = vpop.permute.xlu0 %2559
        %v2563 = vadd.f32 %v2456, %v2558
        %v2564 = vadd.f32 %v2457, %v2560
        %s2565 = sadd.s32 %s2284, 3
        %s2566 = sld [smem:[#allocation4 + %s2565]]
        %s2567 = sld [smem:[#allocation7 + %s2565]]
        %v2568 = vmul.f32 %v2270, %v688
        %v2569 = vmul.f32 %v2271, %v690
        %v2570 = vmul.f32 %v2274, %v696
        %v2571 = vmul.f32 %v2275, %v698
        %v2572 = vadd.f32 %v2568, %v2570
        %v2573 = vadd.f32 %v2569, %v2571
        %v2574 = vmul.f32 %v2278, %v706
        %v2575 = vmul.f32 %v2279, %v708
        %v2576 = vadd.f32 %v2572, %v2574
        %v2577 = vadd.f32 %v2573, %v2575
        %v2578 = vmax.f32 %v2576, 0.0001
        %v2579 = vmax.f32 %v2577, 0.0001
        %v2580 = vmin.f32 %v2578, 1.0
        %v2581 = vmin.f32 %v2579, 1.0
        %v2582 = vmul.f32 %v2580, %v2580
        %v2583 = vmul.f32 %v2581, %v2581
        %v2584 = vmul.f32 %v2582, %v2582
        %v2585 = vmul.f32 %v2583, %v2583
        %v2586 = vmul.f32 %v2584, %v2584
        %v2587 = vmul.f32 %v2585, %v2585
        %v2588 = vmul.f32 %v2586, %v2586
        %v2589 = vmul.f32 %v2587, %v2587
        %v2590 = vmul.f32 %v2588, %v2588
        %v2591 = vmul.f32 %v2589, %v2589
        %v2592 = vmul.f32 %v2590, %v2590
        %v2593 = vmul.f32 %v2591, %v2591
        %v2594 = vmul.f32 %v2592, %v2592
        %v2595 = vmul.f32 %v2593, %v2593
        %v2596 = vstv %s2567
        %v2597 = vmul.f32 %v317, %v2596
        %v2598 = vmul.f32 %v318, %v2596
        %v2599 = vmin.f32 %v2597, 10000.0
        %v2600 = vmin.f32 %v2598, 10000.0
        %v2601 = vsub.f32 %v2282, %v739
        %v2602 = vsub.f32 %v2283, %v741
        %v2603 = vand.u32 2147483647, %v2601
        %v2604 = vand.u32 2147483647, %v2602
        %2607 = vrot.lane.b32.xlu0 %v2599, 3
        %v2608 = vpop.permute.xlu0 %2607
        %2609 = vrot.lane.b32.xlu0 %v2600, 3
        %v2610 = vpop.permute.xlu0 %2609
        %v2613 = vmul.f32 %v2603, %v2608
        %v2614 = vmul.f32 %v2604, %v2610
        %v2615 = vsub.f32 0.0, %v2613
        %v2616 = vsub.f32 0.0, %v2614
        %v2617 = vmul.f32 %v2615, 1.442695
        %v2618 = vpow.pop %v2617
        %v2619 = vmul.f32 %v2616, 1.442695
        %v2620 = vpow.pop %v2619
        %v2621 = vstv %s2566
        %v2622 = vmul.f32 %v2621, %v2594
        %v2623 = vmul.f32 %v2621, %v2595
        %v2624 = vmul.f32 %v2622, %v2618
        %v2625 = vmul.f32 %v2623, %v2620
        %v2626 = vmul.f32 %v2258, %v2624
        %v2627 = vmul.f32 %v2259, %v2625
        %2630 = vrot.lane.b32.xlu0 %v2626, 125
        %v2631 = vpop.permute.xlu0 %2630
        %2632 = vrot.lane.b32.xlu0 %v2627, 125
        %v2633 = vpop.permute.xlu0 %2632
        %v2636 = vadd.f32 %v2529, %v2631
        %v2637 = vadd.f32 %v2530, %v2633
        %v2638 = vmul.f32 %v2262, %v2624
        %v2639 = vmul.f32 %v2263, %v2625
        %2642 = vrot.lane.b32.xlu0 %v2638, 125
        %v2643 = vpop.permute.xlu0 %2642
        %2644 = vrot.lane.b32.xlu0 %v2639, 125
        %v2645 = vpop.permute.xlu0 %2644
        %v2648 = vadd.f32 %v2541, %v2643
        %v2649 = vadd.f32 %v2542, %v2645
        %v2650 = vmul.f32 %v2266, %v2624
        %v2651 = vmul.f32 %v2267, %v2625
        %2654 = vrot.lane.b32.xlu0 %v2650, 125
        %v2655 = vpop.permute.xlu0 %2654
        %2656 = vrot.lane.b32.xlu0 %v2651, 125
        %v2657 = vpop.permute.xlu0 %2656
        %v2660 = vadd.f32 %v2553, %v2655
        %v2661 = vadd.f32 %v2554, %v2657
        %2664 = vrot.lane.b32.xlu0 %v2624, 125
        %v2665 = vpop.permute.xlu0 %2664
        %2666 = vrot.lane.b32.xlu0 %v2625, 125
        %v2667 = vpop.permute.xlu0 %2666
        %v2670 = vadd.f32 %v2563, %v2665
        %v2671 = vadd.f32 %v2564, %v2667
        %s2672 = sadd.s32 %s2284, 4
        %s2673 = sld [smem:[#allocation4 + %s2672]]
        %s2674 = sld [smem:[#allocation7 + %s2672]]
        %v2675 = vmul.f32 %v2270, %v819
        %v2676 = vmul.f32 %v2271, %v821
        %v2677 = vmul.f32 %v2274, %v827
        %v2678 = vmul.f32 %v2275, %v829
        %v2679 = vadd.f32 %v2675, %v2677
        %v2680 = vadd.f32 %v2676, %v2678
        %v2681 = vmul.f32 %v2278, %v837
        %v2682 = vmul.f32 %v2279, %v839
        %v2683 = vadd.f32 %v2679, %v2681
        %v2684 = vadd.f32 %v2680, %v2682
        %v2685 = vmax.f32 %v2683, 0.0001
        %v2686 = vmax.f32 %v2684, 0.0001
        %v2687 = vmin.f32 %v2685, 1.0
        %v2688 = vmin.f32 %v2686, 1.0
        %v2689 = vmul.f32 %v2687, %v2687
        %v2690 = vmul.f32 %v2688, %v2688
        %v2691 = vmul.f32 %v2689, %v2689
        %v2692 = vmul.f32 %v2690, %v2690
        %v2693 = vmul.f32 %v2691, %v2691
        %v2694 = vmul.f32 %v2692, %v2692
        %v2695 = vmul.f32 %v2693, %v2693
        %v2696 = vmul.f32 %v2694, %v2694
        %v2697 = vmul.f32 %v2695, %v2695
        %v2698 = vmul.f32 %v2696, %v2696
        %v2699 = vmul.f32 %v2697, %v2697
        %v2700 = vmul.f32 %v2698, %v2698
        %v2701 = vmul.f32 %v2699, %v2699
        %v2702 = vmul.f32 %v2700, %v2700
        %v2703 = vstv %s2674
        %v2704 = vmul.f32 %v317, %v2703
        %v2705 = vmul.f32 %v318, %v2703
        %v2706 = vmin.f32 %v2704, 10000.0
        %v2707 = vmin.f32 %v2705, 10000.0
        %v2708 = vsub.f32 %v2282, %v870
        %v2709 = vsub.f32 %v2283, %v872
        %v2710 = vand.u32 2147483647, %v2708
        %v2711 = vand.u32 2147483647, %v2709
        %2714 = vrot.lane.b32.xlu0 %v2706, 4
        %v2715 = vpop.permute.xlu0 %2714
        %2716 = vrot.lane.b32.xlu0 %v2707, 4
        %v2717 = vpop.permute.xlu0 %2716
        %v2720 = vmul.f32 %v2710, %v2715
        %v2721 = vmul.f32 %v2711, %v2717
        %v2722 = vsub.f32 0.0, %v2720
        %v2723 = vsub.f32 0.0, %v2721
        %v2724 = vmul.f32 %v2722, 1.442695
        %v2725 = vpow.pop %v2724
        %v2726 = vmul.f32 %v2723, 1.442695
        %v2727 = vpow.pop %v2726
        %v2728 = vstv %s2673
        %v2729 = vmul.f32 %v2728, %v2701
        %v2730 = vmul.f32 %v2728, %v2702
        %v2731 = vmul.f32 %v2729, %v2725
        %v2732 = vmul.f32 %v2730, %v2727
        %v2733 = vmul.f32 %v2258, %v2731
        %v2734 = vmul.f32 %v2259, %v2732
        %2737 = vrot.lane.b32.xlu0 %v2733, 124
        %v2738 = vpop.permute.xlu0 %2737
        %2739 = vrot.lane.b32.xlu0 %v2734, 124
        %v2740 = vpop.permute.xlu0 %2739
        %v2743 = vadd.f32 %v2636, %v2738
        %v2744 = vadd.f32 %v2637, %v2740
        %v2745 = vmul.f32 %v2262, %v2731
        %v2746 = vmul.f32 %v2263, %v2732
        %2749 = vrot.lane.b32.xlu0 %v2745, 124
        %v2750 = vpop.permute.xlu0 %2749
        %2751 = vrot.lane.b32.xlu0 %v2746, 124
        %v2752 = vpop.permute.xlu0 %2751
        %v2755 = vadd.f32 %v2648, %v2750
        %v2756 = vadd.f32 %v2649, %v2752
        %v2757 = vmul.f32 %v2266, %v2731
        %v2758 = vmul.f32 %v2267, %v2732
        %2761 = vrot.lane.b32.xlu0 %v2757, 124
        %v2762 = vpop.permute.xlu0 %2761
        %2763 = vrot.lane.b32.xlu0 %v2758, 124
        %v2764 = vpop.permute.xlu0 %2763
        %v2767 = vadd.f32 %v2660, %v2762
        %v2768 = vadd.f32 %v2661, %v2764
        %2771 = vrot.lane.b32.xlu0 %v2731, 124
        %v2772 = vpop.permute.xlu0 %2771
        %2773 = vrot.lane.b32.xlu0 %v2732, 124
        %v2774 = vpop.permute.xlu0 %2773
        %v2777 = vadd.f32 %v2670, %v2772
        %v2778 = vadd.f32 %v2671, %v2774
        %s2779 = sadd.s32 %s2284, 5
        %s2780 = sld [smem:[#allocation4 + %s2779]]
        %s2781 = sld [smem:[#allocation7 + %s2779]]
        %v2782 = vmul.f32 %v2270, %v950
        %v2783 = vmul.f32 %v2271, %v952
        %v2784 = vmul.f32 %v2274, %v958
        %v2785 = vmul.f32 %v2275, %v960
        %v2786 = vadd.f32 %v2782, %v2784
        %v2787 = vadd.f32 %v2783, %v2785
        %v2788 = vmul.f32 %v2278, %v968
        %v2789 = vmul.f32 %v2279, %v970
        %v2790 = vadd.f32 %v2786, %v2788
        %v2791 = vadd.f32 %v2787, %v2789
        %v2792 = vmax.f32 %v2790, 0.0001
        %v2793 = vmax.f32 %v2791, 0.0001
        %v2794 = vmin.f32 %v2792, 1.0
        %v2795 = vmin.f32 %v2793, 1.0
        %v2796 = vmul.f32 %v2794, %v2794
        %v2797 = vmul.f32 %v2795, %v2795
        %v2798 = vmul.f32 %v2796, %v2796
        %v2799 = vmul.f32 %v2797, %v2797
        %v2800 = vmul.f32 %v2798, %v2798
        %v2801 = vmul.f32 %v2799, %v2799
        %v2802 = vmul.f32 %v2800, %v2800
        %v2803 = vmul.f32 %v2801, %v2801
        %v2804 = vmul.f32 %v2802, %v2802
        %v2805 = vmul.f32 %v2803, %v2803
        %v2806 = vmul.f32 %v2804, %v2804
        %v2807 = vmul.f32 %v2805, %v2805
        %v2808 = vmul.f32 %v2806, %v2806
        %v2809 = vmul.f32 %v2807, %v2807
        %v2810 = vstv %s2781
        %v2811 = vmul.f32 %v317, %v2810
        %v2812 = vmul.f32 %v318, %v2810
        %v2813 = vmin.f32 %v2811, 10000.0
        %v2814 = vmin.f32 %v2812, 10000.0
        %v2815 = vsub.f32 %v2282, %v1001
        %v2816 = vsub.f32 %v2283, %v1003
        %v2817 = vand.u32 2147483647, %v2815
        %v2818 = vand.u32 2147483647, %v2816
        %2821 = vrot.lane.b32.xlu0 %v2813, 5
        %v2822 = vpop.permute.xlu0 %2821
        %2823 = vrot.lane.b32.xlu0 %v2814, 5
        %v2824 = vpop.permute.xlu0 %2823
        %v2827 = vmul.f32 %v2817, %v2822
        %v2828 = vmul.f32 %v2818, %v2824
        %v2829 = vsub.f32 0.0, %v2827
        %v2830 = vsub.f32 0.0, %v2828
        %v2831 = vmul.f32 %v2829, 1.442695
        %v2832 = vpow.pop %v2831
        %v2833 = vmul.f32 %v2830, 1.442695
        %v2834 = vpow.pop %v2833
        %v2835 = vstv %s2780
        %v2836 = vmul.f32 %v2835, %v2808
        %v2837 = vmul.f32 %v2835, %v2809
        %v2838 = vmul.f32 %v2836, %v2832
        %v2839 = vmul.f32 %v2837, %v2834
        %v2840 = vmul.f32 %v2258, %v2838
        %v2841 = vmul.f32 %v2259, %v2839
        %2844 = vrot.lane.b32.xlu0 %v2840, 123
        %v2845 = vpop.permute.xlu0 %2844
        %2846 = vrot.lane.b32.xlu0 %v2841, 123
        %v2847 = vpop.permute.xlu0 %2846
        %v2850 = vadd.f32 %v2743, %v2845
        %v2851 = vadd.f32 %v2744, %v2847
        %v2852 = vmul.f32 %v2262, %v2838
        %v2853 = vmul.f32 %v2263, %v2839
        %2856 = vrot.lane.b32.xlu0 %v2852, 123
        %v2857 = vpop.permute.xlu0 %2856
        %2858 = vrot.lane.b32.xlu0 %v2853, 123
        %v2859 = vpop.permute.xlu0 %2858
        %v2862 = vadd.f32 %v2755, %v2857
        %v2863 = vadd.f32 %v2756, %v2859
        %v2864 = vmul.f32 %v2266, %v2838
        %v2865 = vmul.f32 %v2267, %v2839
        %2868 = vrot.lane.b32.xlu0 %v2864, 123
        %v2869 = vpop.permute.xlu0 %2868
        %2870 = vrot.lane.b32.xlu0 %v2865, 123
        %v2871 = vpop.permute.xlu0 %2870
        %v2874 = vadd.f32 %v2767, %v2869
        %v2875 = vadd.f32 %v2768, %v2871
        %2878 = vrot.lane.b32.xlu0 %v2838, 123
        %v2879 = vpop.permute.xlu0 %2878
        %2880 = vrot.lane.b32.xlu0 %v2839, 123
        %v2881 = vpop.permute.xlu0 %2880
        %v2884 = vadd.f32 %v2777, %v2879
        %v2885 = vadd.f32 %v2778, %v2881
        %s2886 = sadd.s32 %s2284, 6
        %s2887 = sld [smem:[#allocation4 + %s2886]]
        %s2888 = sld [smem:[#allocation7 + %s2886]]
        %v2889 = vmul.f32 %v2270, %v1081
        %v2890 = vmul.f32 %v2271, %v1083
        %v2891 = vmul.f32 %v2274, %v1089
        %v2892 = vmul.f32 %v2275, %v1091
        %v2893 = vadd.f32 %v2889, %v2891
        %v2894 = vadd.f32 %v2890, %v2892
        %v2895 = vmul.f32 %v2278, %v1099
        %v2896 = vmul.f32 %v2279, %v1101
        %v2897 = vadd.f32 %v2893, %v2895
        %v2898 = vadd.f32 %v2894, %v2896
        %v2899 = vmax.f32 %v2897, 0.0001
        %v2900 = vmax.f32 %v2898, 0.0001
        %v2901 = vmin.f32 %v2899, 1.0
        %v2902 = vmin.f32 %v2900, 1.0
        %v2903 = vmul.f32 %v2901, %v2901
        %v2904 = vmul.f32 %v2902, %v2902
        %v2905 = vmul.f32 %v2903, %v2903
        %v2906 = vmul.f32 %v2904, %v2904
        %v2907 = vmul.f32 %v2905, %v2905
        %v2908 = vmul.f32 %v2906, %v2906
        %v2909 = vmul.f32 %v2907, %v2907
        %v2910 = vmul.f32 %v2908, %v2908
        %v2911 = vmul.f32 %v2909, %v2909
        %v2912 = vmul.f32 %v2910, %v2910
        %v2913 = vmul.f32 %v2911, %v2911
        %v2914 = vmul.f32 %v2912, %v2912
        %v2915 = vmul.f32 %v2913, %v2913
        %v2916 = vmul.f32 %v2914, %v2914
        %v2917 = vstv %s2888
        %v2918 = vmul.f32 %v317, %v2917
        %v2919 = vmul.f32 %v318, %v2917
        %v2920 = vmin.f32 %v2918, 10000.0
        %v2921 = vmin.f32 %v2919, 10000.0
        %v2922 = vsub.f32 %v2282, %v1132
        %v2923 = vsub.f32 %v2283, %v1134
        %v2924 = vand.u32 2147483647, %v2922
        %v2925 = vand.u32 2147483647, %v2923
        %2928 = vrot.lane.b32.xlu0 %v2920, 6
        %v2929 = vpop.permute.xlu0 %2928
        %2930 = vrot.lane.b32.xlu0 %v2921, 6
        %v2931 = vpop.permute.xlu0 %2930
        %v2934 = vmul.f32 %v2924, %v2929
        %v2935 = vmul.f32 %v2925, %v2931
        %v2936 = vsub.f32 0.0, %v2934
        %v2937 = vsub.f32 0.0, %v2935
        %v2938 = vmul.f32 %v2936, 1.442695
        %v2939 = vpow.pop %v2938
        %v2940 = vmul.f32 %v2937, 1.442695
        %v2941 = vpow.pop %v2940
        %v2942 = vstv %s2887
        %v2943 = vmul.f32 %v2942, %v2915
        %v2944 = vmul.f32 %v2942, %v2916
        %v2945 = vmul.f32 %v2943, %v2939
        %v2946 = vmul.f32 %v2944, %v2941
        %v2947 = vmul.f32 %v2258, %v2945
        %v2948 = vmul.f32 %v2259, %v2946
        %2951 = vrot.lane.b32.xlu0 %v2947, 122
        %v2952 = vpop.permute.xlu0 %2951
        %2953 = vrot.lane.b32.xlu0 %v2948, 122
        %v2954 = vpop.permute.xlu0 %2953
        %v2957 = vadd.f32 %v2850, %v2952
        %v2958 = vadd.f32 %v2851, %v2954
        %v2959 = vmul.f32 %v2262, %v2945
        %v2960 = vmul.f32 %v2263, %v2946
        %2963 = vrot.lane.b32.xlu0 %v2959, 122
        %v2964 = vpop.permute.xlu0 %2963
        %2965 = vrot.lane.b32.xlu0 %v2960, 122
        %v2966 = vpop.permute.xlu0 %2965
        %v2969 = vadd.f32 %v2862, %v2964
        %v2970 = vadd.f32 %v2863, %v2966
        %v2971 = vmul.f32 %v2266, %v2945
        %v2972 = vmul.f32 %v2267, %v2946
        %2975 = vrot.lane.b32.xlu0 %v2971, 122
        %v2976 = vpop.permute.xlu0 %2975
        %2977 = vrot.lane.b32.xlu0 %v2972, 122
        %v2978 = vpop.permute.xlu0 %2977
        %v2981 = vadd.f32 %v2874, %v2976
        %v2982 = vadd.f32 %v2875, %v2978
        %2985 = vrot.lane.b32.xlu0 %v2945, 122
        %v2986 = vpop.permute.xlu0 %2985
        %2987 = vrot.lane.b32.xlu0 %v2946, 122
        %v2988 = vpop.permute.xlu0 %2987
        %v2991 = vadd.f32 %v2884, %v2986
        %v2992 = vadd.f32 %v2885, %v2988
        %s2993 = sadd.s32 %s2284, 7
        %s2994 = sld [smem:[#allocation4 + %s2993]]
        %s2995 = sld [smem:[#allocation7 + %s2993]]
        %v2996 = vmul.f32 %v2270, %v1212
        %v2997 = vmul.f32 %v2271, %v1214
        %v2998 = vmul.f32 %v2274, %v1220
        %v2999 = vmul.f32 %v2275, %v1222
        %v3000 = vadd.f32 %v2996, %v2998
        %v3001 = vadd.f32 %v2997, %v2999
        %v3002 = vmul.f32 %v2278, %v1230
        %v3003 = vmul.f32 %v2279, %v1232
        %v3004 = vadd.f32 %v3000, %v3002
        %v3005 = vadd.f32 %v3001, %v3003
        %v3006 = vmax.f32 %v3004, 0.0001
        %v3007 = vmax.f32 %v3005, 0.0001
        %v3008 = vmin.f32 %v3006, 1.0
        %v3009 = vmin.f32 %v3007, 1.0
        %v3010 = vmul.f32 %v3008, %v3008
        %v3011 = vmul.f32 %v3009, %v3009
        %v3012 = vmul.f32 %v3010, %v3010
        %v3013 = vmul.f32 %v3011, %v3011
        %v3014 = vmul.f32 %v3012, %v3012
        %v3015 = vmul.f32 %v3013, %v3013
        %v3016 = vmul.f32 %v3014, %v3014
        %v3017 = vmul.f32 %v3015, %v3015
        %v3018 = vmul.f32 %v3016, %v3016
        %v3019 = vmul.f32 %v3017, %v3017
        %v3020 = vmul.f32 %v3018, %v3018
        %v3021 = vmul.f32 %v3019, %v3019
        %v3022 = vmul.f32 %v3020, %v3020
        %v3023 = vmul.f32 %v3021, %v3021
        %v3024 = vstv %s2995
        %v3025 = vmul.f32 %v317, %v3024
        %v3026 = vmul.f32 %v318, %v3024
        %v3027 = vmin.f32 %v3025, 10000.0
        %v3028 = vmin.f32 %v3026, 10000.0
        %v3029 = vsub.f32 %v2282, %v1263
        %v3030 = vsub.f32 %v2283, %v1265
        %v3031 = vand.u32 2147483647, %v3029
        %v3032 = vand.u32 2147483647, %v3030
        %3035 = vrot.lane.b32.xlu0 %v3027, 7
        %v3036 = vpop.permute.xlu0 %3035
        %3037 = vrot.lane.b32.xlu0 %v3028, 7
        %v3038 = vpop.permute.xlu0 %3037
        %v3041 = vmul.f32 %v3031, %v3036
        %v3042 = vmul.f32 %v3032, %v3038
        %v3043 = vsub.f32 0.0, %v3041
        %v3044 = vsub.f32 0.0, %v3042
        %v3045 = vmul.f32 %v3043, 1.442695
        %v3046 = vpow.pop %v3045
        %v3047 = vmul.f32 %v3044, 1.442695
        %v3048 = vpow.pop %v3047
        %v3049 = vstv %s2994
        %v3050 = vmul.f32 %v3049, %v3022
        %v3051 = vmul.f32 %v3049, %v3023
        %v3052 = vmul.f32 %v3050, %v3046
        %v3053 = vmul.f32 %v3051, %v3048
        %v3054 = vmul.f32 %v2258, %v3052
        %v3055 = vmul.f32 %v2259, %v3053
        %3058 = vrot.lane.b32.xlu0 %v3054, 121
        %v3059 = vpop.permute.xlu0 %3058
        %3060 = vrot.lane.b32.xlu0 %v3055, 121
        %v3061 = vpop.permute.xlu0 %3060
        %v3064 = vadd.f32 %v2957, %v3059
        %v3065 = vadd.f32 %v2958, %v3061
        %v3066 = vmul.f32 %v2262, %v3052
        %v3067 = vmul.f32 %v2263, %v3053
        %3070 = vrot.lane.b32.xlu0 %v3066, 121
        %v3071 = vpop.permute.xlu0 %3070
        %3072 = vrot.lane.b32.xlu0 %v3067, 121
        %v3073 = vpop.permute.xlu0 %3072
        %v3076 = vadd.f32 %v2969, %v3071
        %v3077 = vadd.f32 %v2970, %v3073
        %v3078 = vmul.f32 %v2266, %v3052
        %v3079 = vmul.f32 %v2267, %v3053
        %3082 = vrot.lane.b32.xlu0 %v3078, 121
        %v3083 = vpop.permute.xlu0 %3082
        %3084 = vrot.lane.b32.xlu0 %v3079, 121
        %v3085 = vpop.permute.xlu0 %3084
        %v3088 = vadd.f32 %v2981, %v3083
        %v3089 = vadd.f32 %v2982, %v3085
        %3092 = vrot.lane.b32.xlu0 %v3052, 121
        %v3093 = vpop.permute.xlu0 %3092
        %3094 = vrot.lane.b32.xlu0 %v3053, 121
        %v3095 = vpop.permute.xlu0 %3094
        %v3098 = vadd.f32 %v2991, %v3093
        %v3099 = vadd.f32 %v2992, %v3095
        %s3100 = sadd.s32 %s2284, 8
        %s3101 = sld [smem:[#allocation4 + %s3100]]
        %s3102 = sld [smem:[#allocation7 + %s3100]]
        %v3103 = vmul.f32 %v2270, %v1343
        %v3104 = vmul.f32 %v2271, %v1345
        %v3105 = vmul.f32 %v2274, %v1351
        %v3106 = vmul.f32 %v2275, %v1353
        %v3107 = vadd.f32 %v3103, %v3105
        %v3108 = vadd.f32 %v3104, %v3106
        %v3109 = vmul.f32 %v2278, %v1361
        %v3110 = vmul.f32 %v2279, %v1363
        %v3111 = vadd.f32 %v3107, %v3109
        %v3112 = vadd.f32 %v3108, %v3110
        %v3113 = vmax.f32 %v3111, 0.0001
        %v3114 = vmax.f32 %v3112, 0.0001
        %v3115 = vmin.f32 %v3113, 1.0
        %v3116 = vmin.f32 %v3114, 1.0
        %v3117 = vmul.f32 %v3115, %v3115
        %v3118 = vmul.f32 %v3116, %v3116
        %v3119 = vmul.f32 %v3117, %v3117
        %v3120 = vmul.f32 %v3118, %v3118
        %v3121 = vmul.f32 %v3119, %v3119
        %v3122 = vmul.f32 %v3120, %v3120
        %v3123 = vmul.f32 %v3121, %v3121
        %v3124 = vmul.f32 %v3122, %v3122
        %v3125 = vmul.f32 %v3123, %v3123
        %v3126 = vmul.f32 %v3124, %v3124
        %v3127 = vmul.f32 %v3125, %v3125
        %v3128 = vmul.f32 %v3126, %v3126
        %v3129 = vmul.f32 %v3127, %v3127
        %v3130 = vmul.f32 %v3128, %v3128
        %v3131 = vstv %s3102
        %v3132 = vmul.f32 %v317, %v3131
        %v3133 = vmul.f32 %v318, %v3131
        %v3134 = vmin.f32 %v3132, 10000.0
        %v3135 = vmin.f32 %v3133, 10000.0
        %v3136 = vsub.f32 %v2282, %v1394
        %v3137 = vsub.f32 %v2283, %v1396
        %v3138 = vand.u32 2147483647, %v3136
        %v3139 = vand.u32 2147483647, %v3137
        %3142 = vrot.lane.b32.xlu0 %v3134, 8
        %v3143 = vpop.permute.xlu0 %3142
        %3144 = vrot.lane.b32.xlu0 %v3135, 8
        %v3145 = vpop.permute.xlu0 %3144
        %v3148 = vmul.f32 %v3138, %v3143
        %v3149 = vmul.f32 %v3139, %v3145
        %v3150 = vsub.f32 0.0, %v3148
        %v3151 = vsub.f32 0.0, %v3149
        %v3152 = vmul.f32 %v3150, 1.442695
        %v3153 = vpow.pop %v3152
        %v3154 = vmul.f32 %v3151, 1.442695
        %v3155 = vpow.pop %v3154
        %v3156 = vstv %s3101
        %v3157 = vmul.f32 %v3156, %v3129
        %v3158 = vmul.f32 %v3156, %v3130
        %v3159 = vmul.f32 %v3157, %v3153
        %v3160 = vmul.f32 %v3158, %v3155
        %v3161 = vmul.f32 %v2258, %v3159
        %v3162 = vmul.f32 %v2259, %v3160
        %3165 = vrot.lane.b32.xlu0 %v3161, 120
        %v3166 = vpop.permute.xlu0 %3165
        %3167 = vrot.lane.b32.xlu0 %v3162, 120
        %v3168 = vpop.permute.xlu0 %3167
        %v3171 = vadd.f32 %v3064, %v3166
        %v3172 = vadd.f32 %v3065, %v3168
        %v3173 = vmul.f32 %v2262, %v3159
        %v3174 = vmul.f32 %v2263, %v3160
        %3177 = vrot.lane.b32.xlu0 %v3173, 120
        %v3178 = vpop.permute.xlu0 %3177
        %3179 = vrot.lane.b32.xlu0 %v3174, 120
        %v3180 = vpop.permute.xlu0 %3179
        %v3183 = vadd.f32 %v3076, %v3178
        %v3184 = vadd.f32 %v3077, %v3180
        %v3185 = vmul.f32 %v2266, %v3159
        %v3186 = vmul.f32 %v2267, %v3160
        %3189 = vrot.lane.b32.xlu0 %v3185, 120
        %v3190 = vpop.permute.xlu0 %3189
        %3191 = vrot.lane.b32.xlu0 %v3186, 120
        %v3192 = vpop.permute.xlu0 %3191
        %v3195 = vadd.f32 %v3088, %v3190
        %v3196 = vadd.f32 %v3089, %v3192
        %3199 = vrot.lane.b32.xlu0 %v3159, 120
        %v3200 = vpop.permute.xlu0 %3199
        %3201 = vrot.lane.b32.xlu0 %v3160, 120
        %v3202 = vpop.permute.xlu0 %3201
        %v3205 = vadd.f32 %v3098, %v3200
        %v3206 = vadd.f32 %v3099, %v3202
        %s3207 = sadd.s32 %s2284, 9
        %s3208 = sld [smem:[#allocation4 + %s3207]]
        %s3209 = sld [smem:[#allocation7 + %s3207]]
        %v3210 = vmul.f32 %v2270, %v1474
        %v3211 = vmul.f32 %v2271, %v1476
        %v3212 = vmul.f32 %v2274, %v1482
        %v3213 = vmul.f32 %v2275, %v1484
        %v3214 = vadd.f32 %v3210, %v3212
        %v3215 = vadd.f32 %v3211, %v3213
        %v3216 = vmul.f32 %v2278, %v1492
        %v3217 = vmul.f32 %v2279, %v1494
        %v3218 = vadd.f32 %v3214, %v3216
        %v3219 = vadd.f32 %v3215, %v3217
        %v3220 = vmax.f32 %v3218, 0.0001
        %v3221 = vmax.f32 %v3219, 0.0001
        %v3222 = vmin.f32 %v3220, 1.0
        %v3223 = vmin.f32 %v3221, 1.0
        %v3224 = vmul.f32 %v3222, %v3222
        %v3225 = vmul.f32 %v3223, %v3223
        %v3226 = vmul.f32 %v3224, %v3224
        %v3227 = vmul.f32 %v3225, %v3225
        %v3228 = vmul.f32 %v3226, %v3226
        %v3229 = vmul.f32 %v3227, %v3227
        %v3230 = vmul.f32 %v3228, %v3228
        %v3231 = vmul.f32 %v3229, %v3229
        %v3232 = vmul.f32 %v3230, %v3230
        %v3233 = vmul.f32 %v3231, %v3231
        %v3234 = vmul.f32 %v3232, %v3232
        %v3235 = vmul.f32 %v3233, %v3233
        %v3236 = vmul.f32 %v3234, %v3234
        %v3237 = vmul.f32 %v3235, %v3235
        %v3238 = vstv %s3209
        %v3239 = vmul.f32 %v317, %v3238
        %v3240 = vmul.f32 %v318, %v3238
        %v3241 = vmin.f32 %v3239, 10000.0
        %v3242 = vmin.f32 %v3240, 10000.0
        %v3243 = vsub.f32 %v2282, %v1525
        %v3244 = vsub.f32 %v2283, %v1527
        %v3245 = vand.u32 2147483647, %v3243
        %v3246 = vand.u32 2147483647, %v3244
        %3249 = vrot.lane.b32.xlu0 %v3241, 9
        %v3250 = vpop.permute.xlu0 %3249
        %3251 = vrot.lane.b32.xlu0 %v3242, 9
        %v3252 = vpop.permute.xlu0 %3251
        %v3255 = vmul.f32 %v3245, %v3250
        %v3256 = vmul.f32 %v3246, %v3252
        %v3257 = vsub.f32 0.0, %v3255
        %v3258 = vsub.f32 0.0, %v3256
        %v3259 = vmul.f32 %v3257, 1.442695
        %v3260 = vpow.pop %v3259
        %v3261 = vmul.f32 %v3258, 1.442695
        %v3262 = vpow.pop %v3261
        %v3263 = vstv %s3208
        %v3264 = vmul.f32 %v3263, %v3236
        %v3265 = vmul.f32 %v3263, %v3237
        %v3266 = vmul.f32 %v3264, %v3260
        %v3267 = vmul.f32 %v3265, %v3262
        %v3268 = vmul.f32 %v2258, %v3266
        %v3269 = vmul.f32 %v2259, %v3267
        %3272 = vrot.lane.b32.xlu0 %v3268, 119
        %v3273 = vpop.permute.xlu0 %3272
        %3274 = vrot.lane.b32.xlu0 %v3269, 119
        %v3275 = vpop.permute.xlu0 %3274
        %v3278 = vadd.f32 %v3171, %v3273
        %v3279 = vadd.f32 %v3172, %v3275
        %v3280 = vmul.f32 %v2262, %v3266
        %v3281 = vmul.f32 %v2263, %v3267
        %3284 = vrot.lane.b32.xlu0 %v3280, 119
        %v3285 = vpop.permute.xlu0 %3284
        %3286 = vrot.lane.b32.xlu0 %v3281, 119
        %v3287 = vpop.permute.xlu0 %3286
        %v3290 = vadd.f32 %v3183, %v3285
        %v3291 = vadd.f32 %v3184, %v3287
        %v3292 = vmul.f32 %v2266, %v3266
        %v3293 = vmul.f32 %v2267, %v3267
        %3296 = vrot.lane.b32.xlu0 %v3292, 119
        %v3297 = vpop.permute.xlu0 %3296
        %3298 = vrot.lane.b32.xlu0 %v3293, 119
        %v3299 = vpop.permute.xlu0 %3298
        %v3302 = vadd.f32 %v3195, %v3297
        %v3303 = vadd.f32 %v3196, %v3299
        %3306 = vrot.lane.b32.xlu0 %v3266, 119
        %v3307 = vpop.permute.xlu0 %3306
        %3308 = vrot.lane.b32.xlu0 %v3267, 119
        %v3309 = vpop.permute.xlu0 %3308
        %v3312 = vadd.f32 %v3205, %v3307
        %v3313 = vadd.f32 %v3206, %v3309
        %s3314 = sadd.s32 %s2284, 10
        %s3315 = sld [smem:[#allocation4 + %s3314]]
        %s3316 = sld [smem:[#allocation7 + %s3314]]
        %v3317 = vmul.f32 %v2270, %v1605
        %v3318 = vmul.f32 %v2271, %v1607
        %v3319 = vmul.f32 %v2274, %v1613
        %v3320 = vmul.f32 %v2275, %v1615
        %v3321 = vadd.f32 %v3317, %v3319
        %v3322 = vadd.f32 %v3318, %v3320
        %v3323 = vmul.f32 %v2278, %v1623
        %v3324 = vmul.f32 %v2279, %v1625
        %v3325 = vadd.f32 %v3321, %v3323
        %v3326 = vadd.f32 %v3322, %v3324
        %v3327 = vmax.f32 %v3325, 0.0001
        %v3328 = vmax.f32 %v3326, 0.0001
        %v3329 = vmin.f32 %v3327, 1.0
        %v3330 = vmin.f32 %v3328, 1.0
        %v3331 = vmul.f32 %v3329, %v3329
        %v3332 = vmul.f32 %v3330, %v3330
        %v3333 = vmul.f32 %v3331, %v3331
        %v3334 = vmul.f32 %v3332, %v3332
        %v3335 = vmul.f32 %v3333, %v3333
        %v3336 = vmul.f32 %v3334, %v3334
        %v3337 = vmul.f32 %v3335, %v3335
        %v3338 = vmul.f32 %v3336, %v3336
        %v3339 = vmul.f32 %v3337, %v3337
        %v3340 = vmul.f32 %v3338, %v3338
        %v3341 = vmul.f32 %v3339, %v3339
        %v3342 = vmul.f32 %v3340, %v3340
        %v3343 = vmul.f32 %v3341, %v3341
        %v3344 = vmul.f32 %v3342, %v3342
        %v3345 = vstv %s3316
        %v3346 = vmul.f32 %v317, %v3345
        %v3347 = vmul.f32 %v318, %v3345
        %v3348 = vmin.f32 %v3346, 10000.0
        %v3349 = vmin.f32 %v3347, 10000.0
        %v3350 = vsub.f32 %v2282, %v1656
        %v3351 = vsub.f32 %v2283, %v1658
        %v3352 = vand.u32 2147483647, %v3350
        %v3353 = vand.u32 2147483647, %v3351
        %3356 = vrot.lane.b32.xlu0 %v3348, 10
        %v3357 = vpop.permute.xlu0 %3356
        %3358 = vrot.lane.b32.xlu0 %v3349, 10
        %v3359 = vpop.permute.xlu0 %3358
        %v3362 = vmul.f32 %v3352, %v3357
        %v3363 = vmul.f32 %v3353, %v3359
        %v3364 = vsub.f32 0.0, %v3362
        %v3365 = vsub.f32 0.0, %v3363
        %v3366 = vmul.f32 %v3364, 1.442695
        %v3367 = vpow.pop %v3366
        %v3368 = vmul.f32 %v3365, 1.442695
        %v3369 = vpow.pop %v3368
        %v3370 = vstv %s3315
        %v3371 = vmul.f32 %v3370, %v3343
        %v3372 = vmul.f32 %v3370, %v3344
        %v3373 = vmul.f32 %v3371, %v3367
        %v3374 = vmul.f32 %v3372, %v3369
        %v3375 = vmul.f32 %v2258, %v3373
        %v3376 = vmul.f32 %v2259, %v3374
        %3379 = vrot.lane.b32.xlu0 %v3375, 118
        %v3380 = vpop.permute.xlu0 %3379
        %3381 = vrot.lane.b32.xlu0 %v3376, 118
        %v3382 = vpop.permute.xlu0 %3381
        %v3385 = vadd.f32 %v3278, %v3380
        %v3386 = vadd.f32 %v3279, %v3382
        %v3387 = vmul.f32 %v2262, %v3373
        %v3388 = vmul.f32 %v2263, %v3374
        %3391 = vrot.lane.b32.xlu0 %v3387, 118
        %v3392 = vpop.permute.xlu0 %3391
        %3393 = vrot.lane.b32.xlu0 %v3388, 118
        %v3394 = vpop.permute.xlu0 %3393
        %v3397 = vadd.f32 %v3290, %v3392
        %v3398 = vadd.f32 %v3291, %v3394
        %v3399 = vmul.f32 %v2266, %v3373
        %v3400 = vmul.f32 %v2267, %v3374
        %3403 = vrot.lane.b32.xlu0 %v3399, 118
        %v3404 = vpop.permute.xlu0 %3403
        %3405 = vrot.lane.b32.xlu0 %v3400, 118
        %v3406 = vpop.permute.xlu0 %3405
        %v3409 = vadd.f32 %v3302, %v3404
        %v3410 = vadd.f32 %v3303, %v3406
        %3413 = vrot.lane.b32.xlu0 %v3373, 118
        %v3414 = vpop.permute.xlu0 %3413
        %3415 = vrot.lane.b32.xlu0 %v3374, 118
        %v3416 = vpop.permute.xlu0 %3415
        %v3419 = vadd.f32 %v3312, %v3414
        %v3420 = vadd.f32 %v3313, %v3416
        %s3421 = sadd.s32 %s2284, 11
        %s3422 = sld [smem:[#allocation4 + %s3421]]
        %s3423 = sld [smem:[#allocation7 + %s3421]]
        %v3424 = vmul.f32 %v2270, %v1736
        %v3425 = vmul.f32 %v2271, %v1738
        %v3426 = vmul.f32 %v2274, %v1744
        %v3427 = vmul.f32 %v2275, %v1746
        %v3428 = vadd.f32 %v3424, %v3426
        %v3429 = vadd.f32 %v3425, %v3427
        %v3430 = vmul.f32 %v2278, %v1754
        %v3431 = vmul.f32 %v2279, %v1756
        %v3432 = vadd.f32 %v3428, %v3430
        %v3433 = vadd.f32 %v3429, %v3431
        %v3434 = vmax.f32 %v3432, 0.0001
        %v3435 = vmax.f32 %v3433, 0.0001
        %v3436 = vmin.f32 %v3434, 1.0
        %v3437 = vmin.f32 %v3435, 1.0
        %v3438 = vmul.f32 %v3436, %v3436
        %v3439 = vmul.f32 %v3437, %v3437
        %v3440 = vmul.f32 %v3438, %v3438
        %v3441 = vmul.f32 %v3439, %v3439
        %v3442 = vmul.f32 %v3440, %v3440
        %v3443 = vmul.f32 %v3441, %v3441
        %v3444 = vmul.f32 %v3442, %v3442
        %v3445 = vmul.f32 %v3443, %v3443
        %v3446 = vmul.f32 %v3444, %v3444
        %v3447 = vmul.f32 %v3445, %v3445
        %v3448 = vmul.f32 %v3446, %v3446
        %v3449 = vmul.f32 %v3447, %v3447
        %v3450 = vmul.f32 %v3448, %v3448
        %v3451 = vmul.f32 %v3449, %v3449
        %v3452 = vstv %s3423
        %v3453 = vmul.f32 %v317, %v3452
        %v3454 = vmul.f32 %v318, %v3452
        %v3455 = vmin.f32 %v3453, 10000.0
        %v3456 = vmin.f32 %v3454, 10000.0
        %v3457 = vsub.f32 %v2282, %v1787
        %v3458 = vsub.f32 %v2283, %v1789
        %v3459 = vand.u32 2147483647, %v3457
        %v3460 = vand.u32 2147483647, %v3458
        %3463 = vrot.lane.b32.xlu0 %v3455, 11
        %v3464 = vpop.permute.xlu0 %3463
        %3465 = vrot.lane.b32.xlu0 %v3456, 11
        %v3466 = vpop.permute.xlu0 %3465
        %v3469 = vmul.f32 %v3459, %v3464
        %v3470 = vmul.f32 %v3460, %v3466
        %v3471 = vsub.f32 0.0, %v3469
        %v3472 = vsub.f32 0.0, %v3470
        %v3473 = vmul.f32 %v3471, 1.442695
        %v3474 = vpow.pop %v3473
        %v3475 = vmul.f32 %v3472, 1.442695
        %v3476 = vpow.pop %v3475
        %v3477 = vstv %s3422
        %v3478 = vmul.f32 %v3477, %v3450
        %v3479 = vmul.f32 %v3477, %v3451
        %v3480 = vmul.f32 %v3478, %v3474
        %v3481 = vmul.f32 %v3479, %v3476
        %v3482 = vmul.f32 %v2258, %v3480
        %v3483 = vmul.f32 %v2259, %v3481
        %3486 = vrot.lane.b32.xlu0 %v3482, 117
        %v3487 = vpop.permute.xlu0 %3486
        %3488 = vrot.lane.b32.xlu0 %v3483, 117
        %v3489 = vpop.permute.xlu0 %3488
        %v3492 = vadd.f32 %v3385, %v3487
        %v3493 = vadd.f32 %v3386, %v3489
        %v3494 = vmul.f32 %v2262, %v3480
        %v3495 = vmul.f32 %v2263, %v3481
        %3498 = vrot.lane.b32.xlu0 %v3494, 117
        %v3499 = vpop.permute.xlu0 %3498
        %3500 = vrot.lane.b32.xlu0 %v3495, 117
        %v3501 = vpop.permute.xlu0 %3500
        %v3504 = vadd.f32 %v3397, %v3499
        %v3505 = vadd.f32 %v3398, %v3501
        %v3506 = vmul.f32 %v2266, %v3480
        %v3507 = vmul.f32 %v2267, %v3481
        %3510 = vrot.lane.b32.xlu0 %v3506, 117
        %v3511 = vpop.permute.xlu0 %3510
        %3512 = vrot.lane.b32.xlu0 %v3507, 117
        %v3513 = vpop.permute.xlu0 %3512
        %v3516 = vadd.f32 %v3409, %v3511
        %v3517 = vadd.f32 %v3410, %v3513
        %3520 = vrot.lane.b32.xlu0 %v3480, 117
        %v3521 = vpop.permute.xlu0 %3520
        %3522 = vrot.lane.b32.xlu0 %v3481, 117
        %v3523 = vpop.permute.xlu0 %3522
        %v3526 = vadd.f32 %v3419, %v3521
        %v3527 = vadd.f32 %v3420, %v3523
        %s3528 = sadd.s32 %s2284, 12
        %s3529 = sld [smem:[#allocation4 + %s3528]]
        %s3530 = sld [smem:[#allocation7 + %s3528]]
        %v3531 = vmul.f32 %v2270, %v1867
        %v3532 = vmul.f32 %v2271, %v1869
        %v3533 = vmul.f32 %v2274, %v1875
        %v3534 = vmul.f32 %v2275, %v1877
        %v3535 = vadd.f32 %v3531, %v3533
        %v3536 = vadd.f32 %v3532, %v3534
        %v3537 = vmul.f32 %v2278, %v1885
        %v3538 = vmul.f32 %v2279, %v1887
        %v3539 = vadd.f32 %v3535, %v3537
        %v3540 = vadd.f32 %v3536, %v3538
        %v3541 = vmax.f32 %v3539, 0.0001
        %v3542 = vmax.f32 %v3540, 0.0001
        %v3543 = vmin.f32 %v3541, 1.0
        %v3544 = vmin.f32 %v3542, 1.0
        %v3545 = vmul.f32 %v3543, %v3543
        %v3546 = vmul.f32 %v3544, %v3544
        %v3547 = vmul.f32 %v3545, %v3545
        %v3548 = vmul.f32 %v3546, %v3546
        %v3549 = vmul.f32 %v3547, %v3547
        %v3550 = vmul.f32 %v3548, %v3548
        %v3551 = vmul.f32 %v3549, %v3549
        %v3552 = vmul.f32 %v3550, %v3550
        %v3553 = vmul.f32 %v3551, %v3551
        %v3554 = vmul.f32 %v3552, %v3552
        %v3555 = vmul.f32 %v3553, %v3553
        %v3556 = vmul.f32 %v3554, %v3554
        %v3557 = vmul.f32 %v3555, %v3555
        %v3558 = vmul.f32 %v3556, %v3556
        %v3559 = vstv %s3530
        %v3560 = vmul.f32 %v317, %v3559
        %v3561 = vmul.f32 %v318, %v3559
        %v3562 = vmin.f32 %v3560, 10000.0
        %v3563 = vmin.f32 %v3561, 10000.0
        %v3564 = vsub.f32 %v2282, %v1918
        %v3565 = vsub.f32 %v2283, %v1920
        %v3566 = vand.u32 2147483647, %v3564
        %v3567 = vand.u32 2147483647, %v3565
        %3570 = vrot.lane.b32.xlu0 %v3562, 12
        %v3571 = vpop.permute.xlu0 %3570
        %3572 = vrot.lane.b32.xlu0 %v3563, 12
        %v3573 = vpop.permute.xlu0 %3572
        %v3576 = vmul.f32 %v3566, %v3571
        %v3577 = vmul.f32 %v3567, %v3573
        %v3578 = vsub.f32 0.0, %v3576
        %v3579 = vsub.f32 0.0, %v3577
        %v3580 = vmul.f32 %v3578, 1.442695
        %v3581 = vpow.pop %v3580
        %v3582 = vmul.f32 %v3579, 1.442695
        %v3583 = vpow.pop %v3582
        %v3584 = vstv %s3529
        %v3585 = vmul.f32 %v3584, %v3557
        %v3586 = vmul.f32 %v3584, %v3558
        %v3587 = vmul.f32 %v3585, %v3581
        %v3588 = vmul.f32 %v3586, %v3583
        %v3589 = vmul.f32 %v2258, %v3587
        %v3590 = vmul.f32 %v2259, %v3588
        %3593 = vrot.lane.b32.xlu0 %v3589, 116
        %v3594 = vpop.permute.xlu0 %3593
        %3595 = vrot.lane.b32.xlu0 %v3590, 116
        %v3596 = vpop.permute.xlu0 %3595
        %v3599 = vadd.f32 %v3492, %v3594
        %v3600 = vadd.f32 %v3493, %v3596
        %v3601 = vmul.f32 %v2262, %v3587
        %v3602 = vmul.f32 %v2263, %v3588
        %3605 = vrot.lane.b32.xlu0 %v3601, 116
        %v3606 = vpop.permute.xlu0 %3605
        %3607 = vrot.lane.b32.xlu0 %v3602, 116
        %v3608 = vpop.permute.xlu0 %3607
        %v3611 = vadd.f32 %v3504, %v3606
        %v3612 = vadd.f32 %v3505, %v3608
        %v3613 = vmul.f32 %v2266, %v3587
        %v3614 = vmul.f32 %v2267, %v3588
        %3617 = vrot.lane.b32.xlu0 %v3613, 116
        %v3618 = vpop.permute.xlu0 %3617
        %3619 = vrot.lane.b32.xlu0 %v3614, 116
        %v3620 = vpop.permute.xlu0 %3619
        %v3623 = vadd.f32 %v3516, %v3618
        %v3624 = vadd.f32 %v3517, %v3620
        %3627 = vrot.lane.b32.xlu0 %v3587, 116
        %v3628 = vpop.permute.xlu0 %3627
        %3629 = vrot.lane.b32.xlu0 %v3588, 116
        %v3630 = vpop.permute.xlu0 %3629
        %v3633 = vadd.f32 %v3526, %v3628
        %v3634 = vadd.f32 %v3527, %v3630
        %s3635 = sadd.s32 %s2284, 13
        %s3636 = sld [smem:[#allocation4 + %s3635]]
        %s3637 = sld [smem:[#allocation7 + %s3635]]
        %v3638 = vmul.f32 %v2270, %v1998
        %v3639 = vmul.f32 %v2271, %v2000
        %v3640 = vmul.f32 %v2274, %v2006
        %v3641 = vmul.f32 %v2275, %v2008
        %v3642 = vadd.f32 %v3638, %v3640
        %v3643 = vadd.f32 %v3639, %v3641
        %v3644 = vmul.f32 %v2278, %v2016
        %v3645 = vmul.f32 %v2279, %v2018
        %v3646 = vadd.f32 %v3642, %v3644
        %v3647 = vadd.f32 %v3643, %v3645
        %v3648 = vmax.f32 %v3646, 0.0001
        %v3649 = vmax.f32 %v3647, 0.0001
        %v3650 = vmin.f32 %v3648, 1.0
        %v3651 = vmin.f32 %v3649, 1.0
        %v3652 = vmul.f32 %v3650, %v3650
        %v3653 = vmul.f32 %v3651, %v3651
        %v3654 = vmul.f32 %v3652, %v3652
        %v3655 = vmul.f32 %v3653, %v3653
        %v3656 = vmul.f32 %v3654, %v3654
        %v3657 = vmul.f32 %v3655, %v3655
        %v3658 = vmul.f32 %v3656, %v3656
        %v3659 = vmul.f32 %v3657, %v3657
        %v3660 = vmul.f32 %v3658, %v3658
        %v3661 = vmul.f32 %v3659, %v3659
        %v3662 = vmul.f32 %v3660, %v3660
        %v3663 = vmul.f32 %v3661, %v3661
        %v3664 = vmul.f32 %v3662, %v3662
        %v3665 = vmul.f32 %v3663, %v3663
        %v3666 = vstv %s3637
        %v3667 = vmul.f32 %v317, %v3666
        %v3668 = vmul.f32 %v318, %v3666
        %v3669 = vmin.f32 %v3667, 10000.0
        %v3670 = vmin.f32 %v3668, 10000.0
        %v3671 = vsub.f32 %v2282, %v2049
        %v3672 = vsub.f32 %v2283, %v2051
        %v3673 = vand.u32 2147483647, %v3671
        %v3674 = vand.u32 2147483647, %v3672
        %3677 = vrot.lane.b32.xlu0 %v3669, 13
        %v3678 = vpop.permute.xlu0 %3677
        %3679 = vrot.lane.b32.xlu0 %v3670, 13
        %v3680 = vpop.permute.xlu0 %3679
        %v3683 = vmul.f32 %v3673, %v3678
        %v3684 = vmul.f32 %v3674, %v3680
        %v3685 = vsub.f32 0.0, %v3683
        %v3686 = vsub.f32 0.0, %v3684
        %v3687 = vmul.f32 %v3685, 1.442695
        %v3688 = vpow.pop %v3687
        %v3689 = vmul.f32 %v3686, 1.442695
        %v3690 = vpow.pop %v3689
        %v3691 = vstv %s3636
        %v3692 = vmul.f32 %v3691, %v3664
        %v3693 = vmul.f32 %v3691, %v3665
        %v3694 = vmul.f32 %v3692, %v3688
        %v3695 = vmul.f32 %v3693, %v3690
        %v3696 = vmul.f32 %v2258, %v3694
        %v3697 = vmul.f32 %v2259, %v3695
        %3700 = vrot.lane.b32.xlu0 %v3696, 115
        %v3701 = vpop.permute.xlu0 %3700
        %3702 = vrot.lane.b32.xlu0 %v3697, 115
        %v3703 = vpop.permute.xlu0 %3702
        %v3706 = vadd.f32 %v3599, %v3701
        %v3707 = vadd.f32 %v3600, %v3703
        %v3708 = vmul.f32 %v2262, %v3694
        %v3709 = vmul.f32 %v2263, %v3695
        %3712 = vrot.lane.b32.xlu0 %v3708, 115
        %v3713 = vpop.permute.xlu0 %3712
        %3714 = vrot.lane.b32.xlu0 %v3709, 115
        %v3715 = vpop.permute.xlu0 %3714
        %v3718 = vadd.f32 %v3611, %v3713
        %v3719 = vadd.f32 %v3612, %v3715
        %v3720 = vmul.f32 %v2266, %v3694
        %v3721 = vmul.f32 %v2267, %v3695
        %3724 = vrot.lane.b32.xlu0 %v3720, 115
        %v3725 = vpop.permute.xlu0 %3724
        %3726 = vrot.lane.b32.xlu0 %v3721, 115
        %v3727 = vpop.permute.xlu0 %3726
        %v3730 = vadd.f32 %v3623, %v3725
        %v3731 = vadd.f32 %v3624, %v3727
        %3734 = vrot.lane.b32.xlu0 %v3694, 115
        %v3735 = vpop.permute.xlu0 %3734
        %3736 = vrot.lane.b32.xlu0 %v3695, 115
        %v3737 = vpop.permute.xlu0 %3736
        %v3740 = vadd.f32 %v3633, %v3735
        %v3741 = vadd.f32 %v3634, %v3737
        %s3742 = sadd.s32 %s2284, 14
        %s3743 = sld [smem:[#allocation4 + %s3742]]
        %s3744 = sld [smem:[#allocation7 + %s3742]]
        %v3745 = vmul.f32 %v2270, %v2129
        %v3746 = vmul.f32 %v2271, %v2131
        %v3747 = vmul.f32 %v2274, %v2137
        %v3748 = vmul.f32 %v2275, %v2139
        %v3749 = vadd.f32 %v3745, %v3747
        %v3750 = vadd.f32 %v3746, %v3748
        %v3751 = vmul.f32 %v2278, %v2147
        %v3752 = vmul.f32 %v2279, %v2149
        %v3753 = vadd.f32 %v3749, %v3751
        %v3754 = vadd.f32 %v3750, %v3752
        %v3755 = vmax.f32 %v3753, 0.0001
        %v3756 = vmax.f32 %v3754, 0.0001
        %v3757 = vmin.f32 %v3755, 1.0
        %v3758 = vmin.f32 %v3756, 1.0
        %v3759 = vmul.f32 %v3757, %v3757
        %v3760 = vmul.f32 %v3758, %v3758
        %v3761 = vmul.f32 %v3759, %v3759
        %v3762 = vmul.f32 %v3760, %v3760
        %v3763 = vmul.f32 %v3761, %v3761
        %v3764 = vmul.f32 %v3762, %v3762
        %v3765 = vmul.f32 %v3763, %v3763
        %v3766 = vmul.f32 %v3764, %v3764
        %v3767 = vmul.f32 %v3765, %v3765
        %v3768 = vmul.f32 %v3766, %v3766
        %v3769 = vmul.f32 %v3767, %v3767
        %v3770 = vmul.f32 %v3768, %v3768
        %v3771 = vmul.f32 %v3769, %v3769
        %v3772 = vmul.f32 %v3770, %v3770
        %v3773 = vstv %s3744
        %v3774 = vmul.f32 %v317, %v3773
        %v3775 = vmul.f32 %v318, %v3773
        %v3776 = vmin.f32 %v3774, 10000.0
        %v3777 = vmin.f32 %v3775, 10000.0
        %v3778 = vsub.f32 %v2282, %v2180
        %v3779 = vsub.f32 %v2283, %v2182
        %v3780 = vand.u32 2147483647, %v3778
        %v3781 = vand.u32 2147483647, %v3779
        %3784 = vrot.lane.b32.xlu0 %v3776, 14
        %v3785 = vpop.permute.xlu0 %3784
        %3786 = vrot.lane.b32.xlu0 %v3777, 14
        %v3787 = vpop.permute.xlu0 %3786
        %v3790 = vmul.f32 %v3780, %v3785
        %v3791 = vmul.f32 %v3781, %v3787
        %v3792 = vsub.f32 0.0, %v3790
        %v3793 = vsub.f32 0.0, %v3791
        %v3794 = vmul.f32 %v3792, 1.442695
        %v3795 = vpow.pop %v3794
        %v3796 = vmul.f32 %v3793, 1.442695
        %v3797 = vpow.pop %v3796
        %v3798 = vstv %s3743
        %v3799 = vmul.f32 %v3798, %v3771
        %v3800 = vmul.f32 %v3798, %v3772
        %v3801 = vmul.f32 %v3799, %v3795
        %v3802 = vmul.f32 %v3800, %v3797
        %v3803 = vmul.f32 %v2258, %v3801
        %v3804 = vmul.f32 %v2259, %v3802
        %3807 = vrot.lane.b32.xlu0 %v3803, 114
        %v3808 = vpop.permute.xlu0 %3807
        %3809 = vrot.lane.b32.xlu0 %v3804, 114
        %v3810 = vpop.permute.xlu0 %3809
        %v3813 = vadd.f32 %v3706, %v3808
        %v3814 = vadd.f32 %v3707, %v3810
        %v3815 = vmul.f32 %v2262, %v3801
        %v3816 = vmul.f32 %v2263, %v3802
        %3819 = vrot.lane.b32.xlu0 %v3815, 114
        %v3820 = vpop.permute.xlu0 %3819
        %3821 = vrot.lane.b32.xlu0 %v3816, 114
        %v3822 = vpop.permute.xlu0 %3821
        %v3825 = vadd.f32 %v3718, %v3820
        %v3826 = vadd.f32 %v3719, %v3822
        %v3827 = vmul.f32 %v2266, %v3801
        %v3828 = vmul.f32 %v2267, %v3802
        %3831 = vrot.lane.b32.xlu0 %v3827, 114
        %v3832 = vpop.permute.xlu0 %3831
        %3833 = vrot.lane.b32.xlu0 %v3828, 114
        %v3834 = vpop.permute.xlu0 %3833
        %v3837 = vadd.f32 %v3730, %v3832
        %v3838 = vadd.f32 %v3731, %v3834
        %3841 = vrot.lane.b32.xlu0 %v3801, 114
        %v3842 = vpop.permute.xlu0 %3841
        %3843 = vrot.lane.b32.xlu0 %v3802, 114
        %v3844 = vpop.permute.xlu0 %3843
        %v3847 = vadd.f32 %v3740, %v3842
        %v3848 = vadd.f32 %v3741, %v3844
        %s3849 = sadd.s32 %s319, 2
        %s3850 = scalar_lea.vmem %s291, %s3849
        %v3851 = vld [vmem:[%s3850] sm:$0xff]
        %v3852 = vld [vmem:[%s3850 + $0x8] sm:$0xff]
        %s3853 = sadd.s32 %s3849, 32
        %s3854 = scalar_lea.vmem %s291, %s3853
        %v3855 = vld [vmem:[%s3854] sm:$0xff]
        %v3856 = vld [vmem:[%s3854 + $0x8] sm:$0xff]
        %s3857 = sadd.s32 %s3849, 64
        %s3858 = scalar_lea.vmem %s291, %s3857
        %v3859 = vld [vmem:[%s3858] sm:$0xff]
        %v3860 = vld [vmem:[%s3858 + $0x8] sm:$0xff]
        %s3861 = sadd.s32 %s3849, 96
        %s3862 = scalar_lea.vmem %s291, %s3861
        %v3863 = vld [vmem:[%s3862] sm:$0xff]
        %v3864 = vld [vmem:[%s3862 + $0x8] sm:$0xff]
        %s3865 = sadd.s32 %s3849, 128
        %s3866 = scalar_lea.vmem %s291, %s3865
        %v3867 = vld [vmem:[%s3866] sm:$0xff]
        %v3868 = vld [vmem:[%s3866 + $0x8] sm:$0xff]
        %s3869 = sadd.s32 %s3849, 160
        %s3870 = scalar_lea.vmem %s291, %s3869
        %v3871 = vld [vmem:[%s3870] sm:$0xff]
        %v3872 = vld [vmem:[%s3870 + $0x8] sm:$0xff]
        %s3873 = sadd.s32 %s3849, 192
        %s3874 = scalar_lea.vmem %s291, %s3873
        %v3875 = vld [vmem:[%s3874] sm:$0xff]
        %v3876 = vld [vmem:[%s3874 + $0x8] sm:$0xff]
        %s3877 = smul.u32 %s3849, 15
        %s3878 = sld [smem:[#allocation4 + %s3877]]
        %s3879 = sld [smem:[#allocation7 + %s3877]]
        %v3880 = vmul.f32 %v3863, %v305
        %v3881 = vmul.f32 %v3864, %v306
        %v3882 = vmul.f32 %v3867, %v308
        %v3883 = vmul.f32 %v3868, %v309
        %v3884 = vadd.f32 %v3880, %v3882
        %v3885 = vadd.f32 %v3881, %v3883
        %v3886 = vmul.f32 %v3871, %v311
        %v3887 = vmul.f32 %v3872, %v312
        %v3888 = vadd.f32 %v3884, %v3886
        %v3889 = vadd.f32 %v3885, %v3887
        %v3890 = vmax.f32 %v3888, 0.0001
        %v3891 = vmax.f32 %v3889, 0.0001
        %v3892 = vmin.f32 %v3890, 1.0
        %v3893 = vmin.f32 %v3891, 1.0
        %v3894 = vmul.f32 %v3892, %v3892
        %v3895 = vmul.f32 %v3893, %v3893
        %v3896 = vmul.f32 %v3894, %v3894
        %v3897 = vmul.f32 %v3895, %v3895
        %v3898 = vmul.f32 %v3896, %v3896
        %v3899 = vmul.f32 %v3897, %v3897
        %v3900 = vmul.f32 %v3898, %v3898
        %v3901 = vmul.f32 %v3899, %v3899
        %v3902 = vmul.f32 %v3900, %v3900
        %v3903 = vmul.f32 %v3901, %v3901
        %v3904 = vmul.f32 %v3902, %v3902
        %v3905 = vmul.f32 %v3903, %v3903
        %v3906 = vmul.f32 %v3904, %v3904
        %v3907 = vmul.f32 %v3905, %v3905
        %v3908 = vstv %s3879
        %v3909 = vmul.f32 %v317, %v3908
        %v3910 = vmul.f32 %v318, %v3908
        %v3911 = vmin.f32 %v3909, 10000.0
        %v3912 = vmin.f32 %v3910, 10000.0
        %v3913 = vsub.f32 %v3875, %v314
        %v3914 = vsub.f32 %v3876, %v315
        %v3915 = vand.u32 2147483647, %v3913
        %v3916 = vand.u32 2147483647, %v3914
        %v3917 = vmul.f32 %v3915, %v3911
        %v3918 = vmul.f32 %v3916, %v3912
        %v3919 = vsub.f32 0.0, %v3917
        %v3920 = vsub.f32 0.0, %v3918
        %v3921 = vmul.f32 %v3919, 1.442695
        %v3922 = vpow.pop %v3921
        %v3923 = vmul.f32 %v3920, 1.442695
        %v3924 = vpow.pop %v3923
        %v3925 = vstv %s3878
        %v3926 = vmul.f32 %v3925, %v3906
        %v3927 = vmul.f32 %v3925, %v3907
        %v3928 = vmul.f32 %v3926, %v3922
        %v3929 = vmul.f32 %v3927, %v3924
        %v3930 = vmul.f32 %v3851, %v3928
        %v3931 = vmul.f32 %v3852, %v3929
        %v3932 = vadd.f32 %v3813, %v3930
        %v3933 = vadd.f32 %v3814, %v3931
        %v3934 = vmul.f32 %v3855, %v3928
        %v3935 = vmul.f32 %v3856, %v3929
        %v3936 = vadd.f32 %v3825, %v3934
        %v3937 = vadd.f32 %v3826, %v3935
        %v3938 = vmul.f32 %v3859, %v3928
        %v3939 = vmul.f32 %v3860, %v3929
        %v3940 = vadd.f32 %v3837, %v3938
        %v3941 = vadd.f32 %v3838, %v3939
        %v3942 = vadd.f32 %v3847, %v3928
        %v3943 = vadd.f32 %v3848, %v3929
        %s3944 = sadd.s32 %s3877, 1
        %s3945 = sld [smem:[#allocation4 + %s3944]]
        %s3946 = sld [smem:[#allocation7 + %s3944]]
        %v3947 = vmul.f32 %v3863, %v420
        %v3948 = vmul.f32 %v3864, %v422
        %v3949 = vmul.f32 %v3867, %v430
        %v3950 = vmul.f32 %v3868, %v432
        %v3951 = vadd.f32 %v3947, %v3949
        %v3952 = vadd.f32 %v3948, %v3950
        %v3953 = vmul.f32 %v3871, %v442
        %v3954 = vmul.f32 %v3872, %v444
        %v3955 = vadd.f32 %v3951, %v3953
        %v3956 = vadd.f32 %v3952, %v3954
        %v3957 = vmax.f32 %v3955, 0.0001
        %v3958 = vmax.f32 %v3956, 0.0001
        %v3959 = vmin.f32 %v3957, 1.0
        %v3960 = vmin.f32 %v3958, 1.0
        %v3961 = vmul.f32 %v3959, %v3959
        %v3962 = vmul.f32 %v3960, %v3960
        %v3963 = vmul.f32 %v3961, %v3961
        %v3964 = vmul.f32 %v3962, %v3962
        %v3965 = vmul.f32 %v3963, %v3963
        %v3966 = vmul.f32 %v3964, %v3964
        %v3967 = vmul.f32 %v3965, %v3965
        %v3968 = vmul.f32 %v3966, %v3966
        %v3969 = vmul.f32 %v3967, %v3967
        %v3970 = vmul.f32 %v3968, %v3968
        %v3971 = vmul.f32 %v3969, %v3969
        %v3972 = vmul.f32 %v3970, %v3970
        %v3973 = vmul.f32 %v3971, %v3971
        %v3974 = vmul.f32 %v3972, %v3972
        %v3975 = vstv %s3946
        %v3976 = vmul.f32 %v317, %v3975
        %v3977 = vmul.f32 %v318, %v3975
        %v3978 = vmin.f32 %v3976, 10000.0
        %v3979 = vmin.f32 %v3977, 10000.0
        %v3980 = vsub.f32 %v3875, %v477
        %v3981 = vsub.f32 %v3876, %v479
        %v3982 = vand.u32 2147483647, %v3980
        %v3983 = vand.u32 2147483647, %v3981
        %3986 = vrot.lane.b32.xlu0 %v3978, 1
        %v3987 = vpop.permute.xlu0 %3986
        %3988 = vrot.lane.b32.xlu0 %v3979, 1
        %v3989 = vpop.permute.xlu0 %3988
        %v3992 = vmul.f32 %v3982, %v3987
        %v3993 = vmul.f32 %v3983, %v3989
        %v3994 = vsub.f32 0.0, %v3992
        %v3995 = vsub.f32 0.0, %v3993
        %v3996 = vmul.f32 %v3994, 1.442695
        %v3997 = vpow.pop %v3996
        %v3998 = vmul.f32 %v3995, 1.442695
        %v3999 = vpow.pop %v3998
        %v4000 = vstv %s3945
        %v4001 = vmul.f32 %v4000, %v3973
        %v4002 = vmul.f32 %v4000, %v3974
        %v4003 = vmul.f32 %v4001, %v3997
        %v4004 = vmul.f32 %v4002, %v3999
        %v4005 = vmul.f32 %v3851, %v4003
        %v4006 = vmul.f32 %v3852, %v4004
        %4009 = vrot.lane.b32.xlu0 %v4005, 127
        %v4010 = vpop.permute.xlu0 %4009
        %4011 = vrot.lane.b32.xlu0 %v4006, 127
        %v4012 = vpop.permute.xlu0 %4011
        %v4015 = vadd.f32 %v3932, %v4010
        %v4016 = vadd.f32 %v3933, %v4012
        %v4017 = vmul.f32 %v3855, %v4003
        %v4018 = vmul.f32 %v3856, %v4004
        %4021 = vrot.lane.b32.xlu0 %v4017, 127
        %v4022 = vpop.permute.xlu0 %4021
        %4023 = vrot.lane.b32.xlu0 %v4018, 127
        %v4024 = vpop.permute.xlu0 %4023
        %v4027 = vadd.f32 %v3936, %v4022
        %v4028 = vadd.f32 %v3937, %v4024
        %v4029 = vmul.f32 %v3859, %v4003
        %v4030 = vmul.f32 %v3860, %v4004
        %4033 = vrot.lane.b32.xlu0 %v4029, 127
        %v4034 = vpop.permute.xlu0 %4033
        %4035 = vrot.lane.b32.xlu0 %v4030, 127
        %v4036 = vpop.permute.xlu0 %4035
        %v4039 = vadd.f32 %v3940, %v4034
        %v4040 = vadd.f32 %v3941, %v4036
        %4043 = vrot.lane.b32.xlu0 %v4003, 127
        %v4044 = vpop.permute.xlu0 %4043
        %4045 = vrot.lane.b32.xlu0 %v4004, 127
        %v4046 = vpop.permute.xlu0 %4045
        %v4049 = vadd.f32 %v3942, %v4044
        %v4050 = vadd.f32 %v3943, %v4046
        %s4051 = sadd.s32 %s3877, 2
        %s4052 = sld [smem:[#allocation4 + %s4051]]
        %s4053 = sld [smem:[#allocation7 + %s4051]]
        %v4054 = vmul.f32 %v3863, %v557
        %v4055 = vmul.f32 %v3864, %v559
        %v4056 = vmul.f32 %v3867, %v565
        %v4057 = vmul.f32 %v3868, %v567
        %v4058 = vadd.f32 %v4054, %v4056
        %v4059 = vadd.f32 %v4055, %v4057
        %v4060 = vmul.f32 %v3871, %v575
        %v4061 = vmul.f32 %v3872, %v577
        %v4062 = vadd.f32 %v4058, %v4060
        %v4063 = vadd.f32 %v4059, %v4061
        %v4064 = vmax.f32 %v4062, 0.0001
        %v4065 = vmax.f32 %v4063, 0.0001
        %v4066 = vmin.f32 %v4064, 1.0
        %v4067 = vmin.f32 %v4065, 1.0
        %v4068 = vmul.f32 %v4066, %v4066
        %v4069 = vmul.f32 %v4067, %v4067
        %v4070 = vmul.f32 %v4068, %v4068
        %v4071 = vmul.f32 %v4069, %v4069
        %v4072 = vmul.f32 %v4070, %v4070
        %v4073 = vmul.f32 %v4071, %v4071
        %v4074 = vmul.f32 %v4072, %v4072
        %v4075 = vmul.f32 %v4073, %v4073
        %v4076 = vmul.f32 %v4074, %v4074
        %v4077 = vmul.f32 %v4075, %v4075
        %v4078 = vmul.f32 %v4076, %v4076
        %v4079 = vmul.f32 %v4077, %v4077
        %v4080 = vmul.f32 %v4078, %v4078
        %v4081 = vmul.f32 %v4079, %v4079
        %v4082 = vstv %s4053
        %v4083 = vmul.f32 %v317, %v4082
        %v4084 = vmul.f32 %v318, %v4082
        %v4085 = vmin.f32 %v4083, 10000.0
        %v4086 = vmin.f32 %v4084, 10000.0
        %v4087 = vsub.f32 %v3875, %v608
        %v4088 = vsub.f32 %v3876, %v610
        %v4089 = vand.u32 2147483647, %v4087
        %v4090 = vand.u32 2147483647, %v4088
        %4093 = vrot.lane.b32.xlu0 %v4085, 2
        %v4094 = vpop.permute.xlu0 %4093
        %4095 = vrot.lane.b32.xlu0 %v4086, 2
        %v4096 = vpop.permute.xlu0 %4095
        %v4099 = vmul.f32 %v4089, %v4094
        %v4100 = vmul.f32 %v4090, %v4096
        %v4101 = vsub.f32 0.0, %v4099
        %v4102 = vsub.f32 0.0, %v4100
        %v4103 = vmul.f32 %v4101, 1.442695
        %v4104 = vpow.pop %v4103
        %v4105 = vmul.f32 %v4102, 1.442695
        %v4106 = vpow.pop %v4105
        %v4107 = vstv %s4052
        %v4108 = vmul.f32 %v4107, %v4080
        %v4109 = vmul.f32 %v4107, %v4081
        %v4110 = vmul.f32 %v4108, %v4104
        %v4111 = vmul.f32 %v4109, %v4106
        %v4112 = vmul.f32 %v3851, %v4110
        %v4113 = vmul.f32 %v3852, %v4111
        %4116 = vrot.lane.b32.xlu0 %v4112, 126
        %v4117 = vpop.permute.xlu0 %4116
        %4118 = vrot.lane.b32.xlu0 %v4113, 126
        %v4119 = vpop.permute.xlu0 %4118
        %v4122 = vadd.f32 %v4015, %v4117
        %v4123 = vadd.f32 %v4016, %v4119
        %v4124 = vmul.f32 %v3855, %v4110
        %v4125 = vmul.f32 %v3856, %v4111
        %4128 = vrot.lane.b32.xlu0 %v4124, 126
        %v4129 = vpop.permute.xlu0 %4128
        %4130 = vrot.lane.b32.xlu0 %v4125, 126
        %v4131 = vpop.permute.xlu0 %4130
        %v4134 = vadd.f32 %v4027, %v4129
        %v4135 = vadd.f32 %v4028, %v4131
        %v4136 = vmul.f32 %v3859, %v4110
        %v4137 = vmul.f32 %v3860, %v4111
        %4140 = vrot.lane.b32.xlu0 %v4136, 126
        %v4141 = vpop.permute.xlu0 %4140
        %4142 = vrot.lane.b32.xlu0 %v4137, 126
        %v4143 = vpop.permute.xlu0 %4142
        %v4146 = vadd.f32 %v4039, %v4141
        %v4147 = vadd.f32 %v4040, %v4143
        %4150 = vrot.lane.b32.xlu0 %v4110, 126
        %v4151 = vpop.permute.xlu0 %4150
        %4152 = vrot.lane.b32.xlu0 %v4111, 126
        %v4153 = vpop.permute.xlu0 %4152
        %v4156 = vadd.f32 %v4049, %v4151
        %v4157 = vadd.f32 %v4050, %v4153
        %s4158 = sadd.s32 %s3877, 3
        %s4159 = sld [smem:[#allocation4 + %s4158]]
        %s4160 = sld [smem:[#allocation7 + %s4158]]
        %v4161 = vmul.f32 %v3863, %v688
        %v4162 = vmul.f32 %v3864, %v690
        %v4163 = vmul.f32 %v3867, %v696
        %v4164 = vmul.f32 %v3868, %v698
        %v4165 = vadd.f32 %v4161, %v4163
        %v4166 = vadd.f32 %v4162, %v4164
        %v4167 = vmul.f32 %v3871, %v706
        %v4168 = vmul.f32 %v3872, %v708
        %v4169 = vadd.f32 %v4165, %v4167
        %v4170 = vadd.f32 %v4166, %v4168
        %v4171 = vmax.f32 %v4169, 0.0001
        %v4172 = vmax.f32 %v4170, 0.0001
        %v4173 = vmin.f32 %v4171, 1.0
        %v4174 = vmin.f32 %v4172, 1.0
        %v4175 = vmul.f32 %v4173, %v4173
        %v4176 = vmul.f32 %v4174, %v4174
        %v4177 = vmul.f32 %v4175, %v4175
        %v4178 = vmul.f32 %v4176, %v4176
        %v4179 = vmul.f32 %v4177, %v4177
        %v4180 = vmul.f32 %v4178, %v4178
        %v4181 = vmul.f32 %v4179, %v4179
        %v4182 = vmul.f32 %v4180, %v4180
        %v4183 = vmul.f32 %v4181, %v4181
        %v4184 = vmul.f32 %v4182, %v4182
        %v4185 = vmul.f32 %v4183, %v4183
        %v4186 = vmul.f32 %v4184, %v4184
        %v4187 = vmul.f32 %v4185, %v4185
        %v4188 = vmul.f32 %v4186, %v4186
        %v4189 = vstv %s4160
        %v4190 = vmul.f32 %v317, %v4189
        %v4191 = vmul.f32 %v318, %v4189
        %v4192 = vmin.f32 %v4190, 10000.0
        %v4193 = vmin.f32 %v4191, 10000.0
        %v4194 = vsub.f32 %v3875, %v739
        %v4195 = vsub.f32 %v3876, %v741
        %v4196 = vand.u32 2147483647, %v4194
        %v4197 = vand.u32 2147483647, %v4195
        %4200 = vrot.lane.b32.xlu0 %v4192, 3
        %v4201 = vpop.permute.xlu0 %4200
        %4202 = vrot.lane.b32.xlu0 %v4193, 3
        %v4203 = vpop.permute.xlu0 %4202
        %v4206 = vmul.f32 %v4196, %v4201
        %v4207 = vmul.f32 %v4197, %v4203
        %v4208 = vsub.f32 0.0, %v4206
        %v4209 = vsub.f32 0.0, %v4207
        %v4210 = vmul.f32 %v4208, 1.442695
        %v4211 = vpow.pop %v4210
        %v4212 = vmul.f32 %v4209, 1.442695
        %v4213 = vpow.pop %v4212
        %v4214 = vstv %s4159
        %v4215 = vmul.f32 %v4214, %v4187
        %v4216 = vmul.f32 %v4214, %v4188
        %v4217 = vmul.f32 %v4215, %v4211
        %v4218 = vmul.f32 %v4216, %v4213
        %v4219 = vmul.f32 %v3851, %v4217
        %v4220 = vmul.f32 %v3852, %v4218
        %4223 = vrot.lane.b32.xlu0 %v4219, 125
        %v4224 = vpop.permute.xlu0 %4223
        %4225 = vrot.lane.b32.xlu0 %v4220, 125
        %v4226 = vpop.permute.xlu0 %4225
        %v4229 = vadd.f32 %v4122, %v4224
        %v4230 = vadd.f32 %v4123, %v4226
        %v4231 = vmul.f32 %v3855, %v4217
        %v4232 = vmul.f32 %v3856, %v4218
        %4235 = vrot.lane.b32.xlu0 %v4231, 125
        %v4236 = vpop.permute.xlu0 %4235
        %4237 = vrot.lane.b32.xlu0 %v4232, 125
        %v4238 = vpop.permute.xlu0 %4237
        %v4241 = vadd.f32 %v4134, %v4236
        %v4242 = vadd.f32 %v4135, %v4238
        %v4243 = vmul.f32 %v3859, %v4217
        %v4244 = vmul.f32 %v3860, %v4218
        %4247 = vrot.lane.b32.xlu0 %v4243, 125
        %v4248 = vpop.permute.xlu0 %4247
        %4249 = vrot.lane.b32.xlu0 %v4244, 125
        %v4250 = vpop.permute.xlu0 %4249
        %v4253 = vadd.f32 %v4146, %v4248
        %v4254 = vadd.f32 %v4147, %v4250
        %4257 = vrot.lane.b32.xlu0 %v4217, 125
        %v4258 = vpop.permute.xlu0 %4257
        %4259 = vrot.lane.b32.xlu0 %v4218, 125
        %v4260 = vpop.permute.xlu0 %4259
        %v4263 = vadd.f32 %v4156, %v4258
        %v4264 = vadd.f32 %v4157, %v4260
        %s4265 = sadd.s32 %s3877, 4
        %s4266 = sld [smem:[#allocation4 + %s4265]]
        %s4267 = sld [smem:[#allocation7 + %s4265]]
        %v4268 = vmul.f32 %v3863, %v819
        %v4269 = vmul.f32 %v3864, %v821
        %v4270 = vmul.f32 %v3867, %v827
        %v4271 = vmul.f32 %v3868, %v829
        %v4272 = vadd.f32 %v4268, %v4270
        %v4273 = vadd.f32 %v4269, %v4271
        %v4274 = vmul.f32 %v3871, %v837
        %v4275 = vmul.f32 %v3872, %v839
        %v4276 = vadd.f32 %v4272, %v4274
        %v4277 = vadd.f32 %v4273, %v4275
        %v4278 = vmax.f32 %v4276, 0.0001
        %v4279 = vmax.f32 %v4277, 0.0001
        %v4280 = vmin.f32 %v4278, 1.0
        %v4281 = vmin.f32 %v4279, 1.0
        %v4282 = vmul.f32 %v4280, %v4280
        %v4283 = vmul.f32 %v4281, %v4281
        %v4284 = vmul.f32 %v4282, %v4282
        %v4285 = vmul.f32 %v4283, %v4283
        %v4286 = vmul.f32 %v4284, %v4284
        %v4287 = vmul.f32 %v4285, %v4285
        %v4288 = vmul.f32 %v4286, %v4286
        %v4289 = vmul.f32 %v4287, %v4287
        %v4290 = vmul.f32 %v4288, %v4288
        %v4291 = vmul.f32 %v4289, %v4289
        %v4292 = vmul.f32 %v4290, %v4290
        %v4293 = vmul.f32 %v4291, %v4291
        %v4294 = vmul.f32 %v4292, %v4292
        %v4295 = vmul.f32 %v4293, %v4293
        %v4296 = vstv %s4267
        %v4297 = vmul.f32 %v317, %v4296
        %v4298 = vmul.f32 %v318, %v4296
        %v4299 = vmin.f32 %v4297, 10000.0
        %v4300 = vmin.f32 %v4298, 10000.0
        %v4301 = vsub.f32 %v3875, %v870
        %v4302 = vsub.f32 %v3876, %v872
        %v4303 = vand.u32 2147483647, %v4301
        %v4304 = vand.u32 2147483647, %v4302
        %4307 = vrot.lane.b32.xlu0 %v4299, 4
        %v4308 = vpop.permute.xlu0 %4307
        %4309 = vrot.lane.b32.xlu0 %v4300, 4
        %v4310 = vpop.permute.xlu0 %4309
        %v4313 = vmul.f32 %v4303, %v4308
        %v4314 = vmul.f32 %v4304, %v4310
        %v4315 = vsub.f32 0.0, %v4313
        %v4316 = vsub.f32 0.0, %v4314
        %v4317 = vmul.f32 %v4315, 1.442695
        %v4318 = vpow.pop %v4317
        %v4319 = vmul.f32 %v4316, 1.442695
        %v4320 = vpow.pop %v4319
        %v4321 = vstv %s4266
        %v4322 = vmul.f32 %v4321, %v4294
        %v4323 = vmul.f32 %v4321, %v4295
        %v4324 = vmul.f32 %v4322, %v4318
        %v4325 = vmul.f32 %v4323, %v4320
        %v4326 = vmul.f32 %v3851, %v4324
        %v4327 = vmul.f32 %v3852, %v4325
        %4330 = vrot.lane.b32.xlu0 %v4326, 124
        %v4331 = vpop.permute.xlu0 %4330
        %4332 = vrot.lane.b32.xlu0 %v4327, 124
        %v4333 = vpop.permute.xlu0 %4332
        %v4336 = vadd.f32 %v4229, %v4331
        %v4337 = vadd.f32 %v4230, %v4333
        %v4338 = vmul.f32 %v3855, %v4324
        %v4339 = vmul.f32 %v3856, %v4325
        %4342 = vrot.lane.b32.xlu0 %v4338, 124
        %v4343 = vpop.permute.xlu0 %4342
        %4344 = vrot.lane.b32.xlu0 %v4339, 124
        %v4345 = vpop.permute.xlu0 %4344
        %v4348 = vadd.f32 %v4241, %v4343
        %v4349 = vadd.f32 %v4242, %v4345
        %v4350 = vmul.f32 %v3859, %v4324
        %v4351 = vmul.f32 %v3860, %v4325
        %4354 = vrot.lane.b32.xlu0 %v4350, 124
        %v4355 = vpop.permute.xlu0 %4354
        %4356 = vrot.lane.b32.xlu0 %v4351, 124
        %v4357 = vpop.permute.xlu0 %4356
        %v4360 = vadd.f32 %v4253, %v4355
        %v4361 = vadd.f32 %v4254, %v4357
        %4364 = vrot.lane.b32.xlu0 %v4324, 124
        %v4365 = vpop.permute.xlu0 %4364
        %4366 = vrot.lane.b32.xlu0 %v4325, 124
        %v4367 = vpop.permute.xlu0 %4366
        %v4370 = vadd.f32 %v4263, %v4365
        %v4371 = vadd.f32 %v4264, %v4367
        %s4372 = sadd.s32 %s3877, 5
        %s4373 = sld [smem:[#allocation4 + %s4372]]
        %s4374 = sld [smem:[#allocation7 + %s4372]]
        %v4375 = vmul.f32 %v3863, %v950
        %v4376 = vmul.f32 %v3864, %v952
        %v4377 = vmul.f32 %v3867, %v958
        %v4378 = vmul.f32 %v3868, %v960
        %v4379 = vadd.f32 %v4375, %v4377
        %v4380 = vadd.f32 %v4376, %v4378
        %v4381 = vmul.f32 %v3871, %v968
        %v4382 = vmul.f32 %v3872, %v970
        %v4383 = vadd.f32 %v4379, %v4381
        %v4384 = vadd.f32 %v4380, %v4382
        %v4385 = vmax.f32 %v4383, 0.0001
        %v4386 = vmax.f32 %v4384, 0.0001
        %v4387 = vmin.f32 %v4385, 1.0
        %v4388 = vmin.f32 %v4386, 1.0
        %v4389 = vmul.f32 %v4387, %v4387
        %v4390 = vmul.f32 %v4388, %v4388
        %v4391 = vmul.f32 %v4389, %v4389
        %v4392 = vmul.f32 %v4390, %v4390
        %v4393 = vmul.f32 %v4391, %v4391
        %v4394 = vmul.f32 %v4392, %v4392
        %v4395 = vmul.f32 %v4393, %v4393
        %v4396 = vmul.f32 %v4394, %v4394
        %v4397 = vmul.f32 %v4395, %v4395
        %v4398 = vmul.f32 %v4396, %v4396
        %v4399 = vmul.f32 %v4397, %v4397
        %v4400 = vmul.f32 %v4398, %v4398
        %v4401 = vmul.f32 %v4399, %v4399
        %v4402 = vmul.f32 %v4400, %v4400
        %v4403 = vstv %s4374
        %v4404 = vmul.f32 %v317, %v4403
        %v4405 = vmul.f32 %v318, %v4403
        %v4406 = vmin.f32 %v4404, 10000.0
        %v4407 = vmin.f32 %v4405, 10000.0
        %v4408 = vsub.f32 %v3875, %v1001
        %v4409 = vsub.f32 %v3876, %v1003
        %v4410 = vand.u32 2147483647, %v4408
        %v4411 = vand.u32 2147483647, %v4409
        %4414 = vrot.lane.b32.xlu0 %v4406, 5
        %v4415 = vpop.permute.xlu0 %4414
        %4416 = vrot.lane.b32.xlu0 %v4407, 5
        %v4417 = vpop.permute.xlu0 %4416
        %v4420 = vmul.f32 %v4410, %v4415
        %v4421 = vmul.f32 %v4411, %v4417
        %v4422 = vsub.f32 0.0, %v4420
        %v4423 = vsub.f32 0.0, %v4421
        %v4424 = vmul.f32 %v4422, 1.442695
        %v4425 = vpow.pop %v4424
        %v4426 = vmul.f32 %v4423, 1.442695
        %v4427 = vpow.pop %v4426
        %v4428 = vstv %s4373
        %v4429 = vmul.f32 %v4428, %v4401
        %v4430 = vmul.f32 %v4428, %v4402
        %v4431 = vmul.f32 %v4429, %v4425
        %v4432 = vmul.f32 %v4430, %v4427
        %v4433 = vmul.f32 %v3851, %v4431
        %v4434 = vmul.f32 %v3852, %v4432
        %4437 = vrot.lane.b32.xlu0 %v4433, 123
        %v4438 = vpop.permute.xlu0 %4437
        %4439 = vrot.lane.b32.xlu0 %v4434, 123
        %v4440 = vpop.permute.xlu0 %4439
        %v4443 = vadd.f32 %v4336, %v4438
        %v4444 = vadd.f32 %v4337, %v4440
        %v4445 = vmul.f32 %v3855, %v4431
        %v4446 = vmul.f32 %v3856, %v4432
        %4449 = vrot.lane.b32.xlu0 %v4445, 123
        %v4450 = vpop.permute.xlu0 %4449
        %4451 = vrot.lane.b32.xlu0 %v4446, 123
        %v4452 = vpop.permute.xlu0 %4451
        %v4455 = vadd.f32 %v4348, %v4450
        %v4456 = vadd.f32 %v4349, %v4452
        %v4457 = vmul.f32 %v3859, %v4431
        %v4458 = vmul.f32 %v3860, %v4432
        %4461 = vrot.lane.b32.xlu0 %v4457, 123
        %v4462 = vpop.permute.xlu0 %4461
        %4463 = vrot.lane.b32.xlu0 %v4458, 123
        %v4464 = vpop.permute.xlu0 %4463
        %v4467 = vadd.f32 %v4360, %v4462
        %v4468 = vadd.f32 %v4361, %v4464
        %4471 = vrot.lane.b32.xlu0 %v4431, 123
        %v4472 = vpop.permute.xlu0 %4471
        %4473 = vrot.lane.b32.xlu0 %v4432, 123
        %v4474 = vpop.permute.xlu0 %4473
        %v4477 = vadd.f32 %v4370, %v4472
        %v4478 = vadd.f32 %v4371, %v4474
        %s4479 = sadd.s32 %s3877, 6
        %s4480 = sld [smem:[#allocation4 + %s4479]]
        %s4481 = sld [smem:[#allocation7 + %s4479]]
        %v4482 = vmul.f32 %v3863, %v1081
        %v4483 = vmul.f32 %v3864, %v1083
        %v4484 = vmul.f32 %v3867, %v1089
        %v4485 = vmul.f32 %v3868, %v1091
        %v4486 = vadd.f32 %v4482, %v4484
        %v4487 = vadd.f32 %v4483, %v4485
        %v4488 = vmul.f32 %v3871, %v1099
        %v4489 = vmul.f32 %v3872, %v1101
        %v4490 = vadd.f32 %v4486, %v4488
        %v4491 = vadd.f32 %v4487, %v4489
        %v4492 = vmax.f32 %v4490, 0.0001
        %v4493 = vmax.f32 %v4491, 0.0001
        %v4494 = vmin.f32 %v4492, 1.0
        %v4495 = vmin.f32 %v4493, 1.0
        %v4496 = vmul.f32 %v4494, %v4494
        %v4497 = vmul.f32 %v4495, %v4495
        %v4498 = vmul.f32 %v4496, %v4496
        %v4499 = vmul.f32 %v4497, %v4497
        %v4500 = vmul.f32 %v4498, %v4498
        %v4501 = vmul.f32 %v4499, %v4499
        %v4502 = vmul.f32 %v4500, %v4500
        %v4503 = vmul.f32 %v4501, %v4501
        %v4504 = vmul.f32 %v4502, %v4502
        %v4505 = vmul.f32 %v4503, %v4503
        %v4506 = vmul.f32 %v4504, %v4504
        %v4507 = vmul.f32 %v4505, %v4505
        %v4508 = vmul.f32 %v4506, %v4506
        %v4509 = vmul.f32 %v4507, %v4507
        %v4510 = vstv %s4481
        %v4511 = vmul.f32 %v317, %v4510
        %v4512 = vmul.f32 %v318, %v4510
        %v4513 = vmin.f32 %v4511, 10000.0
        %v4514 = vmin.f32 %v4512, 10000.0
        %v4515 = vsub.f32 %v3875, %v1132
        %v4516 = vsub.f32 %v3876, %v1134
        %v4517 = vand.u32 2147483647, %v4515
        %v4518 = vand.u32 2147483647, %v4516
        %4521 = vrot.lane.b32.xlu0 %v4513, 6
        %v4522 = vpop.permute.xlu0 %4521
        %4523 = vrot.lane.b32.xlu0 %v4514, 6
        %v4524 = vpop.permute.xlu0 %4523
        %v4527 = vmul.f32 %v4517, %v4522
        %v4528 = vmul.f32 %v4518, %v4524
        %v4529 = vsub.f32 0.0, %v4527
        %v4530 = vsub.f32 0.0, %v4528
        %v4531 = vmul.f32 %v4529, 1.442695
        %v4532 = vpow.pop %v4531
        %v4533 = vmul.f32 %v4530, 1.442695
        %v4534 = vpow.pop %v4533
        %v4535 = vstv %s4480
        %v4536 = vmul.f32 %v4535, %v4508
        %v4537 = vmul.f32 %v4535, %v4509
        %v4538 = vmul.f32 %v4536, %v4532
        %v4539 = vmul.f32 %v4537, %v4534
        %v4540 = vmul.f32 %v3851, %v4538
        %v4541 = vmul.f32 %v3852, %v4539
        %4544 = vrot.lane.b32.xlu0 %v4540, 122
        %v4545 = vpop.permute.xlu0 %4544
        %4546 = vrot.lane.b32.xlu0 %v4541, 122
        %v4547 = vpop.permute.xlu0 %4546
        %v4550 = vadd.f32 %v4443, %v4545
        %v4551 = vadd.f32 %v4444, %v4547
        %v4552 = vmul.f32 %v3855, %v4538
        %v4553 = vmul.f32 %v3856, %v4539
        %4556 = vrot.lane.b32.xlu0 %v4552, 122
        %v4557 = vpop.permute.xlu0 %4556
        %4558 = vrot.lane.b32.xlu0 %v4553, 122
        %v4559 = vpop.permute.xlu0 %4558
        %v4562 = vadd.f32 %v4455, %v4557
        %v4563 = vadd.f32 %v4456, %v4559
        %v4564 = vmul.f32 %v3859, %v4538
        %v4565 = vmul.f32 %v3860, %v4539
        %4568 = vrot.lane.b32.xlu0 %v4564, 122
        %v4569 = vpop.permute.xlu0 %4568
        %4570 = vrot.lane.b32.xlu0 %v4565, 122
        %v4571 = vpop.permute.xlu0 %4570
        %v4574 = vadd.f32 %v4467, %v4569
        %v4575 = vadd.f32 %v4468, %v4571
        %4578 = vrot.lane.b32.xlu0 %v4538, 122
        %v4579 = vpop.permute.xlu0 %4578
        %4580 = vrot.lane.b32.xlu0 %v4539, 122
        %v4581 = vpop.permute.xlu0 %4580
        %v4584 = vadd.f32 %v4477, %v4579
        %v4585 = vadd.f32 %v4478, %v4581
        %s4586 = sadd.s32 %s3877, 7
        %s4587 = sld [smem:[#allocation4 + %s4586]]
        %s4588 = sld [smem:[#allocation7 + %s4586]]
        %v4589 = vmul.f32 %v3863, %v1212
        %v4590 = vmul.f32 %v3864, %v1214
        %v4591 = vmul.f32 %v3867, %v1220
        %v4592 = vmul.f32 %v3868, %v1222
        %v4593 = vadd.f32 %v4589, %v4591
        %v4594 = vadd.f32 %v4590, %v4592
        %v4595 = vmul.f32 %v3871, %v1230
        %v4596 = vmul.f32 %v3872, %v1232
        %v4597 = vadd.f32 %v4593, %v4595
        %v4598 = vadd.f32 %v4594, %v4596
        %v4599 = vmax.f32 %v4597, 0.0001
        %v4600 = vmax.f32 %v4598, 0.0001
        %v4601 = vmin.f32 %v4599, 1.0
        %v4602 = vmin.f32 %v4600, 1.0
        %v4603 = vmul.f32 %v4601, %v4601
        %v4604 = vmul.f32 %v4602, %v4602
        %v4605 = vmul.f32 %v4603, %v4603
        %v4606 = vmul.f32 %v4604, %v4604
        %v4607 = vmul.f32 %v4605, %v4605
        %v4608 = vmul.f32 %v4606, %v4606
        %v4609 = vmul.f32 %v4607, %v4607
        %v4610 = vmul.f32 %v4608, %v4608
        %v4611 = vmul.f32 %v4609, %v4609
        %v4612 = vmul.f32 %v4610, %v4610
        %v4613 = vmul.f32 %v4611, %v4611
        %v4614 = vmul.f32 %v4612, %v4612
        %v4615 = vmul.f32 %v4613, %v4613
        %v4616 = vmul.f32 %v4614, %v4614
        %v4617 = vstv %s4588
        %v4618 = vmul.f32 %v317, %v4617
        %v4619 = vmul.f32 %v318, %v4617
        %v4620 = vmin.f32 %v4618, 10000.0
        %v4621 = vmin.f32 %v4619, 10000.0
        %v4622 = vsub.f32 %v3875, %v1263
        %v4623 = vsub.f32 %v3876, %v1265
        %v4624 = vand.u32 2147483647, %v4622
        %v4625 = vand.u32 2147483647, %v4623
        %4628 = vrot.lane.b32.xlu0 %v4620, 7
        %v4629 = vpop.permute.xlu0 %4628
        %4630 = vrot.lane.b32.xlu0 %v4621, 7
        %v4631 = vpop.permute.xlu0 %4630
        %v4634 = vmul.f32 %v4624, %v4629
        %v4635 = vmul.f32 %v4625, %v4631
        %v4636 = vsub.f32 0.0, %v4634
        %v4637 = vsub.f32 0.0, %v4635
        %v4638 = vmul.f32 %v4636, 1.442695
        %v4639 = vpow.pop %v4638
        %v4640 = vmul.f32 %v4637, 1.442695
        %v4641 = vpow.pop %v4640
        %v4642 = vstv %s4587
        %v4643 = vmul.f32 %v4642, %v4615
        %v4644 = vmul.f32 %v4642, %v4616
        %v4645 = vmul.f32 %v4643, %v4639
        %v4646 = vmul.f32 %v4644, %v4641
        %v4647 = vmul.f32 %v3851, %v4645
        %v4648 = vmul.f32 %v3852, %v4646
        %4651 = vrot.lane.b32.xlu0 %v4647, 121
        %v4652 = vpop.permute.xlu0 %4651
        %4653 = vrot.lane.b32.xlu0 %v4648, 121
        %v4654 = vpop.permute.xlu0 %4653
        %v4657 = vadd.f32 %v4550, %v4652
        %v4658 = vadd.f32 %v4551, %v4654
        %v4659 = vmul.f32 %v3855, %v4645
        %v4660 = vmul.f32 %v3856, %v4646
        %4663 = vrot.lane.b32.xlu0 %v4659, 121
        %v4664 = vpop.permute.xlu0 %4663
        %4665 = vrot.lane.b32.xlu0 %v4660, 121
        %v4666 = vpop.permute.xlu0 %4665
        %v4669 = vadd.f32 %v4562, %v4664
        %v4670 = vadd.f32 %v4563, %v4666
        %v4671 = vmul.f32 %v3859, %v4645
        %v4672 = vmul.f32 %v3860, %v4646
        %4675 = vrot.lane.b32.xlu0 %v4671, 121
        %v4676 = vpop.permute.xlu0 %4675
        %4677 = vrot.lane.b32.xlu0 %v4672, 121
        %v4678 = vpop.permute.xlu0 %4677
        %v4681 = vadd.f32 %v4574, %v4676
        %v4682 = vadd.f32 %v4575, %v4678
        %4685 = vrot.lane.b32.xlu0 %v4645, 121
        %v4686 = vpop.permute.xlu0 %4685
        %4687 = vrot.lane.b32.xlu0 %v4646, 121
        %v4688 = vpop.permute.xlu0 %4687
        %v4691 = vadd.f32 %v4584, %v4686
        %v4692 = vadd.f32 %v4585, %v4688
        %s4693 = sadd.s32 %s3877, 8
        %s4694 = sld [smem:[#allocation4 + %s4693]]
        %s4695 = sld [smem:[#allocation7 + %s4693]]
        %v4696 = vmul.f32 %v3863, %v1343
        %v4697 = vmul.f32 %v3864, %v1345
        %v4698 = vmul.f32 %v3867, %v1351
        %v4699 = vmul.f32 %v3868, %v1353
        %v4700 = vadd.f32 %v4696, %v4698
        %v4701 = vadd.f32 %v4697, %v4699
        %v4702 = vmul.f32 %v3871, %v1361
        %v4703 = vmul.f32 %v3872, %v1363
        %v4704 = vadd.f32 %v4700, %v4702
        %v4705 = vadd.f32 %v4701, %v4703
        %v4706 = vmax.f32 %v4704, 0.0001
        %v4707 = vmax.f32 %v4705, 0.0001
        %v4708 = vmin.f32 %v4706, 1.0
        %v4709 = vmin.f32 %v4707, 1.0
        %v4710 = vmul.f32 %v4708, %v4708
        %v4711 = vmul.f32 %v4709, %v4709
        %v4712 = vmul.f32 %v4710, %v4710
        %v4713 = vmul.f32 %v4711, %v4711
        %v4714 = vmul.f32 %v4712, %v4712
        %v4715 = vmul.f32 %v4713, %v4713
        %v4716 = vmul.f32 %v4714, %v4714
        %v4717 = vmul.f32 %v4715, %v4715
        %v4718 = vmul.f32 %v4716, %v4716
        %v4719 = vmul.f32 %v4717, %v4717
        %v4720 = vmul.f32 %v4718, %v4718
        %v4721 = vmul.f32 %v4719, %v4719
        %v4722 = vmul.f32 %v4720, %v4720
        %v4723 = vmul.f32 %v4721, %v4721
        %v4724 = vstv %s4695
        %v4725 = vmul.f32 %v317, %v4724
        %v4726 = vmul.f32 %v318, %v4724
        %v4727 = vmin.f32 %v4725, 10000.0
        %v4728 = vmin.f32 %v4726, 10000.0
        %v4729 = vsub.f32 %v3875, %v1394
        %v4730 = vsub.f32 %v3876, %v1396
        %v4731 = vand.u32 2147483647, %v4729
        %v4732 = vand.u32 2147483647, %v4730
        %4735 = vrot.lane.b32.xlu0 %v4727, 8
        %v4736 = vpop.permute.xlu0 %4735
        %4737 = vrot.lane.b32.xlu0 %v4728, 8
        %v4738 = vpop.permute.xlu0 %4737
        %v4741 = vmul.f32 %v4731, %v4736
        %v4742 = vmul.f32 %v4732, %v4738
        %v4743 = vsub.f32 0.0, %v4741
        %v4744 = vsub.f32 0.0, %v4742
        %v4745 = vmul.f32 %v4743, 1.442695
        %v4746 = vpow.pop %v4745
        %v4747 = vmul.f32 %v4744, 1.442695
        %v4748 = vpow.pop %v4747
        %v4749 = vstv %s4694
        %v4750 = vmul.f32 %v4749, %v4722
        %v4751 = vmul.f32 %v4749, %v4723
        %v4752 = vmul.f32 %v4750, %v4746
        %v4753 = vmul.f32 %v4751, %v4748
        %v4754 = vmul.f32 %v3851, %v4752
        %v4755 = vmul.f32 %v3852, %v4753
        %4758 = vrot.lane.b32.xlu0 %v4754, 120
        %v4759 = vpop.permute.xlu0 %4758
        %4760 = vrot.lane.b32.xlu0 %v4755, 120
        %v4761 = vpop.permute.xlu0 %4760
        %v4764 = vadd.f32 %v4657, %v4759
        %v4765 = vadd.f32 %v4658, %v4761
        %v4766 = vmul.f32 %v3855, %v4752
        %v4767 = vmul.f32 %v3856, %v4753
        %4770 = vrot.lane.b32.xlu0 %v4766, 120
        %v4771 = vpop.permute.xlu0 %4770
        %4772 = vrot.lane.b32.xlu0 %v4767, 120
        %v4773 = vpop.permute.xlu0 %4772
        %v4776 = vadd.f32 %v4669, %v4771
        %v4777 = vadd.f32 %v4670, %v4773
        %v4778 = vmul.f32 %v3859, %v4752
        %v4779 = vmul.f32 %v3860, %v4753
        %4782 = vrot.lane.b32.xlu0 %v4778, 120
        %v4783 = vpop.permute.xlu0 %4782
        %4784 = vrot.lane.b32.xlu0 %v4779, 120
        %v4785 = vpop.permute.xlu0 %4784
        %v4788 = vadd.f32 %v4681, %v4783
        %v4789 = vadd.f32 %v4682, %v4785
        %4792 = vrot.lane.b32.xlu0 %v4752, 120
        %v4793 = vpop.permute.xlu0 %4792
        %4794 = vrot.lane.b32.xlu0 %v4753, 120
        %v4795 = vpop.permute.xlu0 %4794
        %v4798 = vadd.f32 %v4691, %v4793
        %v4799 = vadd.f32 %v4692, %v4795
        %s4800 = sadd.s32 %s3877, 9
        %s4801 = sld [smem:[#allocation4 + %s4800]]
        %s4802 = sld [smem:[#allocation7 + %s4800]]
        %v4803 = vmul.f32 %v3863, %v1474
        %v4804 = vmul.f32 %v3864, %v1476
        %v4805 = vmul.f32 %v3867, %v1482
        %v4806 = vmul.f32 %v3868, %v1484
        %v4807 = vadd.f32 %v4803, %v4805
        %v4808 = vadd.f32 %v4804, %v4806
        %v4809 = vmul.f32 %v3871, %v1492
        %v4810 = vmul.f32 %v3872, %v1494
        %v4811 = vadd.f32 %v4807, %v4809
        %v4812 = vadd.f32 %v4808, %v4810
        %v4813 = vmax.f32 %v4811, 0.0001
        %v4814 = vmax.f32 %v4812, 0.0001
        %v4815 = vmin.f32 %v4813, 1.0
        %v4816 = vmin.f32 %v4814, 1.0
        %v4817 = vmul.f32 %v4815, %v4815
        %v4818 = vmul.f32 %v4816, %v4816
        %v4819 = vmul.f32 %v4817, %v4817
        %v4820 = vmul.f32 %v4818, %v4818
        %v4821 = vmul.f32 %v4819, %v4819
        %v4822 = vmul.f32 %v4820, %v4820
        %v4823 = vmul.f32 %v4821, %v4821
        %v4824 = vmul.f32 %v4822, %v4822
        %v4825 = vmul.f32 %v4823, %v4823
        %v4826 = vmul.f32 %v4824, %v4824
        %v4827 = vmul.f32 %v4825, %v4825
        %v4828 = vmul.f32 %v4826, %v4826
        %v4829 = vmul.f32 %v4827, %v4827
        %v4830 = vmul.f32 %v4828, %v4828
        %v4831 = vstv %s4802
        %v4832 = vmul.f32 %v317, %v4831
        %v4833 = vmul.f32 %v318, %v4831
        %v4834 = vmin.f32 %v4832, 10000.0
        %v4835 = vmin.f32 %v4833, 10000.0
        %v4836 = vsub.f32 %v3875, %v1525
        %v4837 = vsub.f32 %v3876, %v1527
        %v4838 = vand.u32 2147483647, %v4836
        %v4839 = vand.u32 2147483647, %v4837
        %4842 = vrot.lane.b32.xlu0 %v4834, 9
        %v4843 = vpop.permute.xlu0 %4842
        %4844 = vrot.lane.b32.xlu0 %v4835, 9
        %v4845 = vpop.permute.xlu0 %4844
        %v4848 = vmul.f32 %v4838, %v4843
        %v4849 = vmul.f32 %v4839, %v4845
        %v4850 = vsub.f32 0.0, %v4848
        %v4851 = vsub.f32 0.0, %v4849
        %v4852 = vmul.f32 %v4850, 1.442695
        %v4853 = vpow.pop %v4852
        %v4854 = vmul.f32 %v4851, 1.442695
        %v4855 = vpow.pop %v4854
        %v4856 = vstv %s4801
        %v4857 = vmul.f32 %v4856, %v4829
        %v4858 = vmul.f32 %v4856, %v4830
        %v4859 = vmul.f32 %v4857, %v4853
        %v4860 = vmul.f32 %v4858, %v4855
        %v4861 = vmul.f32 %v3851, %v4859
        %v4862 = vmul.f32 %v3852, %v4860
        %4865 = vrot.lane.b32.xlu0 %v4861, 119
        %v4866 = vpop.permute.xlu0 %4865
        %4867 = vrot.lane.b32.xlu0 %v4862, 119
        %v4868 = vpop.permute.xlu0 %4867
        %v4871 = vadd.f32 %v4764, %v4866
        %v4872 = vadd.f32 %v4765, %v4868
        %v4873 = vmul.f32 %v3855, %v4859
        %v4874 = vmul.f32 %v3856, %v4860
        %4877 = vrot.lane.b32.xlu0 %v4873, 119
        %v4878 = vpop.permute.xlu0 %4877
        %4879 = vrot.lane.b32.xlu0 %v4874, 119
        %v4880 = vpop.permute.xlu0 %4879
        %v4883 = vadd.f32 %v4776, %v4878
        %v4884 = vadd.f32 %v4777, %v4880
        %v4885 = vmul.f32 %v3859, %v4859
        %v4886 = vmul.f32 %v3860, %v4860
        %4889 = vrot.lane.b32.xlu0 %v4885, 119
        %v4890 = vpop.permute.xlu0 %4889
        %4891 = vrot.lane.b32.xlu0 %v4886, 119
        %v4892 = vpop.permute.xlu0 %4891
        %v4895 = vadd.f32 %v4788, %v4890
        %v4896 = vadd.f32 %v4789, %v4892
        %4899 = vrot.lane.b32.xlu0 %v4859, 119
        %v4900 = vpop.permute.xlu0 %4899
        %4901 = vrot.lane.b32.xlu0 %v4860, 119
        %v4902 = vpop.permute.xlu0 %4901
        %v4905 = vadd.f32 %v4798, %v4900
        %v4906 = vadd.f32 %v4799, %v4902
        %s4907 = sadd.s32 %s3877, 10
        %s4908 = sld [smem:[#allocation4 + %s4907]]
        %s4909 = sld [smem:[#allocation7 + %s4907]]
        %v4910 = vmul.f32 %v3863, %v1605
        %v4911 = vmul.f32 %v3864, %v1607
        %v4912 = vmul.f32 %v3867, %v1613
        %v4913 = vmul.f32 %v3868, %v1615
        %v4914 = vadd.f32 %v4910, %v4912
        %v4915 = vadd.f32 %v4911, %v4913
        %v4916 = vmul.f32 %v3871, %v1623
        %v4917 = vmul.f32 %v3872, %v1625
        %v4918 = vadd.f32 %v4914, %v4916
        %v4919 = vadd.f32 %v4915, %v4917
        %v4920 = vmax.f32 %v4918, 0.0001
        %v4921 = vmax.f32 %v4919, 0.0001
        %v4922 = vmin.f32 %v4920, 1.0
        %v4923 = vmin.f32 %v4921, 1.0
        %v4924 = vmul.f32 %v4922, %v4922
        %v4925 = vmul.f32 %v4923, %v4923
        %v4926 = vmul.f32 %v4924, %v4924
        %v4927 = vmul.f32 %v4925, %v4925
        %v4928 = vmul.f32 %v4926, %v4926
        %v4929 = vmul.f32 %v4927, %v4927
        %v4930 = vmul.f32 %v4928, %v4928
        %v4931 = vmul.f32 %v4929, %v4929
        %v4932 = vmul.f32 %v4930, %v4930
        %v4933 = vmul.f32 %v4931, %v4931
        %v4934 = vmul.f32 %v4932, %v4932
        %v4935 = vmul.f32 %v4933, %v4933
        %v4936 = vmul.f32 %v4934, %v4934
        %v4937 = vmul.f32 %v4935, %v4935
        %v4938 = vstv %s4909
        %v4939 = vmul.f32 %v317, %v4938
        %v4940 = vmul.f32 %v318, %v4938
        %v4941 = vmin.f32 %v4939, 10000.0
        %v4942 = vmin.f32 %v4940, 10000.0
        %v4943 = vsub.f32 %v3875, %v1656
        %v4944 = vsub.f32 %v3876, %v1658
        %v4945 = vand.u32 2147483647, %v4943
        %v4946 = vand.u32 2147483647, %v4944
        %4949 = vrot.lane.b32.xlu0 %v4941, 10
        %v4950 = vpop.permute.xlu0 %4949
        %4951 = vrot.lane.b32.xlu0 %v4942, 10
        %v4952 = vpop.permute.xlu0 %4951
        %v4955 = vmul.f32 %v4945, %v4950
        %v4956 = vmul.f32 %v4946, %v4952
        %v4957 = vsub.f32 0.0, %v4955
        %v4958 = vsub.f32 0.0, %v4956
        %v4959 = vmul.f32 %v4957, 1.442695
        %v4960 = vpow.pop %v4959
        %v4961 = vmul.f32 %v4958, 1.442695
        %v4962 = vpow.pop %v4961
        %v4963 = vstv %s4908
        %v4964 = vmul.f32 %v4963, %v4936
        %v4965 = vmul.f32 %v4963, %v4937
        %v4966 = vmul.f32 %v4964, %v4960
        %v4967 = vmul.f32 %v4965, %v4962
        %v4968 = vmul.f32 %v3851, %v4966
        %v4969 = vmul.f32 %v3852, %v4967
        %4972 = vrot.lane.b32.xlu0 %v4968, 118
        %v4973 = vpop.permute.xlu0 %4972
        %4974 = vrot.lane.b32.xlu0 %v4969, 118
        %v4975 = vpop.permute.xlu0 %4974
        %v4978 = vadd.f32 %v4871, %v4973
        %v4979 = vadd.f32 %v4872, %v4975
        %v4980 = vmul.f32 %v3855, %v4966
        %v4981 = vmul.f32 %v3856, %v4967
        %4984 = vrot.lane.b32.xlu0 %v4980, 118
        %v4985 = vpop.permute.xlu0 %4984
        %4986 = vrot.lane.b32.xlu0 %v4981, 118
        %v4987 = vpop.permute.xlu0 %4986
        %v4990 = vadd.f32 %v4883, %v4985
        %v4991 = vadd.f32 %v4884, %v4987
        %v4992 = vmul.f32 %v3859, %v4966
        %v4993 = vmul.f32 %v3860, %v4967
        %4996 = vrot.lane.b32.xlu0 %v4992, 118
        %v4997 = vpop.permute.xlu0 %4996
        %4998 = vrot.lane.b32.xlu0 %v4993, 118
        %v4999 = vpop.permute.xlu0 %4998
        %v5002 = vadd.f32 %v4895, %v4997
        %v5003 = vadd.f32 %v4896, %v4999
        %5006 = vrot.lane.b32.xlu0 %v4966, 118
        %v5007 = vpop.permute.xlu0 %5006
        %5008 = vrot.lane.b32.xlu0 %v4967, 118
        %v5009 = vpop.permute.xlu0 %5008
        %v5012 = vadd.f32 %v4905, %v5007
        %v5013 = vadd.f32 %v4906, %v5009
        %s5014 = sadd.s32 %s3877, 11
        %s5015 = sld [smem:[#allocation4 + %s5014]]
        %s5016 = sld [smem:[#allocation7 + %s5014]]
        %v5017 = vmul.f32 %v3863, %v1736
        %v5018 = vmul.f32 %v3864, %v1738
        %v5019 = vmul.f32 %v3867, %v1744
        %v5020 = vmul.f32 %v3868, %v1746
        %v5021 = vadd.f32 %v5017, %v5019
        %v5022 = vadd.f32 %v5018, %v5020
        %v5023 = vmul.f32 %v3871, %v1754
        %v5024 = vmul.f32 %v3872, %v1756
        %v5025 = vadd.f32 %v5021, %v5023
        %v5026 = vadd.f32 %v5022, %v5024
        %v5027 = vmax.f32 %v5025, 0.0001
        %v5028 = vmax.f32 %v5026, 0.0001
        %v5029 = vmin.f32 %v5027, 1.0
        %v5030 = vmin.f32 %v5028, 1.0
        %v5031 = vmul.f32 %v5029, %v5029
        %v5032 = vmul.f32 %v5030, %v5030
        %v5033 = vmul.f32 %v5031, %v5031
        %v5034 = vmul.f32 %v5032, %v5032
        %v5035 = vmul.f32 %v5033, %v5033
        %v5036 = vmul.f32 %v5034, %v5034
        %v5037 = vmul.f32 %v5035, %v5035
        %v5038 = vmul.f32 %v5036, %v5036
        %v5039 = vmul.f32 %v5037, %v5037
        %v5040 = vmul.f32 %v5038, %v5038
        %v5041 = vmul.f32 %v5039, %v5039
        %v5042 = vmul.f32 %v5040, %v5040
        %v5043 = vmul.f32 %v5041, %v5041
        %v5044 = vmul.f32 %v5042, %v5042
        %v5045 = vstv %s5016
        %v5046 = vmul.f32 %v317, %v5045
        %v5047 = vmul.f32 %v318, %v5045
        %v5048 = vmin.f32 %v5046, 10000.0
        %v5049 = vmin.f32 %v5047, 10000.0
        %v5050 = vsub.f32 %v3875, %v1787
        %v5051 = vsub.f32 %v3876, %v1789
        %v5052 = vand.u32 2147483647, %v5050
        %v5053 = vand.u32 2147483647, %v5051
        %5056 = vrot.lane.b32.xlu0 %v5048, 11
        %v5057 = vpop.permute.xlu0 %5056
        %5058 = vrot.lane.b32.xlu0 %v5049, 11
        %v5059 = vpop.permute.xlu0 %5058
        %v5062 = vmul.f32 %v5052, %v5057
        %v5063 = vmul.f32 %v5053, %v5059
        %v5064 = vsub.f32 0.0, %v5062
        %v5065 = vsub.f32 0.0, %v5063
        %v5066 = vmul.f32 %v5064, 1.442695
        %v5067 = vpow.pop %v5066
        %v5068 = vmul.f32 %v5065, 1.442695
        %v5069 = vpow.pop %v5068
        %v5070 = vstv %s5015
        %v5071 = vmul.f32 %v5070, %v5043
        %v5072 = vmul.f32 %v5070, %v5044
        %v5073 = vmul.f32 %v5071, %v5067
        %v5074 = vmul.f32 %v5072, %v5069
        %v5075 = vmul.f32 %v3851, %v5073
        %v5076 = vmul.f32 %v3852, %v5074
        %5079 = vrot.lane.b32.xlu0 %v5075, 117
        %v5080 = vpop.permute.xlu0 %5079
        %5081 = vrot.lane.b32.xlu0 %v5076, 117
        %v5082 = vpop.permute.xlu0 %5081
        %v5085 = vadd.f32 %v4978, %v5080
        %v5086 = vadd.f32 %v4979, %v5082
        %v5087 = vmul.f32 %v3855, %v5073
        %v5088 = vmul.f32 %v3856, %v5074
        %5091 = vrot.lane.b32.xlu0 %v5087, 117
        %v5092 = vpop.permute.xlu0 %5091
        %5093 = vrot.lane.b32.xlu0 %v5088, 117
        %v5094 = vpop.permute.xlu0 %5093
        %v5097 = vadd.f32 %v4990, %v5092
        %v5098 = vadd.f32 %v4991, %v5094
        %v5099 = vmul.f32 %v3859, %v5073
        %v5100 = vmul.f32 %v3860, %v5074
        %5103 = vrot.lane.b32.xlu0 %v5099, 117
        %v5104 = vpop.permute.xlu0 %5103
        %5105 = vrot.lane.b32.xlu0 %v5100, 117
        %v5106 = vpop.permute.xlu0 %5105
        %v5109 = vadd.f32 %v5002, %v5104
        %v5110 = vadd.f32 %v5003, %v5106
        %5113 = vrot.lane.b32.xlu0 %v5073, 117
        %v5114 = vpop.permute.xlu0 %5113
        %5115 = vrot.lane.b32.xlu0 %v5074, 117
        %v5116 = vpop.permute.xlu0 %5115
        %v5119 = vadd.f32 %v5012, %v5114
        %v5120 = vadd.f32 %v5013, %v5116
        %s5121 = sadd.s32 %s3877, 12
        %s5122 = sld [smem:[#allocation4 + %s5121]]
        %s5123 = sld [smem:[#allocation7 + %s5121]]
        %v5124 = vmul.f32 %v3863, %v1867
        %v5125 = vmul.f32 %v3864, %v1869
        %v5126 = vmul.f32 %v3867, %v1875
        %v5127 = vmul.f32 %v3868, %v1877
        %v5128 = vadd.f32 %v5124, %v5126
        %v5129 = vadd.f32 %v5125, %v5127
        %v5130 = vmul.f32 %v3871, %v1885
        %v5131 = vmul.f32 %v3872, %v1887
        %v5132 = vadd.f32 %v5128, %v5130
        %v5133 = vadd.f32 %v5129, %v5131
        %v5134 = vmax.f32 %v5132, 0.0001
        %v5135 = vmax.f32 %v5133, 0.0001
        %v5136 = vmin.f32 %v5134, 1.0
        %v5137 = vmin.f32 %v5135, 1.0
        %v5138 = vmul.f32 %v5136, %v5136
        %v5139 = vmul.f32 %v5137, %v5137
        %v5140 = vmul.f32 %v5138, %v5138
        %v5141 = vmul.f32 %v5139, %v5139
        %v5142 = vmul.f32 %v5140, %v5140
        %v5143 = vmul.f32 %v5141, %v5141
        %v5144 = vmul.f32 %v5142, %v5142
        %v5145 = vmul.f32 %v5143, %v5143
        %v5146 = vmul.f32 %v5144, %v5144
        %v5147 = vmul.f32 %v5145, %v5145
        %v5148 = vmul.f32 %v5146, %v5146
        %v5149 = vmul.f32 %v5147, %v5147
        %v5150 = vmul.f32 %v5148, %v5148
        %v5151 = vmul.f32 %v5149, %v5149
        %v5152 = vstv %s5123
        %v5153 = vmul.f32 %v317, %v5152
        %v5154 = vmul.f32 %v318, %v5152
        %v5155 = vmin.f32 %v5153, 10000.0
        %v5156 = vmin.f32 %v5154, 10000.0
        %v5157 = vsub.f32 %v3875, %v1918
        %v5158 = vsub.f32 %v3876, %v1920
        %v5159 = vand.u32 2147483647, %v5157
        %v5160 = vand.u32 2147483647, %v5158
        %5163 = vrot.lane.b32.xlu0 %v5155, 12
        %v5164 = vpop.permute.xlu0 %5163
        %5165 = vrot.lane.b32.xlu0 %v5156, 12
        %v5166 = vpop.permute.xlu0 %5165
        %v5169 = vmul.f32 %v5159, %v5164
        %v5170 = vmul.f32 %v5160, %v5166
        %v5171 = vsub.f32 0.0, %v5169
        %v5172 = vsub.f32 0.0, %v5170
        %v5173 = vmul.f32 %v5171, 1.442695
        %v5174 = vpow.pop %v5173
        %v5175 = vmul.f32 %v5172, 1.442695
        %v5176 = vpow.pop %v5175
        %v5177 = vstv %s5122
        %v5178 = vmul.f32 %v5177, %v5150
        %v5179 = vmul.f32 %v5177, %v5151
        %v5180 = vmul.f32 %v5178, %v5174
        %v5181 = vmul.f32 %v5179, %v5176
        %v5182 = vmul.f32 %v3851, %v5180
        %v5183 = vmul.f32 %v3852, %v5181
        %5186 = vrot.lane.b32.xlu0 %v5182, 116
        %v5187 = vpop.permute.xlu0 %5186
        %5188 = vrot.lane.b32.xlu0 %v5183, 116
        %v5189 = vpop.permute.xlu0 %5188
        %v5192 = vadd.f32 %v5085, %v5187
        %v5193 = vadd.f32 %v5086, %v5189
        %v5194 = vmul.f32 %v3855, %v5180
        %v5195 = vmul.f32 %v3856, %v5181
        %5198 = vrot.lane.b32.xlu0 %v5194, 116
        %v5199 = vpop.permute.xlu0 %5198
        %5200 = vrot.lane.b32.xlu0 %v5195, 116
        %v5201 = vpop.permute.xlu0 %5200
        %v5204 = vadd.f32 %v5097, %v5199
        %v5205 = vadd.f32 %v5098, %v5201
        %v5206 = vmul.f32 %v3859, %v5180
        %v5207 = vmul.f32 %v3860, %v5181
        %5210 = vrot.lane.b32.xlu0 %v5206, 116
        %v5211 = vpop.permute.xlu0 %5210
        %5212 = vrot.lane.b32.xlu0 %v5207, 116
        %v5213 = vpop.permute.xlu0 %5212
        %v5216 = vadd.f32 %v5109, %v5211
        %v5217 = vadd.f32 %v5110, %v5213
        %5220 = vrot.lane.b32.xlu0 %v5180, 116
        %v5221 = vpop.permute.xlu0 %5220
        %5222 = vrot.lane.b32.xlu0 %v5181, 116
        %v5223 = vpop.permute.xlu0 %5222
        %v5226 = vadd.f32 %v5119, %v5221
        %v5227 = vadd.f32 %v5120, %v5223
        %s5228 = sadd.s32 %s3877, 13
        %s5229 = sld [smem:[#allocation4 + %s5228]]
        %s5230 = sld [smem:[#allocation7 + %s5228]]
        %v5231 = vmul.f32 %v3863, %v1998
        %v5232 = vmul.f32 %v3864, %v2000
        %v5233 = vmul.f32 %v3867, %v2006
        %v5234 = vmul.f32 %v3868, %v2008
        %v5235 = vadd.f32 %v5231, %v5233
        %v5236 = vadd.f32 %v5232, %v5234
        %v5237 = vmul.f32 %v3871, %v2016
        %v5238 = vmul.f32 %v3872, %v2018
        %v5239 = vadd.f32 %v5235, %v5237
        %v5240 = vadd.f32 %v5236, %v5238
        %v5241 = vmax.f32 %v5239, 0.0001
        %v5242 = vmax.f32 %v5240, 0.0001
        %v5243 = vmin.f32 %v5241, 1.0
        %v5244 = vmin.f32 %v5242, 1.0
        %v5245 = vmul.f32 %v5243, %v5243
        %v5246 = vmul.f32 %v5244, %v5244
        %v5247 = vmul.f32 %v5245, %v5245
        %v5248 = vmul.f32 %v5246, %v5246
        %v5249 = vmul.f32 %v5247, %v5247
        %v5250 = vmul.f32 %v5248, %v5248
        %v5251 = vmul.f32 %v5249, %v5249
        %v5252 = vmul.f32 %v5250, %v5250
        %v5253 = vmul.f32 %v5251, %v5251
        %v5254 = vmul.f32 %v5252, %v5252
        %v5255 = vmul.f32 %v5253, %v5253
        %v5256 = vmul.f32 %v5254, %v5254
        %v5257 = vmul.f32 %v5255, %v5255
        %v5258 = vmul.f32 %v5256, %v5256
        %v5259 = vstv %s5230
        %v5260 = vmul.f32 %v317, %v5259
        %v5261 = vmul.f32 %v318, %v5259
        %v5262 = vmin.f32 %v5260, 10000.0
        %v5263 = vmin.f32 %v5261, 10000.0
        %v5264 = vsub.f32 %v3875, %v2049
        %v5265 = vsub.f32 %v3876, %v2051
        %v5266 = vand.u32 2147483647, %v5264
        %v5267 = vand.u32 2147483647, %v5265
        %5270 = vrot.lane.b32.xlu0 %v5262, 13
        %v5271 = vpop.permute.xlu0 %5270
        %5272 = vrot.lane.b32.xlu0 %v5263, 13
        %v5273 = vpop.permute.xlu0 %5272
        %v5276 = vmul.f32 %v5266, %v5271
        %v5277 = vmul.f32 %v5267, %v5273
        %v5278 = vsub.f32 0.0, %v5276
        %v5279 = vsub.f32 0.0, %v5277
        %v5280 = vmul.f32 %v5278, 1.442695
        %v5281 = vpow.pop %v5280
        %v5282 = vmul.f32 %v5279, 1.442695
        %v5283 = vpow.pop %v5282
        %v5284 = vstv %s5229
        %v5285 = vmul.f32 %v5284, %v5257
        %v5286 = vmul.f32 %v5284, %v5258
        %v5287 = vmul.f32 %v5285, %v5281
        %v5288 = vmul.f32 %v5286, %v5283
        %v5289 = vmul.f32 %v3851, %v5287
        %v5290 = vmul.f32 %v3852, %v5288
        %5293 = vrot.lane.b32.xlu0 %v5289, 115
        %v5294 = vpop.permute.xlu0 %5293
        %5295 = vrot.lane.b32.xlu0 %v5290, 115
        %v5296 = vpop.permute.xlu0 %5295
        %v5299 = vadd.f32 %v5192, %v5294
        %v5300 = vadd.f32 %v5193, %v5296
        %v5301 = vmul.f32 %v3855, %v5287
        %v5302 = vmul.f32 %v3856, %v5288
        %5305 = vrot.lane.b32.xlu0 %v5301, 115
        %v5306 = vpop.permute.xlu0 %5305
        %5307 = vrot.lane.b32.xlu0 %v5302, 115
        %v5308 = vpop.permute.xlu0 %5307
        %v5311 = vadd.f32 %v5204, %v5306
        %v5312 = vadd.f32 %v5205, %v5308
        %v5313 = vmul.f32 %v3859, %v5287
        %v5314 = vmul.f32 %v3860, %v5288
        %5317 = vrot.lane.b32.xlu0 %v5313, 115
        %v5318 = vpop.permute.xlu0 %5317
        %5319 = vrot.lane.b32.xlu0 %v5314, 115
        %v5320 = vpop.permute.xlu0 %5319
        %v5323 = vadd.f32 %v5216, %v5318
        %v5324 = vadd.f32 %v5217, %v5320
        %5327 = vrot.lane.b32.xlu0 %v5287, 115
        %v5328 = vpop.permute.xlu0 %5327
        %5329 = vrot.lane.b32.xlu0 %v5288, 115
        %v5330 = vpop.permute.xlu0 %5329
        %v5333 = vadd.f32 %v5226, %v5328
        %v5334 = vadd.f32 %v5227, %v5330
        %s5335 = sadd.s32 %s3877, 14
        %s5336 = sld [smem:[#allocation4 + %s5335]]
        %s5337 = sld [smem:[#allocation7 + %s5335]]
        %v5338 = vmul.f32 %v3863, %v2129
        %v5339 = vmul.f32 %v3864, %v2131
        %v5340 = vmul.f32 %v3867, %v2137
        %v5341 = vmul.f32 %v3868, %v2139
        %v5342 = vadd.f32 %v5338, %v5340
        %v5343 = vadd.f32 %v5339, %v5341
        %v5344 = vmul.f32 %v3871, %v2147
        %v5345 = vmul.f32 %v3872, %v2149
        %v5346 = vadd.f32 %v5342, %v5344
        %v5347 = vadd.f32 %v5343, %v5345
        %v5348 = vmax.f32 %v5346, 0.0001
        %v5349 = vmax.f32 %v5347, 0.0001
        %v5350 = vmin.f32 %v5348, 1.0
        %v5351 = vmin.f32 %v5349, 1.0
        %v5352 = vmul.f32 %v5350, %v5350
        %v5353 = vmul.f32 %v5351, %v5351
        %v5354 = vmul.f32 %v5352, %v5352
        %v5355 = vmul.f32 %v5353, %v5353
        %v5356 = vmul.f32 %v5354, %v5354
        %v5357 = vmul.f32 %v5355, %v5355
        %v5358 = vmul.f32 %v5356, %v5356
        %v5359 = vmul.f32 %v5357, %v5357
        %v5360 = vmul.f32 %v5358, %v5358
        %v5361 = vmul.f32 %v5359, %v5359
        %v5362 = vmul.f32 %v5360, %v5360
        %v5363 = vmul.f32 %v5361, %v5361
        %v5364 = vmul.f32 %v5362, %v5362
        %v5365 = vmul.f32 %v5363, %v5363
        %v5366 = vstv %s5337
        %v5367 = vmul.f32 %v317, %v5366
        %v5368 = vmul.f32 %v318, %v5366
        %v5369 = vmin.f32 %v5367, 10000.0
        %v5370 = vmin.f32 %v5368, 10000.0
        %v5371 = vsub.f32 %v3875, %v2180
        %v5372 = vsub.f32 %v3876, %v2182
        %v5373 = vand.u32 2147483647, %v5371
        %v5374 = vand.u32 2147483647, %v5372
        %5377 = vrot.lane.b32.xlu0 %v5369, 14
        %v5378 = vpop.permute.xlu0 %5377
        %5379 = vrot.lane.b32.xlu0 %v5370, 14
        %v5380 = vpop.permute.xlu0 %5379
        %v5383 = vmul.f32 %v5373, %v5378
        %v5384 = vmul.f32 %v5374, %v5380
        %v5385 = vsub.f32 0.0, %v5383
        %v5386 = vsub.f32 0.0, %v5384
        %v5387 = vmul.f32 %v5385, 1.442695
        %v5388 = vpow.pop %v5387
        %v5389 = vmul.f32 %v5386, 1.442695
        %v5390 = vpow.pop %v5389
        %v5391 = vstv %s5336
        %v5392 = vmul.f32 %v5391, %v5364
        %v5393 = vmul.f32 %v5391, %v5365
        %v5394 = vmul.f32 %v5392, %v5388
        %v5395 = vmul.f32 %v5393, %v5390
        %v5396 = vmul.f32 %v3851, %v5394
        %v5397 = vmul.f32 %v3852, %v5395
        %5400 = vrot.lane.b32.xlu0 %v5396, 114
        %v5401 = vpop.permute.xlu0 %5400
        %5402 = vrot.lane.b32.xlu0 %v5397, 114
        %v5403 = vpop.permute.xlu0 %5402
        %v5406 = vadd.f32 %v5299, %v5401
        %v5407 = vadd.f32 %v5300, %v5403
        %v5408 = vmul.f32 %v3855, %v5394
        %v5409 = vmul.f32 %v3856, %v5395
        %5412 = vrot.lane.b32.xlu0 %v5408, 114
        %v5413 = vpop.permute.xlu0 %5412
        %5414 = vrot.lane.b32.xlu0 %v5409, 114
        %v5415 = vpop.permute.xlu0 %5414
        %v5418 = vadd.f32 %v5311, %v5413
        %v5419 = vadd.f32 %v5312, %v5415
        %v5420 = vmul.f32 %v3859, %v5394
        %v5421 = vmul.f32 %v3860, %v5395
        %5424 = vrot.lane.b32.xlu0 %v5420, 114
        %v5425 = vpop.permute.xlu0 %5424
        %5426 = vrot.lane.b32.xlu0 %v5421, 114
        %v5427 = vpop.permute.xlu0 %5426
        %v5430 = vadd.f32 %v5323, %v5425
        %v5431 = vadd.f32 %v5324, %v5427
        %5434 = vrot.lane.b32.xlu0 %v5394, 114
        %v5435 = vpop.permute.xlu0 %5434
        %5436 = vrot.lane.b32.xlu0 %v5395, 114
        %v5437 = vpop.permute.xlu0 %5436
        %v5440 = vadd.f32 %v5333, %v5435
        %v5441 = vadd.f32 %v5334, %v5437
        %v5442 = vld [vmem:[#allocation2] sm:$0xff]
        %v5443 = vld [vmem:[#allocation2 + $0x8] sm:$0xff]
        %v5444 = vadd.f32 %v5442, %v5406
        %v5445 = vadd.f32 %v5443, %v5407
        %vm5446 = vcmask 130048
        %5447 = vst.msk [vmem:[#allocation2] sm:$0xff] %vm5446, %v5444
        %5448 = vst.msk [vmem:[#allocation2 + $0x8] sm:$0xff] %vm5446, %v5445
        %s5449 = scalar_lea.vmem [#allocation2], 16
        %v5450 = vld [vmem:[%s5449] sm:$0xff]
        %v5451 = vld [vmem:[%s5449 + $0x8] sm:$0xff]
        %v5452 = vadd.f32 %v5450, %v5418
        %v5453 = vadd.f32 %v5451, %v5419
        %5454 = vst.msk [vmem:[%s5449] sm:$0xff] %vm5446, %v5452
        %5455 = vst.msk [vmem:[%s5449 + $0x8] sm:$0xff] %vm5446, %v5453
        %s5456 = scalar_lea.vmem [#allocation2], 32
        %v5457 = vld [vmem:[%s5456] sm:$0xff]
        %v5458 = vld [vmem:[%s5456 + $0x8] sm:$0xff]
        %v5459 = vadd.f32 %v5457, %v5430
        %v5460 = vadd.f32 %v5458, %v5431
        %5461 = vst.msk [vmem:[%s5456] sm:$0xff] %vm5446, %v5459
        %5462 = vst.msk [vmem:[%s5456 + $0x8] sm:$0xff] %vm5446, %v5460
        %v5463 = vld [vmem:[#allocation3] sm:$0xff]
        %v5464 = vld [vmem:[#allocation3 + $0x8] sm:$0xff]
        %v5465 = vadd.f32 %v5463, %v5440
        %v5466 = vadd.f32 %v5464, %v5441
        %5467 = vst.msk [vmem:[#allocation3] sm:$0xff] %vm5446, %v5465
        %5468 = vst.msk [vmem:[#allocation3 + $0x8] sm:$0xff] %vm5446, %v5466
        %p5469 = scmp.eq.s32.totalorder %s27, 4
        // Predicated region
        $region49: #{tpu_custom_call.1} parent=35 // pred_check
          %p5470 = pneg %p5469
        $region50: #{tpu_custom_call.1} parent=35 // pred_check_branch
          %5472 = sbr.rel (%p5470) target = $region52
        $region51: #{tpu_custom_call.1} parent=35 // pred_region
          %v5473 = vld [vmem:[#allocation3] sm:$0xff]
          %v5474 = vld [vmem:[#allocation3 + $0x8] sm:$0xff]
          %v5475 = vmax.f32 %v5473, 0.0001
          %v5476 = vmax.f32 %v5474, 0.0001
          %v5477 = vrcp.pop %v5475
          %v5478 = vmul.f32 1.0, %v5477
          %v5479 = vrcp.pop %v5476
          %v5480 = vmul.f32 1.0, %v5479
          %v5481 = vld [vmem:[#allocation2] sm:$0xff]
          %v5482 = vld [vmem:[#allocation2 + $0x8] sm:$0xff]
          %v5483 = vmul.f32 %v5481, %v5478
          %v5484 = vmul.f32 %v5482, %v5480
          %5485 = vst.msk [vmem:[%s273] sm:$0xff] %vm5446, %v5483
          %5486 = vst.msk [vmem:[%s273 + $0x8] sm:$0xff] %vm5446, %v5484
          %v5487 = vld [vmem:[%s5449] sm:$0xff]
          %v5488 = vld [vmem:[%s5449 + $0x8] sm:$0xff]
          %v5489 = vmul.f32 %v5487, %v5478
          %v5490 = vmul.f32 %v5488, %v5480
          %s5491 = scalar_lea.vmem %s273, 16 [#allocation9]
          %5492 = vst.msk [vmem:[%s5491] sm:$0xff] %vm5446, %v5489
          %5493 = vst.msk [vmem:[%s5491 + $0x8] sm:$0xff] %vm5446, %v5490
          %v5494 = vld [vmem:[%s5456] sm:$0xff]
          %v5495 = vld [vmem:[%s5456 + $0x8] sm:$0xff]
          %v5496 = vmul.f32 %v5494, %v5478
          %v5497 = vmul.f32 %v5495, %v5480
          %s5498 = scalar_lea.vmem %s273, 32 [#allocation9]
          %5499 = vst.msk [vmem:[%s5498] sm:$0xff] %vm5446, %v5496
          %5500 = vst.msk [vmem:[%s5498 + $0x8] sm:$0xff] %vm5446, %v5497
        $region52: #{tpu_custom_call.1} parent=35 // pred_fallthru
          _
        %s5501 = sand.u32 %s147, 1
        %s5502 = scalar_lea.sflag [#allocation5], %s5501
        %s5503 = sand.u32 %s147, 1
        %s5504 = smul.addr %s5503, 48
        %s5505 = scalar_lea.vmem [#allocation9], %s5504
        // Predicated region
        $region53: #{tpu_custom_call.1} parent=35 // pred_check
          %p5506 = pneg %p157
        $region54: #{tpu_custom_call.1} parent=35 // pred_check_branch
          %5508 = sbr.rel (%p5506) target = $region56
        $region55: #{tpu_custom_call.1} parent=35 // pred_region
          %s5510 = ssub.s32 768, 768
          %5511 = vsyncadd %s5502, %s5510
          %s5512 = smul.addr %s26, 6
          %s5513 = smul.addr %s25, 6
          %s5514 = sadd.s32 %s5512, %s5513
          %s5515 = smul.addr %s5514, 128
          %s5516 = scalar_lea.hbm %s4, %s5515
          %s5517 = sshll.u32 %s5505, 4
          %s5518 = int_to_ptr.vmem [resolvable:$true] %s5517
          %5523 = dma.vmem_to_hbm [thread:$0]  %s5518, 768, %s5516, %s5502, 128, 128, 8
        $region56: #{tpu_custom_call.1} parent=35 // pred_fallthru
          _
      $region36: #{tpu_custom_call.1} parent=5 // pred_fallthru
        _
      %p5524 = scmp.le.s32.totalorder 2, %s15
      // Predicated region
      $region57: #{tpu_custom_call.1} parent=5 // pred_check
        %p5525 = pneg %p5524
      $region58: #{tpu_custom_call.1} parent=5 // pred_check_branch
        %5527 = sbr.rel (%p5525) target = $region60
      $region59: #{tpu_custom_call.1} parent=5 // pred_region
        %s5528 = ssub.s32 %s15, 2
        // Predicated region
        $region61: #{tpu_custom_call.1} parent=59 // pred_check
          %p5529 = pneg %p163
        $region62: #{tpu_custom_call.1} parent=59 // pred_check_branch
          %5531 = sbr.rel (%p5529) target = $region64
        $region63: #{tpu_custom_call.1} parent=59 // pred_region
          %s5532 = sand.u32 %s148, 1
          %s5533 = scalar_lea.sflag [#allocation5], %s5532
          %s5534 = sand.u32 %s148, 1
          %s5535 = smul.addr %s5534, 48
          %s5536 = scalar_lea.vmem [#allocation9], %s5535
          %5537 = dma.done %s5533, 768
        $region64: #{tpu_custom_call.1} parent=59 // pred_fallthru
          _
      $region60: #{tpu_custom_call.1} parent=5 // pred_fallthru
        _
    $region6: #{tpu_custom_call.1} parent=1 // loop_footer
      %s19 = sadd.s32 1, %s15
    $region7: #{tpu_custom_call.1} parent=1 // loop_footer_branch
      %14 = sbr.rel target = $region3
    $region8: #{tpu_custom_call.1} parent=1 // loop_exit
      _
    %5538 = vsyncpa [#allocation5], 1
    %s5539 = scalar_lea.sflag [#allocation5], 1
    %5540 = vsyncpa %s5539, 1
    %5541 = vsyncpa [#allocation6], 1
    %s5542 = scalar_lea.sflag [#allocation6], 1
    %5543 = vsyncpa %s5542, 1
    %5544 = vsyncpa [#allocation8], 1

</llo_original>
